<compile_context>
chip_gen: v7x
topology: tpu7x:2x2x1
jax: 0.10.0
libtpu: 0.0.40
codegen_flags: <defaults>
</compile_context>

<pallas_src>
import math

import jax
import jax.numpy as jnp
from jax import lax
from jax.experimental import pallas as pl
from jax.experimental.pallas import tpu as pltpu

# ----- deterministic parameter setup (matches IntegralEquirect.__init__) -----
BG_RES = 16                 # bg_resolution -> bg_mat: (1, 3, 16, 32)
INIT_VAL = 0.5              # init_val
MIPBIAS = 0.0               # nn.Parameter(mipbias=0)
BRIGHTNESS = 0.0            # nn.Parameter(0.0)
MUL = 1.0                   # nn.Parameter(1.0)
MIPNOISE = 0.0              # mipnoise=0 -> rand term vanishes
MULTI = 1000.0
EPS = float(jnp.finfo(jnp.float32).eps)

H = BG_RES                  # 16
W = 2 * BG_RES              # 32


def integral_equirect_kernel(flags_ref, rays_ref, cum_ref, selr_ref, pole_ref,
                             out_ref):
    # layout (rays on lanes):
    #   flags_ref (num_tiles,) i32 SMEM  1 if any ray in the tile crosses a pole
    #   rays_ref  (8, TN) f32  rows = [xl, xr, yb, yt, xl+rot, xr+rot, cy, 1/size]
    #   cum_ref   (3H, W) f32  SAT, row index = c*H + j  (cum[c, j, i])
    #   selr_ref  (3, 3H) f32  channel-group summation matrix
    #   pole_ref  (3, 2)  f32  col 0 = top-row mean, col 1 = bottom-row mean
    #   out_ref   (3, TN) f32  background color per ray (channels on sublanes)
    TN = rays_ref.shape[1]
    rays = rays_ref[...]
    xl = rays[0:1, :]
    xr = rays[1:2, :]
    yb = rays[2:3, :]
    yt = rays[3:4, :]
    xlr = rays[4:5, :]
    xrr = rays[5:6, :]
    cy = rays[6:7, :]
    inv_size = rays[7:8, :]
    scale = MULTI * inv_size                                  # (1, TN)

    iota_w = lax.broadcasted_iota(jnp.int32, (W, TN), 0)
    iota_h = lax.broadcasted_iota(jnp.int32, (H, TN), 0)
    # constant border taps (axis weights of coordinate -1 / +1) are one-hot rows
    col_first = (iota_w == 0).astype(jnp.float32)
    col_last = (iota_w == W - 1).astype(jnp.float32)
    row_first = (iota_h == 0).astype(jnp.float32)
    row_last = (iota_h == H - 1).astype(jnp.float32)

    def taps(g, iota, dim):
        # bilinear (align_corners=True) axis weights of coord g over `dim` samples,
        # expressed as nested selects against an integer floor (robust equality).
        gc = jnp.clip(g, -1.0, 1.0)
        f = (gc + 1.0) * (0.5 * (dim - 1))
        f0 = jnp.floor(f)
        frac = f - f0
        f0i = f0.astype(jnp.int32)
        return jnp.where(iota == f0i, 1.0 - frac,
                         jnp.where(iota == f0i + 1, frac, 0.0))

    def dx_wrap_lr(gl, gr):
        # x-axis weights of the L/R-wrapped rectangle group (integrate_area_wrap_lr):
        # base rect + right wrap (gr > 1) + left wrap (gl < -1).
        m_r = (gr > 1.0).astype(jnp.float32)
        m_l = (gl < -1.0).astype(jnp.float32)
        dx = taps(gr, iota_w, W) - taps(gl, iota_w, W)
        dx = dx + m_r * (taps(gr - 2.0, iota_w, W) - col_first)
        dx = dx + m_l * (col_last - taps(gl + 2.0, iota_w, W))
        return dx

    cum = cum_ref[...]          # (3H, W)
    selr = selr_ref[...]        # (3, 3H)
    pole = pole_ref[...]        # (3, 2)

    def tile3(dy):              # replicate (H, TN) across the 3 channel groups
        return jnp.concatenate([dy, dy, dy], axis=0)          # (3H, TN)

    # ---- base rectangle group (always present) ----
    dy_base = taps(yt, iota_h, H) - taps(yb, iota_h, H)        # (H, TN)
    p_base = jnp.dot(cum, dx_wrap_lr(xl, xr),
                     preferred_element_type=jnp.float32) * tile3(dy_base)

    cutoff = 1.0 - 2.0 / H * 3.0

    def finish(p_total):
        # final channel reduction on the MXU, pole-row override, single store.
        bg = jnp.dot(selr, p_total, preferred_element_type=jnp.float32) * scale
        res = jnp.where(cy > cutoff, pole[:, 1:2], bg)         # bottom row mean
        res = jnp.where(cy < -cutoff, pole[:, 0:1], res)       # top row mean
        out_ref[...] = res

    flag = flags_ref[pl.program_id(0)]

    @pl.when(flag == 0)
    def _():
        finish(p_base)

    # ---- pole wrap group (top + bottom share the same rotated x edges) ----
    @pl.when(flag != 0)
    def _():
        m_t = (yt > 1.0).astype(jnp.float32)
        m_b = (yb < -1.0).astype(jnp.float32)
        over_t = jnp.clip(yt - 1.0, 0.0, 0.5)
        over_b = jnp.clip(-1.0 - yb, 0.0, 0.5)
        dy_pole = (m_t * (row_last - taps(1.0 - over_t, iota_h, H))
                   + m_b * (taps(-1.0 + over_b, iota_h, H) - row_first))
        p_pole = jnp.dot(cum, dx_wrap_lr(xlr, xrr),
                         preferred_element_type=jnp.float32) * tile3(dy_pole)
        finish(p_base + p_pole)


def integral_equirect_forward(viewdirs, sa_sample, bg_mat, brightness, mul,
                              tile_n=1024):
    """Glue: activation, SAT precompute, angular coords + sa2mip (cheap per-ray
    scalar math); the per-ray-per-texel hot path runs in the Pallas kernel."""
    n = viewdirs.shape[0]
    h, w = bg_mat.shape[2], bg_mat.shape[3]
    assert (h, w) == (H, W)

    # identity activation: brightness + mul * x
    activated = (brightness + mul * bg_mat).astype(jnp.float32)          # (1,3,H,W)
    cum = jnp.cumsum(jnp.cumsum(activated / MULTI, axis=2), axis=3)      # (1,3,H,W)
    cum_rows = cum[0].reshape(3 * h, w)                                   # (3H, W)
    pole_cols = jnp.stack(
        [jnp.mean(activated[0, :, 0, :], axis=-1),
         jnp.mean(activated[0, :, -1, :], axis=-1)], axis=1)              # (3, 2)
    selr = jnp.repeat(jnp.eye(3, dtype=jnp.float32), h, axis=1)           # (3, 3H)

    vd = viewdirs.astype(jnp.float32)
    sa = sa_sample.reshape(-1).astype(jnp.float32)
    a = vd[:, 0]
    b = vd[:, 1]
    c = vd[:, 2]
    norm2d = jnp.sqrt(a * a + b * b)
    phi = jnp.arctan2(b, a)
    theta = jnp.arctan2(c, norm2d)
    cx = (jnp.mod(phi, 2.0 * math.pi) - math.pi) / math.pi
    cy = -theta / math.pi * 2.0

    # ---- sa2mip ----
    cosv = jnp.sqrt(jnp.clip(1.0 - c * c, EPS, None))
    d = (h * w) / jnp.clip(2.0 * math.pi ** 2 * cosv, EPS, None)
    area = jnp.exp(jnp.log(d / 2.0) + sa)
    hh = jnp.clip(jnp.sqrt(jnp.clip(area, EPS, None)) * cosv, EPS, None)
    ww = area / hh
    mip_w = jnp.clip(jnp.log(ww) / math.log(2.0) + MIPBIAS, 0.0, 7.0)
    mip_h = jnp.clip(jnp.log(hh) / math.log(2.0) + MIPBIAS, 0.0, 7.0)
    sw = jnp.exp2(mip_w) / h / 2.0
    shh = jnp.exp2(mip_h) / h
    inv_size = 1.0 / ((sw / 2.0 * w) * (shh / 2.0 * h))

    xl = cx - sw / 2.0
    xr = cx + sw / 2.0
    yb = cy - shh / 2.0
    yt = cy + shh / 2.0
    rot = jnp.where(xl > 0.0, -1.0, 1.0)     # pole-wrap azimuth rotation (from tl.x)
    rays = jnp.stack([xl, xr, yb, yt, xl + rot, xr + rot, cy, inv_size], axis=0)

    n_pad = ((n + tile_n - 1) // tile_n) * tile_n
    if n_pad != n:
        rays = jnp.pad(rays, ((0, 0), (0, n_pad - n)))
    num_tiles = n_pad // tile_n

    # per-tile flag: does any ray in the tile cross a pole?  (exact skip otherwise)
    pole = (rays[3, :] > 1.0) | (rays[2, :] < -1.0)
    flags = jnp.any(pole.reshape(num_tiles, tile_n), axis=1).astype(jnp.int32)

    out = pl.pallas_call(
        integral_equirect_kernel,
        out_shape=jax.ShapeDtypeStruct((3, n_pad), jnp.float32),
        grid_spec=pltpu.PrefetchScalarGridSpec(
            num_scalar_prefetch=1,
            grid=(num_tiles,),
            in_specs=[
                pl.BlockSpec((8, tile_n), lambda i, flags: (0, i)),    # packed rays
                pl.BlockSpec((3 * H, W), lambda i, flags: (0, 0)),     # SAT (const)
                pl.BlockSpec((3, 3 * H), lambda i, flags: (0, 0)),     # channel reduce
                pl.BlockSpec((3, 2), lambda i, flags: (0, 0)),         # pole row means
            ],
            out_specs=pl.BlockSpec((3, tile_n), lambda i, flags: (0, i)),
        ),
        compiler_params=pltpu.CompilerParams(
            dimension_semantics=("parallel",)),
    )(flags, rays, cum_rows, selr, pole_cols)
    return out[:, :n].T


if __name__ == "__main__":
    key = jax.random.PRNGKey(0)
    k1, k2 = jax.random.split(key)

    n_rays = 2048   # 2 tiles of 1024 -> v7x's two TensorCores both get a grid step
    viewdirs = jax.random.normal(k1, (n_rays, 3), dtype=jnp.float32)
    viewdirs = viewdirs / jnp.linalg.norm(viewdirs, axis=-1, keepdims=True)
    sa_sample = jax.random.uniform(k2, (n_rays, 1), dtype=jnp.float32,
                                   minval=-6.0, maxval=-1.0)

    # Module parameters, deterministic init per __init__.
    bg_mat = INIT_VAL * jnp.ones((1, 3, H, W), dtype=jnp.float32)

    fwd = jax.jit(lambda v, s, m: integral_equirect_forward(
        v, s, m, jnp.float32(BRIGHTNESS), jnp.float32(MUL)))
    out = fwd(viewdirs, sa_sample, bg_mat)
    out = jax.block_until_ready(out)

    assert out.shape == (n_rays, 3)
    assert bool(jnp.all(jnp.isfinite(out)))
    print("KERNEL_OK")
</pallas_src>

<mosaic_0001>
module attributes {stable_mosaic.version = 11 : i64} {
  func.func @integral_equirect_kernel(%arg0: i32, %arg1: memref<2xi32, #tpu.memory_space<smem>>, %arg2: memref<8x1024xf32, #tpu.memory_space<vmem>>, %arg3: memref<48x32xf32, #tpu.memory_space<vmem>>, %arg4: memref<3x48xf32, #tpu.memory_space<vmem>>, %arg5: memref<3x2xf32, #tpu.memory_space<vmem>>, %arg6: memref<3x1024xf32, #tpu.memory_space<vmem>>) attributes {dimension_semantics = [#tpu.dimension_semantics<parallel>], iteration_bounds = array<i64: 2>, scalar_prefetch = 1 : i64, scratch_operands = 0 : i64, tpu.core_type = #tpu.core_type<tc>, window_params = [{transform_indices = @transform_0, window_bounds = array<i64: 8, 1024>}, {pipeline_mode = #tpu.pipeline_mode<synchronous>, transform_indices = @transform_1, window_bounds = array<i64: 48, 32>}, {pipeline_mode = #tpu.pipeline_mode<synchronous>, transform_indices = @transform_2, window_bounds = array<i64: 3, 48>}, {pipeline_mode = #tpu.pipeline_mode<synchronous>, transform_indices = @transform_3, window_bounds = array<i64: 3, 2>}, {transform_indices = @transform_4, window_bounds = array<i64: 3, 1024>}]} {
    %c0 = arith.constant 0 : index
    %c0_0 = arith.constant 0 : index
    %0 = vector.load %arg2[%c0, %c0_0] : memref<8x1024xf32, #tpu.memory_space<vmem>>, vector<8x1024xf32>
    %1 = vector.extract_strided_slice %0 {offsets = [0, 0], sizes = [1, 1024], strides = [1, 1]} : vector<8x1024xf32> to vector<1x1024xf32>
    %2 = vector.extract_strided_slice %0 {offsets = [1, 0], sizes = [1, 1024], strides = [1, 1]} : vector<8x1024xf32> to vector<1x1024xf32>
    %3 = vector.extract_strided_slice %0 {offsets = [2, 0], sizes = [1, 1024], strides = [1, 1]} : vector<8x1024xf32> to vector<1x1024xf32>
    %4 = vector.extract_strided_slice %0 {offsets = [3, 0], sizes = [1, 1024], strides = [1, 1]} : vector<8x1024xf32> to vector<1x1024xf32>
    %5 = vector.extract_strided_slice %0 {offsets = [4, 0], sizes = [1, 1024], strides = [1, 1]} : vector<8x1024xf32> to vector<1x1024xf32>
    %6 = vector.extract_strided_slice %0 {offsets = [5, 0], sizes = [1, 1024], strides = [1, 1]} : vector<8x1024xf32> to vector<1x1024xf32>
    %7 = vector.extract_strided_slice %0 {offsets = [6, 0], sizes = [1, 1024], strides = [1, 1]} : vector<8x1024xf32> to vector<1x1024xf32>
    %8 = vector.extract_strided_slice %0 {offsets = [7, 0], sizes = [1, 1024], strides = [1, 1]} : vector<8x1024xf32> to vector<1x1024xf32>
    %cst = arith.constant 1.000000e+03 : f32
    %9 = vector.broadcast %cst : f32 to vector<1x1024xf32>
    %10 = arith.mulf %9, %8 : vector<1x1024xf32>
    %11 = tpu.iota {dimensions = array<i32: 0>} : vector<32x1024xi32>
    %12 = tpu.iota {dimensions = array<i32: 0>} : vector<16x1024xi32>
    %c0_i32 = arith.constant 0 : i32
    %13 = vector.broadcast %c0_i32 : i32 to vector<32x1024xi32>
    %14 = arith.cmpi eq, %11, %13 : vector<32x1024xi32>
    %15 = arith.extui %14 : vector<32x1024xi1> to vector<32x1024xi32>
    %16 = arith.sitofp %15 : vector<32x1024xi32> to vector<32x1024xf32>
    %c31_i32 = arith.constant 31 : i32
    %17 = vector.broadcast %c31_i32 : i32 to vector<32x1024xi32>
    %18 = arith.cmpi eq, %11, %17 : vector<32x1024xi32>
    %19 = arith.extui %18 : vector<32x1024xi1> to vector<32x1024xi32>
    %20 = arith.sitofp %19 : vector<32x1024xi32> to vector<32x1024xf32>
    %c0_i32_1 = arith.constant 0 : i32
    %21 = vector.broadcast %c0_i32_1 : i32 to vector<16x1024xi32>
    %22 = arith.cmpi eq, %12, %21 : vector<16x1024xi32>
    %23 = arith.extui %22 : vector<16x1024xi1> to vector<16x1024xi32>
    %24 = arith.sitofp %23 : vector<16x1024xi32> to vector<16x1024xf32>
    %c15_i32 = arith.constant 15 : i32
    %25 = vector.broadcast %c15_i32 : i32 to vector<16x1024xi32>
    %26 = arith.cmpi eq, %12, %25 : vector<16x1024xi32>
    %27 = arith.extui %26 : vector<16x1024xi1> to vector<16x1024xi32>
    %28 = arith.sitofp %27 : vector<16x1024xi32> to vector<16x1024xf32>
    %c0_2 = arith.constant 0 : index
    %c0_3 = arith.constant 0 : index
    %29 = vector.load %arg3[%c0_2, %c0_3] : memref<48x32xf32, #tpu.memory_space<vmem>>, vector<48x32xf32>
    %c0_4 = arith.constant 0 : index
    %c0_5 = arith.constant 0 : index
    %30 = vector.load %arg4[%c0_4, %c0_5] : memref<3x48xf32, #tpu.memory_space<vmem>>, vector<3x48xf32>
    %c0_6 = arith.constant 0 : index
    %c0_7 = arith.constant 0 : index
    %31 = vector.load %arg5[%c0_6, %c0_7] : memref<3x2xf32, #tpu.memory_space<vmem>>, vector<3x2xf32>
    %cst_8 = arith.constant -1.000000e+00 : f32
    %cst_9 = arith.constant 1.000000e+00 : f32
    %32 = vector.broadcast %cst_8 : f32 to vector<1x1024xf32>
    %33 = arith.maximumf %32, %4 : vector<1x1024xf32>
    %34 = vector.broadcast %cst_9 : f32 to vector<1x1024xf32>
    %35 = arith.minimumf %34, %33 : vector<1x1024xf32>
    %cst_10 = arith.constant 1.000000e+00 : f32
    %36 = vector.broadcast %cst_10 : f32 to vector<1x1024xf32>
    %37 = arith.addf %35, %36 : vector<1x1024xf32>
    %cst_11 = arith.constant 7.500000e+00 : f32
    %38 = vector.broadcast %cst_11 : f32 to vector<1x1024xf32>
    %39 = arith.mulf %37, %38 : vector<1x1024xf32>
    %40 = math.floor %39 : vector<1x1024xf32>
    %41 = arith.subf %39, %40 : vector<1x1024xf32>
    %42 = arith.fptosi %40 : vector<1x1024xf32> to vector<1x1024xi32>
    %43 = vector.broadcast %42 : vector<1x1024xi32> to vector<16x1024xi32>
    %44 = arith.cmpi eq, %12, %43 : vector<16x1024xi32>
    %cst_12 = arith.constant 1.000000e+00 : f32
    %45 = vector.broadcast %cst_12 : f32 to vector<1x1024xf32>
    %46 = arith.subf %45, %41 : vector<1x1024xf32>
    %c1_i32 = arith.constant 1 : i32
    %47 = vector.broadcast %c1_i32 : i32 to vector<1x1024xi32>
    %48 = arith.addi %42, %47 : vector<1x1024xi32>
    %49 = vector.broadcast %48 : vector<1x1024xi32> to vector<16x1024xi32>
    %50 = arith.cmpi eq, %12, %49 : vector<16x1024xi32>
    %cst_13 = arith.constant 0.000000e+00 : f32
    %51 = vector.shape_cast %41 : vector<1x1024xf32> to vector<1x1024xf32>
    %52 = vector.broadcast %51 : vector<1x1024xf32> to vector<16x1024xf32>
    %53 = vector.broadcast %cst_13 : f32 to vector<16x1024xf32>
    %54 = arith.select %50, %52, %53 : vector<16x1024xi1>, vector<16x1024xf32>
    %55 = vector.shape_cast %46 : vector<1x1024xf32> to vector<1x1024xf32>
    %56 = vector.broadcast %55 : vector<1x1024xf32> to vector<16x1024xf32>
    %57 = arith.select %44, %56, %54 : vector<16x1024xi1>, vector<16x1024xf32>
    %cst_14 = arith.constant -1.000000e+00 : f32
    %cst_15 = arith.constant 1.000000e+00 : f32
    %58 = vector.broadcast %cst_14 : f32 to vector<1x1024xf32>
    %59 = arith.maximumf %58, %3 : vector<1x1024xf32>
    %60 = vector.broadcast %cst_15 : f32 to vector<1x1024xf32>
    %61 = arith.minimumf %60, %59 : vector<1x1024xf32>
    %cst_16 = arith.constant 1.000000e+00 : f32
    %62 = vector.broadcast %cst_16 : f32 to vector<1x1024xf32>
    %63 = arith.addf %61, %62 : vector<1x1024xf32>
    %cst_17 = arith.constant 7.500000e+00 : f32
    %64 = vector.broadcast %cst_17 : f32 to vector<1x1024xf32>
    %65 = arith.mulf %63, %64 : vector<1x1024xf32>
    %66 = math.floor %65 : vector<1x1024xf32>
    %67 = arith.subf %65, %66 : vector<1x1024xf32>
    %68 = arith.fptosi %66 : vector<1x1024xf32> to vector<1x1024xi32>
    %69 = vector.broadcast %68 : vector<1x1024xi32> to vector<16x1024xi32>
    %70 = arith.cmpi eq, %12, %69 : vector<16x1024xi32>
    %cst_18 = arith.constant 1.000000e+00 : f32
    %71 = vector.broadcast %cst_18 : f32 to vector<1x1024xf32>
    %72 = arith.subf %71, %67 : vector<1x1024xf32>
    %c1_i32_19 = arith.constant 1 : i32
    %73 = vector.broadcast %c1_i32_19 : i32 to vector<1x1024xi32>
    %74 = arith.addi %68, %73 : vector<1x1024xi32>
    %75 = vector.broadcast %74 : vector<1x1024xi32> to vector<16x1024xi32>
    %76 = arith.cmpi eq, %12, %75 : vector<16x1024xi32>
    %cst_20 = arith.constant 0.000000e+00 : f32
    %77 = vector.shape_cast %67 : vector<1x1024xf32> to vector<1x1024xf32>
    %78 = vector.broadcast %77 : vector<1x1024xf32> to vector<16x1024xf32>
    %79 = vector.broadcast %cst_20 : f32 to vector<16x1024xf32>
    %80 = arith.select %76, %78, %79 : vector<16x1024xi1>, vector<16x1024xf32>
    %81 = vector.shape_cast %72 : vector<1x1024xf32> to vector<1x1024xf32>
    %82 = vector.broadcast %81 : vector<1x1024xf32> to vector<16x1024xf32>
    %83 = arith.select %70, %82, %80 : vector<16x1024xi1>, vector<16x1024xf32>
    %84 = arith.subf %57, %83 : vector<16x1024xf32>
    %cst_21 = arith.constant 1.000000e+00 : f32
    %85 = vector.broadcast %cst_21 : f32 to vector<1x1024xf32>
    %86 = arith.cmpf ogt, %2, %85 : vector<1x1024xf32>
    %87 = arith.extui %86 : vector<1x1024xi1> to vector<1x1024xi32>
    %88 = arith.sitofp %87 : vector<1x1024xi32> to vector<1x1024xf32>
    %cst_22 = arith.constant -1.000000e+00 : f32
    %89 = vector.broadcast %cst_22 : f32 to vector<1x1024xf32>
    %90 = arith.cmpf olt, %1, %89 : vector<1x1024xf32>
    %91 = arith.extui %90 : vector<1x1024xi1> to vector<1x1024xi32>
    %92 = arith.sitofp %91 : vector<1x1024xi32> to vector<1x1024xf32>
    %cst_23 = arith.constant -1.000000e+00 : f32
    %cst_24 = arith.constant 1.000000e+00 : f32
    %93 = vector.broadcast %cst_23 : f32 to vector<1x1024xf32>
    %94 = arith.maximumf %93, %2 : vector<1x1024xf32>
    %95 = vector.broadcast %cst_24 : f32 to vector<1x1024xf32>
    %96 = arith.minimumf %95, %94 : vector<1x1024xf32>
    %cst_25 = arith.constant 1.000000e+00 : f32
    %97 = vector.broadcast %cst_25 : f32 to vector<1x1024xf32>
    %98 = arith.addf %96, %97 : vector<1x1024xf32>
    %cst_26 = arith.constant 1.550000e+01 : f32
    %99 = vector.broadcast %cst_26 : f32 to vector<1x1024xf32>
    %100 = arith.mulf %98, %99 : vector<1x1024xf32>
    %101 = math.floor %100 : vector<1x1024xf32>
    %102 = arith.subf %100, %101 : vector<1x1024xf32>
    %103 = arith.fptosi %101 : vector<1x1024xf32> to vector<1x1024xi32>
    %104 = vector.broadcast %103 : vector<1x1024xi32> to vector<32x1024xi32>
    %105 = arith.cmpi eq, %11, %104 : vector<32x1024xi32>
    %cst_27 = arith.constant 1.000000e+00 : f32
    %106 = vector.broadcast %cst_27 : f32 to vector<1x1024xf32>
    %107 = arith.subf %106, %102 : vector<1x1024xf32>
    %c1_i32_28 = arith.constant 1 : i32
    %108 = vector.broadcast %c1_i32_28 : i32 to vector<1x1024xi32>
    %109 = arith.addi %103, %108 : vector<1x1024xi32>
    %110 = vector.broadcast %109 : vector<1x1024xi32> to vector<32x1024xi32>
    %111 = arith.cmpi eq, %11, %110 : vector<32x1024xi32>
    %cst_29 = arith.constant 0.000000e+00 : f32
    %112 = vector.shape_cast %102 : vector<1x1024xf32> to vector<1x1024xf32>
    %113 = vector.broadcast %112 : vector<1x1024xf32> to vector<32x1024xf32>
    %114 = vector.broadcast %cst_29 : f32 to vector<32x1024xf32>
    %115 = arith.select %111, %113, %114 : vector<32x1024xi1>, vector<32x1024xf32>
    %116 = vector.shape_cast %107 : vector<1x1024xf32> to vector<1x1024xf32>
    %117 = vector.broadcast %116 : vector<1x1024xf32> to vector<32x1024xf32>
    %118 = arith.select %105, %117, %115 : vector<32x1024xi1>, vector<32x1024xf32>
    %cst_30 = arith.constant -1.000000e+00 : f32
    %cst_31 = arith.constant 1.000000e+00 : f32
    %119 = vector.broadcast %cst_30 : f32 to vector<1x1024xf32>
    %120 = arith.maximumf %119, %1 : vector<1x1024xf32>
    %121 = vector.broadcast %cst_31 : f32 to vector<1x1024xf32>
    %122 = arith.minimumf %121, %120 : vector<1x1024xf32>
    %cst_32 = arith.constant 1.000000e+00 : f32
    %123 = vector.broadcast %cst_32 : f32 to vector<1x1024xf32>
    %124 = arith.addf %122, %123 : vector<1x1024xf32>
    %cst_33 = arith.constant 1.550000e+01 : f32
    %125 = vector.broadcast %cst_33 : f32 to vector<1x1024xf32>
    %126 = arith.mulf %124, %125 : vector<1x1024xf32>
    %127 = math.floor %126 : vector<1x1024xf32>
    %128 = arith.subf %126, %127 : vector<1x1024xf32>
    %129 = arith.fptosi %127 : vector<1x1024xf32> to vector<1x1024xi32>
    %130 = vector.broadcast %129 : vector<1x1024xi32> to vector<32x1024xi32>
    %131 = arith.cmpi eq, %11, %130 : vector<32x1024xi32>
    %cst_34 = arith.constant 1.000000e+00 : f32
    %132 = vector.broadcast %cst_34 : f32 to vector<1x1024xf32>
    %133 = arith.subf %132, %128 : vector<1x1024xf32>
    %c1_i32_35 = arith.constant 1 : i32
    %134 = vector.broadcast %c1_i32_35 : i32 to vector<1x1024xi32>
    %135 = arith.addi %129, %134 : vector<1x1024xi32>
    %136 = vector.broadcast %135 : vector<1x1024xi32> to vector<32x1024xi32>
    %137 = arith.cmpi eq, %11, %136 : vector<32x1024xi32>
    %cst_36 = arith.constant 0.000000e+00 : f32
    %138 = vector.shape_cast %128 : vector<1x1024xf32> to vector<1x1024xf32>
    %139 = vector.broadcast %138 : vector<1x1024xf32> to vector<32x1024xf32>
    %140 = vector.broadcast %cst_36 : f32 to vector<32x1024xf32>
    %141 = arith.select %137, %139, %140 : vector<32x1024xi1>, vector<32x1024xf32>
    %142 = vector.shape_cast %133 : vector<1x1024xf32> to vector<1x1024xf32>
    %143 = vector.broadcast %142 : vector<1x1024xf32> to vector<32x1024xf32>
    %144 = arith.select %131, %143, %141 : vector<32x1024xi1>, vector<32x1024xf32>
    %145 = arith.subf %118, %144 : vector<32x1024xf32>
    %cst_37 = arith.constant 2.000000e+00 : f32
    %146 = vector.broadcast %cst_37 : f32 to vector<1x1024xf32>
    %147 = arith.subf %2, %146 : vector<1x1024xf32>
    %cst_38 = arith.constant -1.000000e+00 : f32
    %cst_39 = arith.constant 1.000000e+00 : f32
    %148 = vector.broadcast %cst_38 : f32 to vector<1x1024xf32>
    %149 = arith.maximumf %148, %147 : vector<1x1024xf32>
    %150 = vector.broadcast %cst_39 : f32 to vector<1x1024xf32>
    %151 = arith.minimumf %150, %149 : vector<1x1024xf32>
    %cst_40 = arith.constant 1.000000e+00 : f32
    %152 = vector.broadcast %cst_40 : f32 to vector<1x1024xf32>
    %153 = arith.addf %151, %152 : vector<1x1024xf32>
    %cst_41 = arith.constant 1.550000e+01 : f32
    %154 = vector.broadcast %cst_41 : f32 to vector<1x1024xf32>
    %155 = arith.mulf %153, %154 : vector<1x1024xf32>
    %156 = math.floor %155 : vector<1x1024xf32>
    %157 = arith.subf %155, %156 : vector<1x1024xf32>
    %158 = arith.fptosi %156 : vector<1x1024xf32> to vector<1x1024xi32>
    %159 = vector.broadcast %158 : vector<1x1024xi32> to vector<32x1024xi32>
    %160 = arith.cmpi eq, %11, %159 : vector<32x1024xi32>
    %cst_42 = arith.constant 1.000000e+00 : f32
    %161 = vector.broadcast %cst_42 : f32 to vector<1x1024xf32>
    %162 = arith.subf %161, %157 : vector<1x1024xf32>
    %c1_i32_43 = arith.constant 1 : i32
    %163 = vector.broadcast %c1_i32_43 : i32 to vector<1x1024xi32>
    %164 = arith.addi %158, %163 : vector<1x1024xi32>
    %165 = vector.broadcast %164 : vector<1x1024xi32> to vector<32x1024xi32>
    %166 = arith.cmpi eq, %11, %165 : vector<32x1024xi32>
    %cst_44 = arith.constant 0.000000e+00 : f32
    %167 = vector.shape_cast %157 : vector<1x1024xf32> to vector<1x1024xf32>
    %168 = vector.broadcast %167 : vector<1x1024xf32> to vector<32x1024xf32>
    %169 = vector.broadcast %cst_44 : f32 to vector<32x1024xf32>
    %170 = arith.select %166, %168, %169 : vector<32x1024xi1>, vector<32x1024xf32>
    %171 = vector.shape_cast %162 : vector<1x1024xf32> to vector<1x1024xf32>
    %172 = vector.broadcast %171 : vector<1x1024xf32> to vector<32x1024xf32>
    %173 = arith.select %160, %172, %170 : vector<32x1024xi1>, vector<32x1024xf32>
    %174 = arith.subf %173, %16 : vector<32x1024xf32>
    %175 = vector.broadcast %88 : vector<1x1024xf32> to vector<32x1024xf32>
    %176 = arith.mulf %175, %174 : vector<32x1024xf32>
    %177 = arith.addf %145, %176 : vector<32x1024xf32>
    %cst_45 = arith.constant 2.000000e+00 : f32
    %178 = vector.broadcast %cst_45 : f32 to vector<1x1024xf32>
    %179 = arith.addf %1, %178 : vector<1x1024xf32>
    %cst_46 = arith.constant -1.000000e+00 : f32
    %cst_47 = arith.constant 1.000000e+00 : f32
    %180 = vector.broadcast %cst_46 : f32 to vector<1x1024xf32>
    %181 = arith.maximumf %180, %179 : vector<1x1024xf32>
    %182 = vector.broadcast %cst_47 : f32 to vector<1x1024xf32>
    %183 = arith.minimumf %182, %181 : vector<1x1024xf32>
    %cst_48 = arith.constant 1.000000e+00 : f32
    %184 = vector.broadcast %cst_48 : f32 to vector<1x1024xf32>
    %185 = arith.addf %183, %184 : vector<1x1024xf32>
    %cst_49 = arith.constant 1.550000e+01 : f32
    %186 = vector.broadcast %cst_49 : f32 to vector<1x1024xf32>
    %187 = arith.mulf %185, %186 : vector<1x1024xf32>
    %188 = math.floor %187 : vector<1x1024xf32>
    %189 = arith.subf %187, %188 : vector<1x1024xf32>
    %190 = arith.fptosi %188 : vector<1x1024xf32> to vector<1x1024xi32>
    %191 = vector.broadcast %190 : vector<1x1024xi32> to vector<32x1024xi32>
    %192 = arith.cmpi eq, %11, %191 : vector<32x1024xi32>
    %cst_50 = arith.constant 1.000000e+00 : f32
    %193 = vector.broadcast %cst_50 : f32 to vector<1x1024xf32>
    %194 = arith.subf %193, %189 : vector<1x1024xf32>
    %c1_i32_51 = arith.constant 1 : i32
    %195 = vector.broadcast %c1_i32_51 : i32 to vector<1x1024xi32>
    %196 = arith.addi %190, %195 : vector<1x1024xi32>
    %197 = vector.broadcast %196 : vector<1x1024xi32> to vector<32x1024xi32>
    %198 = arith.cmpi eq, %11, %197 : vector<32x1024xi32>
    %cst_52 = arith.constant 0.000000e+00 : f32
    %199 = vector.shape_cast %189 : vector<1x1024xf32> to vector<1x1024xf32>
    %200 = vector.broadcast %199 : vector<1x1024xf32> to vector<32x1024xf32>
    %201 = vector.broadcast %cst_52 : f32 to vector<32x1024xf32>
    %202 = arith.select %198, %200, %201 : vector<32x1024xi1>, vector<32x1024xf32>
    %203 = vector.shape_cast %194 : vector<1x1024xf32> to vector<1x1024xf32>
    %204 = vector.broadcast %203 : vector<1x1024xf32> to vector<32x1024xf32>
    %205 = arith.select %192, %204, %202 : vector<32x1024xi1>, vector<32x1024xf32>
    %206 = arith.subf %20, %205 : vector<32x1024xf32>
    %207 = vector.broadcast %92 : vector<1x1024xf32> to vector<32x1024xf32>
    %208 = arith.mulf %207, %206 : vector<32x1024xf32>
    %209 = arith.addf %177, %208 : vector<32x1024xf32>
    %cst_53 = arith.constant dense<0.000000e+00> : vector<48x1024xf32>
    %210 = tpu.matmul %29, %209, %cst_53 {dimension_numbers = #tpu.dot_dimension_numbers<[1], [0], [0], [1], [0, 0, 1, 1], [], []>} : vector<48x32xf32>, vector<32x1024xf32>, vector<48x1024xf32> -> vector<48x1024xf32>
    %211 = tpu.concatenate %84, %84, %84 in 0 : vector<16x1024xf32>, vector<16x1024xf32>, vector<16x1024xf32> -> vector<48x1024xf32>
    %212 = arith.mulf %210, %211 : vector<48x1024xf32>
    %213 = arith.index_cast %arg0 : i32 to index
    %214 = memref.load %arg1[%213] : memref<2xi32, #tpu.memory_space<smem>>
    %c0_i32_54 = arith.constant 0 : i32
    %215 = arith.cmpi eq, %214, %c0_i32_54 : i32
    %216 = arith.extui %215 : i1 to i32
    %c0_i32_55 = arith.constant 0 : i32
    %217 = arith.cmpi ne, %216, %c0_i32_55 : i32
    scf.if %217 {
      %cst_58 = arith.constant dense<0.000000e+00> : vector<3x1024xf32>
      %221 = tpu.matmul %30, %212, %cst_58 {dimension_numbers = #tpu.dot_dimension_numbers<[1], [0], [0], [1], [0, 0, 1, 1], [], []>} : vector<3x48xf32>, vector<48x1024xf32>, vector<3x1024xf32> -> vector<3x1024xf32>
      %222 = vector.broadcast %10 : vector<1x1024xf32> to vector<3x1024xf32>
      %223 = arith.mulf %221, %222 : vector<3x1024xf32>
      %cst_59 = arith.constant 6.250000e-01 : f32
      %224 = vector.broadcast %cst_59 : f32 to vector<1x1024xf32>
      %225 = arith.cmpf ogt, %7, %224 : vector<1x1024xf32>
      %226 = vector.extract_strided_slice %31 {offsets = [0, 1], sizes = [3, 1], strides = [1, 1]} : vector<3x2xf32> to vector<3x1xf32>
      %227 = vector.shape_cast %225 : vector<1x1024xi1> to vector<1x1024xi1>
      %228 = vector.broadcast %227 : vector<1x1024xi1> to vector<3x1024xi1>
      %229 = vector.shape_cast %226 : vector<3x1xf32> to vector<3x1xf32>
      %230 = vector.broadcast %229 : vector<3x1xf32> to vector<3x1024xf32>
      %231 = arith.select %228, %230, %223 : vector<3x1024xi1>, vector<3x1024xf32>
      %cst_60 = arith.constant -6.250000e-01 : f32
      %232 = vector.broadcast %cst_60 : f32 to vector<1x1024xf32>
      %233 = arith.cmpf olt, %7, %232 : vector<1x1024xf32>
      %234 = vector.extract_strided_slice %31 {offsets = [0, 0], sizes = [3, 1], strides = [1, 1]} : vector<3x2xf32> to vector<3x1xf32>
      %235 = vector.shape_cast %233 : vector<1x1024xi1> to vector<1x1024xi1>
      %236 = vector.broadcast %235 : vector<1x1024xi1> to vector<3x1024xi1>
      %237 = vector.shape_cast %234 : vector<3x1xf32> to vector<3x1xf32>
      %238 = vector.broadcast %237 : vector<3x1xf32> to vector<3x1024xf32>
      %239 = arith.select %236, %238, %231 : vector<3x1024xi1>, vector<3x1024xf32>
      %c0_61 = arith.constant 0 : index
      %c0_62 = arith.constant 0 : index
      %240 = vector.load %arg6[%c0_61, %c0_62] : memref<3x1024xf32, #tpu.memory_space<vmem>>, vector<3x1024xf32>
      tpu.vector_store %arg6[%c0_61, %c0_62], %239 {strides = array<i32>} : memref<3x1024xf32, #tpu.memory_space<vmem>>, vector<3x1024xf32>,
    } else {
    }
    %c0_i32_56 = arith.constant 0 : i32
    %218 = arith.cmpi ne, %214, %c0_i32_56 : i32
    %219 = arith.extui %218 : i1 to i32
    %c0_i32_57 = arith.constant 0 : i32
    %220 = arith.cmpi ne, %219, %c0_i32_57 : i32
    scf.if %220 {
      %cst_58 = arith.constant 1.000000e+00 : f32
      %221 = vector.broadcast %cst_58 : f32 to vector<1x1024xf32>
      %222 = arith.cmpf ogt, %4, %221 : vector<1x1024xf32>
      %223 = arith.extui %222 : vector<1x1024xi1> to vector<1x1024xi32>
      %224 = arith.sitofp %223 : vector<1x1024xi32> to vector<1x1024xf32>
      %cst_59 = arith.constant -1.000000e+00 : f32
      %225 = vector.broadcast %cst_59 : f32 to vector<1x1024xf32>
      %226 = arith.cmpf olt, %3, %225 : vector<1x1024xf32>
      %227 = arith.extui %226 : vector<1x1024xi1> to vector<1x1024xi32>
      %228 = arith.sitofp %227 : vector<1x1024xi32> to vector<1x1024xf32>
      %cst_60 = arith.constant 1.000000e+00 : f32
      %229 = vector.broadcast %cst_60 : f32 to vector<1x1024xf32>
      %230 = arith.subf %4, %229 : vector<1x1024xf32>
      %cst_61 = arith.constant 0.000000e+00 : f32
      %cst_62 = arith.constant 5.000000e-01 : f32
      %231 = vector.broadcast %cst_61 : f32 to vector<1x1024xf32>
      %232 = arith.maximumf %231, %230 : vector<1x1024xf32>
      %233 = vector.broadcast %cst_62 : f32 to vector<1x1024xf32>
      %234 = arith.minimumf %233, %232 : vector<1x1024xf32>
      %cst_63 = arith.constant -1.000000e+00 : f32
      %235 = vector.broadcast %cst_63 : f32 to vector<1x1024xf32>
      %236 = arith.subf %235, %3 : vector<1x1024xf32>
      %cst_64 = arith.constant 0.000000e+00 : f32
      %cst_65 = arith.constant 5.000000e-01 : f32
      %237 = vector.broadcast %cst_64 : f32 to vector<1x1024xf32>
      %238 = arith.maximumf %237, %236 : vector<1x1024xf32>
      %239 = vector.broadcast %cst_65 : f32 to vector<1x1024xf32>
      %240 = arith.minimumf %239, %238 : vector<1x1024xf32>
      %cst_66 = arith.constant 1.000000e+00 : f32
      %241 = vector.broadcast %cst_66 : f32 to vector<1x1024xf32>
      %242 = arith.subf %241, %234 : vector<1x1024xf32>
      %cst_67 = arith.constant -1.000000e+00 : f32
      %cst_68 = arith.constant 1.000000e+00 : f32
      %243 = vector.broadcast %cst_67 : f32 to vector<1x1024xf32>
      %244 = arith.maximumf %243, %242 : vector<1x1024xf32>
      %245 = vector.broadcast %cst_68 : f32 to vector<1x1024xf32>
      %246 = arith.minimumf %245, %244 : vector<1x1024xf32>
      %cst_69 = arith.constant 1.000000e+00 : f32
      %247 = vector.broadcast %cst_69 : f32 to vector<1x1024xf32>
      %248 = arith.addf %246, %247 : vector<1x1024xf32>
      %cst_70 = arith.constant 7.500000e+00 : f32
      %249 = vector.broadcast %cst_70 : f32 to vector<1x1024xf32>
      %250 = arith.mulf %248, %249 : vector<1x1024xf32>
      %251 = math.floor %250 : vector<1x1024xf32>
      %252 = arith.subf %250, %251 : vector<1x1024xf32>
      %253 = arith.fptosi %251 : vector<1x1024xf32> to vector<1x1024xi32>
      %254 = vector.broadcast %253 : vector<1x1024xi32> to vector<16x1024xi32>
      %255 = arith.cmpi eq, %12, %254 : vector<16x1024xi32>
      %cst_71 = arith.constant 1.000000e+00 : f32
      %256 = vector.broadcast %cst_71 : f32 to vector<1x1024xf32>
      %257 = arith.subf %256, %252 : vector<1x1024xf32>
      %c1_i32_72 = arith.constant 1 : i32
      %258 = vector.broadcast %c1_i32_72 : i32 to vector<1x1024xi32>
      %259 = arith.addi %253, %258 : vector<1x1024xi32>
      %260 = vector.broadcast %259 : vector<1x1024xi32> to vector<16x1024xi32>
      %261 = arith.cmpi eq, %12, %260 : vector<16x1024xi32>
      %cst_73 = arith.constant 0.000000e+00 : f32
      %262 = vector.shape_cast %252 : vector<1x1024xf32> to vector<1x1024xf32>
      %263 = vector.broadcast %262 : vector<1x1024xf32> to vector<16x1024xf32>
      %264 = vector.broadcast %cst_73 : f32 to vector<16x1024xf32>
      %265 = arith.select %261, %263, %264 : vector<16x1024xi1>, vector<16x1024xf32>
      %266 = vector.shape_cast %257 : vector<1x1024xf32> to vector<1x1024xf32>
      %267 = vector.broadcast %266 : vector<1x1024xf32> to vector<16x1024xf32>
      %268 = arith.select %255, %267, %265 : vector<16x1024xi1>, vector<16x1024xf32>
      %269 = arith.subf %28, %268 : vector<16x1024xf32>
      %270 = vector.broadcast %224 : vector<1x1024xf32> to vector<16x1024xf32>
      %271 = arith.mulf %270, %269 : vector<16x1024xf32>
      %cst_74 = arith.constant -1.000000e+00 : f32
      %272 = vector.broadcast %cst_74 : f32 to vector<1x1024xf32>
      %273 = arith.addf %272, %240 : vector<1x1024xf32>
      %cst_75 = arith.constant -1.000000e+00 : f32
      %cst_76 = arith.constant 1.000000e+00 : f32
      %274 = vector.broadcast %cst_75 : f32 to vector<1x1024xf32>
      %275 = arith.maximumf %274, %273 : vector<1x1024xf32>
      %276 = vector.broadcast %cst_76 : f32 to vector<1x1024xf32>
      %277 = arith.minimumf %276, %275 : vector<1x1024xf32>
      %cst_77 = arith.constant 1.000000e+00 : f32
      %278 = vector.broadcast %cst_77 : f32 to vector<1x1024xf32>
      %279 = arith.addf %277, %278 : vector<1x1024xf32>
      %cst_78 = arith.constant 7.500000e+00 : f32
      %280 = vector.broadcast %cst_78 : f32 to vector<1x1024xf32>
      %281 = arith.mulf %279, %280 : vector<1x1024xf32>
      %282 = math.floor %281 : vector<1x1024xf32>
      %283 = arith.subf %281, %282 : vector<1x1024xf32>
      %284 = arith.fptosi %282 : vector<1x1024xf32> to vector<1x1024xi32>
      %285 = vector.broadcast %284 : vector<1x1024xi32> to vector<16x1024xi32>
      %286 = arith.cmpi eq, %12, %285 : vector<16x1024xi32>
      %cst_79 = arith.constant 1.000000e+00 : f32
      %287 = vector.broadcast %cst_79 : f32 to vector<1x1024xf32>
      %288 = arith.subf %287, %283 : vector<1x1024xf32>
      %c1_i32_80 = arith.constant 1 : i32
      %289 = vector.broadcast %c1_i32_80 : i32 to vector<1x1024xi32>
      %290 = arith.addi %284, %289 : vector<1x1024xi32>
      %291 = vector.broadcast %290 : vector<1x1024xi32> to vector<16x1024xi32>
      %292 = arith.cmpi eq, %12, %291 : vector<16x1024xi32>
      %cst_81 = arith.constant 0.000000e+00 : f32
      %293 = vector.shape_cast %283 : vector<1x1024xf32> to vector<1x1024xf32>
      %294 = vector.broadcast %293 : vector<1x1024xf32> to vector<16x1024xf32>
      %295 = vector.broadcast %cst_81 : f32 to vector<16x1024xf32>
      %296 = arith.select %292, %294, %295 : vector<16x1024xi1>, vector<16x1024xf32>
      %297 = vector.shape_cast %288 : vector<1x1024xf32> to vector<1x1024xf32>
      %298 = vector.broadcast %297 : vector<1x1024xf32> to vector<16x1024xf32>
      %299 = arith.select %286, %298, %296 : vector<16x1024xi1>, vector<16x1024xf32>
      %300 = arith.subf %299, %24 : vector<16x1024xf32>
      %301 = vector.broadcast %228 : vector<1x1024xf32> to vector<16x1024xf32>
      %302 = arith.mulf %301, %300 : vector<16x1024xf32>
      %303 = arith.addf %271, %302 : vector<16x1024xf32>
      %cst_82 = arith.constant 1.000000e+00 : f32
      %304 = vector.broadcast %cst_82 : f32 to vector<1x1024xf32>
      %305 = arith.cmpf ogt, %6, %304 : vector<1x1024xf32>
      %306 = arith.extui %305 : vector<1x1024xi1> to vector<1x1024xi32>
      %307 = arith.sitofp %306 : vector<1x1024xi32> to vector<1x1024xf32>
      %cst_83 = arith.constant -1.000000e+00 : f32
      %308 = vector.broadcast %cst_83 : f32 to vector<1x1024xf32>
      %309 = arith.cmpf olt, %5, %308 : vector<1x1024xf32>
      %310 = arith.extui %309 : vector<1x1024xi1> to vector<1x1024xi32>
      %311 = arith.sitofp %310 : vector<1x1024xi32> to vector<1x1024xf32>
      %cst_84 = arith.constant -1.000000e+00 : f32
      %cst_85 = arith.constant 1.000000e+00 : f32
      %312 = vector.broadcast %cst_84 : f32 to vector<1x1024xf32>
      %313 = arith.maximumf %312, %6 : vector<1x1024xf32>
      %314 = vector.broadcast %cst_85 : f32 to vector<1x1024xf32>
      %315 = arith.minimumf %314, %313 : vector<1x1024xf32>
      %cst_86 = arith.constant 1.000000e+00 : f32
      %316 = vector.broadcast %cst_86 : f32 to vector<1x1024xf32>
      %317 = arith.addf %315, %316 : vector<1x1024xf32>
      %cst_87 = arith.constant 1.550000e+01 : f32
      %318 = vector.broadcast %cst_87 : f32 to vector<1x1024xf32>
      %319 = arith.mulf %317, %318 : vector<1x1024xf32>
      %320 = math.floor %319 : vector<1x1024xf32>
      %321 = arith.subf %319, %320 : vector<1x1024xf32>
      %322 = arith.fptosi %320 : vector<1x1024xf32> to vector<1x1024xi32>
      %323 = vector.broadcast %322 : vector<1x1024xi32> to vector<32x1024xi32>
      %324 = arith.cmpi eq, %11, %323 : vector<32x1024xi32>
      %cst_88 = arith.constant 1.000000e+00 : f32
      %325 = vector.broadcast %cst_88 : f32 to vector<1x1024xf32>
      %326 = arith.subf %325, %321 : vector<1x1024xf32>
      %c1_i32_89 = arith.constant 1 : i32
      %327 = vector.broadcast %c1_i32_89 : i32 to vector<1x1024xi32>
      %328 = arith.addi %322, %327 : vector<1x1024xi32>
      %329 = vector.broadcast %328 : vector<1x1024xi32> to vector<32x1024xi32>
      %330 = arith.cmpi eq, %11, %329 : vector<32x1024xi32>
      %cst_90 = arith.constant 0.000000e+00 : f32
      %331 = vector.shape_cast %321 : vector<1x1024xf32> to vector<1x1024xf32>
      %332 = vector.broadcast %331 : vector<1x1024xf32> to vector<32x1024xf32>
      %333 = vector.broadcast %cst_90 : f32 to vector<32x1024xf32>
      %334 = arith.select %330, %332, %333 : vector<32x1024xi1>, vector<32x1024xf32>
      %335 = vector.shape_cast %326 : vector<1x1024xf32> to vector<1x1024xf32>
      %336 = vector.broadcast %335 : vector<1x1024xf32> to vector<32x1024xf32>
      %337 = arith.select %324, %336, %334 : vector<32x1024xi1>, vector<32x1024xf32>
      %cst_91 = arith.constant -1.000000e+00 : f32
      %cst_92 = arith.constant 1.000000e+00 : f32
      %338 = vector.broadcast %cst_91 : f32 to vector<1x1024xf32>
      %339 = arith.maximumf %338, %5 : vector<1x1024xf32>
      %340 = vector.broadcast %cst_92 : f32 to vector<1x1024xf32>
      %341 = arith.minimumf %340, %339 : vector<1x1024xf32>
      %cst_93 = arith.constant 1.000000e+00 : f32
      %342 = vector.broadcast %cst_93 : f32 to vector<1x1024xf32>
      %343 = arith.addf %341, %342 : vector<1x1024xf32>
      %cst_94 = arith.constant 1.550000e+01 : f32
      %344 = vector.broadcast %cst_94 : f32 to vector<1x1024xf32>
      %345 = arith.mulf %343, %344 : vector<1x1024xf32>
      %346 = math.floor %345 : vector<1x1024xf32>
      %347 = arith.subf %345, %346 : vector<1x1024xf32>
      %348 = arith.fptosi %346 : vector<1x1024xf32> to vector<1x1024xi32>
      %349 = vector.broadcast %348 : vector<1x1024xi32> to vector<32x1024xi32>
      %350 = arith.cmpi eq, %11, %349 : vector<32x1024xi32>
      %cst_95 = arith.constant 1.000000e+00 : f32
      %351 = vector.broadcast %cst_95 : f32 to vector<1x1024xf32>
      %352 = arith.subf %351, %347 : vector<1x1024xf32>
      %c1_i32_96 = arith.constant 1 : i32
      %353 = vector.broadcast %c1_i32_96 : i32 to vector<1x1024xi32>
      %354 = arith.addi %348, %353 : vector<1x1024xi32>
      %355 = vector.broadcast %354 : vector<1x1024xi32> to vector<32x1024xi32>
      %356 = arith.cmpi eq, %11, %355 : vector<32x1024xi32>
      %cst_97 = arith.constant 0.000000e+00 : f32
      %357 = vector.shape_cast %347 : vector<1x1024xf32> to vector<1x1024xf32>
      %358 = vector.broadcast %357 : vector<1x1024xf32> to vector<32x1024xf32>
      %359 = vector.broadcast %cst_97 : f32 to vector<32x1024xf32>
      %360 = arith.select %356, %358, %359 : vector<32x1024xi1>, vector<32x1024xf32>
      %361 = vector.shape_cast %352 : vector<1x1024xf32> to vector<1x1024xf32>
      %362 = vector.broadcast %361 : vector<1x1024xf32> to vector<32x1024xf32>
      %363 = arith.select %350, %362, %360 : vector<32x1024xi1>, vector<32x1024xf32>
      %364 = arith.subf %337, %363 : vector<32x1024xf32>
      %cst_98 = arith.constant 2.000000e+00 : f32
      %365 = vector.broadcast %cst_98 : f32 to vector<1x1024xf32>
      %366 = arith.subf %6, %365 : vector<1x1024xf32>
      %cst_99 = arith.constant -1.000000e+00 : f32
      %cst_100 = arith.constant 1.000000e+00 : f32
      %367 = vector.broadcast %cst_99 : f32 to vector<1x1024xf32>
      %368 = arith.maximumf %367, %366 : vector<1x1024xf32>
      %369 = vector.broadcast %cst_100 : f32 to vector<1x1024xf32>
      %370 = arith.minimumf %369, %368 : vector<1x1024xf32>
      %cst_101 = arith.constant 1.000000e+00 : f32
      %371 = vector.broadcast %cst_101 : f32 to vector<1x1024xf32>
      %372 = arith.addf %370, %371 : vector<1x1024xf32>
      %cst_102 = arith.constant 1.550000e+01 : f32
      %373 = vector.broadcast %cst_102 : f32 to vector<1x1024xf32>
      %374 = arith.mulf %372, %373 : vector<1x1024xf32>
      %375 = math.floor %374 : vector<1x1024xf32>
      %376 = arith.subf %374, %375 : vector<1x1024xf32>
      %377 = arith.fptosi %375 : vector<1x1024xf32> to vector<1x1024xi32>
      %378 = vector.broadcast %377 : vector<1x1024xi32> to vector<32x1024xi32>
      %379 = arith.cmpi eq, %11, %378 : vector<32x1024xi32>
      %cst_103 = arith.constant 1.000000e+00 : f32
      %380 = vector.broadcast %cst_103 : f32 to vector<1x1024xf32>
      %381 = arith.subf %380, %376 : vector<1x1024xf32>
      %c1_i32_104 = arith.constant 1 : i32
      %382 = vector.broadcast %c1_i32_104 : i32 to vector<1x1024xi32>
      %383 = arith.addi %377, %382 : vector<1x1024xi32>
      %384 = vector.broadcast %383 : vector<1x1024xi32> to vector<32x1024xi32>
      %385 = arith.cmpi eq, %11, %384 : vector<32x1024xi32>
      %cst_105 = arith.constant 0.000000e+00 : f32
      %386 = vector.shape_cast %376 : vector<1x1024xf32> to vector<1x1024xf32>
      %387 = vector.broadcast %386 : vector<1x1024xf32> to vector<32x1024xf32>
      %388 = vector.broadcast %cst_105 : f32 to vector<32x1024xf32>
      %389 = arith.select %385, %387, %388 : vector<32x1024xi1>, vector<32x1024xf32>
      %390 = vector.shape_cast %381 : vector<1x1024xf32> to vector<1x1024xf32>
      %391 = vector.broadcast %390 : vector<1x1024xf32> to vector<32x1024xf32>
      %392 = arith.select %379, %391, %389 : vector<32x1024xi1>, vector<32x1024xf32>
      %393 = arith.subf %392, %16 : vector<32x1024xf32>
      %394 = vector.broadcast %307 : vector<1x1024xf32> to vector<32x1024xf32>
      %395 = arith.mulf %394, %393 : vector<32x1024xf32>
      %396 = arith.addf %364, %395 : vector<32x1024xf32>
      %cst_106 = arith.constant 2.000000e+00 : f32
      %397 = vector.broadcast %cst_106 : f32 to vector<1x1024xf32>
      %398 = arith.addf %5, %397 : vector<1x1024xf32>
      %cst_107 = arith.constant -1.000000e+00 : f32
      %cst_108 = arith.constant 1.000000e+00 : f32
      %399 = vector.broadcast %cst_107 : f32 to vector<1x1024xf32>
      %400 = arith.maximumf %399, %398 : vector<1x1024xf32>
      %401 = vector.broadcast %cst_108 : f32 to vector<1x1024xf32>
      %402 = arith.minimumf %401, %400 : vector<1x1024xf32>
      %cst_109 = arith.constant 1.000000e+00 : f32
      %403 = vector.broadcast %cst_109 : f32 to vector<1x1024xf32>
      %404 = arith.addf %402, %403 : vector<1x1024xf32>
      %cst_110 = arith.constant 1.550000e+01 : f32
      %405 = vector.broadcast %cst_110 : f32 to vector<1x1024xf32>
      %406 = arith.mulf %404, %405 : vector<1x1024xf32>
      %407 = math.floor %406 : vector<1x1024xf32>
      %408 = arith.subf %406, %407 : vector<1x1024xf32>
      %409 = arith.fptosi %407 : vector<1x1024xf32> to vector<1x1024xi32>
      %410 = vector.broadcast %409 : vector<1x1024xi32> to vector<32x1024xi32>
      %411 = arith.cmpi eq, %11, %410 : vector<32x1024xi32>
      %cst_111 = arith.constant 1.000000e+00 : f32
      %412 = vector.broadcast %cst_111 : f32 to vector<1x1024xf32>
      %413 = arith.subf %412, %408 : vector<1x1024xf32>
      %c1_i32_112 = arith.constant 1 : i32
      %414 = vector.broadcast %c1_i32_112 : i32 to vector<1x1024xi32>
      %415 = arith.addi %409, %414 : vector<1x1024xi32>
      %416 = vector.broadcast %415 : vector<1x1024xi32> to vector<32x1024xi32>
      %417 = arith.cmpi eq, %11, %416 : vector<32x1024xi32>
      %cst_113 = arith.constant 0.000000e+00 : f32
      %418 = vector.shape_cast %408 : vector<1x1024xf32> to vector<1x1024xf32>
      %419 = vector.broadcast %418 : vector<1x1024xf32> to vector<32x1024xf32>
      %420 = vector.broadcast %cst_113 : f32 to vector<32x1024xf32>
      %421 = arith.select %417, %419, %420 : vector<32x1024xi1>, vector<32x1024xf32>
      %422 = vector.shape_cast %413 : vector<1x1024xf32> to vector<1x1024xf32>
      %423 = vector.broadcast %422 : vector<1x1024xf32> to vector<32x1024xf32>
      %424 = arith.select %411, %423, %421 : vector<32x1024xi1>, vector<32x1024xf32>
      %425 = arith.subf %20, %424 : vector<32x1024xf32>
      %426 = vector.broadcast %311 : vector<1x1024xf32> to vector<32x1024xf32>
      %427 = arith.mulf %426, %425 : vector<32x1024xf32>
      %428 = arith.addf %396, %427 : vector<32x1024xf32>
      %cst_114 = arith.constant dense<0.000000e+00> : vector<48x1024xf32>
      %429 = tpu.matmul %29, %428, %cst_114 {dimension_numbers = #tpu.dot_dimension_numbers<[1], [0], [0], [1], [0, 0, 1, 1], [], []>} : vector<48x32xf32>, vector<32x1024xf32>, vector<48x1024xf32> -> vector<48x1024xf32>
      %430 = tpu.concatenate %303, %303, %303 in 0 : vector<16x1024xf32>, vector<16x1024xf32>, vector<16x1024xf32> -> vector<48x1024xf32>
      %431 = arith.mulf %429, %430 : vector<48x1024xf32>
      %432 = arith.addf %212, %431 : vector<48x1024xf32>
      %cst_115 = arith.constant dense<0.000000e+00> : vector<3x1024xf32>
      %433 = tpu.matmul %30, %432, %cst_115 {dimension_numbers = #tpu.dot_dimension_numbers<[1], [0], [0], [1], [0, 0, 1, 1], [], []>} : vector<3x48xf32>, vector<48x1024xf32>, vector<3x1024xf32> -> vector<3x1024xf32>
      %434 = vector.broadcast %10 : vector<1x1024xf32> to vector<3x1024xf32>
      %435 = arith.mulf %433, %434 : vector<3x1024xf32>
      %cst_116 = arith.constant 6.250000e-01 : f32
      %436 = vector.broadcast %cst_116 : f32 to vector<1x1024xf32>
      %437 = arith.cmpf ogt, %7, %436 : vector<1x1024xf32>
      %438 = vector.extract_strided_slice %31 {offsets = [0, 1], sizes = [3, 1], strides = [1, 1]} : vector<3x2xf32> to vector<3x1xf32>
      %439 = vector.shape_cast %437 : vector<1x1024xi1> to vector<1x1024xi1>
      %440 = vector.broadcast %439 : vector<1x1024xi1> to vector<3x1024xi1>
      %441 = vector.shape_cast %438 : vector<3x1xf32> to vector<3x1xf32>
      %442 = vector.broadcast %441 : vector<3x1xf32> to vector<3x1024xf32>
      %443 = arith.select %440, %442, %435 : vector<3x1024xi1>, vector<3x1024xf32>
      %cst_117 = arith.constant -6.250000e-01 : f32
      %444 = vector.broadcast %cst_117 : f32 to vector<1x1024xf32>
      %445 = arith.cmpf olt, %7, %444 : vector<1x1024xf32>
      %446 = vector.extract_strided_slice %31 {offsets = [0, 0], sizes = [3, 1], strides = [1, 1]} : vector<3x2xf32> to vector<3x1xf32>
      %447 = vector.shape_cast %445 : vector<1x1024xi1> to vector<1x1024xi1>
      %448 = vector.broadcast %447 : vector<1x1024xi1> to vector<3x1024xi1>
      %449 = vector.shape_cast %446 : vector<3x1xf32> to vector<3x1xf32>
      %450 = vector.broadcast %449 : vector<3x1xf32> to vector<3x1024xf32>
      %451 = arith.select %448, %450, %443 : vector<3x1024xi1>, vector<3x1024xf32>
      %c0_118 = arith.constant 0 : index
      %c0_119 = arith.constant 0 : index
      %452 = vector.load %arg6[%c0_118, %c0_119] : memref<3x1024xf32, #tpu.memory_space<vmem>>, vector<3x1024xf32>
      tpu.vector_store %arg6[%c0_118, %c0_119], %451 {strides = array<i32>} : memref<3x1024xf32, #tpu.memory_space<vmem>>, vector<3x1024xf32>,
    } else {
    }
    return
  }
  func.func @transform_0(%arg0: i32, %arg1: memref<2xi32, #tpu.memory_space<smem>>) -> (i32, i32) {
    %c0_i32 = arith.constant 0 : i32
    %c0_i32_0 = arith.constant 0 : i32
    return %c0_i32, %arg0 : i32, i32
  }
  func.func @transform_1(%arg0: i32, %arg1: memref<2xi32, #tpu.memory_space<smem>>) -> (i32, i32) {
    %c0_i32 = arith.constant 0 : i32
    %c0_i32_0 = arith.constant 0 : i32
    %c0_i32_1 = arith.constant 0 : i32
    return %c0_i32, %c0_i32_0 : i32, i32
  }
  func.func @transform_2(%arg0: i32, %arg1: memref<2xi32, #tpu.memory_space<smem>>) -> (i32, i32) {
    %c0_i32 = arith.constant 0 : i32
    %c0_i32_0 = arith.constant 0 : i32
    %c0_i32_1 = arith.constant 0 : i32
    return %c0_i32, %c0_i32_0 : i32, i32
  }
  func.func @transform_3(%arg0: i32, %arg1: memref<2xi32, #tpu.memory_space<smem>>) -> (i32, i32) {
    %c0_i32 = arith.constant 0 : i32
    %c0_i32_0 = arith.constant 0 : i32
    %c0_i32_1 = arith.constant 0 : i32
    return %c0_i32, %c0_i32_0 : i32, i32
  }
  func.func @transform_4(%arg0: i32, %arg1: memref<2xi32, #tpu.memory_space<smem>>) -> (i32, i32) {
    %c0_i32 = arith.constant 0 : i32
    %c0_i32_0 = arith.constant 0 : i32
    return %c0_i32, %arg0 : i32, i32
  }
}

</mosaic_0001>

<llo_original>
// kernel: _lambda_.1
$region0: #{_lambda_.1}
  #allocation0 [shape = 'u32[]', space=smem, size = 0x4, offset = 0x4, fixed_abs, tag = 'smem constant byte address 0x4 - core index']
  #allocation1 [shape = 'u32[144,128]{1,0:T(1,128)}', space=vmem, size = 0x12000, scoped, tag = 'internal scratch']
  #allocation2 [shape = 's32[1]{0}', space=sflag, size = 0x4, scoped, tag = 'scoped memory for _lambda_.1']
  #allocation3 [shape = 'u8[512]{0}', space=smem, size = 0x200, scoped, tag = 'prefetched SMEM operand 0']
  %s0 = inlined_call_operand.vmem [shape: s32[2], index: 0, kind: input, shape index: {}]
  %s1 = inlined_call_operand.vmem [shape: f32[8,2048], index: 1, kind: input, shape index: {}]
  %s2 = inlined_call_operand.vmem [shape: f32[48,32], index: 2, kind: input, shape index: {}]
  %s3 = inlined_call_operand.vmem [shape: f32[3,48], index: 3, kind: input, shape index: {}]
  %s4 = inlined_call_operand.vmem [shape: f32[3,2], index: 4, kind: input, shape index: {}]
  %s5 = inlined_call_operand.hbm [shape: f32[3,2048], index: 5, kind: output, shape index: {}]
  %s6 = sld [smem:[#allocation0]]
  $region57: #{_lambda_.1} parent=0
    _
  %s8 = ssub.s32 1, %s6
  %s9 = scalar_select 0, %s8, %s6
  %s10 = sshll.u32 %s0, 4
  %s11 = int_to_ptr.vmem [resolvable:$true] %s10
  %13 = dma.vmem_to_smem %s11, 16, [#allocation3], [#allocation2]
  %14 = dma.done [#allocation2], 16
  %15 = sfence
  $region1: #{_lambda_.1} parent=0
    #allocation4 [shape = 'u8[32768]{0}', space=vmem, size = 0x8000, scoped, tag = 'output window, operand 0']
    #allocation5 [shape = 's32[2]{0}', space=sflag, size = 0x8, scoped, tag = 'scoped memory for _lambda_.1']
    %16 = vsyncpa [#allocation5], 0
    %s17 = scalar_lea.sflag [#allocation5], 1
    %18 = vsyncpa %s17, 0
    loop: start=0, step=1, limit=4
    $region2: #{_lambda_.1} parent=1 // loop_pre_header
      _
    $region3: #{_lambda_.1} parent=1 // loop_header
      %s20 = sphi 0, %s24
      %p21 = scmp.ge.s32.totalorder %s20, 4
      %s30 = sphi 0, %s32
      %s33 = sphi 0, %s30
      %s34 = sphi 0, %s33
      %s50 = sphi 0, %s34
      %s54 = sphi 0, %s54
      %s56 = sphi 0, %s54
      %s57 = sphi 0, %s56
      %s71 = sphi 0, %s57
      %s75 = sphi 0, %s75
      %s77 = sphi 0, %s75
      %s78 = sphi 0, %s77
      %s92 = sphi 0, %s78
      %s96 = sphi 0, %s96
      %s98 = sphi 0, %s96
      %s99 = sphi 0, %s98
      %s113 = sphi 0, %s99
      %s119 = sphi 0, %s121
      %s122 = sphi 0, %s119
      %s123 = sphi 0, %s122
      %s139 = sphi 0, %s123
    $region4: #{_lambda_.1} parent=1 // loop_header_branch
      %23 = sbr.rel (%p21) target = $region8
    $region5: #{_lambda_.1} parent=1 // loop_body
      %s25 = ssub.s32 %s20, 1
      %s26 = ssub.s32 %s20, 2
      %s27 = sadd.s32 %s20, 1
      %s28 = ssub.s32 %s20, %s27
      %p29 = scmp.eq.s32.totalorder %s28, 0
      %s31 = sadd.s32 %s30, 1
      %s32 = scalar_select %p29, %s30, %s31
      %p35 = pneg %p29
      %p36 = scmp.eq.s32.totalorder %s20, 1
      %p37 = por %p35, %p36
      %p38 = scmp.ne.s32.totalorder %s30, %s33
      %p39 = scmp.eq.s32.totalorder %s20, 0
      %p40 = por %p38, %p39
      %p41 = scmp.ne.s32.totalorder %s30, %s33
      %p42 = scmp.eq.s32.totalorder %s25, 1
      %p43 = por %p41, %p42
      %p44 = scmp.ne.s32.totalorder %s33, %s34
      %p45 = scmp.eq.s32.totalorder %s25, 0
      %p46 = por %p44, %p45
      %p47 = scmp.ne.s32.totalorder %s33, %s34
      %p48 = scmp.eq.s32.totalorder %s26, 1
      %p49 = por %p47, %p48
      %p51 = scmp.ne.s32.totalorder %s34, %s50
      %p52 = scmp.eq.s32.totalorder %s26, 0
      %p53 = por %p51, %p52
      %s55 = sadd.s32 %s54, 1
      %p58 = scmp.eq.s32.totalorder %s20, 1
      %p59 = scmp.ne.s32.totalorder %s54, %s56
      %p60 = scmp.eq.s32.totalorder %s20, 0
      %p61 = por %p59, %p60
      %p62 = scmp.ne.s32.totalorder %s54, %s56
      %p63 = scmp.eq.s32.totalorder %s25, 1
      %p64 = por %p62, %p63
      %p65 = scmp.ne.s32.totalorder %s56, %s57
      %p66 = scmp.eq.s32.totalorder %s25, 0
      %p67 = por %p65, %p66
      %p68 = scmp.ne.s32.totalorder %s56, %s57
      %p69 = scmp.eq.s32.totalorder %s26, 1
      %p70 = por %p68, %p69
      %p72 = scmp.ne.s32.totalorder %s57, %s71
      %p73 = scmp.eq.s32.totalorder %s26, 0
      %p74 = por %p72, %p73
      %s76 = sadd.s32 %s75, 1
      %p79 = scmp.eq.s32.totalorder %s20, 1
      %p80 = scmp.ne.s32.totalorder %s75, %s77
      %p81 = scmp.eq.s32.totalorder %s20, 0
      %p82 = por %p80, %p81
      %p83 = scmp.ne.s32.totalorder %s75, %s77
      %p84 = scmp.eq.s32.totalorder %s25, 1
      %p85 = por %p83, %p84
      %p86 = scmp.ne.s32.totalorder %s77, %s78
      %p87 = scmp.eq.s32.totalorder %s25, 0
      %p88 = por %p86, %p87
      %p89 = scmp.ne.s32.totalorder %s77, %s78
      %p90 = scmp.eq.s32.totalorder %s26, 1
      %p91 = por %p89, %p90
      %p93 = scmp.ne.s32.totalorder %s78, %s92
      %p94 = scmp.eq.s32.totalorder %s26, 0
      %p95 = por %p93, %p94
      %s97 = sadd.s32 %s96, 1
      %p100 = scmp.eq.s32.totalorder %s20, 1
      %p101 = scmp.ne.s32.totalorder %s96, %s98
      %p102 = scmp.eq.s32.totalorder %s20, 0
      %p103 = por %p101, %p102
      %p104 = scmp.ne.s32.totalorder %s96, %s98
      %p105 = scmp.eq.s32.totalorder %s25, 1
      %p106 = por %p104, %p105
      %p107 = scmp.ne.s32.totalorder %s98, %s99
      %p108 = scmp.eq.s32.totalorder %s25, 0
      %p109 = por %p107, %p108
      %p110 = scmp.ne.s32.totalorder %s98, %s99
      %p111 = scmp.eq.s32.totalorder %s26, 1
      %p112 = por %p110, %p111
      %p114 = scmp.ne.s32.totalorder %s99, %s113
      %p115 = scmp.eq.s32.totalorder %s26, 0
      %p116 = por %p114, %p115
      %s117 = ssub.s32 %s20, %s27
      %p118 = scmp.eq.s32.totalorder %s117, 0
      %s120 = sadd.s32 %s119, 1
      %s121 = scalar_select %p118, %s119, %s120
      %p124 = pneg %p118
      %p125 = scmp.eq.s32.totalorder %s20, 1
      %p126 = por %p124, %p125
      %p127 = scmp.ne.s32.totalorder %s119, %s122
      %p128 = scmp.eq.s32.totalorder %s20, 0
      %p129 = por %p127, %p128
      %p130 = scmp.ne.s32.totalorder %s119, %s122
      %p131 = scmp.eq.s32.totalorder %s25, 1
      %p132 = por %p130, %p131
      %p133 = scmp.ne.s32.totalorder %s122, %s123
      %p134 = scmp.eq.s32.totalorder %s25, 0
      %p135 = por %p133, %p134
      %p136 = scmp.ne.s32.totalorder %s122, %s123
      %p137 = scmp.eq.s32.totalorder %s26, 1
      %p138 = por %p136, %p137
      %p140 = scmp.ne.s32.totalorder %s123, %s139
      %p141 = scmp.eq.s32.totalorder %s26, 0
      %p142 = por %p140, %p141
      %p143 = scmp.le.s32.totalorder 1, %s20
      %p144 = scmp.lt.s32.totalorder %s20, 3
      %p145 = pnand %p143, %p144
      %p146 = pneg %p145
      // Predicated region
      $region9: #{_lambda_.1} parent=5 // pred_check
        _
      $region10: #{_lambda_.1} parent=5 // pred_check_branch
        %148 = sbr.rel (%p145) target = $region12
      $region11: #{_lambda_.1} parent=5 // pred_region
        %s149 = ssub.s32 %s20, 1
        // Predicated region
        $region13: #{_lambda_.1} parent=11 // pred_check
          %p150 = pneg %p67
        $region14: #{_lambda_.1} parent=11 // pred_check_branch
          %152 = sbr.rel (%p150) target = $region16
        $region15: #{_lambda_.1} parent=11 // pred_region
          _
        $region16: #{_lambda_.1} parent=11 // pred_fallthru
          _
        // Predicated region
        $region17: #{_lambda_.1} parent=11 // pred_check
          %p153 = pneg %p88
        $region18: #{_lambda_.1} parent=11 // pred_check_branch
          %155 = sbr.rel (%p153) target = $region20
        $region19: #{_lambda_.1} parent=11 // pred_region
          _
        $region20: #{_lambda_.1} parent=11 // pred_fallthru
          _
        // Predicated region
        $region21: #{_lambda_.1} parent=11 // pred_check
          %p156 = pneg %p109
        $region22: #{_lambda_.1} parent=11 // pred_check_branch
          %158 = sbr.rel (%p156) target = $region24
        $region23: #{_lambda_.1} parent=11 // pred_region
          _
        $region24: #{_lambda_.1} parent=11 // pred_fallthru
          _
      $region12: #{_lambda_.1} parent=5 // pred_fallthru
        _
      %p159 = scmp.lt.s32.totalorder %s20, 2
      // Predicated region
      $region25: #{_lambda_.1} parent=5 // pred_check
        %p160 = pneg %p159
      $region26: #{_lambda_.1} parent=5 // pred_check_branch
        %162 = sbr.rel (%p160) target = $region28
      $region27: #{_lambda_.1} parent=5 // pred_region
        // Predicated region
        $region29: #{_lambda_.1} parent=27 // pred_check
          %p163 = pneg %p40
        $region30: #{_lambda_.1} parent=27 // pred_check_branch
          %165 = sbr.rel (%p163) target = $region32
        $region31: #{_lambda_.1} parent=27 // pred_region
          %s166 = smul.u32 8, %s20
          %p167 = scmp.lt.s32.totalorder %s166, 15
          %s168 = scalar_select %p167, %s166, 15
          %s169 = smul.addr %s168, 8
          %s170 = scalar_lea.vmem %s1, %s169
          %s171 = smul.u32 8, %s20
        $region32: #{_lambda_.1} parent=27 // pred_fallthru
          _
      $region28: #{_lambda_.1} parent=5 // pred_fallthru
        _
      %p172 = scmp.le.s32.totalorder 1, %s20
      %p173 = scmp.lt.s32.totalorder %s20, 3
      %p174 = pnand %p172, %p173
      %p175 = pneg %p174
      // Predicated region
      $region33: #{_lambda_.1} parent=5 // pred_check
        _
      $region34: #{_lambda_.1} parent=5 // pred_check_branch
        %177 = sbr.rel (%p174) target = $region36
      $region35: #{_lambda_.1} parent=5 // pred_region
        %s178 = ssub.s32 %s20, 1
        %s179 = smul.u32 8, %s25
        %p180 = scmp.lt.s32.totalorder %s179, 15
        %s181 = scalar_select %p180, %s179, 15
        %s182 = smul.addr %s181, 8
        %s183 = scalar_lea.vmem %s1, %s182
        %p184 = pneg %p46
        %p185 = pneg %p43
        %p186 = pneg %p67
        %p187 = pneg %p64
        %p188 = pneg %p88
        %p189 = pneg %p85
        %p190 = pneg %p109
        %p191 = pneg %p106
        %p192 = pneg %p135
        %p193 = pneg %p132
        %s194 = sand.u32 %s122, 1
        %s195 = scalar_lea.sflag [#allocation5], %s194
        %s196 = sand.u32 %s122, 1
        %s197 = smul.addr %s196, 32
        %s198 = scalar_lea.vmem [#allocation4], %s197
        %s199 = smul.u32 8, %s25
        %p200 = scmp.lt.s32.totalorder %s199, 15
        %s201 = scalar_select %p200, %s199, 15
        %s202 = smul.addr %s201, 8
        %s203 = scalar_lea.vmem %s1, %s202
        %s204 = smul.u32 8, %s25
        %s205 = smul.u32 8, %s25
        %v206 = vld [vmem:[%s203] sm:$0xff]
        %v207 = vld [vmem:[%s203 + $0x8] sm:$0xff]
        %v208 = vld [vmem:[%s203 + $0x10] sm:$0xff]
        %v209 = vld [vmem:[%s203 + $0x18] sm:$0xff]
        %v210 = vld [vmem:[%s203 + $0x20] sm:$0xff]
        %v211 = vld [vmem:[%s203 + $0x28] sm:$0xff]
        %v212 = vld [vmem:[%s203 + $0x30] sm:$0xff]
        %v213 = vld [vmem:[%s203 + $0x38] sm:$0xff]
        %v214 = vmul.f32 %v206, 1000.0
        %v215 = vmul.f32 %v207, 1000.0
        %v216 = vmul.f32 %v208, 1000.0
        %v217 = vmul.f32 %v209, 1000.0
        %v218 = vmul.f32 %v210, 1000.0
        %v219 = vmul.f32 %v211, 1000.0
        %v220 = vmul.f32 %v212, 1000.0
        %v221 = vmul.f32 %v213, 1000.0
        %v222 = vlaneseq
        %v223 = vshrl.u32 %v222, 7
        %v224 = vadd.s32 %v223, 8
        %v225 = vadd.s32 %v223, 16
        %v226 = vadd.s32 %v223, 24
        %vm227 = vcmp.eq.s32.totalorder %v223, 0
        %vm228 = vcmp.eq.s32.totalorder %v224, 0
        %vm229 = vcmp.eq.s32.totalorder %v225, 0
        %vm230 = vcmp.eq.s32.totalorder %v226, 0
        %v231 = vsel %vm227, 1, 0
        %v232 = vsel %vm228, 1, 0
        %v233 = vsel %vm229, 1, 0
        %v234 = vsel %vm230, 1, 0
        %v235 = vcvt.s32.f32 %v231
        %v236 = vcvt.s32.f32 %v232
        %v237 = vcvt.s32.f32 %v233
        %v238 = vcvt.s32.f32 %v234
        %vm239 = vcmp.eq.s32.totalorder %v223, 31
        %vm240 = vcmp.eq.s32.totalorder %v224, 31
        %vm241 = vcmp.eq.s32.totalorder %v225, 31
        %vm242 = vcmp.eq.s32.totalorder %v226, 31
        %v243 = vsel %vm239, 1, 0
        %v244 = vsel %vm240, 1, 0
        %v245 = vsel %vm241, 1, 0
        %v246 = vsel %vm242, 1, 0
        %v247 = vcvt.s32.f32 %v243
        %v248 = vcvt.s32.f32 %v244
        %v249 = vcvt.s32.f32 %v245
        %v250 = vcvt.s32.f32 %v246
        %vm251 = vcmp.eq.s32.totalorder %v223, 15
        %vm252 = vcmp.eq.s32.totalorder %v224, 15
        %v253 = vsel %vm251, 1, 0
        %v254 = vsel %vm252, 1, 0
        %v255 = vcvt.s32.f32 %v253
        %v256 = vcvt.s32.f32 %v254
        %v257 = vld [vmem:[%s2] sm:$0xff]
        %v258 = vld [vmem:[%s2 + $0x8] sm:$0xff]
        %v259 = vld [vmem:[%s2 + $0x10] sm:$0xff]
        %v260 = vld [vmem:[%s2 + $0x18] sm:$0xff]
        %v261 = vld [vmem:[%s2 + $0x20] sm:$0xff]
        %v262 = vld [vmem:[%s2 + $0x28] sm:$0xff]
        %v263 = vld [vmem:[%s3] sm:$0x7]
        %v264 = vld [vmem:[%s4] sm:$0x7]
        %v265 = vmax.f32 %v206, -1.0
        %v266 = vmax.f32 %v207, -1.0
        %v267 = vmax.f32 %v208, -1.0
        %v268 = vmax.f32 %v209, -1.0
        %v269 = vmax.f32 %v210, -1.0
        %v270 = vmax.f32 %v211, -1.0
        %v271 = vmax.f32 %v212, -1.0
        %v272 = vmax.f32 %v213, -1.0
        %v273 = vmin.f32 %v265, 1.0
        %v274 = vmin.f32 %v266, 1.0
        %v275 = vmin.f32 %v267, 1.0
        %v276 = vmin.f32 %v268, 1.0
        %v277 = vmin.f32 %v269, 1.0
        %v278 = vmin.f32 %v270, 1.0
        %v279 = vmin.f32 %v271, 1.0
        %v280 = vmin.f32 %v272, 1.0
        %v281 = vadd.f32 %v273, 1.0
        %v282 = vadd.f32 %v274, 1.0
        %v283 = vadd.f32 %v275, 1.0
        %v284 = vadd.f32 %v276, 1.0
        %v285 = vadd.f32 %v277, 1.0
        %v286 = vadd.f32 %v278, 1.0
        %v287 = vadd.f32 %v279, 1.0
        %v288 = vadd.f32 %v280, 1.0
        %v289 = vmul.f32 %v281, 7.5
        %v290 = vmul.f32 %v282, 7.5
        %v291 = vmul.f32 %v283, 7.5
        %v292 = vmul.f32 %v284, 7.5
        %v293 = vmul.f32 %v285, 7.5
        %v294 = vmul.f32 %v286, 7.5
        %v295 = vmul.f32 %v287, 7.5
        %v296 = vmul.f32 %v288, 7.5
        %v297 = vfloor.f32 %v289
        %v298 = vfloor.f32 %v290
        %v299 = vfloor.f32 %v291
        %v300 = vfloor.f32 %v292
        %v301 = vfloor.f32 %v293
        %v302 = vfloor.f32 %v294
        %v303 = vfloor.f32 %v295
        %v304 = vfloor.f32 %v296
        %v305 = vsub.f32 %v289, %v297
        %v306 = vsub.f32 %v290, %v298
        %v307 = vsub.f32 %v291, %v299
        %v308 = vsub.f32 %v292, %v300
        %v309 = vsub.f32 %v293, %v301
        %v310 = vsub.f32 %v294, %v302
        %v311 = vsub.f32 %v295, %v303
        %v312 = vsub.f32 %v296, %v304
        %v313 = vcvt.f32.s32.to.zero.pseudo %v297
        %v314 = vcvt.f32.s32.to.zero.pseudo %v298
        %v315 = vcvt.f32.s32.to.zero.pseudo %v299
        %v316 = vcvt.f32.s32.to.zero.pseudo %v300
        %v317 = vcvt.f32.s32.to.zero.pseudo %v301
        %v318 = vcvt.f32.s32.to.zero.pseudo %v302
        %v319 = vcvt.f32.s32.to.zero.pseudo %v303
        %v320 = vcvt.f32.s32.to.zero.pseudo %v304
        %v321 = vlaneseq
        %v322 = vshrl.u32 %v321, 7
        %v323 = vsub.s32 3, %v322
        %v324 = vrot.slane %v313, %v323
        %v325 = vlaneseq
        %v326 = vshrl.u32 %v325, 7
        %v327 = vsub.s32 3, %v326
        %v328 = vrot.slane %v314, %v327
        %v329 = vlaneseq
        %v330 = vshrl.u32 %v329, 7
        %v331 = vsub.s32 3, %v330
        %v332 = vrot.slane %v315, %v331
        %v333 = vlaneseq
        %v334 = vshrl.u32 %v333, 7
        %v335 = vsub.s32 3, %v334
        %v336 = vrot.slane %v316, %v335
        %v337 = vlaneseq
        %v338 = vshrl.u32 %v337, 7
        %v339 = vsub.s32 3, %v338
        %v340 = vrot.slane %v317, %v339
        %v341 = vlaneseq
        %v342 = vshrl.u32 %v341, 7
        %v343 = vsub.s32 3, %v342
        %v344 = vrot.slane %v318, %v343
        %v345 = vlaneseq
        %v346 = vshrl.u32 %v345, 7
        %v347 = vsub.s32 3, %v346
        %v348 = vrot.slane %v319, %v347
        %v349 = vlaneseq
        %v350 = vshrl.u32 %v349, 7
        %v351 = vsub.s32 3, %v350
        %v352 = vrot.slane %v320, %v351
        %vm353 = vcmp.eq.s32.totalorder %v223, %v324
        %vm354 = vcmp.eq.s32.totalorder %v223, %v328
        %vm355 = vcmp.eq.s32.totalorder %v223, %v332
        %vm356 = vcmp.eq.s32.totalorder %v223, %v336
        %vm357 = vcmp.eq.s32.totalorder %v223, %v340
        %vm358 = vcmp.eq.s32.totalorder %v223, %v344
        %vm359 = vcmp.eq.s32.totalorder %v223, %v348
        %vm360 = vcmp.eq.s32.totalorder %v223, %v352
        %vm361 = vcmp.eq.s32.totalorder %v224, %v324
        %vm362 = vcmp.eq.s32.totalorder %v224, %v328
        %vm363 = vcmp.eq.s32.totalorder %v224, %v332
        %vm364 = vcmp.eq.s32.totalorder %v224, %v336
        %vm365 = vcmp.eq.s32.totalorder %v224, %v340
        %vm366 = vcmp.eq.s32.totalorder %v224, %v344
        %vm367 = vcmp.eq.s32.totalorder %v224, %v348
        %vm368 = vcmp.eq.s32.totalorder %v224, %v352
        %v369 = vsub.f32 1.0, %v305
        %v370 = vsub.f32 1.0, %v306
        %v371 = vsub.f32 1.0, %v307
        %v372 = vsub.f32 1.0, %v308
        %v373 = vsub.f32 1.0, %v309
        %v374 = vsub.f32 1.0, %v310
        %v375 = vsub.f32 1.0, %v311
        %v376 = vsub.f32 1.0, %v312
        %v377 = vadd.s32 %v313, 1
        %v378 = vadd.s32 %v314, 1
        %v379 = vadd.s32 %v315, 1
        %v380 = vadd.s32 %v316, 1
        %v381 = vadd.s32 %v317, 1
        %v382 = vadd.s32 %v318, 1
        %v383 = vadd.s32 %v319, 1
        %v384 = vadd.s32 %v320, 1
        %v385 = vlaneseq
        %v386 = vshrl.u32 %v385, 7
        %v387 = vsub.s32 3, %v386
        %v388 = vrot.slane %v377, %v387
        %v389 = vlaneseq
        %v390 = vshrl.u32 %v389, 7
        %v391 = vsub.s32 3, %v390
        %v392 = vrot.slane %v378, %v391
        %v393 = vlaneseq
        %v394 = vshrl.u32 %v393, 7
        %v395 = vsub.s32 3, %v394
        %v396 = vrot.slane %v379, %v395
        %v397 = vlaneseq
        %v398 = vshrl.u32 %v397, 7
        %v399 = vsub.s32 3, %v398
        %v400 = vrot.slane %v380, %v399
        %v401 = vlaneseq
        %v402 = vshrl.u32 %v401, 7
        %v403 = vsub.s32 3, %v402
        %v404 = vrot.slane %v381, %v403
        %v405 = vlaneseq
        %v406 = vshrl.u32 %v405, 7
        %v407 = vsub.s32 3, %v406
        %v408 = vrot.slane %v382, %v407
        %v409 = vlaneseq
        %v410 = vshrl.u32 %v409, 7
        %v411 = vsub.s32 3, %v410
        %v412 = vrot.slane %v383, %v411
        %v413 = vlaneseq
        %v414 = vshrl.u32 %v413, 7
        %v415 = vsub.s32 3, %v414
        %v416 = vrot.slane %v384, %v415
        %vm417 = vcmp.eq.s32.totalorder %v223, %v388
        %vm418 = vcmp.eq.s32.totalorder %v223, %v392
        %vm419 = vcmp.eq.s32.totalorder %v223, %v396
        %vm420 = vcmp.eq.s32.totalorder %v223, %v400
        %vm421 = vcmp.eq.s32.totalorder %v223, %v404
        %vm422 = vcmp.eq.s32.totalorder %v223, %v408
        %vm423 = vcmp.eq.s32.totalorder %v223, %v412
        %vm424 = vcmp.eq.s32.totalorder %v223, %v416
        %vm425 = vcmp.eq.s32.totalorder %v224, %v388
        %vm426 = vcmp.eq.s32.totalorder %v224, %v392
        %vm427 = vcmp.eq.s32.totalorder %v224, %v396
        %vm428 = vcmp.eq.s32.totalorder %v224, %v400
        %vm429 = vcmp.eq.s32.totalorder %v224, %v404
        %vm430 = vcmp.eq.s32.totalorder %v224, %v408
        %vm431 = vcmp.eq.s32.totalorder %v224, %v412
        %vm432 = vcmp.eq.s32.totalorder %v224, %v416
        %v433 = vlaneseq
        %v434 = vshrl.u32 %v433, 7
        %v435 = vsub.s32 3, %v434
        %v436 = vrot.slane %v305, %v435
        %v437 = vlaneseq
        %v438 = vshrl.u32 %v437, 7
        %v439 = vsub.s32 3, %v438
        %v440 = vrot.slane %v306, %v439
        %v441 = vlaneseq
        %v442 = vshrl.u32 %v441, 7
        %v443 = vsub.s32 3, %v442
        %v444 = vrot.slane %v307, %v443
        %v445 = vlaneseq
        %v446 = vshrl.u32 %v445, 7
        %v447 = vsub.s32 3, %v446
        %v448 = vrot.slane %v308, %v447
        %v449 = vlaneseq
        %v450 = vshrl.u32 %v449, 7
        %v451 = vsub.s32 3, %v450
        %v452 = vrot.slane %v309, %v451
        %v453 = vlaneseq
        %v454 = vshrl.u32 %v453, 7
        %v455 = vsub.s32 3, %v454
        %v456 = vrot.slane %v310, %v455
        %v457 = vlaneseq
        %v458 = vshrl.u32 %v457, 7
        %v459 = vsub.s32 3, %v458
        %v460 = vrot.slane %v311, %v459
        %v461 = vlaneseq
        %v462 = vshrl.u32 %v461, 7
        %v463 = vsub.s32 3, %v462
        %v464 = vrot.slane %v312, %v463
        %v465 = vsel %vm417, %v436, 0.0
        %v466 = vsel %vm418, %v440, 0.0
        %v467 = vsel %vm419, %v444, 0.0
        %v468 = vsel %vm420, %v448, 0.0
        %v469 = vsel %vm421, %v452, 0.0
        %v470 = vsel %vm422, %v456, 0.0
        %v471 = vsel %vm423, %v460, 0.0
        %v472 = vsel %vm424, %v464, 0.0
        %v473 = vsel %vm425, %v436, 0.0
        %v474 = vsel %vm426, %v440, 0.0
        %v475 = vsel %vm427, %v444, 0.0
        %v476 = vsel %vm428, %v448, 0.0
        %v477 = vsel %vm429, %v452, 0.0
        %v478 = vsel %vm430, %v456, 0.0
        %v479 = vsel %vm431, %v460, 0.0
        %v480 = vsel %vm432, %v464, 0.0
        %v481 = vlaneseq
        %v482 = vshrl.u32 %v481, 7
        %v483 = vsub.s32 3, %v482
        %v484 = vrot.slane %v369, %v483
        %v485 = vlaneseq
        %v486 = vshrl.u32 %v485, 7
        %v487 = vsub.s32 3, %v486
        %v488 = vrot.slane %v370, %v487
        %v489 = vlaneseq
        %v490 = vshrl.u32 %v489, 7
        %v491 = vsub.s32 3, %v490
        %v492 = vrot.slane %v371, %v491
        %v493 = vlaneseq
        %v494 = vshrl.u32 %v493, 7
        %v495 = vsub.s32 3, %v494
        %v496 = vrot.slane %v372, %v495
        %v497 = vlaneseq
        %v498 = vshrl.u32 %v497, 7
        %v499 = vsub.s32 3, %v498
        %v500 = vrot.slane %v373, %v499
        %v501 = vlaneseq
        %v502 = vshrl.u32 %v501, 7
        %v503 = vsub.s32 3, %v502
        %v504 = vrot.slane %v374, %v503
        %v505 = vlaneseq
        %v506 = vshrl.u32 %v505, 7
        %v507 = vsub.s32 3, %v506
        %v508 = vrot.slane %v375, %v507
        %v509 = vlaneseq
        %v510 = vshrl.u32 %v509, 7
        %v511 = vsub.s32 3, %v510
        %v512 = vrot.slane %v376, %v511
        %v513 = vsel %vm353, %v484, %v465
        %v514 = vsel %vm354, %v488, %v466
        %v515 = vsel %vm355, %v492, %v467
        %v516 = vsel %vm356, %v496, %v468
        %v517 = vsel %vm357, %v500, %v469
        %v518 = vsel %vm358, %v504, %v470
        %v519 = vsel %vm359, %v508, %v471
        %v520 = vsel %vm360, %v512, %v472
        %v521 = vsel %vm361, %v484, %v473
        %v522 = vsel %vm362, %v488, %v474
        %v523 = vsel %vm363, %v492, %v475
        %v524 = vsel %vm364, %v496, %v476
        %v525 = vsel %vm365, %v500, %v477
        %v526 = vsel %vm366, %v504, %v478
        %v527 = vsel %vm367, %v508, %v479
        %v528 = vsel %vm368, %v512, %v480
        %v529 = vlaneseq
        %v530 = vshrl.u32 %v529, 7
        %v531 = vsub.s32 2, %v530
        %v532 = vrot.slane %v313, %v531
        %v533 = vlaneseq
        %v534 = vshrl.u32 %v533, 7
        %v535 = vsub.s32 2, %v534
        %v536 = vrot.slane %v314, %v535
        %v537 = vlaneseq
        %v538 = vshrl.u32 %v537, 7
        %v539 = vsub.s32 2, %v538
        %v540 = vrot.slane %v315, %v539
        %v541 = vlaneseq
        %v542 = vshrl.u32 %v541, 7
        %v543 = vsub.s32 2, %v542
        %v544 = vrot.slane %v316, %v543
        %v545 = vlaneseq
        %v546 = vshrl.u32 %v545, 7
        %v547 = vsub.s32 2, %v546
        %v548 = vrot.slane %v317, %v547
        %v549 = vlaneseq
        %v550 = vshrl.u32 %v549, 7
        %v551 = vsub.s32 2, %v550
        %v552 = vrot.slane %v318, %v551
        %v553 = vlaneseq
        %v554 = vshrl.u32 %v553, 7
        %v555 = vsub.s32 2, %v554
        %v556 = vrot.slane %v319, %v555
        %v557 = vlaneseq
        %v558 = vshrl.u32 %v557, 7
        %v559 = vsub.s32 2, %v558
        %v560 = vrot.slane %v320, %v559
        %vm561 = vcmp.eq.s32.totalorder %v223, %v532
        %vm562 = vcmp.eq.s32.totalorder %v223, %v536
        %vm563 = vcmp.eq.s32.totalorder %v223, %v540
        %vm564 = vcmp.eq.s32.totalorder %v223, %v544
        %vm565 = vcmp.eq.s32.totalorder %v223, %v548
        %vm566 = vcmp.eq.s32.totalorder %v223, %v552
        %vm567 = vcmp.eq.s32.totalorder %v223, %v556
        %vm568 = vcmp.eq.s32.totalorder %v223, %v560
        %vm569 = vcmp.eq.s32.totalorder %v224, %v532
        %vm570 = vcmp.eq.s32.totalorder %v224, %v536
        %vm571 = vcmp.eq.s32.totalorder %v224, %v540
        %vm572 = vcmp.eq.s32.totalorder %v224, %v544
        %vm573 = vcmp.eq.s32.totalorder %v224, %v548
        %vm574 = vcmp.eq.s32.totalorder %v224, %v552
        %vm575 = vcmp.eq.s32.totalorder %v224, %v556
        %vm576 = vcmp.eq.s32.totalorder %v224, %v560
        %v577 = vlaneseq
        %v578 = vshrl.u32 %v577, 7
        %v579 = vsub.s32 2, %v578
        %v580 = vrot.slane %v377, %v579
        %v581 = vlaneseq
        %v582 = vshrl.u32 %v581, 7
        %v583 = vsub.s32 2, %v582
        %v584 = vrot.slane %v378, %v583
        %v585 = vlaneseq
        %v586 = vshrl.u32 %v585, 7
        %v587 = vsub.s32 2, %v586
        %v588 = vrot.slane %v379, %v587
        %v589 = vlaneseq
        %v590 = vshrl.u32 %v589, 7
        %v591 = vsub.s32 2, %v590
        %v592 = vrot.slane %v380, %v591
        %v593 = vlaneseq
        %v594 = vshrl.u32 %v593, 7
        %v595 = vsub.s32 2, %v594
        %v596 = vrot.slane %v381, %v595
        %v597 = vlaneseq
        %v598 = vshrl.u32 %v597, 7
        %v599 = vsub.s32 2, %v598
        %v600 = vrot.slane %v382, %v599
        %v601 = vlaneseq
        %v602 = vshrl.u32 %v601, 7
        %v603 = vsub.s32 2, %v602
        %v604 = vrot.slane %v383, %v603
        %v605 = vlaneseq
        %v606 = vshrl.u32 %v605, 7
        %v607 = vsub.s32 2, %v606
        %v608 = vrot.slane %v384, %v607
        %vm609 = vcmp.eq.s32.totalorder %v223, %v580
        %vm610 = vcmp.eq.s32.totalorder %v223, %v584
        %vm611 = vcmp.eq.s32.totalorder %v223, %v588
        %vm612 = vcmp.eq.s32.totalorder %v223, %v592
        %vm613 = vcmp.eq.s32.totalorder %v223, %v596
        %vm614 = vcmp.eq.s32.totalorder %v223, %v600
        %vm615 = vcmp.eq.s32.totalorder %v223, %v604
        %vm616 = vcmp.eq.s32.totalorder %v223, %v608
        %vm617 = vcmp.eq.s32.totalorder %v224, %v580
        %vm618 = vcmp.eq.s32.totalorder %v224, %v584
        %vm619 = vcmp.eq.s32.totalorder %v224, %v588
        %vm620 = vcmp.eq.s32.totalorder %v224, %v592
        %vm621 = vcmp.eq.s32.totalorder %v224, %v596
        %vm622 = vcmp.eq.s32.totalorder %v224, %v600
        %vm623 = vcmp.eq.s32.totalorder %v224, %v604
        %vm624 = vcmp.eq.s32.totalorder %v224, %v608
        %v625 = vlaneseq
        %v626 = vshrl.u32 %v625, 7
        %v627 = vsub.s32 2, %v626
        %v628 = vrot.slane %v305, %v627
        %v629 = vlaneseq
        %v630 = vshrl.u32 %v629, 7
        %v631 = vsub.s32 2, %v630
        %v632 = vrot.slane %v306, %v631
        %v633 = vlaneseq
        %v634 = vshrl.u32 %v633, 7
        %v635 = vsub.s32 2, %v634
        %v636 = vrot.slane %v307, %v635
        %v637 = vlaneseq
        %v638 = vshrl.u32 %v637, 7
        %v639 = vsub.s32 2, %v638
        %v640 = vrot.slane %v308, %v639
        %v641 = vlaneseq
        %v642 = vshrl.u32 %v641, 7
        %v643 = vsub.s32 2, %v642
        %v644 = vrot.slane %v309, %v643
        %v645 = vlaneseq
        %v646 = vshrl.u32 %v645, 7
        %v647 = vsub.s32 2, %v646
        %v648 = vrot.slane %v310, %v647
        %v649 = vlaneseq
        %v650 = vshrl.u32 %v649, 7
        %v651 = vsub.s32 2, %v650
        %v652 = vrot.slane %v311, %v651
        %v653 = vlaneseq
        %v654 = vshrl.u32 %v653, 7
        %v655 = vsub.s32 2, %v654
        %v656 = vrot.slane %v312, %v655
        %v657 = vsel %vm609, %v628, 0.0
        %v658 = vsel %vm610, %v632, 0.0
        %v659 = vsel %vm611, %v636, 0.0
        %v660 = vsel %vm612, %v640, 0.0
        %v661 = vsel %vm613, %v644, 0.0
        %v662 = vsel %vm614, %v648, 0.0
        %v663 = vsel %vm615, %v652, 0.0
        %v664 = vsel %vm616, %v656, 0.0
        %v665 = vsel %vm617, %v628, 0.0
        %v666 = vsel %vm618, %v632, 0.0
        %v667 = vsel %vm619, %v636, 0.0
        %v668 = vsel %vm620, %v640, 0.0
        %v669 = vsel %vm621, %v644, 0.0
        %v670 = vsel %vm622, %v648, 0.0
        %v671 = vsel %vm623, %v652, 0.0
        %v672 = vsel %vm624, %v656, 0.0
        %v673 = vlaneseq
        %v674 = vshrl.u32 %v673, 7
        %v675 = vsub.s32 2, %v674
        %v676 = vrot.slane %v369, %v675
        %v677 = vlaneseq
        %v678 = vshrl.u32 %v677, 7
        %v679 = vsub.s32 2, %v678
        %v680 = vrot.slane %v370, %v679
        %v681 = vlaneseq
        %v682 = vshrl.u32 %v681, 7
        %v683 = vsub.s32 2, %v682
        %v684 = vrot.slane %v371, %v683
        %v685 = vlaneseq
        %v686 = vshrl.u32 %v685, 7
        %v687 = vsub.s32 2, %v686
        %v688 = vrot.slane %v372, %v687
        %v689 = vlaneseq
        %v690 = vshrl.u32 %v689, 7
        %v691 = vsub.s32 2, %v690
        %v692 = vrot.slane %v373, %v691
        %v693 = vlaneseq
        %v694 = vshrl.u32 %v693, 7
        %v695 = vsub.s32 2, %v694
        %v696 = vrot.slane %v374, %v695
        %v697 = vlaneseq
        %v698 = vshrl.u32 %v697, 7
        %v699 = vsub.s32 2, %v698
        %v700 = vrot.slane %v375, %v699
        %v701 = vlaneseq
        %v702 = vshrl.u32 %v701, 7
        %v703 = vsub.s32 2, %v702
        %v704 = vrot.slane %v376, %v703
        %v705 = vsel %vm561, %v676, %v657
        %v706 = vsel %vm562, %v680, %v658
        %v707 = vsel %vm563, %v684, %v659
        %v708 = vsel %vm564, %v688, %v660
        %v709 = vsel %vm565, %v692, %v661
        %v710 = vsel %vm566, %v696, %v662
        %v711 = vsel %vm567, %v700, %v663
        %v712 = vsel %vm568, %v704, %v664
        %v713 = vsel %vm569, %v676, %v665
        %v714 = vsel %vm570, %v680, %v666
        %v715 = vsel %vm571, %v684, %v667
        %v716 = vsel %vm572, %v688, %v668
        %v717 = vsel %vm573, %v692, %v669
        %v718 = vsel %vm574, %v696, %v670
        %v719 = vsel %vm575, %v700, %v671
        %v720 = vsel %vm576, %v704, %v672
        %v721 = vsub.f32 %v513, %v705
        %v722 = vsub.f32 %v514, %v706
        %v723 = vsub.f32 %v515, %v707
        %v724 = vsub.f32 %v516, %v708
        %v725 = vsub.f32 %v517, %v709
        %v726 = vsub.f32 %v518, %v710
        %v727 = vsub.f32 %v519, %v711
        %v728 = vsub.f32 %v520, %v712
        %v729 = vsub.f32 %v521, %v713
        %v730 = vsub.f32 %v522, %v714
        %v731 = vsub.f32 %v523, %v715
        %v732 = vsub.f32 %v524, %v716
        %v733 = vsub.f32 %v525, %v717
        %v734 = vsub.f32 %v526, %v718
        %v735 = vsub.f32 %v527, %v719
        %v736 = vsub.f32 %v528, %v720
        %vm737 = vcmp.gt.f32.partialorder %v206, 1.0
        %vm738 = vcmp.gt.f32.partialorder %v207, 1.0
        %vm739 = vcmp.gt.f32.partialorder %v208, 1.0
        %vm740 = vcmp.gt.f32.partialorder %v209, 1.0
        %vm741 = vcmp.gt.f32.partialorder %v210, 1.0
        %vm742 = vcmp.gt.f32.partialorder %v211, 1.0
        %vm743 = vcmp.gt.f32.partialorder %v212, 1.0
        %vm744 = vcmp.gt.f32.partialorder %v213, 1.0
        %v745 = vsel %vm737, 1, 0
        %v746 = vsel %vm738, 1, 0
        %v747 = vsel %vm739, 1, 0
        %v748 = vsel %vm740, 1, 0
        %v749 = vsel %vm741, 1, 0
        %v750 = vsel %vm742, 1, 0
        %v751 = vsel %vm743, 1, 0
        %v752 = vsel %vm744, 1, 0
        %v753 = vcvt.s32.f32 %v745
        %v754 = vcvt.s32.f32 %v746
        %v755 = vcvt.s32.f32 %v747
        %v756 = vcvt.s32.f32 %v748
        %v757 = vcvt.s32.f32 %v749
        %v758 = vcvt.s32.f32 %v750
        %v759 = vcvt.s32.f32 %v751
        %v760 = vcvt.s32.f32 %v752
        %vm761 = vcmp.lt.f32.partialorder %v206, -1.0
        %vm762 = vcmp.lt.f32.partialorder %v207, -1.0
        %vm763 = vcmp.lt.f32.partialorder %v208, -1.0
        %vm764 = vcmp.lt.f32.partialorder %v209, -1.0
        %vm765 = vcmp.lt.f32.partialorder %v210, -1.0
        %vm766 = vcmp.lt.f32.partialorder %v211, -1.0
        %vm767 = vcmp.lt.f32.partialorder %v212, -1.0
        %vm768 = vcmp.lt.f32.partialorder %v213, -1.0
        %v769 = vsel %vm761, 1, 0
        %v770 = vsel %vm762, 1, 0
        %v771 = vsel %vm763, 1, 0
        %v772 = vsel %vm764, 1, 0
        %v773 = vsel %vm765, 1, 0
        %v774 = vsel %vm766, 1, 0
        %v775 = vsel %vm767, 1, 0
        %v776 = vsel %vm768, 1, 0
        %v777 = vcvt.s32.f32 %v769
        %v778 = vcvt.s32.f32 %v770
        %v779 = vcvt.s32.f32 %v771
        %v780 = vcvt.s32.f32 %v772
        %v781 = vcvt.s32.f32 %v773
        %v782 = vcvt.s32.f32 %v774
        %v783 = vcvt.s32.f32 %v775
        %v784 = vcvt.s32.f32 %v776
        %v785 = vmul.f32 %v281, 15.5
        %v786 = vmul.f32 %v282, 15.5
        %v787 = vmul.f32 %v283, 15.5
        %v788 = vmul.f32 %v284, 15.5
        %v789 = vmul.f32 %v285, 15.5
        %v790 = vmul.f32 %v286, 15.5
        %v791 = vmul.f32 %v287, 15.5
        %v792 = vmul.f32 %v288, 15.5
        %v793 = vfloor.f32 %v785
        %v794 = vfloor.f32 %v786
        %v795 = vfloor.f32 %v787
        %v796 = vfloor.f32 %v788
        %v797 = vfloor.f32 %v789
        %v798 = vfloor.f32 %v790
        %v799 = vfloor.f32 %v791
        %v800 = vfloor.f32 %v792
        %v801 = vsub.f32 %v785, %v793
        %v802 = vsub.f32 %v786, %v794
        %v803 = vsub.f32 %v787, %v795
        %v804 = vsub.f32 %v788, %v796
        %v805 = vsub.f32 %v789, %v797
        %v806 = vsub.f32 %v790, %v798
        %v807 = vsub.f32 %v791, %v799
        %v808 = vsub.f32 %v792, %v800
        %v809 = vcvt.f32.s32.to.zero.pseudo %v793
        %v810 = vcvt.f32.s32.to.zero.pseudo %v794
        %v811 = vcvt.f32.s32.to.zero.pseudo %v795
        %v812 = vcvt.f32.s32.to.zero.pseudo %v796
        %v813 = vcvt.f32.s32.to.zero.pseudo %v797
        %v814 = vcvt.f32.s32.to.zero.pseudo %v798
        %v815 = vcvt.f32.s32.to.zero.pseudo %v799
        %v816 = vcvt.f32.s32.to.zero.pseudo %v800
        %v817 = vlaneseq
        %v818 = vshrl.u32 %v817, 7
        %v819 = vsub.s32 1, %v818
        %v820 = vrot.slane %v809, %v819
        %v821 = vlaneseq
        %v822 = vshrl.u32 %v821, 7
        %v823 = vsub.s32 1, %v822
        %v824 = vrot.slane %v810, %v823
        %v825 = vlaneseq
        %v826 = vshrl.u32 %v825, 7
        %v827 = vsub.s32 1, %v826
        %v828 = vrot.slane %v811, %v827
        %v829 = vlaneseq
        %v830 = vshrl.u32 %v829, 7
        %v831 = vsub.s32 1, %v830
        %v832 = vrot.slane %v812, %v831
        %v833 = vlaneseq
        %v834 = vshrl.u32 %v833, 7
        %v835 = vsub.s32 1, %v834
        %v836 = vrot.slane %v813, %v835
        %v837 = vlaneseq
        %v838 = vshrl.u32 %v837, 7
        %v839 = vsub.s32 1, %v838
        %v840 = vrot.slane %v814, %v839
        %v841 = vlaneseq
        %v842 = vshrl.u32 %v841, 7
        %v843 = vsub.s32 1, %v842
        %v844 = vrot.slane %v815, %v843
        %v845 = vlaneseq
        %v846 = vshrl.u32 %v845, 7
        %v847 = vsub.s32 1, %v846
        %v848 = vrot.slane %v816, %v847
        %vm849 = vcmp.eq.s32.totalorder %v223, %v820
        %vm850 = vcmp.eq.s32.totalorder %v223, %v824
        %vm851 = vcmp.eq.s32.totalorder %v223, %v828
        %vm852 = vcmp.eq.s32.totalorder %v223, %v832
        %vm853 = vcmp.eq.s32.totalorder %v223, %v836
        %vm854 = vcmp.eq.s32.totalorder %v223, %v840
        %vm855 = vcmp.eq.s32.totalorder %v223, %v844
        %vm856 = vcmp.eq.s32.totalorder %v223, %v848
        %vm857 = vcmp.eq.s32.totalorder %v224, %v820
        %vm858 = vcmp.eq.s32.totalorder %v224, %v824
        %vm859 = vcmp.eq.s32.totalorder %v224, %v828
        %vm860 = vcmp.eq.s32.totalorder %v224, %v832
        %vm861 = vcmp.eq.s32.totalorder %v224, %v836
        %vm862 = vcmp.eq.s32.totalorder %v224, %v840
        %vm863 = vcmp.eq.s32.totalorder %v224, %v844
        %vm864 = vcmp.eq.s32.totalorder %v224, %v848
        %vm865 = vcmp.eq.s32.totalorder %v225, %v820
        %vm866 = vcmp.eq.s32.totalorder %v225, %v824
        %vm867 = vcmp.eq.s32.totalorder %v225, %v828
        %vm868 = vcmp.eq.s32.totalorder %v225, %v832
        %vm869 = vcmp.eq.s32.totalorder %v225, %v836
        %vm870 = vcmp.eq.s32.totalorder %v225, %v840
        %vm871 = vcmp.eq.s32.totalorder %v225, %v844
        %vm872 = vcmp.eq.s32.totalorder %v225, %v848
        %vm873 = vcmp.eq.s32.totalorder %v226, %v820
        %vm874 = vcmp.eq.s32.totalorder %v226, %v824
        %vm875 = vcmp.eq.s32.totalorder %v226, %v828
        %vm876 = vcmp.eq.s32.totalorder %v226, %v832
        %vm877 = vcmp.eq.s32.totalorder %v226, %v836
        %vm878 = vcmp.eq.s32.totalorder %v226, %v840
        %vm879 = vcmp.eq.s32.totalorder %v226, %v844
        %vm880 = vcmp.eq.s32.totalorder %v226, %v848
        %v881 = vsub.f32 1.0, %v801
        %v882 = vsub.f32 1.0, %v802
        %v883 = vsub.f32 1.0, %v803
        %v884 = vsub.f32 1.0, %v804
        %v885 = vsub.f32 1.0, %v805
        %v886 = vsub.f32 1.0, %v806
        %v887 = vsub.f32 1.0, %v807
        %v888 = vsub.f32 1.0, %v808
        %v889 = vadd.s32 %v809, 1
        %v890 = vadd.s32 %v810, 1
        %v891 = vadd.s32 %v811, 1
        %v892 = vadd.s32 %v812, 1
        %v893 = vadd.s32 %v813, 1
        %v894 = vadd.s32 %v814, 1
        %v895 = vadd.s32 %v815, 1
        %v896 = vadd.s32 %v816, 1
        %v897 = vlaneseq
        %v898 = vshrl.u32 %v897, 7
        %v899 = vsub.s32 1, %v898
        %v900 = vrot.slane %v889, %v899
        %v901 = vlaneseq
        %v902 = vshrl.u32 %v901, 7
        %v903 = vsub.s32 1, %v902
        %v904 = vrot.slane %v890, %v903
        %v905 = vlaneseq
        %v906 = vshrl.u32 %v905, 7
        %v907 = vsub.s32 1, %v906
        %v908 = vrot.slane %v891, %v907
        %v909 = vlaneseq
        %v910 = vshrl.u32 %v909, 7
        %v911 = vsub.s32 1, %v910
        %v912 = vrot.slane %v892, %v911
        %v913 = vlaneseq
        %v914 = vshrl.u32 %v913, 7
        %v915 = vsub.s32 1, %v914
        %v916 = vrot.slane %v893, %v915
        %v917 = vlaneseq
        %v918 = vshrl.u32 %v917, 7
        %v919 = vsub.s32 1, %v918
        %v920 = vrot.slane %v894, %v919
        %v921 = vlaneseq
        %v922 = vshrl.u32 %v921, 7
        %v923 = vsub.s32 1, %v922
        %v924 = vrot.slane %v895, %v923
        %v925 = vlaneseq
        %v926 = vshrl.u32 %v925, 7
        %v927 = vsub.s32 1, %v926
        %v928 = vrot.slane %v896, %v927
        %vm929 = vcmp.eq.s32.totalorder %v223, %v900
        %vm930 = vcmp.eq.s32.totalorder %v223, %v904
        %vm931 = vcmp.eq.s32.totalorder %v223, %v908
        %vm932 = vcmp.eq.s32.totalorder %v223, %v912
        %vm933 = vcmp.eq.s32.totalorder %v223, %v916
        %vm934 = vcmp.eq.s32.totalorder %v223, %v920
        %vm935 = vcmp.eq.s32.totalorder %v223, %v924
        %vm936 = vcmp.eq.s32.totalorder %v223, %v928
        %vm937 = vcmp.eq.s32.totalorder %v224, %v900
        %vm938 = vcmp.eq.s32.totalorder %v224, %v904
        %vm939 = vcmp.eq.s32.totalorder %v224, %v908
        %vm940 = vcmp.eq.s32.totalorder %v224, %v912
        %vm941 = vcmp.eq.s32.totalorder %v224, %v916
        %vm942 = vcmp.eq.s32.totalorder %v224, %v920
        %vm943 = vcmp.eq.s32.totalorder %v224, %v924
        %vm944 = vcmp.eq.s32.totalorder %v224, %v928
        %vm945 = vcmp.eq.s32.totalorder %v225, %v900
        %vm946 = vcmp.eq.s32.totalorder %v225, %v904
        %vm947 = vcmp.eq.s32.totalorder %v225, %v908
        %vm948 = vcmp.eq.s32.totalorder %v225, %v912
        %vm949 = vcmp.eq.s32.totalorder %v225, %v916
        %vm950 = vcmp.eq.s32.totalorder %v225, %v920
        %vm951 = vcmp.eq.s32.totalorder %v225, %v924
        %vm952 = vcmp.eq.s32.totalorder %v225, %v928
        %vm953 = vcmp.eq.s32.totalorder %v226, %v900
        %vm954 = vcmp.eq.s32.totalorder %v226, %v904
        %vm955 = vcmp.eq.s32.totalorder %v226, %v908
        %vm956 = vcmp.eq.s32.totalorder %v226, %v912
        %vm957 = vcmp.eq.s32.totalorder %v226, %v916
        %vm958 = vcmp.eq.s32.totalorder %v226, %v920
        %vm959 = vcmp.eq.s32.totalorder %v226, %v924
        %vm960 = vcmp.eq.s32.totalorder %v226, %v928
        %v961 = vlaneseq
        %v962 = vshrl.u32 %v961, 7
        %v963 = vsub.s32 1, %v962
        %v964 = vrot.slane %v801, %v963
        %v965 = vlaneseq
        %v966 = vshrl.u32 %v965, 7
        %v967 = vsub.s32 1, %v966
        %v968 = vrot.slane %v802, %v967
        %v969 = vlaneseq
        %v970 = vshrl.u32 %v969, 7
        %v971 = vsub.s32 1, %v970
        %v972 = vrot.slane %v803, %v971
        %v973 = vlaneseq
        %v974 = vshrl.u32 %v973, 7
        %v975 = vsub.s32 1, %v974
        %v976 = vrot.slane %v804, %v975
        %v977 = vlaneseq
        %v978 = vshrl.u32 %v977, 7
        %v979 = vsub.s32 1, %v978
        %v980 = vrot.slane %v805, %v979
        %v981 = vlaneseq
        %v982 = vshrl.u32 %v981, 7
        %v983 = vsub.s32 1, %v982
        %v984 = vrot.slane %v806, %v983
        %v985 = vlaneseq
        %v986 = vshrl.u32 %v985, 7
        %v987 = vsub.s32 1, %v986
        %v988 = vrot.slane %v807, %v987
        %v989 = vlaneseq
        %v990 = vshrl.u32 %v989, 7
        %v991 = vsub.s32 1, %v990
        %v992 = vrot.slane %v808, %v991
        %v993 = vsel %vm929, %v964, 0.0
        %v994 = vsel %vm930, %v968, 0.0
        %v995 = vsel %vm931, %v972, 0.0
        %v996 = vsel %vm932, %v976, 0.0
        %v997 = vsel %vm933, %v980, 0.0
        %v998 = vsel %vm934, %v984, 0.0
        %v999 = vsel %vm935, %v988, 0.0
        %v1000 = vsel %vm936, %v992, 0.0
        %v1001 = vsel %vm937, %v964, 0.0
        %v1002 = vsel %vm938, %v968, 0.0
        %v1003 = vsel %vm939, %v972, 0.0
        %v1004 = vsel %vm940, %v976, 0.0
        %v1005 = vsel %vm941, %v980, 0.0
        %v1006 = vsel %vm942, %v984, 0.0
        %v1007 = vsel %vm943, %v988, 0.0
        %v1008 = vsel %vm944, %v992, 0.0
        %v1009 = vsel %vm945, %v964, 0.0
        %v1010 = vsel %vm946, %v968, 0.0
        %v1011 = vsel %vm947, %v972, 0.0
        %v1012 = vsel %vm948, %v976, 0.0
        %v1013 = vsel %vm949, %v980, 0.0
        %v1014 = vsel %vm950, %v984, 0.0
        %v1015 = vsel %vm951, %v988, 0.0
        %v1016 = vsel %vm952, %v992, 0.0
        %v1017 = vsel %vm953, %v964, 0.0
        %v1018 = vsel %vm954, %v968, 0.0
        %v1019 = vsel %vm955, %v972, 0.0
        %v1020 = vsel %vm956, %v976, 0.0
        %v1021 = vsel %vm957, %v980, 0.0
        %v1022 = vsel %vm958, %v984, 0.0
        %v1023 = vsel %vm959, %v988, 0.0
        %v1024 = vsel %vm960, %v992, 0.0
        %v1025 = vlaneseq
        %v1026 = vshrl.u32 %v1025, 7
        %v1027 = vsub.s32 1, %v1026
        %v1028 = vrot.slane %v881, %v1027
        %v1029 = vlaneseq
        %v1030 = vshrl.u32 %v1029, 7
        %v1031 = vsub.s32 1, %v1030
        %v1032 = vrot.slane %v882, %v1031
        %v1033 = vlaneseq
        %v1034 = vshrl.u32 %v1033, 7
        %v1035 = vsub.s32 1, %v1034
        %v1036 = vrot.slane %v883, %v1035
        %v1037 = vlaneseq
        %v1038 = vshrl.u32 %v1037, 7
        %v1039 = vsub.s32 1, %v1038
        %v1040 = vrot.slane %v884, %v1039
        %v1041 = vlaneseq
        %v1042 = vshrl.u32 %v1041, 7
        %v1043 = vsub.s32 1, %v1042
        %v1044 = vrot.slane %v885, %v1043
        %v1045 = vlaneseq
        %v1046 = vshrl.u32 %v1045, 7
        %v1047 = vsub.s32 1, %v1046
        %v1048 = vrot.slane %v886, %v1047
        %v1049 = vlaneseq
        %v1050 = vshrl.u32 %v1049, 7
        %v1051 = vsub.s32 1, %v1050
        %v1052 = vrot.slane %v887, %v1051
        %v1053 = vlaneseq
        %v1054 = vshrl.u32 %v1053, 7
        %v1055 = vsub.s32 1, %v1054
        %v1056 = vrot.slane %v888, %v1055
        %v1057 = vsel %vm849, %v1028, %v993
        %v1058 = vsel %vm850, %v1032, %v994
        %v1059 = vsel %vm851, %v1036, %v995
        %v1060 = vsel %vm852, %v1040, %v996
        %v1061 = vsel %vm853, %v1044, %v997
        %v1062 = vsel %vm854, %v1048, %v998
        %v1063 = vsel %vm855, %v1052, %v999
        %v1064 = vsel %vm856, %v1056, %v1000
        %v1065 = vsel %vm857, %v1028, %v1001
        %v1066 = vsel %vm858, %v1032, %v1002
        %v1067 = vsel %vm859, %v1036, %v1003
        %v1068 = vsel %vm860, %v1040, %v1004
        %v1069 = vsel %vm861, %v1044, %v1005
        %v1070 = vsel %vm862, %v1048, %v1006
        %v1071 = vsel %vm863, %v1052, %v1007
        %v1072 = vsel %vm864, %v1056, %v1008
        %v1073 = vsel %vm865, %v1028, %v1009
        %v1074 = vsel %vm866, %v1032, %v1010
        %v1075 = vsel %vm867, %v1036, %v1011
        %v1076 = vsel %vm868, %v1040, %v1012
        %v1077 = vsel %vm869, %v1044, %v1013
        %v1078 = vsel %vm870, %v1048, %v1014
        %v1079 = vsel %vm871, %v1052, %v1015
        %v1080 = vsel %vm872, %v1056, %v1016
        %v1081 = vsel %vm873, %v1028, %v1017
        %v1082 = vsel %vm874, %v1032, %v1018
        %v1083 = vsel %vm875, %v1036, %v1019
        %v1084 = vsel %vm876, %v1040, %v1020
        %v1085 = vsel %vm877, %v1044, %v1021
        %v1086 = vsel %vm878, %v1048, %v1022
        %v1087 = vsel %vm879, %v1052, %v1023
        %v1088 = vsel %vm880, %v1056, %v1024
        %v1089 = vlaneseq
        %v1090 = vshrl.u32 %v1089, 7
        %v1091 = vsub.s32 0, %v1090
        %v1092 = vrot.slane %v809, %v1091
        %v1093 = vlaneseq
        %v1094 = vshrl.u32 %v1093, 7
        %v1095 = vsub.s32 0, %v1094
        %v1096 = vrot.slane %v810, %v1095
        %v1097 = vlaneseq
        %v1098 = vshrl.u32 %v1097, 7
        %v1099 = vsub.s32 0, %v1098
        %v1100 = vrot.slane %v811, %v1099
        %v1101 = vlaneseq
        %v1102 = vshrl.u32 %v1101, 7
        %v1103 = vsub.s32 0, %v1102
        %v1104 = vrot.slane %v812, %v1103
        %v1105 = vlaneseq
        %v1106 = vshrl.u32 %v1105, 7
        %v1107 = vsub.s32 0, %v1106
        %v1108 = vrot.slane %v813, %v1107
        %v1109 = vlaneseq
        %v1110 = vshrl.u32 %v1109, 7
        %v1111 = vsub.s32 0, %v1110
        %v1112 = vrot.slane %v814, %v1111
        %v1113 = vlaneseq
        %v1114 = vshrl.u32 %v1113, 7
        %v1115 = vsub.s32 0, %v1114
        %v1116 = vrot.slane %v815, %v1115
        %v1117 = vlaneseq
        %v1118 = vshrl.u32 %v1117, 7
        %v1119 = vsub.s32 0, %v1118
        %v1120 = vrot.slane %v816, %v1119
        %vm1121 = vcmp.eq.s32.totalorder %v223, %v1092
        %vm1122 = vcmp.eq.s32.totalorder %v223, %v1096
        %vm1123 = vcmp.eq.s32.totalorder %v223, %v1100
        %vm1124 = vcmp.eq.s32.totalorder %v223, %v1104
        %vm1125 = vcmp.eq.s32.totalorder %v223, %v1108
        %vm1126 = vcmp.eq.s32.totalorder %v223, %v1112
        %vm1127 = vcmp.eq.s32.totalorder %v223, %v1116
        %vm1128 = vcmp.eq.s32.totalorder %v223, %v1120
        %vm1129 = vcmp.eq.s32.totalorder %v224, %v1092
        %vm1130 = vcmp.eq.s32.totalorder %v224, %v1096
        %vm1131 = vcmp.eq.s32.totalorder %v224, %v1100
        %vm1132 = vcmp.eq.s32.totalorder %v224, %v1104
        %vm1133 = vcmp.eq.s32.totalorder %v224, %v1108
        %vm1134 = vcmp.eq.s32.totalorder %v224, %v1112
        %vm1135 = vcmp.eq.s32.totalorder %v224, %v1116
        %vm1136 = vcmp.eq.s32.totalorder %v224, %v1120
        %vm1137 = vcmp.eq.s32.totalorder %v225, %v1092
        %vm1138 = vcmp.eq.s32.totalorder %v225, %v1096
        %vm1139 = vcmp.eq.s32.totalorder %v225, %v1100
        %vm1140 = vcmp.eq.s32.totalorder %v225, %v1104
        %vm1141 = vcmp.eq.s32.totalorder %v225, %v1108
        %vm1142 = vcmp.eq.s32.totalorder %v225, %v1112
        %vm1143 = vcmp.eq.s32.totalorder %v225, %v1116
        %vm1144 = vcmp.eq.s32.totalorder %v225, %v1120
        %vm1145 = vcmp.eq.s32.totalorder %v226, %v1092
        %vm1146 = vcmp.eq.s32.totalorder %v226, %v1096
        %vm1147 = vcmp.eq.s32.totalorder %v226, %v1100
        %vm1148 = vcmp.eq.s32.totalorder %v226, %v1104
        %vm1149 = vcmp.eq.s32.totalorder %v226, %v1108
        %vm1150 = vcmp.eq.s32.totalorder %v226, %v1112
        %vm1151 = vcmp.eq.s32.totalorder %v226, %v1116
        %vm1152 = vcmp.eq.s32.totalorder %v226, %v1120
        %v1153 = vlaneseq
        %v1154 = vshrl.u32 %v1153, 7
        %v1155 = vsub.s32 0, %v1154
        %v1156 = vrot.slane %v889, %v1155
        %v1157 = vlaneseq
        %v1158 = vshrl.u32 %v1157, 7
        %v1159 = vsub.s32 0, %v1158
        %v1160 = vrot.slane %v890, %v1159
        %v1161 = vlaneseq
        %v1162 = vshrl.u32 %v1161, 7
        %v1163 = vsub.s32 0, %v1162
        %v1164 = vrot.slane %v891, %v1163
        %v1165 = vlaneseq
        %v1166 = vshrl.u32 %v1165, 7
        %v1167 = vsub.s32 0, %v1166
        %v1168 = vrot.slane %v892, %v1167
        %v1169 = vlaneseq
        %v1170 = vshrl.u32 %v1169, 7
        %v1171 = vsub.s32 0, %v1170
        %v1172 = vrot.slane %v893, %v1171
        %v1173 = vlaneseq
        %v1174 = vshrl.u32 %v1173, 7
        %v1175 = vsub.s32 0, %v1174
        %v1176 = vrot.slane %v894, %v1175
        %v1177 = vlaneseq
        %v1178 = vshrl.u32 %v1177, 7
        %v1179 = vsub.s32 0, %v1178
        %v1180 = vrot.slane %v895, %v1179
        %v1181 = vlaneseq
        %v1182 = vshrl.u32 %v1181, 7
        %v1183 = vsub.s32 0, %v1182
        %v1184 = vrot.slane %v896, %v1183
        %vm1185 = vcmp.eq.s32.totalorder %v223, %v1156
        %vm1186 = vcmp.eq.s32.totalorder %v223, %v1160
        %vm1187 = vcmp.eq.s32.totalorder %v223, %v1164
        %vm1188 = vcmp.eq.s32.totalorder %v223, %v1168
        %vm1189 = vcmp.eq.s32.totalorder %v223, %v1172
        %vm1190 = vcmp.eq.s32.totalorder %v223, %v1176
        %vm1191 = vcmp.eq.s32.totalorder %v223, %v1180
        %vm1192 = vcmp.eq.s32.totalorder %v223, %v1184
        %vm1193 = vcmp.eq.s32.totalorder %v224, %v1156
        %vm1194 = vcmp.eq.s32.totalorder %v224, %v1160
        %vm1195 = vcmp.eq.s32.totalorder %v224, %v1164
        %vm1196 = vcmp.eq.s32.totalorder %v224, %v1168
        %vm1197 = vcmp.eq.s32.totalorder %v224, %v1172
        %vm1198 = vcmp.eq.s32.totalorder %v224, %v1176
        %vm1199 = vcmp.eq.s32.totalorder %v224, %v1180
        %vm1200 = vcmp.eq.s32.totalorder %v224, %v1184
        %vm1201 = vcmp.eq.s32.totalorder %v225, %v1156
        %vm1202 = vcmp.eq.s32.totalorder %v225, %v1160
        %vm1203 = vcmp.eq.s32.totalorder %v225, %v1164
        %vm1204 = vcmp.eq.s32.totalorder %v225, %v1168
        %vm1205 = vcmp.eq.s32.totalorder %v225, %v1172
        %vm1206 = vcmp.eq.s32.totalorder %v225, %v1176
        %vm1207 = vcmp.eq.s32.totalorder %v225, %v1180
        %vm1208 = vcmp.eq.s32.totalorder %v225, %v1184
        %vm1209 = vcmp.eq.s32.totalorder %v226, %v1156
        %vm1210 = vcmp.eq.s32.totalorder %v226, %v1160
        %vm1211 = vcmp.eq.s32.totalorder %v226, %v1164
        %vm1212 = vcmp.eq.s32.totalorder %v226, %v1168
        %vm1213 = vcmp.eq.s32.totalorder %v226, %v1172
        %vm1214 = vcmp.eq.s32.totalorder %v226, %v1176
        %vm1215 = vcmp.eq.s32.totalorder %v226, %v1180
        %vm1216 = vcmp.eq.s32.totalorder %v226, %v1184
        %v1217 = vlaneseq
        %v1218 = vshrl.u32 %v1217, 7
        %v1219 = vsub.s32 0, %v1218
        %v1220 = vrot.slane %v801, %v1219
        %v1221 = vlaneseq
        %v1222 = vshrl.u32 %v1221, 7
        %v1223 = vsub.s32 0, %v1222
        %v1224 = vrot.slane %v802, %v1223
        %v1225 = vlaneseq
        %v1226 = vshrl.u32 %v1225, 7
        %v1227 = vsub.s32 0, %v1226
        %v1228 = vrot.slane %v803, %v1227
        %v1229 = vlaneseq
        %v1230 = vshrl.u32 %v1229, 7
        %v1231 = vsub.s32 0, %v1230
        %v1232 = vrot.slane %v804, %v1231
        %v1233 = vlaneseq
        %v1234 = vshrl.u32 %v1233, 7
        %v1235 = vsub.s32 0, %v1234
        %v1236 = vrot.slane %v805, %v1235
        %v1237 = vlaneseq
        %v1238 = vshrl.u32 %v1237, 7
        %v1239 = vsub.s32 0, %v1238
        %v1240 = vrot.slane %v806, %v1239
        %v1241 = vlaneseq
        %v1242 = vshrl.u32 %v1241, 7
        %v1243 = vsub.s32 0, %v1242
        %v1244 = vrot.slane %v807, %v1243
        %v1245 = vlaneseq
        %v1246 = vshrl.u32 %v1245, 7
        %v1247 = vsub.s32 0, %v1246
        %v1248 = vrot.slane %v808, %v1247
        %v1249 = vsel %vm1185, %v1220, 0.0
        %v1250 = vsel %vm1186, %v1224, 0.0
        %v1251 = vsel %vm1187, %v1228, 0.0
        %v1252 = vsel %vm1188, %v1232, 0.0
        %v1253 = vsel %vm1189, %v1236, 0.0
        %v1254 = vsel %vm1190, %v1240, 0.0
        %v1255 = vsel %vm1191, %v1244, 0.0
        %v1256 = vsel %vm1192, %v1248, 0.0
        %v1257 = vsel %vm1193, %v1220, 0.0
        %v1258 = vsel %vm1194, %v1224, 0.0
        %v1259 = vsel %vm1195, %v1228, 0.0
        %v1260 = vsel %vm1196, %v1232, 0.0
        %v1261 = vsel %vm1197, %v1236, 0.0
        %v1262 = vsel %vm1198, %v1240, 0.0
        %v1263 = vsel %vm1199, %v1244, 0.0
        %v1264 = vsel %vm1200, %v1248, 0.0
        %v1265 = vsel %vm1201, %v1220, 0.0
        %v1266 = vsel %vm1202, %v1224, 0.0
        %v1267 = vsel %vm1203, %v1228, 0.0
        %v1268 = vsel %vm1204, %v1232, 0.0
        %v1269 = vsel %vm1205, %v1236, 0.0
        %v1270 = vsel %vm1206, %v1240, 0.0
        %v1271 = vsel %vm1207, %v1244, 0.0
        %v1272 = vsel %vm1208, %v1248, 0.0
        %v1273 = vsel %vm1209, %v1220, 0.0
        %v1274 = vsel %vm1210, %v1224, 0.0
        %v1275 = vsel %vm1211, %v1228, 0.0
        %v1276 = vsel %vm1212, %v1232, 0.0
        %v1277 = vsel %vm1213, %v1236, 0.0
        %v1278 = vsel %vm1214, %v1240, 0.0
        %v1279 = vsel %vm1215, %v1244, 0.0
        %v1280 = vsel %vm1216, %v1248, 0.0
        %v1281 = vlaneseq
        %v1282 = vshrl.u32 %v1281, 7
        %v1283 = vsub.s32 0, %v1282
        %v1284 = vrot.slane %v881, %v1283
        %v1285 = vlaneseq
        %v1286 = vshrl.u32 %v1285, 7
        %v1287 = vsub.s32 0, %v1286
        %v1288 = vrot.slane %v882, %v1287
        %v1289 = vlaneseq
        %v1290 = vshrl.u32 %v1289, 7
        %v1291 = vsub.s32 0, %v1290
        %v1292 = vrot.slane %v883, %v1291
        %v1293 = vlaneseq
        %v1294 = vshrl.u32 %v1293, 7
        %v1295 = vsub.s32 0, %v1294
        %v1296 = vrot.slane %v884, %v1295
        %v1297 = vlaneseq
        %v1298 = vshrl.u32 %v1297, 7
        %v1299 = vsub.s32 0, %v1298
        %v1300 = vrot.slane %v885, %v1299
        %v1301 = vlaneseq
        %v1302 = vshrl.u32 %v1301, 7
        %v1303 = vsub.s32 0, %v1302
        %v1304 = vrot.slane %v886, %v1303
        %v1305 = vlaneseq
        %v1306 = vshrl.u32 %v1305, 7
        %v1307 = vsub.s32 0, %v1306
        %v1308 = vrot.slane %v887, %v1307
        %v1309 = vlaneseq
        %v1310 = vshrl.u32 %v1309, 7
        %v1311 = vsub.s32 0, %v1310
        %v1312 = vrot.slane %v888, %v1311
        %v1313 = vsel %vm1121, %v1284, %v1249
        %v1314 = vsel %vm1122, %v1288, %v1250
        %v1315 = vsel %vm1123, %v1292, %v1251
        %v1316 = vsel %vm1124, %v1296, %v1252
        %v1317 = vsel %vm1125, %v1300, %v1253
        %v1318 = vsel %vm1126, %v1304, %v1254
        %v1319 = vsel %vm1127, %v1308, %v1255
        %v1320 = vsel %vm1128, %v1312, %v1256
        %v1321 = vsel %vm1129, %v1284, %v1257
        %v1322 = vsel %vm1130, %v1288, %v1258
        %v1323 = vsel %vm1131, %v1292, %v1259
        %v1324 = vsel %vm1132, %v1296, %v1260
        %v1325 = vsel %vm1133, %v1300, %v1261
        %v1326 = vsel %vm1134, %v1304, %v1262
        %v1327 = vsel %vm1135, %v1308, %v1263
        %v1328 = vsel %vm1136, %v1312, %v1264
        %v1329 = vsel %vm1137, %v1284, %v1265
        %v1330 = vsel %vm1138, %v1288, %v1266
        %v1331 = vsel %vm1139, %v1292, %v1267
        %v1332 = vsel %vm1140, %v1296, %v1268
        %v1333 = vsel %vm1141, %v1300, %v1269
        %v1334 = vsel %vm1142, %v1304, %v1270
        %v1335 = vsel %vm1143, %v1308, %v1271
        %v1336 = vsel %vm1144, %v1312, %v1272
        %v1337 = vsel %vm1145, %v1284, %v1273
        %v1338 = vsel %vm1146, %v1288, %v1274
        %v1339 = vsel %vm1147, %v1292, %v1275
        %v1340 = vsel %vm1148, %v1296, %v1276
        %v1341 = vsel %vm1149, %v1300, %v1277
        %v1342 = vsel %vm1150, %v1304, %v1278
        %v1343 = vsel %vm1151, %v1308, %v1279
        %v1344 = vsel %vm1152, %v1312, %v1280
        %v1345 = vsub.f32 %v1057, %v1313
        %v1346 = vsub.f32 %v1058, %v1314
        %v1347 = vsub.f32 %v1059, %v1315
        %v1348 = vsub.f32 %v1060, %v1316
        %v1349 = vsub.f32 %v1061, %v1317
        %v1350 = vsub.f32 %v1062, %v1318
        %v1351 = vsub.f32 %v1063, %v1319
        %v1352 = vsub.f32 %v1064, %v1320
        %v1353 = vsub.f32 %v1065, %v1321
        %v1354 = vsub.f32 %v1066, %v1322
        %v1355 = vsub.f32 %v1067, %v1323
        %v1356 = vsub.f32 %v1068, %v1324
        %v1357 = vsub.f32 %v1069, %v1325
        %v1358 = vsub.f32 %v1070, %v1326
        %v1359 = vsub.f32 %v1071, %v1327
        %v1360 = vsub.f32 %v1072, %v1328
        %v1361 = vsub.f32 %v1073, %v1329
        %v1362 = vsub.f32 %v1074, %v1330
        %v1363 = vsub.f32 %v1075, %v1331
        %v1364 = vsub.f32 %v1076, %v1332
        %v1365 = vsub.f32 %v1077, %v1333
        %v1366 = vsub.f32 %v1078, %v1334
        %v1367 = vsub.f32 %v1079, %v1335
        %v1368 = vsub.f32 %v1080, %v1336
        %v1369 = vsub.f32 %v1081, %v1337
        %v1370 = vsub.f32 %v1082, %v1338
        %v1371 = vsub.f32 %v1083, %v1339
        %v1372 = vsub.f32 %v1084, %v1340
        %v1373 = vsub.f32 %v1085, %v1341
        %v1374 = vsub.f32 %v1086, %v1342
        %v1375 = vsub.f32 %v1087, %v1343
        %v1376 = vsub.f32 %v1088, %v1344
        %v1377 = vsub.f32 %v206, 2.0
        %v1378 = vsub.f32 %v207, 2.0
        %v1379 = vsub.f32 %v208, 2.0
        %v1380 = vsub.f32 %v209, 2.0
        %v1381 = vsub.f32 %v210, 2.0
        %v1382 = vsub.f32 %v211, 2.0
        %v1383 = vsub.f32 %v212, 2.0
        %v1384 = vsub.f32 %v213, 2.0
        %v1385 = vmax.f32 %v1377, -1.0
        %v1386 = vmax.f32 %v1378, -1.0
        %v1387 = vmax.f32 %v1379, -1.0
        %v1388 = vmax.f32 %v1380, -1.0
        %v1389 = vmax.f32 %v1381, -1.0
        %v1390 = vmax.f32 %v1382, -1.0
        %v1391 = vmax.f32 %v1383, -1.0
        %v1392 = vmax.f32 %v1384, -1.0
        %v1393 = vmin.f32 %v1385, 1.0
        %v1394 = vmin.f32 %v1386, 1.0
        %v1395 = vmin.f32 %v1387, 1.0
        %v1396 = vmin.f32 %v1388, 1.0
        %v1397 = vmin.f32 %v1389, 1.0
        %v1398 = vmin.f32 %v1390, 1.0
        %v1399 = vmin.f32 %v1391, 1.0
        %v1400 = vmin.f32 %v1392, 1.0
        %v1401 = vadd.f32 %v1393, 1.0
        %v1402 = vadd.f32 %v1394, 1.0
        %v1403 = vadd.f32 %v1395, 1.0
        %v1404 = vadd.f32 %v1396, 1.0
        %v1405 = vadd.f32 %v1397, 1.0
        %v1406 = vadd.f32 %v1398, 1.0
        %v1407 = vadd.f32 %v1399, 1.0
        %v1408 = vadd.f32 %v1400, 1.0
        %v1409 = vmul.f32 %v1401, 15.5
        %v1410 = vmul.f32 %v1402, 15.5
        %v1411 = vmul.f32 %v1403, 15.5
        %v1412 = vmul.f32 %v1404, 15.5
        %v1413 = vmul.f32 %v1405, 15.5
        %v1414 = vmul.f32 %v1406, 15.5
        %v1415 = vmul.f32 %v1407, 15.5
        %v1416 = vmul.f32 %v1408, 15.5
        %v1417 = vfloor.f32 %v1409
        %v1418 = vfloor.f32 %v1410
        %v1419 = vfloor.f32 %v1411
        %v1420 = vfloor.f32 %v1412
        %v1421 = vfloor.f32 %v1413
        %v1422 = vfloor.f32 %v1414
        %v1423 = vfloor.f32 %v1415
        %v1424 = vfloor.f32 %v1416
        %v1425 = vsub.f32 %v1409, %v1417
        %v1426 = vsub.f32 %v1410, %v1418
        %v1427 = vsub.f32 %v1411, %v1419
        %v1428 = vsub.f32 %v1412, %v1420
        %v1429 = vsub.f32 %v1413, %v1421
        %v1430 = vsub.f32 %v1414, %v1422
        %v1431 = vsub.f32 %v1415, %v1423
        %v1432 = vsub.f32 %v1416, %v1424
        %v1433 = vcvt.f32.s32.to.zero.pseudo %v1417
        %v1434 = vcvt.f32.s32.to.zero.pseudo %v1418
        %v1435 = vcvt.f32.s32.to.zero.pseudo %v1419
        %v1436 = vcvt.f32.s32.to.zero.pseudo %v1420
        %v1437 = vcvt.f32.s32.to.zero.pseudo %v1421
        %v1438 = vcvt.f32.s32.to.zero.pseudo %v1422
        %v1439 = vcvt.f32.s32.to.zero.pseudo %v1423
        %v1440 = vcvt.f32.s32.to.zero.pseudo %v1424
        %v1441 = vlaneseq
        %v1442 = vshrl.u32 %v1441, 7
        %v1443 = vsub.s32 1, %v1442
        %v1444 = vrot.slane %v1433, %v1443
        %v1445 = vlaneseq
        %v1446 = vshrl.u32 %v1445, 7
        %v1447 = vsub.s32 1, %v1446
        %v1448 = vrot.slane %v1434, %v1447
        %v1449 = vlaneseq
        %v1450 = vshrl.u32 %v1449, 7
        %v1451 = vsub.s32 1, %v1450
        %v1452 = vrot.slane %v1435, %v1451
        %v1453 = vlaneseq
        %v1454 = vshrl.u32 %v1453, 7
        %v1455 = vsub.s32 1, %v1454
        %v1456 = vrot.slane %v1436, %v1455
        %v1457 = vlaneseq
        %v1458 = vshrl.u32 %v1457, 7
        %v1459 = vsub.s32 1, %v1458
        %v1460 = vrot.slane %v1437, %v1459
        %v1461 = vlaneseq
        %v1462 = vshrl.u32 %v1461, 7
        %v1463 = vsub.s32 1, %v1462
        %v1464 = vrot.slane %v1438, %v1463
        %v1465 = vlaneseq
        %v1466 = vshrl.u32 %v1465, 7
        %v1467 = vsub.s32 1, %v1466
        %v1468 = vrot.slane %v1439, %v1467
        %v1469 = vlaneseq
        %v1470 = vshrl.u32 %v1469, 7
        %v1471 = vsub.s32 1, %v1470
        %v1472 = vrot.slane %v1440, %v1471
        %vm1473 = vcmp.eq.s32.totalorder %v223, %v1444
        %vm1474 = vcmp.eq.s32.totalorder %v223, %v1448
        %vm1475 = vcmp.eq.s32.totalorder %v223, %v1452
        %vm1476 = vcmp.eq.s32.totalorder %v223, %v1456
        %vm1477 = vcmp.eq.s32.totalorder %v223, %v1460
        %vm1478 = vcmp.eq.s32.totalorder %v223, %v1464
        %vm1479 = vcmp.eq.s32.totalorder %v223, %v1468
        %vm1480 = vcmp.eq.s32.totalorder %v223, %v1472
        %vm1481 = vcmp.eq.s32.totalorder %v224, %v1444
        %vm1482 = vcmp.eq.s32.totalorder %v224, %v1448
        %vm1483 = vcmp.eq.s32.totalorder %v224, %v1452
        %vm1484 = vcmp.eq.s32.totalorder %v224, %v1456
        %vm1485 = vcmp.eq.s32.totalorder %v224, %v1460
        %vm1486 = vcmp.eq.s32.totalorder %v224, %v1464
        %vm1487 = vcmp.eq.s32.totalorder %v224, %v1468
        %vm1488 = vcmp.eq.s32.totalorder %v224, %v1472
        %vm1489 = vcmp.eq.s32.totalorder %v225, %v1444
        %vm1490 = vcmp.eq.s32.totalorder %v225, %v1448
        %vm1491 = vcmp.eq.s32.totalorder %v225, %v1452
        %vm1492 = vcmp.eq.s32.totalorder %v225, %v1456
        %vm1493 = vcmp.eq.s32.totalorder %v225, %v1460
        %vm1494 = vcmp.eq.s32.totalorder %v225, %v1464
        %vm1495 = vcmp.eq.s32.totalorder %v225, %v1468
        %vm1496 = vcmp.eq.s32.totalorder %v225, %v1472
        %vm1497 = vcmp.eq.s32.totalorder %v226, %v1444
        %vm1498 = vcmp.eq.s32.totalorder %v226, %v1448
        %vm1499 = vcmp.eq.s32.totalorder %v226, %v1452
        %vm1500 = vcmp.eq.s32.totalorder %v226, %v1456
        %vm1501 = vcmp.eq.s32.totalorder %v226, %v1460
        %vm1502 = vcmp.eq.s32.totalorder %v226, %v1464
        %vm1503 = vcmp.eq.s32.totalorder %v226, %v1468
        %vm1504 = vcmp.eq.s32.totalorder %v226, %v1472
        %v1505 = vsub.f32 1.0, %v1425
        %v1506 = vsub.f32 1.0, %v1426
        %v1507 = vsub.f32 1.0, %v1427
        %v1508 = vsub.f32 1.0, %v1428
        %v1509 = vsub.f32 1.0, %v1429
        %v1510 = vsub.f32 1.0, %v1430
        %v1511 = vsub.f32 1.0, %v1431
        %v1512 = vsub.f32 1.0, %v1432
        %v1513 = vadd.s32 %v1433, 1
        %v1514 = vadd.s32 %v1434, 1
        %v1515 = vadd.s32 %v1435, 1
        %v1516 = vadd.s32 %v1436, 1
        %v1517 = vadd.s32 %v1437, 1
        %v1518 = vadd.s32 %v1438, 1
        %v1519 = vadd.s32 %v1439, 1
        %v1520 = vadd.s32 %v1440, 1
        %v1521 = vlaneseq
        %v1522 = vshrl.u32 %v1521, 7
        %v1523 = vsub.s32 1, %v1522
        %v1524 = vrot.slane %v1513, %v1523
        %v1525 = vlaneseq
        %v1526 = vshrl.u32 %v1525, 7
        %v1527 = vsub.s32 1, %v1526
        %v1528 = vrot.slane %v1514, %v1527
        %v1529 = vlaneseq
        %v1530 = vshrl.u32 %v1529, 7
        %v1531 = vsub.s32 1, %v1530
        %v1532 = vrot.slane %v1515, %v1531
        %v1533 = vlaneseq
        %v1534 = vshrl.u32 %v1533, 7
        %v1535 = vsub.s32 1, %v1534
        %v1536 = vrot.slane %v1516, %v1535
        %v1537 = vlaneseq
        %v1538 = vshrl.u32 %v1537, 7
        %v1539 = vsub.s32 1, %v1538
        %v1540 = vrot.slane %v1517, %v1539
        %v1541 = vlaneseq
        %v1542 = vshrl.u32 %v1541, 7
        %v1543 = vsub.s32 1, %v1542
        %v1544 = vrot.slane %v1518, %v1543
        %v1545 = vlaneseq
        %v1546 = vshrl.u32 %v1545, 7
        %v1547 = vsub.s32 1, %v1546
        %v1548 = vrot.slane %v1519, %v1547
        %v1549 = vlaneseq
        %v1550 = vshrl.u32 %v1549, 7
        %v1551 = vsub.s32 1, %v1550
        %v1552 = vrot.slane %v1520, %v1551
        %vm1553 = vcmp.eq.s32.totalorder %v223, %v1524
        %vm1554 = vcmp.eq.s32.totalorder %v223, %v1528
        %vm1555 = vcmp.eq.s32.totalorder %v223, %v1532
        %vm1556 = vcmp.eq.s32.totalorder %v223, %v1536
        %vm1557 = vcmp.eq.s32.totalorder %v223, %v1540
        %vm1558 = vcmp.eq.s32.totalorder %v223, %v1544
        %vm1559 = vcmp.eq.s32.totalorder %v223, %v1548
        %vm1560 = vcmp.eq.s32.totalorder %v223, %v1552
        %vm1561 = vcmp.eq.s32.totalorder %v224, %v1524
        %vm1562 = vcmp.eq.s32.totalorder %v224, %v1528
        %vm1563 = vcmp.eq.s32.totalorder %v224, %v1532
        %vm1564 = vcmp.eq.s32.totalorder %v224, %v1536
        %vm1565 = vcmp.eq.s32.totalorder %v224, %v1540
        %vm1566 = vcmp.eq.s32.totalorder %v224, %v1544
        %vm1567 = vcmp.eq.s32.totalorder %v224, %v1548
        %vm1568 = vcmp.eq.s32.totalorder %v224, %v1552
        %vm1569 = vcmp.eq.s32.totalorder %v225, %v1524
        %vm1570 = vcmp.eq.s32.totalorder %v225, %v1528
        %vm1571 = vcmp.eq.s32.totalorder %v225, %v1532
        %vm1572 = vcmp.eq.s32.totalorder %v225, %v1536
        %vm1573 = vcmp.eq.s32.totalorder %v225, %v1540
        %vm1574 = vcmp.eq.s32.totalorder %v225, %v1544
        %vm1575 = vcmp.eq.s32.totalorder %v225, %v1548
        %vm1576 = vcmp.eq.s32.totalorder %v225, %v1552
        %vm1577 = vcmp.eq.s32.totalorder %v226, %v1524
        %vm1578 = vcmp.eq.s32.totalorder %v226, %v1528
        %vm1579 = vcmp.eq.s32.totalorder %v226, %v1532
        %vm1580 = vcmp.eq.s32.totalorder %v226, %v1536
        %vm1581 = vcmp.eq.s32.totalorder %v226, %v1540
        %vm1582 = vcmp.eq.s32.totalorder %v226, %v1544
        %vm1583 = vcmp.eq.s32.totalorder %v226, %v1548
        %vm1584 = vcmp.eq.s32.totalorder %v226, %v1552
        %v1585 = vlaneseq
        %v1586 = vshrl.u32 %v1585, 7
        %v1587 = vsub.s32 1, %v1586
        %v1588 = vrot.slane %v1425, %v1587
        %v1589 = vlaneseq
        %v1590 = vshrl.u32 %v1589, 7
        %v1591 = vsub.s32 1, %v1590
        %v1592 = vrot.slane %v1426, %v1591
        %v1593 = vlaneseq
        %v1594 = vshrl.u32 %v1593, 7
        %v1595 = vsub.s32 1, %v1594
        %v1596 = vrot.slane %v1427, %v1595
        %v1597 = vlaneseq
        %v1598 = vshrl.u32 %v1597, 7
        %v1599 = vsub.s32 1, %v1598
        %v1600 = vrot.slane %v1428, %v1599
        %v1601 = vlaneseq
        %v1602 = vshrl.u32 %v1601, 7
        %v1603 = vsub.s32 1, %v1602
        %v1604 = vrot.slane %v1429, %v1603
        %v1605 = vlaneseq
        %v1606 = vshrl.u32 %v1605, 7
        %v1607 = vsub.s32 1, %v1606
        %v1608 = vrot.slane %v1430, %v1607
        %v1609 = vlaneseq
        %v1610 = vshrl.u32 %v1609, 7
        %v1611 = vsub.s32 1, %v1610
        %v1612 = vrot.slane %v1431, %v1611
        %v1613 = vlaneseq
        %v1614 = vshrl.u32 %v1613, 7
        %v1615 = vsub.s32 1, %v1614
        %v1616 = vrot.slane %v1432, %v1615
        %v1617 = vsel %vm1553, %v1588, 0.0
        %v1618 = vsel %vm1554, %v1592, 0.0
        %v1619 = vsel %vm1555, %v1596, 0.0
        %v1620 = vsel %vm1556, %v1600, 0.0
        %v1621 = vsel %vm1557, %v1604, 0.0
        %v1622 = vsel %vm1558, %v1608, 0.0
        %v1623 = vsel %vm1559, %v1612, 0.0
        %v1624 = vsel %vm1560, %v1616, 0.0
        %v1625 = vsel %vm1561, %v1588, 0.0
        %v1626 = vsel %vm1562, %v1592, 0.0
        %v1627 = vsel %vm1563, %v1596, 0.0
        %v1628 = vsel %vm1564, %v1600, 0.0
        %v1629 = vsel %vm1565, %v1604, 0.0
        %v1630 = vsel %vm1566, %v1608, 0.0
        %v1631 = vsel %vm1567, %v1612, 0.0
        %v1632 = vsel %vm1568, %v1616, 0.0
        %v1633 = vsel %vm1569, %v1588, 0.0
        %v1634 = vsel %vm1570, %v1592, 0.0
        %v1635 = vsel %vm1571, %v1596, 0.0
        %v1636 = vsel %vm1572, %v1600, 0.0
        %v1637 = vsel %vm1573, %v1604, 0.0
        %v1638 = vsel %vm1574, %v1608, 0.0
        %v1639 = vsel %vm1575, %v1612, 0.0
        %v1640 = vsel %vm1576, %v1616, 0.0
        %v1641 = vsel %vm1577, %v1588, 0.0
        %v1642 = vsel %vm1578, %v1592, 0.0
        %v1643 = vsel %vm1579, %v1596, 0.0
        %v1644 = vsel %vm1580, %v1600, 0.0
        %v1645 = vsel %vm1581, %v1604, 0.0
        %v1646 = vsel %vm1582, %v1608, 0.0
        %v1647 = vsel %vm1583, %v1612, 0.0
        %v1648 = vsel %vm1584, %v1616, 0.0
        %v1649 = vlaneseq
        %v1650 = vshrl.u32 %v1649, 7
        %v1651 = vsub.s32 1, %v1650
        %v1652 = vrot.slane %v1505, %v1651
        %v1653 = vlaneseq
        %v1654 = vshrl.u32 %v1653, 7
        %v1655 = vsub.s32 1, %v1654
        %v1656 = vrot.slane %v1506, %v1655
        %v1657 = vlaneseq
        %v1658 = vshrl.u32 %v1657, 7
        %v1659 = vsub.s32 1, %v1658
        %v1660 = vrot.slane %v1507, %v1659
        %v1661 = vlaneseq
        %v1662 = vshrl.u32 %v1661, 7
        %v1663 = vsub.s32 1, %v1662
        %v1664 = vrot.slane %v1508, %v1663
        %v1665 = vlaneseq
        %v1666 = vshrl.u32 %v1665, 7
        %v1667 = vsub.s32 1, %v1666
        %v1668 = vrot.slane %v1509, %v1667
        %v1669 = vlaneseq
        %v1670 = vshrl.u32 %v1669, 7
        %v1671 = vsub.s32 1, %v1670
        %v1672 = vrot.slane %v1510, %v1671
        %v1673 = vlaneseq
        %v1674 = vshrl.u32 %v1673, 7
        %v1675 = vsub.s32 1, %v1674
        %v1676 = vrot.slane %v1511, %v1675
        %v1677 = vlaneseq
        %v1678 = vshrl.u32 %v1677, 7
        %v1679 = vsub.s32 1, %v1678
        %v1680 = vrot.slane %v1512, %v1679
        %v1681 = vsel %vm1473, %v1652, %v1617
        %v1682 = vsel %vm1474, %v1656, %v1618
        %v1683 = vsel %vm1475, %v1660, %v1619
        %v1684 = vsel %vm1476, %v1664, %v1620
        %v1685 = vsel %vm1477, %v1668, %v1621
        %v1686 = vsel %vm1478, %v1672, %v1622
        %v1687 = vsel %vm1479, %v1676, %v1623
        %v1688 = vsel %vm1480, %v1680, %v1624
        %v1689 = vsel %vm1481, %v1652, %v1625
        %v1690 = vsel %vm1482, %v1656, %v1626
        %v1691 = vsel %vm1483, %v1660, %v1627
        %v1692 = vsel %vm1484, %v1664, %v1628
        %v1693 = vsel %vm1485, %v1668, %v1629
        %v1694 = vsel %vm1486, %v1672, %v1630
        %v1695 = vsel %vm1487, %v1676, %v1631
        %v1696 = vsel %vm1488, %v1680, %v1632
        %v1697 = vsel %vm1489, %v1652, %v1633
        %v1698 = vsel %vm1490, %v1656, %v1634
        %v1699 = vsel %vm1491, %v1660, %v1635
        %v1700 = vsel %vm1492, %v1664, %v1636
        %v1701 = vsel %vm1493, %v1668, %v1637
        %v1702 = vsel %vm1494, %v1672, %v1638
        %v1703 = vsel %vm1495, %v1676, %v1639
        %v1704 = vsel %vm1496, %v1680, %v1640
        %v1705 = vsel %vm1497, %v1652, %v1641
        %v1706 = vsel %vm1498, %v1656, %v1642
        %v1707 = vsel %vm1499, %v1660, %v1643
        %v1708 = vsel %vm1500, %v1664, %v1644
        %v1709 = vsel %vm1501, %v1668, %v1645
        %v1710 = vsel %vm1502, %v1672, %v1646
        %v1711 = vsel %vm1503, %v1676, %v1647
        %v1712 = vsel %vm1504, %v1680, %v1648
        %v1713 = vsub.f32 %v1681, %v235
        %v1714 = vsub.f32 %v1682, %v235
        %v1715 = vsub.f32 %v1683, %v235
        %v1716 = vsub.f32 %v1684, %v235
        %v1717 = vsub.f32 %v1685, %v235
        %v1718 = vsub.f32 %v1686, %v235
        %v1719 = vsub.f32 %v1687, %v235
        %v1720 = vsub.f32 %v1688, %v235
        %v1721 = vsub.f32 %v1689, %v236
        %v1722 = vsub.f32 %v1690, %v236
        %v1723 = vsub.f32 %v1691, %v236
        %v1724 = vsub.f32 %v1692, %v236
        %v1725 = vsub.f32 %v1693, %v236
        %v1726 = vsub.f32 %v1694, %v236
        %v1727 = vsub.f32 %v1695, %v236
        %v1728 = vsub.f32 %v1696, %v236
        %v1729 = vsub.f32 %v1697, %v237
        %v1730 = vsub.f32 %v1698, %v237
        %v1731 = vsub.f32 %v1699, %v237
        %v1732 = vsub.f32 %v1700, %v237
        %v1733 = vsub.f32 %v1701, %v237
        %v1734 = vsub.f32 %v1702, %v237
        %v1735 = vsub.f32 %v1703, %v237
        %v1736 = vsub.f32 %v1704, %v237
        %v1737 = vsub.f32 %v1705, %v238
        %v1738 = vsub.f32 %v1706, %v238
        %v1739 = vsub.f32 %v1707, %v238
        %v1740 = vsub.f32 %v1708, %v238
        %v1741 = vsub.f32 %v1709, %v238
        %v1742 = vsub.f32 %v1710, %v238
        %v1743 = vsub.f32 %v1711, %v238
        %v1744 = vsub.f32 %v1712, %v238
        %v1745 = vlaneseq
        %v1746 = vshrl.u32 %v1745, 7
        %v1747 = vsub.s32 1, %v1746
        %v1748 = vrot.slane %v753, %v1747
        %v1749 = vlaneseq
        %v1750 = vshrl.u32 %v1749, 7
        %v1751 = vsub.s32 1, %v1750
        %v1752 = vrot.slane %v754, %v1751
        %v1753 = vlaneseq
        %v1754 = vshrl.u32 %v1753, 7
        %v1755 = vsub.s32 1, %v1754
        %v1756 = vrot.slane %v755, %v1755
        %v1757 = vlaneseq
        %v1758 = vshrl.u32 %v1757, 7
        %v1759 = vsub.s32 1, %v1758
        %v1760 = vrot.slane %v756, %v1759
        %v1761 = vlaneseq
        %v1762 = vshrl.u32 %v1761, 7
        %v1763 = vsub.s32 1, %v1762
        %v1764 = vrot.slane %v757, %v1763
        %v1765 = vlaneseq
        %v1766 = vshrl.u32 %v1765, 7
        %v1767 = vsub.s32 1, %v1766
        %v1768 = vrot.slane %v758, %v1767
        %v1769 = vlaneseq
        %v1770 = vshrl.u32 %v1769, 7
        %v1771 = vsub.s32 1, %v1770
        %v1772 = vrot.slane %v759, %v1771
        %v1773 = vlaneseq
        %v1774 = vshrl.u32 %v1773, 7
        %v1775 = vsub.s32 1, %v1774
        %v1776 = vrot.slane %v760, %v1775
        %v1777 = vmul.f32 %v1748, %v1713
        %v1778 = vmul.f32 %v1752, %v1714
        %v1779 = vmul.f32 %v1756, %v1715
        %v1780 = vmul.f32 %v1760, %v1716
        %v1781 = vmul.f32 %v1764, %v1717
        %v1782 = vmul.f32 %v1768, %v1718
        %v1783 = vmul.f32 %v1772, %v1719
        %v1784 = vmul.f32 %v1776, %v1720
        %v1785 = vmul.f32 %v1748, %v1721
        %v1786 = vmul.f32 %v1752, %v1722
        %v1787 = vmul.f32 %v1756, %v1723
        %v1788 = vmul.f32 %v1760, %v1724
        %v1789 = vmul.f32 %v1764, %v1725
        %v1790 = vmul.f32 %v1768, %v1726
        %v1791 = vmul.f32 %v1772, %v1727
        %v1792 = vmul.f32 %v1776, %v1728
        %v1793 = vmul.f32 %v1748, %v1729
        %v1794 = vmul.f32 %v1752, %v1730
        %v1795 = vmul.f32 %v1756, %v1731
        %v1796 = vmul.f32 %v1760, %v1732
        %v1797 = vmul.f32 %v1764, %v1733
        %v1798 = vmul.f32 %v1768, %v1734
        %v1799 = vmul.f32 %v1772, %v1735
        %v1800 = vmul.f32 %v1776, %v1736
        %v1801 = vmul.f32 %v1748, %v1737
        %v1802 = vmul.f32 %v1752, %v1738
        %v1803 = vmul.f32 %v1756, %v1739
        %v1804 = vmul.f32 %v1760, %v1740
        %v1805 = vmul.f32 %v1764, %v1741
        %v1806 = vmul.f32 %v1768, %v1742
        %v1807 = vmul.f32 %v1772, %v1743
        %v1808 = vmul.f32 %v1776, %v1744
        %v1809 = vadd.f32 %v1345, %v1777
        %v1810 = vadd.f32 %v1346, %v1778
        %v1811 = vadd.f32 %v1347, %v1779
        %v1812 = vadd.f32 %v1348, %v1780
        %v1813 = vadd.f32 %v1349, %v1781
        %v1814 = vadd.f32 %v1350, %v1782
        %v1815 = vadd.f32 %v1351, %v1783
        %v1816 = vadd.f32 %v1352, %v1784
        %v1817 = vadd.f32 %v1353, %v1785
        %v1818 = vadd.f32 %v1354, %v1786
        %v1819 = vadd.f32 %v1355, %v1787
        %v1820 = vadd.f32 %v1356, %v1788
        %v1821 = vadd.f32 %v1357, %v1789
        %v1822 = vadd.f32 %v1358, %v1790
        %v1823 = vadd.f32 %v1359, %v1791
        %v1824 = vadd.f32 %v1360, %v1792
        %v1825 = vadd.f32 %v1361, %v1793
        %v1826 = vadd.f32 %v1362, %v1794
        %v1827 = vadd.f32 %v1363, %v1795
        %v1828 = vadd.f32 %v1364, %v1796
        %v1829 = vadd.f32 %v1365, %v1797
        %v1830 = vadd.f32 %v1366, %v1798
        %v1831 = vadd.f32 %v1367, %v1799
        %v1832 = vadd.f32 %v1368, %v1800
        %v1833 = vadd.f32 %v1369, %v1801
        %v1834 = vadd.f32 %v1370, %v1802
        %v1835 = vadd.f32 %v1371, %v1803
        %v1836 = vadd.f32 %v1372, %v1804
        %v1837 = vadd.f32 %v1373, %v1805
        %v1838 = vadd.f32 %v1374, %v1806
        %v1839 = vadd.f32 %v1375, %v1807
        %v1840 = vadd.f32 %v1376, %v1808
        %v1841 = vadd.f32 %v206, 2.0
        %v1842 = vadd.f32 %v207, 2.0
        %v1843 = vadd.f32 %v208, 2.0
        %v1844 = vadd.f32 %v209, 2.0
        %v1845 = vadd.f32 %v210, 2.0
        %v1846 = vadd.f32 %v211, 2.0
        %v1847 = vadd.f32 %v212, 2.0
        %v1848 = vadd.f32 %v213, 2.0
        %v1849 = vmax.f32 %v1841, -1.0
        %v1850 = vmax.f32 %v1842, -1.0
        %v1851 = vmax.f32 %v1843, -1.0
        %v1852 = vmax.f32 %v1844, -1.0
        %v1853 = vmax.f32 %v1845, -1.0
        %v1854 = vmax.f32 %v1846, -1.0
        %v1855 = vmax.f32 %v1847, -1.0
        %v1856 = vmax.f32 %v1848, -1.0
        %v1857 = vmin.f32 %v1849, 1.0
        %v1858 = vmin.f32 %v1850, 1.0
        %v1859 = vmin.f32 %v1851, 1.0
        %v1860 = vmin.f32 %v1852, 1.0
        %v1861 = vmin.f32 %v1853, 1.0
        %v1862 = vmin.f32 %v1854, 1.0
        %v1863 = vmin.f32 %v1855, 1.0
        %v1864 = vmin.f32 %v1856, 1.0
        %v1865 = vadd.f32 %v1857, 1.0
        %v1866 = vadd.f32 %v1858, 1.0
        %v1867 = vadd.f32 %v1859, 1.0
        %v1868 = vadd.f32 %v1860, 1.0
        %v1869 = vadd.f32 %v1861, 1.0
        %v1870 = vadd.f32 %v1862, 1.0
        %v1871 = vadd.f32 %v1863, 1.0
        %v1872 = vadd.f32 %v1864, 1.0
        %v1873 = vmul.f32 %v1865, 15.5
        %v1874 = vmul.f32 %v1866, 15.5
        %v1875 = vmul.f32 %v1867, 15.5
        %v1876 = vmul.f32 %v1868, 15.5
        %v1877 = vmul.f32 %v1869, 15.5
        %v1878 = vmul.f32 %v1870, 15.5
        %v1879 = vmul.f32 %v1871, 15.5
        %v1880 = vmul.f32 %v1872, 15.5
        %v1881 = vfloor.f32 %v1873
        %v1882 = vfloor.f32 %v1874
        %v1883 = vfloor.f32 %v1875
        %v1884 = vfloor.f32 %v1876
        %v1885 = vfloor.f32 %v1877
        %v1886 = vfloor.f32 %v1878
        %v1887 = vfloor.f32 %v1879
        %v1888 = vfloor.f32 %v1880
        %v1889 = vsub.f32 %v1873, %v1881
        %v1890 = vsub.f32 %v1874, %v1882
        %v1891 = vsub.f32 %v1875, %v1883
        %v1892 = vsub.f32 %v1876, %v1884
        %v1893 = vsub.f32 %v1877, %v1885
        %v1894 = vsub.f32 %v1878, %v1886
        %v1895 = vsub.f32 %v1879, %v1887
        %v1896 = vsub.f32 %v1880, %v1888
        %v1897 = vcvt.f32.s32.to.zero.pseudo %v1881
        %v1898 = vcvt.f32.s32.to.zero.pseudo %v1882
        %v1899 = vcvt.f32.s32.to.zero.pseudo %v1883
        %v1900 = vcvt.f32.s32.to.zero.pseudo %v1884
        %v1901 = vcvt.f32.s32.to.zero.pseudo %v1885
        %v1902 = vcvt.f32.s32.to.zero.pseudo %v1886
        %v1903 = vcvt.f32.s32.to.zero.pseudo %v1887
        %v1904 = vcvt.f32.s32.to.zero.pseudo %v1888
        %v1905 = vlaneseq
        %v1906 = vshrl.u32 %v1905, 7
        %v1907 = vsub.s32 0, %v1906
        %v1908 = vrot.slane %v1897, %v1907
        %v1909 = vlaneseq
        %v1910 = vshrl.u32 %v1909, 7
        %v1911 = vsub.s32 0, %v1910
        %v1912 = vrot.slane %v1898, %v1911
        %v1913 = vlaneseq
        %v1914 = vshrl.u32 %v1913, 7
        %v1915 = vsub.s32 0, %v1914
        %v1916 = vrot.slane %v1899, %v1915
        %v1917 = vlaneseq
        %v1918 = vshrl.u32 %v1917, 7
        %v1919 = vsub.s32 0, %v1918
        %v1920 = vrot.slane %v1900, %v1919
        %v1921 = vlaneseq
        %v1922 = vshrl.u32 %v1921, 7
        %v1923 = vsub.s32 0, %v1922
        %v1924 = vrot.slane %v1901, %v1923
        %v1925 = vlaneseq
        %v1926 = vshrl.u32 %v1925, 7
        %v1927 = vsub.s32 0, %v1926
        %v1928 = vrot.slane %v1902, %v1927
        %v1929 = vlaneseq
        %v1930 = vshrl.u32 %v1929, 7
        %v1931 = vsub.s32 0, %v1930
        %v1932 = vrot.slane %v1903, %v1931
        %v1933 = vlaneseq
        %v1934 = vshrl.u32 %v1933, 7
        %v1935 = vsub.s32 0, %v1934
        %v1936 = vrot.slane %v1904, %v1935
        %vm1937 = vcmp.eq.s32.totalorder %v223, %v1908
        %vm1938 = vcmp.eq.s32.totalorder %v223, %v1912
        %vm1939 = vcmp.eq.s32.totalorder %v223, %v1916
        %vm1940 = vcmp.eq.s32.totalorder %v223, %v1920
        %vm1941 = vcmp.eq.s32.totalorder %v223, %v1924
        %vm1942 = vcmp.eq.s32.totalorder %v223, %v1928
        %vm1943 = vcmp.eq.s32.totalorder %v223, %v1932
        %vm1944 = vcmp.eq.s32.totalorder %v223, %v1936
        %vm1945 = vcmp.eq.s32.totalorder %v224, %v1908
        %vm1946 = vcmp.eq.s32.totalorder %v224, %v1912
        %vm1947 = vcmp.eq.s32.totalorder %v224, %v1916
        %vm1948 = vcmp.eq.s32.totalorder %v224, %v1920
        %vm1949 = vcmp.eq.s32.totalorder %v224, %v1924
        %vm1950 = vcmp.eq.s32.totalorder %v224, %v1928
        %vm1951 = vcmp.eq.s32.totalorder %v224, %v1932
        %vm1952 = vcmp.eq.s32.totalorder %v224, %v1936
        %vm1953 = vcmp.eq.s32.totalorder %v225, %v1908
        %vm1954 = vcmp.eq.s32.totalorder %v225, %v1912
        %vm1955 = vcmp.eq.s32.totalorder %v225, %v1916
        %vm1956 = vcmp.eq.s32.totalorder %v225, %v1920
        %vm1957 = vcmp.eq.s32.totalorder %v225, %v1924
        %vm1958 = vcmp.eq.s32.totalorder %v225, %v1928
        %vm1959 = vcmp.eq.s32.totalorder %v225, %v1932
        %vm1960 = vcmp.eq.s32.totalorder %v225, %v1936
        %vm1961 = vcmp.eq.s32.totalorder %v226, %v1908
        %vm1962 = vcmp.eq.s32.totalorder %v226, %v1912
        %vm1963 = vcmp.eq.s32.totalorder %v226, %v1916
        %vm1964 = vcmp.eq.s32.totalorder %v226, %v1920
        %vm1965 = vcmp.eq.s32.totalorder %v226, %v1924
        %vm1966 = vcmp.eq.s32.totalorder %v226, %v1928
        %vm1967 = vcmp.eq.s32.totalorder %v226, %v1932
        %vm1968 = vcmp.eq.s32.totalorder %v226, %v1936
        %v1969 = vsub.f32 1.0, %v1889
        %v1970 = vsub.f32 1.0, %v1890
        %v1971 = vsub.f32 1.0, %v1891
        %v1972 = vsub.f32 1.0, %v1892
        %v1973 = vsub.f32 1.0, %v1893
        %v1974 = vsub.f32 1.0, %v1894
        %v1975 = vsub.f32 1.0, %v1895
        %v1976 = vsub.f32 1.0, %v1896
        %v1977 = vadd.s32 %v1897, 1
        %v1978 = vadd.s32 %v1898, 1
        %v1979 = vadd.s32 %v1899, 1
        %v1980 = vadd.s32 %v1900, 1
        %v1981 = vadd.s32 %v1901, 1
        %v1982 = vadd.s32 %v1902, 1
        %v1983 = vadd.s32 %v1903, 1
        %v1984 = vadd.s32 %v1904, 1
        %v1985 = vlaneseq
        %v1986 = vshrl.u32 %v1985, 7
        %v1987 = vsub.s32 0, %v1986
        %v1988 = vrot.slane %v1977, %v1987
        %v1989 = vlaneseq
        %v1990 = vshrl.u32 %v1989, 7
        %v1991 = vsub.s32 0, %v1990
        %v1992 = vrot.slane %v1978, %v1991
        %v1993 = vlaneseq
        %v1994 = vshrl.u32 %v1993, 7
        %v1995 = vsub.s32 0, %v1994
        %v1996 = vrot.slane %v1979, %v1995
        %v1997 = vlaneseq
        %v1998 = vshrl.u32 %v1997, 7
        %v1999 = vsub.s32 0, %v1998
        %v2000 = vrot.slane %v1980, %v1999
        %v2001 = vlaneseq
        %v2002 = vshrl.u32 %v2001, 7
        %v2003 = vsub.s32 0, %v2002
        %v2004 = vrot.slane %v1981, %v2003
        %v2005 = vlaneseq
        %v2006 = vshrl.u32 %v2005, 7
        %v2007 = vsub.s32 0, %v2006
        %v2008 = vrot.slane %v1982, %v2007
        %v2009 = vlaneseq
        %v2010 = vshrl.u32 %v2009, 7
        %v2011 = vsub.s32 0, %v2010
        %v2012 = vrot.slane %v1983, %v2011
        %v2013 = vlaneseq
        %v2014 = vshrl.u32 %v2013, 7
        %v2015 = vsub.s32 0, %v2014
        %v2016 = vrot.slane %v1984, %v2015
        %vm2017 = vcmp.eq.s32.totalorder %v223, %v1988
        %vm2018 = vcmp.eq.s32.totalorder %v223, %v1992
        %vm2019 = vcmp.eq.s32.totalorder %v223, %v1996
        %vm2020 = vcmp.eq.s32.totalorder %v223, %v2000
        %vm2021 = vcmp.eq.s32.totalorder %v223, %v2004
        %vm2022 = vcmp.eq.s32.totalorder %v223, %v2008
        %vm2023 = vcmp.eq.s32.totalorder %v223, %v2012
        %vm2024 = vcmp.eq.s32.totalorder %v223, %v2016
        %vm2025 = vcmp.eq.s32.totalorder %v224, %v1988
        %vm2026 = vcmp.eq.s32.totalorder %v224, %v1992
        %vm2027 = vcmp.eq.s32.totalorder %v224, %v1996
        %vm2028 = vcmp.eq.s32.totalorder %v224, %v2000
        %vm2029 = vcmp.eq.s32.totalorder %v224, %v2004
        %vm2030 = vcmp.eq.s32.totalorder %v224, %v2008
        %vm2031 = vcmp.eq.s32.totalorder %v224, %v2012
        %vm2032 = vcmp.eq.s32.totalorder %v224, %v2016
        %vm2033 = vcmp.eq.s32.totalorder %v225, %v1988
        %vm2034 = vcmp.eq.s32.totalorder %v225, %v1992
        %vm2035 = vcmp.eq.s32.totalorder %v225, %v1996
        %vm2036 = vcmp.eq.s32.totalorder %v225, %v2000
        %vm2037 = vcmp.eq.s32.totalorder %v225, %v2004
        %vm2038 = vcmp.eq.s32.totalorder %v225, %v2008
        %vm2039 = vcmp.eq.s32.totalorder %v225, %v2012
        %vm2040 = vcmp.eq.s32.totalorder %v225, %v2016
        %vm2041 = vcmp.eq.s32.totalorder %v226, %v1988
        %vm2042 = vcmp.eq.s32.totalorder %v226, %v1992
        %vm2043 = vcmp.eq.s32.totalorder %v226, %v1996
        %vm2044 = vcmp.eq.s32.totalorder %v226, %v2000
        %vm2045 = vcmp.eq.s32.totalorder %v226, %v2004
        %vm2046 = vcmp.eq.s32.totalorder %v226, %v2008
        %vm2047 = vcmp.eq.s32.totalorder %v226, %v2012
        %vm2048 = vcmp.eq.s32.totalorder %v226, %v2016
        %v2049 = vlaneseq
        %v2050 = vshrl.u32 %v2049, 7
        %v2051 = vsub.s32 0, %v2050
        %v2052 = vrot.slane %v1889, %v2051
        %v2053 = vlaneseq
        %v2054 = vshrl.u32 %v2053, 7
        %v2055 = vsub.s32 0, %v2054
        %v2056 = vrot.slane %v1890, %v2055
        %v2057 = vlaneseq
        %v2058 = vshrl.u32 %v2057, 7
        %v2059 = vsub.s32 0, %v2058
        %v2060 = vrot.slane %v1891, %v2059
        %v2061 = vlaneseq
        %v2062 = vshrl.u32 %v2061, 7
        %v2063 = vsub.s32 0, %v2062
        %v2064 = vrot.slane %v1892, %v2063
        %v2065 = vlaneseq
        %v2066 = vshrl.u32 %v2065, 7
        %v2067 = vsub.s32 0, %v2066
        %v2068 = vrot.slane %v1893, %v2067
        %v2069 = vlaneseq
        %v2070 = vshrl.u32 %v2069, 7
        %v2071 = vsub.s32 0, %v2070
        %v2072 = vrot.slane %v1894, %v2071
        %v2073 = vlaneseq
        %v2074 = vshrl.u32 %v2073, 7
        %v2075 = vsub.s32 0, %v2074
        %v2076 = vrot.slane %v1895, %v2075
        %v2077 = vlaneseq
        %v2078 = vshrl.u32 %v2077, 7
        %v2079 = vsub.s32 0, %v2078
        %v2080 = vrot.slane %v1896, %v2079
        %v2081 = vsel %vm2017, %v2052, 0.0
        %v2082 = vsel %vm2018, %v2056, 0.0
        %v2083 = vsel %vm2019, %v2060, 0.0
        %v2084 = vsel %vm2020, %v2064, 0.0
        %v2085 = vsel %vm2021, %v2068, 0.0
        %v2086 = vsel %vm2022, %v2072, 0.0
        %v2087 = vsel %vm2023, %v2076, 0.0
        %v2088 = vsel %vm2024, %v2080, 0.0
        %v2089 = vsel %vm2025, %v2052, 0.0
        %v2090 = vsel %vm2026, %v2056, 0.0
        %v2091 = vsel %vm2027, %v2060, 0.0
        %v2092 = vsel %vm2028, %v2064, 0.0
        %v2093 = vsel %vm2029, %v2068, 0.0
        %v2094 = vsel %vm2030, %v2072, 0.0
        %v2095 = vsel %vm2031, %v2076, 0.0
        %v2096 = vsel %vm2032, %v2080, 0.0
        %v2097 = vsel %vm2033, %v2052, 0.0
        %v2098 = vsel %vm2034, %v2056, 0.0
        %v2099 = vsel %vm2035, %v2060, 0.0
        %v2100 = vsel %vm2036, %v2064, 0.0
        %v2101 = vsel %vm2037, %v2068, 0.0
        %v2102 = vsel %vm2038, %v2072, 0.0
        %v2103 = vsel %vm2039, %v2076, 0.0
        %v2104 = vsel %vm2040, %v2080, 0.0
        %v2105 = vsel %vm2041, %v2052, 0.0
        %v2106 = vsel %vm2042, %v2056, 0.0
        %v2107 = vsel %vm2043, %v2060, 0.0
        %v2108 = vsel %vm2044, %v2064, 0.0
        %v2109 = vsel %vm2045, %v2068, 0.0
        %v2110 = vsel %vm2046, %v2072, 0.0
        %v2111 = vsel %vm2047, %v2076, 0.0
        %v2112 = vsel %vm2048, %v2080, 0.0
        %v2113 = vlaneseq
        %v2114 = vshrl.u32 %v2113, 7
        %v2115 = vsub.s32 0, %v2114
        %v2116 = vrot.slane %v1969, %v2115
        %v2117 = vlaneseq
        %v2118 = vshrl.u32 %v2117, 7
        %v2119 = vsub.s32 0, %v2118
        %v2120 = vrot.slane %v1970, %v2119
        %v2121 = vlaneseq
        %v2122 = vshrl.u32 %v2121, 7
        %v2123 = vsub.s32 0, %v2122
        %v2124 = vrot.slane %v1971, %v2123
        %v2125 = vlaneseq
        %v2126 = vshrl.u32 %v2125, 7
        %v2127 = vsub.s32 0, %v2126
        %v2128 = vrot.slane %v1972, %v2127
        %v2129 = vlaneseq
        %v2130 = vshrl.u32 %v2129, 7
        %v2131 = vsub.s32 0, %v2130
        %v2132 = vrot.slane %v1973, %v2131
        %v2133 = vlaneseq
        %v2134 = vshrl.u32 %v2133, 7
        %v2135 = vsub.s32 0, %v2134
        %v2136 = vrot.slane %v1974, %v2135
        %v2137 = vlaneseq
        %v2138 = vshrl.u32 %v2137, 7
        %v2139 = vsub.s32 0, %v2138
        %v2140 = vrot.slane %v1975, %v2139
        %v2141 = vlaneseq
        %v2142 = vshrl.u32 %v2141, 7
        %v2143 = vsub.s32 0, %v2142
        %v2144 = vrot.slane %v1976, %v2143
        %v2145 = vsel %vm1937, %v2116, %v2081
        %v2146 = vsel %vm1938, %v2120, %v2082
        %v2147 = vsel %vm1939, %v2124, %v2083
        %v2148 = vsel %vm1940, %v2128, %v2084
        %v2149 = vsel %vm1941, %v2132, %v2085
        %v2150 = vsel %vm1942, %v2136, %v2086
        %v2151 = vsel %vm1943, %v2140, %v2087
        %v2152 = vsel %vm1944, %v2144, %v2088
        %v2153 = vsel %vm1945, %v2116, %v2089
        %v2154 = vsel %vm1946, %v2120, %v2090
        %v2155 = vsel %vm1947, %v2124, %v2091
        %v2156 = vsel %vm1948, %v2128, %v2092
        %v2157 = vsel %vm1949, %v2132, %v2093
        %v2158 = vsel %vm1950, %v2136, %v2094
        %v2159 = vsel %vm1951, %v2140, %v2095
        %v2160 = vsel %vm1952, %v2144, %v2096
        %v2161 = vsel %vm1953, %v2116, %v2097
        %v2162 = vsel %vm1954, %v2120, %v2098
        %v2163 = vsel %vm1955, %v2124, %v2099
        %v2164 = vsel %vm1956, %v2128, %v2100
        %v2165 = vsel %vm1957, %v2132, %v2101
        %v2166 = vsel %vm1958, %v2136, %v2102
        %v2167 = vsel %vm1959, %v2140, %v2103
        %v2168 = vsel %vm1960, %v2144, %v2104
        %v2169 = vsel %vm1961, %v2116, %v2105
        %v2170 = vsel %vm1962, %v2120, %v2106
        %v2171 = vsel %vm1963, %v2124, %v2107
        %v2172 = vsel %vm1964, %v2128, %v2108
        %v2173 = vsel %vm1965, %v2132, %v2109
        %v2174 = vsel %vm1966, %v2136, %v2110
        %v2175 = vsel %vm1967, %v2140, %v2111
        %v2176 = vsel %vm1968, %v2144, %v2112
        %v2177 = vsub.f32 %v247, %v2145
        %v2178 = vsub.f32 %v247, %v2146
        %v2179 = vsub.f32 %v247, %v2147
        %v2180 = vsub.f32 %v247, %v2148
        %v2181 = vsub.f32 %v247, %v2149
        %v2182 = vsub.f32 %v247, %v2150
        %v2183 = vsub.f32 %v247, %v2151
        %v2184 = vsub.f32 %v247, %v2152
        %v2185 = vsub.f32 %v248, %v2153
        %v2186 = vsub.f32 %v248, %v2154
        %v2187 = vsub.f32 %v248, %v2155
        %v2188 = vsub.f32 %v248, %v2156
        %v2189 = vsub.f32 %v248, %v2157
        %v2190 = vsub.f32 %v248, %v2158
        %v2191 = vsub.f32 %v248, %v2159
        %v2192 = vsub.f32 %v248, %v2160
        %v2193 = vsub.f32 %v249, %v2161
        %v2194 = vsub.f32 %v249, %v2162
        %v2195 = vsub.f32 %v249, %v2163
        %v2196 = vsub.f32 %v249, %v2164
        %v2197 = vsub.f32 %v249, %v2165
        %v2198 = vsub.f32 %v249, %v2166
        %v2199 = vsub.f32 %v249, %v2167
        %v2200 = vsub.f32 %v249, %v2168
        %v2201 = vsub.f32 %v250, %v2169
        %v2202 = vsub.f32 %v250, %v2170
        %v2203 = vsub.f32 %v250, %v2171
        %v2204 = vsub.f32 %v250, %v2172
        %v2205 = vsub.f32 %v250, %v2173
        %v2206 = vsub.f32 %v250, %v2174
        %v2207 = vsub.f32 %v250, %v2175
        %v2208 = vsub.f32 %v250, %v2176
        %v2209 = vlaneseq
        %v2210 = vshrl.u32 %v2209, 7
        %v2211 = vsub.s32 0, %v2210
        %v2212 = vrot.slane %v777, %v2211
        %v2213 = vlaneseq
        %v2214 = vshrl.u32 %v2213, 7
        %v2215 = vsub.s32 0, %v2214
        %v2216 = vrot.slane %v778, %v2215
        %v2217 = vlaneseq
        %v2218 = vshrl.u32 %v2217, 7
        %v2219 = vsub.s32 0, %v2218
        %v2220 = vrot.slane %v779, %v2219
        %v2221 = vlaneseq
        %v2222 = vshrl.u32 %v2221, 7
        %v2223 = vsub.s32 0, %v2222
        %v2224 = vrot.slane %v780, %v2223
        %v2225 = vlaneseq
        %v2226 = vshrl.u32 %v2225, 7
        %v2227 = vsub.s32 0, %v2226
        %v2228 = vrot.slane %v781, %v2227
        %v2229 = vlaneseq
        %v2230 = vshrl.u32 %v2229, 7
        %v2231 = vsub.s32 0, %v2230
        %v2232 = vrot.slane %v782, %v2231
        %v2233 = vlaneseq
        %v2234 = vshrl.u32 %v2233, 7
        %v2235 = vsub.s32 0, %v2234
        %v2236 = vrot.slane %v783, %v2235
        %v2237 = vlaneseq
        %v2238 = vshrl.u32 %v2237, 7
        %v2239 = vsub.s32 0, %v2238
        %v2240 = vrot.slane %v784, %v2239
        %v2241 = vmul.f32 %v2212, %v2177
        %v2242 = vmul.f32 %v2216, %v2178
        %v2243 = vmul.f32 %v2220, %v2179
        %v2244 = vmul.f32 %v2224, %v2180
        %v2245 = vmul.f32 %v2228, %v2181
        %v2246 = vmul.f32 %v2232, %v2182
        %v2247 = vmul.f32 %v2236, %v2183
        %v2248 = vmul.f32 %v2240, %v2184
        %v2249 = vmul.f32 %v2212, %v2185
        %v2250 = vmul.f32 %v2216, %v2186
        %v2251 = vmul.f32 %v2220, %v2187
        %v2252 = vmul.f32 %v2224, %v2188
        %v2253 = vmul.f32 %v2228, %v2189
        %v2254 = vmul.f32 %v2232, %v2190
        %v2255 = vmul.f32 %v2236, %v2191
        %v2256 = vmul.f32 %v2240, %v2192
        %v2257 = vmul.f32 %v2212, %v2193
        %v2258 = vmul.f32 %v2216, %v2194
        %v2259 = vmul.f32 %v2220, %v2195
        %v2260 = vmul.f32 %v2224, %v2196
        %v2261 = vmul.f32 %v2228, %v2197
        %v2262 = vmul.f32 %v2232, %v2198
        %v2263 = vmul.f32 %v2236, %v2199
        %v2264 = vmul.f32 %v2240, %v2200
        %v2265 = vmul.f32 %v2212, %v2201
        %v2266 = vmul.f32 %v2216, %v2202
        %v2267 = vmul.f32 %v2220, %v2203
        %v2268 = vmul.f32 %v2224, %v2204
        %v2269 = vmul.f32 %v2228, %v2205
        %v2270 = vmul.f32 %v2232, %v2206
        %v2271 = vmul.f32 %v2236, %v2207
        %v2272 = vmul.f32 %v2240, %v2208
        %v2273 = vadd.f32 %v1809, %v2241
        %v2274 = vadd.f32 %v1810, %v2242
        %v2275 = vadd.f32 %v1811, %v2243
        %v2276 = vadd.f32 %v1812, %v2244
        %v2277 = vadd.f32 %v1813, %v2245
        %v2278 = vadd.f32 %v1814, %v2246
        %v2279 = vadd.f32 %v1815, %v2247
        %v2280 = vadd.f32 %v1816, %v2248
        %v2281 = vadd.f32 %v1817, %v2249
        %v2282 = vadd.f32 %v1818, %v2250
        %v2283 = vadd.f32 %v1819, %v2251
        %v2284 = vadd.f32 %v1820, %v2252
        %v2285 = vadd.f32 %v1821, %v2253
        %v2286 = vadd.f32 %v1822, %v2254
        %v2287 = vadd.f32 %v1823, %v2255
        %v2288 = vadd.f32 %v1824, %v2256
        %v2289 = vadd.f32 %v1825, %v2257
        %v2290 = vadd.f32 %v1826, %v2258
        %v2291 = vadd.f32 %v1827, %v2259
        %v2292 = vadd.f32 %v1828, %v2260
        %v2293 = vadd.f32 %v1829, %v2261
        %v2294 = vadd.f32 %v1830, %v2262
        %v2295 = vadd.f32 %v1831, %v2263
        %v2296 = vadd.f32 %v1832, %v2264
        %v2297 = vadd.f32 %v1833, %v2265
        %v2298 = vadd.f32 %v1834, %v2266
        %v2299 = vadd.f32 %v1835, %v2267
        %v2300 = vadd.f32 %v1836, %v2268
        %v2301 = vadd.f32 %v1837, %v2269
        %v2302 = vadd.f32 %v1838, %v2270
        %v2303 = vadd.f32 %v1839, %v2271
        %v2304 = vadd.f32 %v1840, %v2272
        %vm2305 = vcmask 261120
        %v2307 = vsel %vm2305, %v257, 0
        %v2310 = vsel %vm2305, %v258, 0
        %v2313 = vsel %vm2305, %v259, 0
        %v2316 = vsel %vm2305, %v260, 0
        %v2319 = vsel %vm2305, %v261, 0
        %v2322 = vsel %vm2305, %v262, 0
        %2324 = vmatprep.subr.mxu0 %v2274
        %2325 = vmatpush1.msra.mxu0 %v2273
        %2326 = vmatprep.subr.mxu0 %v2282
        %2327 = vmatpush1.msra.mxu0 %v2281
        %2328 = vmatprep.subr.mxu0 %v2290
        %2329 = vmatpush1.msra.mxu0 %v2289
        %2330 = vmatprep.subr.mxu0 %v2298
        %2331 = vmatpush1.msra.mxu0 %v2297
        %2332 = vmatprep.subr.mxu0 0.0
        %2333 = vmatpush1.msra.mxu0 0.0
        %2334 = vmatprep.subr.mxu0 0.0
        %2335 = vmatpush1.msra.mxu0 0.0
        %2336 = vmatprep.subr.mxu0 0.0
        %2337 = vmatpush1.msra.mxu0 0.0
        %2338 = vmatprep.subr.mxu0 0.0
        %2339 = vmatpush1.msra.mxu0 0.0
        %2340 = vmatprep.subr.mxu0 0.0
        %2341 = vmatpush1.msra.mxu0 0.0
        %2342 = vmatprep.subr.mxu0 0.0
        %2343 = vmatpush1.msra.mxu0 0.0
        %2344 = vmatprep.subr.mxu0 0.0
        %2345 = vmatpush1.msra.mxu0 0.0
        %2346 = vmatprep.subr.mxu0 0.0
        %2347 = vmatpush1.msra.mxu0 0.0
        %2348 = vmatprep.subr.mxu0 0.0
        %2349 = vmatpush1.msra.mxu0 0.0
        %2350 = vmatprep.subr.mxu0 0.0
        %2351 = vmatpush1.msra.mxu0 0.0
        %2352 = vmatprep.subr.mxu0 0.0
        %2353 = vmatpush1.msra.mxu0 0.0
        %2354 = vmatprep.subr.mxu0 0.0
        %2355 = vmatpush1.msra.mxu0 0.0
        %2356 = vmatprep.subr.mxu0 0.0
        %2357 = vmatpush1.msra.mxu0 0.0
        %2358 = vmatprep.subr.mxu0 0.0
        %2359 = vmatpush1.msra.mxu0 0.0
        %2360 = vmatprep.subr.mxu0 0.0
        %2361 = vmatpush1.msra.mxu0 0.0
        %2362 = vmatprep.subr.mxu0 0.0
        %2363 = vmatpush1.msra.mxu0 0.0
        %2364 = vmatprep.subr.mxu0 0.0
        %2365 = vmatpush1.msra.mxu0 0.0
        %2366 = vmatprep.subr.mxu0 0.0
        %2367 = vmatpush1.msra.mxu0 0.0
        %2368 = vmatprep.subr.mxu0 0.0
        %2369 = vmatpush1.msra.mxu0 0.0
        %2370 = vmatprep.subr.mxu0 0.0
        %2371 = vmatpush1.msra.mxu0 0.0
        %2372 = vmatprep.subr.mxu0 0.0
        %2373 = vmatpush1.msra.mxu0 0.0
        %2374 = vmatprep.subr.mxu0 0.0
        %2375 = vmatpush1.msra.mxu0 0.0
        %2376 = vmatprep.subr.mxu0 0.0
        %2377 = vmatpush1.msra.mxu0 0.0
        %2378 = vmatprep.subr.mxu0 0.0
        %2379 = vmatpush1.msra.mxu0 0.0
        %2380 = vmatprep.subr.mxu0 0.0
        %2381 = vmatpush1.msra.mxu0 0.0
        %2382 = vmatprep.subr.mxu0 0.0
        %2383 = vmatpush1.msra.mxu0 0.0
        %2384 = vmatprep.subr.mxu0 0.0
        %2385 = vmatpush1.msra.mxu0 0.0
        %2386 = vmatprep.subr.mxu0 0.0
        %2387 = vmatpush1.msra.mxu0 0.0
        %2388 = vmatprep.mubr.f32.mxu0 0.0
        %2389 = vmatmul.mubr.f32.gmra.mrb[0].mxu0 %v2307
        %v2390 = vpop.f32.mrb[0].mxu0
        %v2391 = vadd.f32 0.0, %v2390
        %v2392 = vpop.f32.mrb[0].mxu0
        %v2393 = vadd.f32 0.0, %v2392
        %2394 = vmatprep.mubr.f32.mxu0 0.0
        %2395 = vmatmul.mubr.f32.gmra.mrb[0].mxu0 %v2310
        %v2396 = vpop.f32.mrb[0].mxu0
        %v2397 = vadd.f32 0.0, %v2396
        %v2398 = vpop.f32.mrb[0].mxu0
        %v2399 = vadd.f32 0.0, %v2398
        %2400 = vmatprep.mubr.f32.mxu0 0.0
        %2401 = vmatmul.mubr.f32.gmra.mrb[0].mxu0 %v2313
        %v2402 = vpop.f32.mrb[0].mxu0
        %v2403 = vadd.f32 0.0, %v2402
        %v2404 = vpop.f32.mrb[0].mxu0
        %v2405 = vadd.f32 0.0, %v2404
        %2406 = vmatprep.mubr.f32.mxu0 0.0
        %2407 = vmatmul.mubr.f32.gmra.mrb[0].mxu0 %v2316
        %v2408 = vpop.f32.mrb[0].mxu0
        %v2409 = vadd.f32 0.0, %v2408
        %v2410 = vpop.f32.mrb[0].mxu0
        %v2411 = vadd.f32 0.0, %v2410
        %2412 = vmatprep.mubr.f32.mxu0 0.0
        %2413 = vmatmul.mubr.f32.gmra.mrb[0].mxu0 %v2319
        %v2414 = vpop.f32.mrb[0].mxu0
        %v2415 = vadd.f32 0.0, %v2414
        %v2416 = vpop.f32.mrb[0].mxu0
        %v2417 = vadd.f32 0.0, %v2416
        %2418 = vmatprep.mubr.f32.mxu0 0.0
        %2419 = vmatmul.mubr.f32.gmra.mrb[0].mxu0 %v2322
        %v2420 = vpop.f32.mrb[0].mxu0
        %v2421 = vadd.f32 0.0, %v2420
        %v2422 = vpop.f32.mrb[0].mxu0
        %v2423 = vadd.f32 0.0, %v2422
        %2424 = vdwg.mxu0
        %2425 = vmatprep.subr.mxu0 %v2276
        %2426 = vmatpush1.msra.mxu0 %v2275
        %2427 = vmatprep.subr.mxu0 %v2284
        %2428 = vmatpush1.msra.mxu0 %v2283
        %2429 = vmatprep.subr.mxu0 %v2292
        %2430 = vmatpush1.msra.mxu0 %v2291
        %2431 = vmatprep.subr.mxu0 %v2300
        %2432 = vmatpush1.msra.mxu0 %v2299
        %2433 = vmatprep.subr.mxu0 0.0
        %2434 = vmatpush1.msra.mxu0 0.0
        %2435 = vmatprep.subr.mxu0 0.0
        %2436 = vmatpush1.msra.mxu0 0.0
        %2437 = vmatprep.subr.mxu0 0.0
        %2438 = vmatpush1.msra.mxu0 0.0
        %2439 = vmatprep.subr.mxu0 0.0
        %2440 = vmatpush1.msra.mxu0 0.0
        %2441 = vmatprep.subr.mxu0 0.0
        %2442 = vmatpush1.msra.mxu0 0.0
        %2443 = vmatprep.subr.mxu0 0.0
        %2444 = vmatpush1.msra.mxu0 0.0
        %2445 = vmatprep.subr.mxu0 0.0
        %2446 = vmatpush1.msra.mxu0 0.0
        %2447 = vmatprep.subr.mxu0 0.0
        %2448 = vmatpush1.msra.mxu0 0.0
        %2449 = vmatprep.subr.mxu0 0.0
        %2450 = vmatpush1.msra.mxu0 0.0
        %2451 = vmatprep.subr.mxu0 0.0
        %2452 = vmatpush1.msra.mxu0 0.0
        %2453 = vmatprep.subr.mxu0 0.0
        %2454 = vmatpush1.msra.mxu0 0.0
        %2455 = vmatprep.subr.mxu0 0.0
        %2456 = vmatpush1.msra.mxu0 0.0
        %2457 = vmatprep.subr.mxu0 0.0
        %2458 = vmatpush1.msra.mxu0 0.0
        %2459 = vmatprep.subr.mxu0 0.0
        %2460 = vmatpush1.msra.mxu0 0.0
        %2461 = vmatprep.subr.mxu0 0.0
        %2462 = vmatpush1.msra.mxu0 0.0
        %2463 = vmatprep.subr.mxu0 0.0
        %2464 = vmatpush1.msra.mxu0 0.0
        %2465 = vmatprep.subr.mxu0 0.0
        %2466 = vmatpush1.msra.mxu0 0.0
        %2467 = vmatprep.subr.mxu0 0.0
        %2468 = vmatpush1.msra.mxu0 0.0
        %2469 = vmatprep.subr.mxu0 0.0
        %2470 = vmatpush1.msra.mxu0 0.0
        %2471 = vmatprep.subr.mxu0 0.0
        %2472 = vmatpush1.msra.mxu0 0.0
        %2473 = vmatprep.subr.mxu0 0.0
        %2474 = vmatpush1.msra.mxu0 0.0
        %2475 = vmatprep.subr.mxu0 0.0
        %2476 = vmatpush1.msra.mxu0 0.0
        %2477 = vmatprep.subr.mxu0 0.0
        %2478 = vmatpush1.msra.mxu0 0.0
        %2479 = vmatprep.subr.mxu0 0.0
        %2480 = vmatpush1.msra.mxu0 0.0
        %2481 = vmatprep.subr.mxu0 0.0
        %2482 = vmatpush1.msra.mxu0 0.0
        %2483 = vmatprep.subr.mxu0 0.0
        %2484 = vmatpush1.msra.mxu0 0.0
        %2485 = vmatprep.subr.mxu0 0.0
        %2486 = vmatpush1.msra.mxu0 0.0
        %2487 = vmatprep.subr.mxu0 0.0
        %2488 = vmatpush1.msra.mxu0 0.0
        %2489 = vmatprep.mubr.f32.mxu0 0.0
        %2490 = vmatmul.mubr.f32.gmra.mrb[0].mxu0 %v2307
        %v2491 = vpop.f32.mrb[0].mxu0
        %v2492 = vadd.f32 0.0, %v2491
        %v2493 = vpop.f32.mrb[0].mxu0
        %v2494 = vadd.f32 0.0, %v2493
        %2495 = vmatprep.mubr.f32.mxu0 0.0
        %2496 = vmatmul.mubr.f32.gmra.mrb[0].mxu0 %v2310
        %v2497 = vpop.f32.mrb[0].mxu0
        %v2498 = vadd.f32 0.0, %v2497
        %v2499 = vpop.f32.mrb[0].mxu0
        %v2500 = vadd.f32 0.0, %v2499
        %2501 = vmatprep.mubr.f32.mxu0 0.0
        %2502 = vmatmul.mubr.f32.gmra.mrb[0].mxu0 %v2313
        %v2503 = vpop.f32.mrb[0].mxu0
        %v2504 = vadd.f32 0.0, %v2503
        %v2505 = vpop.f32.mrb[0].mxu0
        %v2506 = vadd.f32 0.0, %v2505
        %2507 = vmatprep.mubr.f32.mxu0 0.0
        %2508 = vmatmul.mubr.f32.gmra.mrb[0].mxu0 %v2316
        %v2509 = vpop.f32.mrb[0].mxu0
        %v2510 = vadd.f32 0.0, %v2509
        %v2511 = vpop.f32.mrb[0].mxu0
        %v2512 = vadd.f32 0.0, %v2511
        %2513 = vmatprep.mubr.f32.mxu0 0.0
        %2514 = vmatmul.mubr.f32.gmra.mrb[0].mxu0 %v2319
        %v2515 = vpop.f32.mrb[0].mxu0
        %v2516 = vadd.f32 0.0, %v2515
        %v2517 = vpop.f32.mrb[0].mxu0
        %v2518 = vadd.f32 0.0, %v2517
        %2519 = vmatprep.mubr.f32.mxu0 0.0
        %2520 = vmatmul.mubr.f32.gmra.mrb[0].mxu0 %v2322
        %v2521 = vpop.f32.mrb[0].mxu0
        %v2522 = vadd.f32 0.0, %v2521
        %v2523 = vpop.f32.mrb[0].mxu0
        %v2524 = vadd.f32 0.0, %v2523
        %2525 = vdwg.mxu0
        %2526 = vmatprep.subr.mxu0 %v2278
        %2527 = vmatpush1.msra.mxu0 %v2277
        %2528 = vmatprep.subr.mxu0 %v2286
        %2529 = vmatpush1.msra.mxu0 %v2285
        %2530 = vmatprep.subr.mxu0 %v2294
        %2531 = vmatpush1.msra.mxu0 %v2293
        %2532 = vmatprep.subr.mxu0 %v2302
        %2533 = vmatpush1.msra.mxu0 %v2301
        %2534 = vmatprep.subr.mxu0 0.0
        %2535 = vmatpush1.msra.mxu0 0.0
        %2536 = vmatprep.subr.mxu0 0.0
        %2537 = vmatpush1.msra.mxu0 0.0
        %2538 = vmatprep.subr.mxu0 0.0
        %2539 = vmatpush1.msra.mxu0 0.0
        %2540 = vmatprep.subr.mxu0 0.0
        %2541 = vmatpush1.msra.mxu0 0.0
        %2542 = vmatprep.subr.mxu0 0.0
        %2543 = vmatpush1.msra.mxu0 0.0
        %2544 = vmatprep.subr.mxu0 0.0
        %2545 = vmatpush1.msra.mxu0 0.0
        %2546 = vmatprep.subr.mxu0 0.0
        %2547 = vmatpush1.msra.mxu0 0.0
        %2548 = vmatprep.subr.mxu0 0.0
        %2549 = vmatpush1.msra.mxu0 0.0
        %2550 = vmatprep.subr.mxu0 0.0
        %2551 = vmatpush1.msra.mxu0 0.0
        %2552 = vmatprep.subr.mxu0 0.0
        %2553 = vmatpush1.msra.mxu0 0.0
        %2554 = vmatprep.subr.mxu0 0.0
        %2555 = vmatpush1.msra.mxu0 0.0
        %2556 = vmatprep.subr.mxu0 0.0
        %2557 = vmatpush1.msra.mxu0 0.0
        %2558 = vmatprep.subr.mxu0 0.0
        %2559 = vmatpush1.msra.mxu0 0.0
        %2560 = vmatprep.subr.mxu0 0.0
        %2561 = vmatpush1.msra.mxu0 0.0
        %2562 = vmatprep.subr.mxu0 0.0
        %2563 = vmatpush1.msra.mxu0 0.0
        %2564 = vmatprep.subr.mxu0 0.0
        %2565 = vmatpush1.msra.mxu0 0.0
        %2566 = vmatprep.subr.mxu0 0.0
        %2567 = vmatpush1.msra.mxu0 0.0
        %2568 = vmatprep.subr.mxu0 0.0
        %2569 = vmatpush1.msra.mxu0 0.0
        %2570 = vmatprep.subr.mxu0 0.0
        %2571 = vmatpush1.msra.mxu0 0.0
        %2572 = vmatprep.subr.mxu0 0.0
        %2573 = vmatpush1.msra.mxu0 0.0
        %2574 = vmatprep.subr.mxu0 0.0
        %2575 = vmatpush1.msra.mxu0 0.0
        %2576 = vmatprep.subr.mxu0 0.0
        %2577 = vmatpush1.msra.mxu0 0.0
        %2578 = vmatprep.subr.mxu0 0.0
        %2579 = vmatpush1.msra.mxu0 0.0
        %2580 = vmatprep.subr.mxu0 0.0
        %2581 = vmatpush1.msra.mxu0 0.0
        %2582 = vmatprep.subr.mxu0 0.0
        %2583 = vmatpush1.msra.mxu0 0.0
        %2584 = vmatprep.subr.mxu0 0.0
        %2585 = vmatpush1.msra.mxu0 0.0
        %2586 = vmatprep.subr.mxu0 0.0
        %2587 = vmatpush1.msra.mxu0 0.0
        %2588 = vmatprep.subr.mxu0 0.0
        %2589 = vmatpush1.msra.mxu0 0.0
        %2590 = vmatprep.mubr.f32.mxu0 0.0
        %2591 = vmatmul.mubr.f32.gmra.mrb[0].mxu0 %v2307
        %v2592 = vpop.f32.mrb[0].mxu0
        %v2593 = vadd.f32 0.0, %v2592
        %v2594 = vpop.f32.mrb[0].mxu0
        %v2595 = vadd.f32 0.0, %v2594
        %2596 = vmatprep.mubr.f32.mxu0 0.0
        %2597 = vmatmul.mubr.f32.gmra.mrb[0].mxu0 %v2310
        %v2598 = vpop.f32.mrb[0].mxu0
        %v2599 = vadd.f32 0.0, %v2598
        %v2600 = vpop.f32.mrb[0].mxu0
        %v2601 = vadd.f32 0.0, %v2600
        %2602 = vmatprep.mubr.f32.mxu0 0.0
        %2603 = vmatmul.mubr.f32.gmra.mrb[0].mxu0 %v2313
        %v2604 = vpop.f32.mrb[0].mxu0
        %v2605 = vadd.f32 0.0, %v2604
        %v2606 = vpop.f32.mrb[0].mxu0
        %v2607 = vadd.f32 0.0, %v2606
        %2608 = vmatprep.mubr.f32.mxu0 0.0
        %2609 = vmatmul.mubr.f32.gmra.mrb[0].mxu0 %v2316
        %v2610 = vpop.f32.mrb[0].mxu0
        %v2611 = vadd.f32 0.0, %v2610
        %v2612 = vpop.f32.mrb[0].mxu0
        %v2613 = vadd.f32 0.0, %v2612
        %2614 = vmatprep.mubr.f32.mxu0 0.0
        %2615 = vmatmul.mubr.f32.gmra.mrb[0].mxu0 %v2319
        %v2616 = vpop.f32.mrb[0].mxu0
        %v2617 = vadd.f32 0.0, %v2616
        %v2618 = vpop.f32.mrb[0].mxu0
        %v2619 = vadd.f32 0.0, %v2618
        %2620 = vmatprep.mubr.f32.mxu0 0.0
        %2621 = vmatmul.mubr.f32.gmra.mrb[0].mxu0 %v2322
        %v2622 = vpop.f32.mrb[0].mxu0
        %v2623 = vadd.f32 0.0, %v2622
        %v2624 = vpop.f32.mrb[0].mxu0
        %v2625 = vadd.f32 0.0, %v2624
        %2626 = vdwg.mxu0
        %2627 = vmatprep.subr.mxu0 %v2280
        %2628 = vmatpush1.msra.mxu0 %v2279
        %2629 = vmatprep.subr.mxu0 %v2288
        %2630 = vmatpush1.msra.mxu0 %v2287
        %2631 = vmatprep.subr.mxu0 %v2296
        %2632 = vmatpush1.msra.mxu0 %v2295
        %2633 = vmatprep.subr.mxu0 %v2304
        %2634 = vmatpush1.msra.mxu0 %v2303
        %2635 = vmatprep.subr.mxu0 0.0
        %2636 = vmatpush1.msra.mxu0 0.0
        %2637 = vmatprep.subr.mxu0 0.0
        %2638 = vmatpush1.msra.mxu0 0.0
        %2639 = vmatprep.subr.mxu0 0.0
        %2640 = vmatpush1.msra.mxu0 0.0
        %2641 = vmatprep.subr.mxu0 0.0
        %2642 = vmatpush1.msra.mxu0 0.0
        %2643 = vmatprep.subr.mxu0 0.0
        %2644 = vmatpush1.msra.mxu0 0.0
        %2645 = vmatprep.subr.mxu0 0.0
        %2646 = vmatpush1.msra.mxu0 0.0
        %2647 = vmatprep.subr.mxu0 0.0
        %2648 = vmatpush1.msra.mxu0 0.0
        %2649 = vmatprep.subr.mxu0 0.0
        %2650 = vmatpush1.msra.mxu0 0.0
        %2651 = vmatprep.subr.mxu0 0.0
        %2652 = vmatpush1.msra.mxu0 0.0
        %2653 = vmatprep.subr.mxu0 0.0
        %2654 = vmatpush1.msra.mxu0 0.0
        %2655 = vmatprep.subr.mxu0 0.0
        %2656 = vmatpush1.msra.mxu0 0.0
        %2657 = vmatprep.subr.mxu0 0.0
        %2658 = vmatpush1.msra.mxu0 0.0
        %2659 = vmatprep.subr.mxu0 0.0
        %2660 = vmatpush1.msra.mxu0 0.0
        %2661 = vmatprep.subr.mxu0 0.0
        %2662 = vmatpush1.msra.mxu0 0.0
        %2663 = vmatprep.subr.mxu0 0.0
        %2664 = vmatpush1.msra.mxu0 0.0
        %2665 = vmatprep.subr.mxu0 0.0
        %2666 = vmatpush1.msra.mxu0 0.0
        %2667 = vmatprep.subr.mxu0 0.0
        %2668 = vmatpush1.msra.mxu0 0.0
        %2669 = vmatprep.subr.mxu0 0.0
        %2670 = vmatpush1.msra.mxu0 0.0
        %2671 = vmatprep.subr.mxu0 0.0
        %2672 = vmatpush1.msra.mxu0 0.0
        %2673 = vmatprep.subr.mxu0 0.0
        %2674 = vmatpush1.msra.mxu0 0.0
        %2675 = vmatprep.subr.mxu0 0.0
        %2676 = vmatpush1.msra.mxu0 0.0
        %2677 = vmatprep.subr.mxu0 0.0
        %2678 = vmatpush1.msra.mxu0 0.0
        %2679 = vmatprep.subr.mxu0 0.0
        %2680 = vmatpush1.msra.mxu0 0.0
        %2681 = vmatprep.subr.mxu0 0.0
        %2682 = vmatpush1.msra.mxu0 0.0
        %2683 = vmatprep.subr.mxu0 0.0
        %2684 = vmatpush1.msra.mxu0 0.0
        %2685 = vmatprep.subr.mxu0 0.0
        %2686 = vmatpush1.msra.mxu0 0.0
        %2687 = vmatprep.subr.mxu0 0.0
        %2688 = vmatpush1.msra.mxu0 0.0
        %2689 = vmatprep.subr.mxu0 0.0
        %2690 = vmatpush1.msra.mxu0 0.0
        %2691 = vmatprep.mubr.f32.mxu0 0.0
        %2692 = vmatmul.mubr.f32.gmra.mrb[0].mxu0 %v2307
        %v2693 = vpop.f32.mrb[0].mxu0
        %v2694 = vadd.f32 0.0, %v2693
        %v2695 = vpop.f32.mrb[0].mxu0
        %v2696 = vadd.f32 0.0, %v2695
        %2697 = vmatprep.mubr.f32.mxu0 0.0
        %2698 = vmatmul.mubr.f32.gmra.mrb[0].mxu0 %v2310
        %v2699 = vpop.f32.mrb[0].mxu0
        %v2700 = vadd.f32 0.0, %v2699
        %v2701 = vpop.f32.mrb[0].mxu0
        %v2702 = vadd.f32 0.0, %v2701
        %2703 = vmatprep.mubr.f32.mxu0 0.0
        %2704 = vmatmul.mubr.f32.gmra.mrb[0].mxu0 %v2313
        %v2705 = vpop.f32.mrb[0].mxu0
        %v2706 = vadd.f32 0.0, %v2705
        %v2707 = vpop.f32.mrb[0].mxu0
        %v2708 = vadd.f32 0.0, %v2707
        %2709 = vmatprep.mubr.f32.mxu0 0.0
        %2710 = vmatmul.mubr.f32.gmra.mrb[0].mxu0 %v2316
        %v2711 = vpop.f32.mrb[0].mxu0
        %v2712 = vadd.f32 0.0, %v2711
        %v2713 = vpop.f32.mrb[0].mxu0
        %v2714 = vadd.f32 0.0, %v2713
        %2715 = vmatprep.mubr.f32.mxu0 0.0
        %2716 = vmatmul.mubr.f32.gmra.mrb[0].mxu0 %v2319
        %v2717 = vpop.f32.mrb[0].mxu0
        %v2718 = vadd.f32 0.0, %v2717
        %v2719 = vpop.f32.mrb[0].mxu0
        %v2720 = vadd.f32 0.0, %v2719
        %2721 = vmatprep.mubr.f32.mxu0 0.0
        %2722 = vmatmul.mubr.f32.gmra.mrb[0].mxu0 %v2322
        %v2723 = vpop.f32.mrb[0].mxu0
        %v2724 = vadd.f32 0.0, %v2723
        %v2725 = vpop.f32.mrb[0].mxu0
        %v2726 = vadd.f32 0.0, %v2725
        %2727 = vdwg.mxu0
        %v2728 = vmul.f32 %v2391, %v721
        %v2729 = vmul.f32 %v2393, %v722
        %v2730 = vmul.f32 %v2492, %v723
        %v2731 = vmul.f32 %v2494, %v724
        %v2732 = vmul.f32 %v2593, %v725
        %v2733 = vmul.f32 %v2595, %v726
        %v2734 = vmul.f32 %v2694, %v727
        %v2735 = vmul.f32 %v2696, %v728
        %v2736 = vmul.f32 %v2397, %v729
        %v2737 = vmul.f32 %v2399, %v730
        %v2738 = vmul.f32 %v2498, %v731
        %v2739 = vmul.f32 %v2500, %v732
        %v2740 = vmul.f32 %v2599, %v733
        %v2741 = vmul.f32 %v2601, %v734
        %v2742 = vmul.f32 %v2700, %v735
        %v2743 = vmul.f32 %v2702, %v736
        %v2744 = vmul.f32 %v2403, %v721
        %v2745 = vmul.f32 %v2405, %v722
        %v2746 = vmul.f32 %v2504, %v723
        %v2747 = vmul.f32 %v2506, %v724
        %v2748 = vmul.f32 %v2605, %v725
        %v2749 = vmul.f32 %v2607, %v726
        %v2750 = vmul.f32 %v2706, %v727
        %v2751 = vmul.f32 %v2708, %v728
        %v2752 = vmul.f32 %v2409, %v729
        %v2753 = vmul.f32 %v2411, %v730
        %v2754 = vmul.f32 %v2510, %v731
        %v2755 = vmul.f32 %v2512, %v732
        %v2756 = vmul.f32 %v2611, %v733
        %v2757 = vmul.f32 %v2613, %v734
        %v2758 = vmul.f32 %v2712, %v735
        %v2759 = vmul.f32 %v2714, %v736
        %v2760 = vmul.f32 %v2415, %v721
        %v2761 = vmul.f32 %v2417, %v722
        %v2762 = vmul.f32 %v2516, %v723
        %v2763 = vmul.f32 %v2518, %v724
        %v2764 = vmul.f32 %v2617, %v725
        %v2765 = vmul.f32 %v2619, %v726
        %v2766 = vmul.f32 %v2718, %v727
        %v2767 = vmul.f32 %v2720, %v728
        %v2768 = vmul.f32 %v2421, %v729
        %v2769 = vmul.f32 %v2423, %v730
        %v2770 = vmul.f32 %v2522, %v731
        %v2771 = vmul.f32 %v2524, %v732
        %v2772 = vmul.f32 %v2623, %v733
        %v2773 = vmul.f32 %v2625, %v734
        %v2774 = vmul.f32 %v2724, %v735
        %v2775 = vmul.f32 %v2726, %v736
        %s2776 = sld [smem:[#allocation3 + %s25]]
        %p2777 = scmp.eq.s32.totalorder %s2776, 0
        // Predicated region
        $region37: #{_lambda_.1} parent=35 // pred_check
          %p2778 = pneg %p2777
        $region38: #{_lambda_.1} parent=35 // pred_check_branch
          %2780 = sbr.rel (%p2778) target = $region40
        $region39: #{_lambda_.1} parent=35 // pred_region
          %vm2781 = vcmask 392192
          %v2783 = vsel %vm2781, %v263, 0
          %2785 = vmatprep.subr.mxu0 %v2729
          %2786 = vmatpush1.msra.mxu0 %v2728
          %2787 = vmatprep.subr.mxu0 %v2737
          %2788 = vmatpush1.msra.mxu0 %v2736
          %2789 = vmatprep.subr.mxu0 %v2745
          %2790 = vmatpush1.msra.mxu0 %v2744
          %2791 = vmatprep.subr.mxu0 %v2753
          %2792 = vmatpush1.msra.mxu0 %v2752
          %2793 = vmatprep.subr.mxu0 %v2761
          %2794 = vmatpush1.msra.mxu0 %v2760
          %2795 = vmatprep.subr.mxu0 %v2769
          %2796 = vmatpush1.msra.mxu0 %v2768
          %2797 = vmatprep.subr.mxu0 0.0
          %2798 = vmatpush1.msra.mxu0 0.0
          %2799 = vmatprep.subr.mxu0 0.0
          %2800 = vmatpush1.msra.mxu0 0.0
          %2801 = vmatprep.subr.mxu0 0.0
          %2802 = vmatpush1.msra.mxu0 0.0
          %2803 = vmatprep.subr.mxu0 0.0
          %2804 = vmatpush1.msra.mxu0 0.0
          %2805 = vmatprep.subr.mxu0 0.0
          %2806 = vmatpush1.msra.mxu0 0.0
          %2807 = vmatprep.subr.mxu0 0.0
          %2808 = vmatpush1.msra.mxu0 0.0
          %2809 = vmatprep.subr.mxu0 0.0
          %2810 = vmatpush1.msra.mxu0 0.0
          %2811 = vmatprep.subr.mxu0 0.0
          %2812 = vmatpush1.msra.mxu0 0.0
          %2813 = vmatprep.subr.mxu0 0.0
          %2814 = vmatpush1.msra.mxu0 0.0
          %2815 = vmatprep.subr.mxu0 0.0
          %2816 = vmatpush1.msra.mxu0 0.0
          %2817 = vmatprep.subr.mxu0 0.0
          %2818 = vmatpush1.msra.mxu0 0.0
          %2819 = vmatprep.subr.mxu0 0.0
          %2820 = vmatpush1.msra.mxu0 0.0
          %2821 = vmatprep.subr.mxu0 0.0
          %2822 = vmatpush1.msra.mxu0 0.0
          %2823 = vmatprep.subr.mxu0 0.0
          %2824 = vmatpush1.msra.mxu0 0.0
          %2825 = vmatprep.subr.mxu0 0.0
          %2826 = vmatpush1.msra.mxu0 0.0
          %2827 = vmatprep.subr.mxu0 0.0
          %2828 = vmatpush1.msra.mxu0 0.0
          %2829 = vmatprep.subr.mxu0 0.0
          %2830 = vmatpush1.msra.mxu0 0.0
          %2831 = vmatprep.subr.mxu0 0.0
          %2832 = vmatpush1.msra.mxu0 0.0
          %2833 = vmatprep.subr.mxu0 0.0
          %2834 = vmatpush1.msra.mxu0 0.0
          %2835 = vmatprep.subr.mxu0 0.0
          %2836 = vmatpush1.msra.mxu0 0.0
          %2837 = vmatprep.subr.mxu0 0.0
          %2838 = vmatpush1.msra.mxu0 0.0
          %2839 = vmatprep.subr.mxu0 0.0
          %2840 = vmatpush1.msra.mxu0 0.0
          %2841 = vmatprep.subr.mxu0 0.0
          %2842 = vmatpush1.msra.mxu0 0.0
          %2843 = vmatprep.subr.mxu0 0.0
          %2844 = vmatpush1.msra.mxu0 0.0
          %2845 = vmatprep.subr.mxu0 0.0
          %2846 = vmatpush1.msra.mxu0 0.0
          %2847 = vmatprep.subr.mxu0 0.0
          %2848 = vmatpush1.msra.mxu0 0.0
          %2849 = vmatprep.mubr.f32.mxu0 0.0
          %2850 = vmatmul.mubr.f32.gmra.mrb[0].mxu0 %v2783
          %v2851 = vpop.f32.mrb[0].mxu0
          %v2852 = vadd.f32 0.0, %v2851
          %v2853 = vpop.f32.mrb[0].mxu0
          %v2854 = vadd.f32 0.0, %v2853
          %2855 = vdwg.mxu0
          %2856 = vmatprep.subr.mxu0 %v2731
          %2857 = vmatpush1.msra.mxu0 %v2730
          %2858 = vmatprep.subr.mxu0 %v2739
          %2859 = vmatpush1.msra.mxu0 %v2738
          %2860 = vmatprep.subr.mxu0 %v2747
          %2861 = vmatpush1.msra.mxu0 %v2746
          %2862 = vmatprep.subr.mxu0 %v2755
          %2863 = vmatpush1.msra.mxu0 %v2754
          %2864 = vmatprep.subr.mxu0 %v2763
          %2865 = vmatpush1.msra.mxu0 %v2762
          %2866 = vmatprep.subr.mxu0 %v2771
          %2867 = vmatpush1.msra.mxu0 %v2770
          %2868 = vmatprep.subr.mxu0 0.0
          %2869 = vmatpush1.msra.mxu0 0.0
          %2870 = vmatprep.subr.mxu0 0.0
          %2871 = vmatpush1.msra.mxu0 0.0
          %2872 = vmatprep.subr.mxu0 0.0
          %2873 = vmatpush1.msra.mxu0 0.0
          %2874 = vmatprep.subr.mxu0 0.0
          %2875 = vmatpush1.msra.mxu0 0.0
          %2876 = vmatprep.subr.mxu0 0.0
          %2877 = vmatpush1.msra.mxu0 0.0
          %2878 = vmatprep.subr.mxu0 0.0
          %2879 = vmatpush1.msra.mxu0 0.0
          %2880 = vmatprep.subr.mxu0 0.0
          %2881 = vmatpush1.msra.mxu0 0.0
          %2882 = vmatprep.subr.mxu0 0.0
          %2883 = vmatpush1.msra.mxu0 0.0
          %2884 = vmatprep.subr.mxu0 0.0
          %2885 = vmatpush1.msra.mxu0 0.0
          %2886 = vmatprep.subr.mxu0 0.0
          %2887 = vmatpush1.msra.mxu0 0.0
          %2888 = vmatprep.subr.mxu0 0.0
          %2889 = vmatpush1.msra.mxu0 0.0
          %2890 = vmatprep.subr.mxu0 0.0
          %2891 = vmatpush1.msra.mxu0 0.0
          %2892 = vmatprep.subr.mxu0 0.0
          %2893 = vmatpush1.msra.mxu0 0.0
          %2894 = vmatprep.subr.mxu0 0.0
          %2895 = vmatpush1.msra.mxu0 0.0
          %2896 = vmatprep.subr.mxu0 0.0
          %2897 = vmatpush1.msra.mxu0 0.0
          %2898 = vmatprep.subr.mxu0 0.0
          %2899 = vmatpush1.msra.mxu0 0.0
          %2900 = vmatprep.subr.mxu0 0.0
          %2901 = vmatpush1.msra.mxu0 0.0
          %2902 = vmatprep.subr.mxu0 0.0
          %2903 = vmatpush1.msra.mxu0 0.0
          %2904 = vmatprep.subr.mxu0 0.0
          %2905 = vmatpush1.msra.mxu0 0.0
          %2906 = vmatprep.subr.mxu0 0.0
          %2907 = vmatpush1.msra.mxu0 0.0
          %2908 = vmatprep.subr.mxu0 0.0
          %2909 = vmatpush1.msra.mxu0 0.0
          %2910 = vmatprep.subr.mxu0 0.0
          %2911 = vmatpush1.msra.mxu0 0.0
          %2912 = vmatprep.subr.mxu0 0.0
          %2913 = vmatpush1.msra.mxu0 0.0
          %2914 = vmatprep.subr.mxu0 0.0
          %2915 = vmatpush1.msra.mxu0 0.0
          %2916 = vmatprep.subr.mxu0 0.0
          %2917 = vmatpush1.msra.mxu0 0.0
          %2918 = vmatprep.subr.mxu0 0.0
          %2919 = vmatpush1.msra.mxu0 0.0
          %2920 = vmatprep.mubr.f32.mxu0 0.0
          %2921 = vmatmul.mubr.f32.gmra.mrb[0].mxu0 %v2783
          %v2922 = vpop.f32.mrb[0].mxu0
          %v2923 = vadd.f32 0.0, %v2922
          %v2924 = vpop.f32.mrb[0].mxu0
          %v2925 = vadd.f32 0.0, %v2924
          %2926 = vdwg.mxu0
          %2927 = vmatprep.subr.mxu0 %v2733
          %2928 = vmatpush1.msra.mxu0 %v2732
          %2929 = vmatprep.subr.mxu0 %v2741
          %2930 = vmatpush1.msra.mxu0 %v2740
          %2931 = vmatprep.subr.mxu0 %v2749
          %2932 = vmatpush1.msra.mxu0 %v2748
          %2933 = vmatprep.subr.mxu0 %v2757
          %2934 = vmatpush1.msra.mxu0 %v2756
          %2935 = vmatprep.subr.mxu0 %v2765
          %2936 = vmatpush1.msra.mxu0 %v2764
          %2937 = vmatprep.subr.mxu0 %v2773
          %2938 = vmatpush1.msra.mxu0 %v2772
          %2939 = vmatprep.subr.mxu0 0.0
          %2940 = vmatpush1.msra.mxu0 0.0
          %2941 = vmatprep.subr.mxu0 0.0
          %2942 = vmatpush1.msra.mxu0 0.0
          %2943 = vmatprep.subr.mxu0 0.0
          %2944 = vmatpush1.msra.mxu0 0.0
          %2945 = vmatprep.subr.mxu0 0.0
          %2946 = vmatpush1.msra.mxu0 0.0
          %2947 = vmatprep.subr.mxu0 0.0
          %2948 = vmatpush1.msra.mxu0 0.0
          %2949 = vmatprep.subr.mxu0 0.0
          %2950 = vmatpush1.msra.mxu0 0.0
          %2951 = vmatprep.subr.mxu0 0.0
          %2952 = vmatpush1.msra.mxu0 0.0
          %2953 = vmatprep.subr.mxu0 0.0
          %2954 = vmatpush1.msra.mxu0 0.0
          %2955 = vmatprep.subr.mxu0 0.0
          %2956 = vmatpush1.msra.mxu0 0.0
          %2957 = vmatprep.subr.mxu0 0.0
          %2958 = vmatpush1.msra.mxu0 0.0
          %2959 = vmatprep.subr.mxu0 0.0
          %2960 = vmatpush1.msra.mxu0 0.0
          %2961 = vmatprep.subr.mxu0 0.0
          %2962 = vmatpush1.msra.mxu0 0.0
          %2963 = vmatprep.subr.mxu0 0.0
          %2964 = vmatpush1.msra.mxu0 0.0
          %2965 = vmatprep.subr.mxu0 0.0
          %2966 = vmatpush1.msra.mxu0 0.0
          %2967 = vmatprep.subr.mxu0 0.0
          %2968 = vmatpush1.msra.mxu0 0.0
          %2969 = vmatprep.subr.mxu0 0.0
          %2970 = vmatpush1.msra.mxu0 0.0
          %2971 = vmatprep.subr.mxu0 0.0
          %2972 = vmatpush1.msra.mxu0 0.0
          %2973 = vmatprep.subr.mxu0 0.0
          %2974 = vmatpush1.msra.mxu0 0.0
          %2975 = vmatprep.subr.mxu0 0.0
          %2976 = vmatpush1.msra.mxu0 0.0
          %2977 = vmatprep.subr.mxu0 0.0
          %2978 = vmatpush1.msra.mxu0 0.0
          %2979 = vmatprep.subr.mxu0 0.0
          %2980 = vmatpush1.msra.mxu0 0.0
          %2981 = vmatprep.subr.mxu0 0.0
          %2982 = vmatpush1.msra.mxu0 0.0
          %2983 = vmatprep.subr.mxu0 0.0
          %2984 = vmatpush1.msra.mxu0 0.0
          %2985 = vmatprep.subr.mxu0 0.0
          %2986 = vmatpush1.msra.mxu0 0.0
          %2987 = vmatprep.subr.mxu0 0.0
          %2988 = vmatpush1.msra.mxu0 0.0
          %2989 = vmatprep.subr.mxu0 0.0
          %2990 = vmatpush1.msra.mxu0 0.0
          %2991 = vmatprep.mubr.f32.mxu0 0.0
          %2992 = vmatmul.mubr.f32.gmra.mrb[0].mxu0 %v2783
          %v2993 = vpop.f32.mrb[0].mxu0
          %v2994 = vadd.f32 0.0, %v2993
          %v2995 = vpop.f32.mrb[0].mxu0
          %v2996 = vadd.f32 0.0, %v2995
          %2997 = vdwg.mxu0
          %2998 = vmatprep.subr.mxu0 %v2735
          %2999 = vmatpush1.msra.mxu0 %v2734
          %3000 = vmatprep.subr.mxu0 %v2743
          %3001 = vmatpush1.msra.mxu0 %v2742
          %3002 = vmatprep.subr.mxu0 %v2751
          %3003 = vmatpush1.msra.mxu0 %v2750
          %3004 = vmatprep.subr.mxu0 %v2759
          %3005 = vmatpush1.msra.mxu0 %v2758
          %3006 = vmatprep.subr.mxu0 %v2767
          %3007 = vmatpush1.msra.mxu0 %v2766
          %3008 = vmatprep.subr.mxu0 %v2775
          %3009 = vmatpush1.msra.mxu0 %v2774
          %3010 = vmatprep.subr.mxu0 0.0
          %3011 = vmatpush1.msra.mxu0 0.0
          %3012 = vmatprep.subr.mxu0 0.0
          %3013 = vmatpush1.msra.mxu0 0.0
          %3014 = vmatprep.subr.mxu0 0.0
          %3015 = vmatpush1.msra.mxu0 0.0
          %3016 = vmatprep.subr.mxu0 0.0
          %3017 = vmatpush1.msra.mxu0 0.0
          %3018 = vmatprep.subr.mxu0 0.0
          %3019 = vmatpush1.msra.mxu0 0.0
          %3020 = vmatprep.subr.mxu0 0.0
          %3021 = vmatpush1.msra.mxu0 0.0
          %3022 = vmatprep.subr.mxu0 0.0
          %3023 = vmatpush1.msra.mxu0 0.0
          %3024 = vmatprep.subr.mxu0 0.0
          %3025 = vmatpush1.msra.mxu0 0.0
          %3026 = vmatprep.subr.mxu0 0.0
          %3027 = vmatpush1.msra.mxu0 0.0
          %3028 = vmatprep.subr.mxu0 0.0
          %3029 = vmatpush1.msra.mxu0 0.0
          %3030 = vmatprep.subr.mxu0 0.0
          %3031 = vmatpush1.msra.mxu0 0.0
          %3032 = vmatprep.subr.mxu0 0.0
          %3033 = vmatpush1.msra.mxu0 0.0
          %3034 = vmatprep.subr.mxu0 0.0
          %3035 = vmatpush1.msra.mxu0 0.0
          %3036 = vmatprep.subr.mxu0 0.0
          %3037 = vmatpush1.msra.mxu0 0.0
          %3038 = vmatprep.subr.mxu0 0.0
          %3039 = vmatpush1.msra.mxu0 0.0
          %3040 = vmatprep.subr.mxu0 0.0
          %3041 = vmatpush1.msra.mxu0 0.0
          %3042 = vmatprep.subr.mxu0 0.0
          %3043 = vmatpush1.msra.mxu0 0.0
          %3044 = vmatprep.subr.mxu0 0.0
          %3045 = vmatpush1.msra.mxu0 0.0
          %3046 = vmatprep.subr.mxu0 0.0
          %3047 = vmatpush1.msra.mxu0 0.0
          %3048 = vmatprep.subr.mxu0 0.0
          %3049 = vmatpush1.msra.mxu0 0.0
          %3050 = vmatprep.subr.mxu0 0.0
          %3051 = vmatpush1.msra.mxu0 0.0
          %3052 = vmatprep.subr.mxu0 0.0
          %3053 = vmatpush1.msra.mxu0 0.0
          %3054 = vmatprep.subr.mxu0 0.0
          %3055 = vmatpush1.msra.mxu0 0.0
          %3056 = vmatprep.subr.mxu0 0.0
          %3057 = vmatpush1.msra.mxu0 0.0
          %3058 = vmatprep.subr.mxu0 0.0
          %3059 = vmatpush1.msra.mxu0 0.0
          %3060 = vmatprep.subr.mxu0 0.0
          %3061 = vmatpush1.msra.mxu0 0.0
          %3062 = vmatprep.mubr.f32.mxu0 0.0
          %3063 = vmatmul.mubr.f32.gmra.mrb[0].mxu0 %v2783
          %v3064 = vpop.f32.mrb[0].mxu0
          %v3065 = vadd.f32 0.0, %v3064
          %v3066 = vpop.f32.mrb[0].mxu0
          %v3067 = vadd.f32 0.0, %v3066
          %3068 = vdwg.mxu0
          %v3069 = vlaneseq
          %v3070 = vshrl.u32 %v3069, 7
          %v3071 = vsub.s32 7, %v3070
          %v3072 = vrot.slane %v214, %v3071
          %v3073 = vlaneseq
          %v3074 = vshrl.u32 %v3073, 7
          %v3075 = vsub.s32 7, %v3074
          %v3076 = vrot.slane %v215, %v3075
          %v3077 = vlaneseq
          %v3078 = vshrl.u32 %v3077, 7
          %v3079 = vsub.s32 7, %v3078
          %v3080 = vrot.slane %v216, %v3079
          %v3081 = vlaneseq
          %v3082 = vshrl.u32 %v3081, 7
          %v3083 = vsub.s32 7, %v3082
          %v3084 = vrot.slane %v217, %v3083
          %v3085 = vlaneseq
          %v3086 = vshrl.u32 %v3085, 7
          %v3087 = vsub.s32 7, %v3086
          %v3088 = vrot.slane %v218, %v3087
          %v3089 = vlaneseq
          %v3090 = vshrl.u32 %v3089, 7
          %v3091 = vsub.s32 7, %v3090
          %v3092 = vrot.slane %v219, %v3091
          %v3093 = vlaneseq
          %v3094 = vshrl.u32 %v3093, 7
          %v3095 = vsub.s32 7, %v3094
          %v3096 = vrot.slane %v220, %v3095
          %v3097 = vlaneseq
          %v3098 = vshrl.u32 %v3097, 7
          %v3099 = vsub.s32 7, %v3098
          %v3100 = vrot.slane %v221, %v3099
          %v3101 = vmul.f32 %v2852, %v3072
          %v3102 = vmul.f32 %v2854, %v3076
          %v3103 = vmul.f32 %v2923, %v3080
          %v3104 = vmul.f32 %v2925, %v3084
          %v3105 = vmul.f32 %v2994, %v3088
          %v3106 = vmul.f32 %v2996, %v3092
          %v3107 = vmul.f32 %v3065, %v3096
          %v3108 = vmul.f32 %v3067, %v3100
          %vm3109 = vcmp.gt.f32.partialorder %v206, 0.625
          %vm3110 = vcmp.gt.f32.partialorder %v207, 0.625
          %vm3111 = vcmp.gt.f32.partialorder %v208, 0.625
          %vm3112 = vcmp.gt.f32.partialorder %v209, 0.625
          %vm3113 = vcmp.gt.f32.partialorder %v210, 0.625
          %vm3114 = vcmp.gt.f32.partialorder %v211, 0.625
          %vm3115 = vcmp.gt.f32.partialorder %v212, 0.625
          %vm3116 = vcmp.gt.f32.partialorder %v213, 0.625
          %v3117 = vsel %vm3109, 1, 0
          %v3118 = vsel %vm3110, 1, 0
          %v3119 = vsel %vm3111, 1, 0
          %v3120 = vsel %vm3112, 1, 0
          %v3121 = vsel %vm3113, 1, 0
          %v3122 = vsel %vm3114, 1, 0
          %v3123 = vsel %vm3115, 1, 0
          %v3124 = vsel %vm3116, 1, 0
          %v3125 = vlaneseq
          %v3126 = vshrl.u32 %v3125, 7
          %v3127 = vsub.s32 6, %v3126
          %v3128 = vrot.slane %v3117, %v3127
          %v3129 = vlaneseq
          %v3130 = vshrl.u32 %v3129, 7
          %v3131 = vsub.s32 6, %v3130
          %v3132 = vrot.slane %v3118, %v3131
          %v3133 = vlaneseq
          %v3134 = vshrl.u32 %v3133, 7
          %v3135 = vsub.s32 6, %v3134
          %v3136 = vrot.slane %v3119, %v3135
          %v3137 = vlaneseq
          %v3138 = vshrl.u32 %v3137, 7
          %v3139 = vsub.s32 6, %v3138
          %v3140 = vrot.slane %v3120, %v3139
          %v3141 = vlaneseq
          %v3142 = vshrl.u32 %v3141, 7
          %v3143 = vsub.s32 6, %v3142
          %v3144 = vrot.slane %v3121, %v3143
          %v3145 = vlaneseq
          %v3146 = vshrl.u32 %v3145, 7
          %v3147 = vsub.s32 6, %v3146
          %v3148 = vrot.slane %v3122, %v3147
          %v3149 = vlaneseq
          %v3150 = vshrl.u32 %v3149, 7
          %v3151 = vsub.s32 6, %v3150
          %v3152 = vrot.slane %v3123, %v3151
          %v3153 = vlaneseq
          %v3154 = vshrl.u32 %v3153, 7
          %v3155 = vsub.s32 6, %v3154
          %v3156 = vrot.slane %v3124, %v3155
          %vm3157 = vcmp.eq.s32.totalorder %v3128, 1
          %vm3158 = vcmp.eq.s32.totalorder %v3132, 1
          %vm3159 = vcmp.eq.s32.totalorder %v3136, 1
          %vm3160 = vcmp.eq.s32.totalorder %v3140, 1
          %vm3161 = vcmp.eq.s32.totalorder %v3144, 1
          %vm3162 = vcmp.eq.s32.totalorder %v3148, 1
          %vm3163 = vcmp.eq.s32.totalorder %v3152, 1
          %vm3164 = vcmp.eq.s32.totalorder %v3156, 1
          %3166 = vset.pattern.permute.xlu0 1
          %3167 = vperm.xlu0 %3166, %v264
          %v3168 = vpop.permute.xlu0 %3167
          %v3170 = vsel %vm3157, %v3168, %v3101
          %v3171 = vsel %vm3158, %v3168, %v3102
          %v3172 = vsel %vm3159, %v3168, %v3103
          %v3173 = vsel %vm3160, %v3168, %v3104
          %v3174 = vsel %vm3161, %v3168, %v3105
          %v3175 = vsel %vm3162, %v3168, %v3106
          %v3176 = vsel %vm3163, %v3168, %v3107
          %v3177 = vsel %vm3164, %v3168, %v3108
          %vm3178 = vcmp.lt.f32.partialorder %v206, -0.625
          %vm3179 = vcmp.lt.f32.partialorder %v207, -0.625
          %vm3180 = vcmp.lt.f32.partialorder %v208, -0.625
          %vm3181 = vcmp.lt.f32.partialorder %v209, -0.625
          %vm3182 = vcmp.lt.f32.partialorder %v210, -0.625
          %vm3183 = vcmp.lt.f32.partialorder %v211, -0.625
          %vm3184 = vcmp.lt.f32.partialorder %v212, -0.625
          %vm3185 = vcmp.lt.f32.partialorder %v213, -0.625
          %v3186 = vsel %vm3178, 1, 0
          %v3187 = vsel %vm3179, 1, 0
          %v3188 = vsel %vm3180, 1, 0
          %v3189 = vsel %vm3181, 1, 0
          %v3190 = vsel %vm3182, 1, 0
          %v3191 = vsel %vm3183, 1, 0
          %v3192 = vsel %vm3184, 1, 0
          %v3193 = vsel %vm3185, 1, 0
          %v3194 = vlaneseq
          %v3195 = vshrl.u32 %v3194, 7
          %v3196 = vsub.s32 6, %v3195
          %v3197 = vrot.slane %v3186, %v3196
          %v3198 = vlaneseq
          %v3199 = vshrl.u32 %v3198, 7
          %v3200 = vsub.s32 6, %v3199
          %v3201 = vrot.slane %v3187, %v3200
          %v3202 = vlaneseq
          %v3203 = vshrl.u32 %v3202, 7
          %v3204 = vsub.s32 6, %v3203
          %v3205 = vrot.slane %v3188, %v3204
          %v3206 = vlaneseq
          %v3207 = vshrl.u32 %v3206, 7
          %v3208 = vsub.s32 6, %v3207
          %v3209 = vrot.slane %v3189, %v3208
          %v3210 = vlaneseq
          %v3211 = vshrl.u32 %v3210, 7
          %v3212 = vsub.s32 6, %v3211
          %v3213 = vrot.slane %v3190, %v3212
          %v3214 = vlaneseq
          %v3215 = vshrl.u32 %v3214, 7
          %v3216 = vsub.s32 6, %v3215
          %v3217 = vrot.slane %v3191, %v3216
          %v3218 = vlaneseq
          %v3219 = vshrl.u32 %v3218, 7
          %v3220 = vsub.s32 6, %v3219
          %v3221 = vrot.slane %v3192, %v3220
          %v3222 = vlaneseq
          %v3223 = vshrl.u32 %v3222, 7
          %v3224 = vsub.s32 6, %v3223
          %v3225 = vrot.slane %v3193, %v3224
          %vm3226 = vcmp.eq.s32.totalorder %v3197, 1
          %vm3227 = vcmp.eq.s32.totalorder %v3201, 1
          %vm3228 = vcmp.eq.s32.totalorder %v3205, 1
          %vm3229 = vcmp.eq.s32.totalorder %v3209, 1
          %vm3230 = vcmp.eq.s32.totalorder %v3213, 1
          %vm3231 = vcmp.eq.s32.totalorder %v3217, 1
          %vm3232 = vcmp.eq.s32.totalorder %v3221, 1
          %vm3233 = vcmp.eq.s32.totalorder %v3225, 1
          %3234 = vset.pattern.permute.xlu0 0
          %3235 = vperm.xlu0 %3234, %v264
          %v3236 = vpop.permute.xlu0 %3235
          %v3238 = vsel %vm3226, %v3236, %v3170
          %v3239 = vsel %vm3227, %v3236, %v3171
          %v3240 = vsel %vm3228, %v3236, %v3172
          %v3241 = vsel %vm3229, %v3236, %v3173
          %v3242 = vsel %vm3230, %v3236, %v3174
          %v3243 = vsel %vm3231, %v3236, %v3175
          %v3244 = vsel %vm3232, %v3236, %v3176
          %v3245 = vsel %vm3233, %v3236, %v3177
          %v3254 = vcombine.low %v3238, %v3239
          %v3255 = vcombine.low %v3240, %v3241
          %v3256 = vcombine.low %v3242, %v3243
          %v3257 = vcombine.low %v3244, %v3245
          %3262 = vst [vmem:[%s198] sm:$0x77] %v3254
          %3263 = vst [vmem:[%s198 + $0x8] sm:$0x77] %v3255
          %3264 = vst [vmem:[%s198 + $0x10] sm:$0x77] %v3256
          %3265 = vst [vmem:[%s198 + $0x18] sm:$0x77] %v3257
        $region40: #{_lambda_.1} parent=35 // pred_fallthru
          _
        %p3266 = scmp.ne.s32.totalorder %s2776, 0
        // Predicated region
        $region41: #{_lambda_.1} parent=35 // pred_check
          %p3267 = pneg %p3266
        $region42: #{_lambda_.1} parent=35 // pred_check_branch
          %3269 = sbr.rel (%p3267) target = $region44
        $region43: #{_lambda_.1} parent=35 // pred_region
          %v3270 = vsub.f32 %v206, 1.0
          %v3271 = vsub.f32 %v207, 1.0
          %v3272 = vsub.f32 %v208, 1.0
          %v3273 = vsub.f32 %v209, 1.0
          %v3274 = vsub.f32 %v210, 1.0
          %v3275 = vsub.f32 %v211, 1.0
          %v3276 = vsub.f32 %v212, 1.0
          %v3277 = vsub.f32 %v213, 1.0
          %v3278 = vmax.f32 %v3270, 0.0
          %v3279 = vmax.f32 %v3271, 0.0
          %v3280 = vmax.f32 %v3272, 0.0
          %v3281 = vmax.f32 %v3273, 0.0
          %v3282 = vmax.f32 %v3274, 0.0
          %v3283 = vmax.f32 %v3275, 0.0
          %v3284 = vmax.f32 %v3276, 0.0
          %v3285 = vmax.f32 %v3277, 0.0
          %v3286 = vmin.f32 %v3278, 0.5
          %v3287 = vmin.f32 %v3279, 0.5
          %v3288 = vmin.f32 %v3280, 0.5
          %v3289 = vmin.f32 %v3281, 0.5
          %v3290 = vmin.f32 %v3282, 0.5
          %v3291 = vmin.f32 %v3283, 0.5
          %v3292 = vmin.f32 %v3284, 0.5
          %v3293 = vmin.f32 %v3285, 0.5
          %v3294 = vsub.f32 -1.0, %v206
          %v3295 = vsub.f32 -1.0, %v207
          %v3296 = vsub.f32 -1.0, %v208
          %v3297 = vsub.f32 -1.0, %v209
          %v3298 = vsub.f32 -1.0, %v210
          %v3299 = vsub.f32 -1.0, %v211
          %v3300 = vsub.f32 -1.0, %v212
          %v3301 = vsub.f32 -1.0, %v213
          %v3302 = vmax.f32 %v3294, 0.0
          %v3303 = vmax.f32 %v3295, 0.0
          %v3304 = vmax.f32 %v3296, 0.0
          %v3305 = vmax.f32 %v3297, 0.0
          %v3306 = vmax.f32 %v3298, 0.0
          %v3307 = vmax.f32 %v3299, 0.0
          %v3308 = vmax.f32 %v3300, 0.0
          %v3309 = vmax.f32 %v3301, 0.0
          %v3310 = vmin.f32 %v3302, 0.5
          %v3311 = vmin.f32 %v3303, 0.5
          %v3312 = vmin.f32 %v3304, 0.5
          %v3313 = vmin.f32 %v3305, 0.5
          %v3314 = vmin.f32 %v3306, 0.5
          %v3315 = vmin.f32 %v3307, 0.5
          %v3316 = vmin.f32 %v3308, 0.5
          %v3317 = vmin.f32 %v3309, 0.5
          %v3318 = vsub.f32 1.0, %v3286
          %v3319 = vsub.f32 1.0, %v3287
          %v3320 = vsub.f32 1.0, %v3288
          %v3321 = vsub.f32 1.0, %v3289
          %v3322 = vsub.f32 1.0, %v3290
          %v3323 = vsub.f32 1.0, %v3291
          %v3324 = vsub.f32 1.0, %v3292
          %v3325 = vsub.f32 1.0, %v3293
          %v3326 = vmax.f32 %v3318, -1.0
          %v3327 = vmax.f32 %v3319, -1.0
          %v3328 = vmax.f32 %v3320, -1.0
          %v3329 = vmax.f32 %v3321, -1.0
          %v3330 = vmax.f32 %v3322, -1.0
          %v3331 = vmax.f32 %v3323, -1.0
          %v3332 = vmax.f32 %v3324, -1.0
          %v3333 = vmax.f32 %v3325, -1.0
          %v3334 = vmin.f32 %v3326, 1.0
          %v3335 = vmin.f32 %v3327, 1.0
          %v3336 = vmin.f32 %v3328, 1.0
          %v3337 = vmin.f32 %v3329, 1.0
          %v3338 = vmin.f32 %v3330, 1.0
          %v3339 = vmin.f32 %v3331, 1.0
          %v3340 = vmin.f32 %v3332, 1.0
          %v3341 = vmin.f32 %v3333, 1.0
          %v3342 = vadd.f32 %v3334, 1.0
          %v3343 = vadd.f32 %v3335, 1.0
          %v3344 = vadd.f32 %v3336, 1.0
          %v3345 = vadd.f32 %v3337, 1.0
          %v3346 = vadd.f32 %v3338, 1.0
          %v3347 = vadd.f32 %v3339, 1.0
          %v3348 = vadd.f32 %v3340, 1.0
          %v3349 = vadd.f32 %v3341, 1.0
          %v3350 = vmul.f32 %v3342, 7.5
          %v3351 = vmul.f32 %v3343, 7.5
          %v3352 = vmul.f32 %v3344, 7.5
          %v3353 = vmul.f32 %v3345, 7.5
          %v3354 = vmul.f32 %v3346, 7.5
          %v3355 = vmul.f32 %v3347, 7.5
          %v3356 = vmul.f32 %v3348, 7.5
          %v3357 = vmul.f32 %v3349, 7.5
          %v3358 = vfloor.f32 %v3350
          %v3359 = vfloor.f32 %v3351
          %v3360 = vfloor.f32 %v3352
          %v3361 = vfloor.f32 %v3353
          %v3362 = vfloor.f32 %v3354
          %v3363 = vfloor.f32 %v3355
          %v3364 = vfloor.f32 %v3356
          %v3365 = vfloor.f32 %v3357
          %v3366 = vsub.f32 %v3350, %v3358
          %v3367 = vsub.f32 %v3351, %v3359
          %v3368 = vsub.f32 %v3352, %v3360
          %v3369 = vsub.f32 %v3353, %v3361
          %v3370 = vsub.f32 %v3354, %v3362
          %v3371 = vsub.f32 %v3355, %v3363
          %v3372 = vsub.f32 %v3356, %v3364
          %v3373 = vsub.f32 %v3357, %v3365
          %v3374 = vcvt.f32.s32.to.zero.pseudo %v3358
          %v3375 = vcvt.f32.s32.to.zero.pseudo %v3359
          %v3376 = vcvt.f32.s32.to.zero.pseudo %v3360
          %v3377 = vcvt.f32.s32.to.zero.pseudo %v3361
          %v3378 = vcvt.f32.s32.to.zero.pseudo %v3362
          %v3379 = vcvt.f32.s32.to.zero.pseudo %v3363
          %v3380 = vcvt.f32.s32.to.zero.pseudo %v3364
          %v3381 = vcvt.f32.s32.to.zero.pseudo %v3365
          %v3382 = vlaneseq
          %v3383 = vshrl.u32 %v3382, 7
          %v3384 = vsub.s32 3, %v3383
          %v3385 = vrot.slane %v3374, %v3384
          %v3386 = vlaneseq
          %v3387 = vshrl.u32 %v3386, 7
          %v3388 = vsub.s32 3, %v3387
          %v3389 = vrot.slane %v3375, %v3388
          %v3390 = vlaneseq
          %v3391 = vshrl.u32 %v3390, 7
          %v3392 = vsub.s32 3, %v3391
          %v3393 = vrot.slane %v3376, %v3392
          %v3394 = vlaneseq
          %v3395 = vshrl.u32 %v3394, 7
          %v3396 = vsub.s32 3, %v3395
          %v3397 = vrot.slane %v3377, %v3396
          %v3398 = vlaneseq
          %v3399 = vshrl.u32 %v3398, 7
          %v3400 = vsub.s32 3, %v3399
          %v3401 = vrot.slane %v3378, %v3400
          %v3402 = vlaneseq
          %v3403 = vshrl.u32 %v3402, 7
          %v3404 = vsub.s32 3, %v3403
          %v3405 = vrot.slane %v3379, %v3404
          %v3406 = vlaneseq
          %v3407 = vshrl.u32 %v3406, 7
          %v3408 = vsub.s32 3, %v3407
          %v3409 = vrot.slane %v3380, %v3408
          %v3410 = vlaneseq
          %v3411 = vshrl.u32 %v3410, 7
          %v3412 = vsub.s32 3, %v3411
          %v3413 = vrot.slane %v3381, %v3412
          %vm3414 = vcmp.eq.s32.totalorder %v223, %v3385
          %vm3415 = vcmp.eq.s32.totalorder %v223, %v3389
          %vm3416 = vcmp.eq.s32.totalorder %v223, %v3393
          %vm3417 = vcmp.eq.s32.totalorder %v223, %v3397
          %vm3418 = vcmp.eq.s32.totalorder %v223, %v3401
          %vm3419 = vcmp.eq.s32.totalorder %v223, %v3405
          %vm3420 = vcmp.eq.s32.totalorder %v223, %v3409
          %vm3421 = vcmp.eq.s32.totalorder %v223, %v3413
          %vm3422 = vcmp.eq.s32.totalorder %v224, %v3385
          %vm3423 = vcmp.eq.s32.totalorder %v224, %v3389
          %vm3424 = vcmp.eq.s32.totalorder %v224, %v3393
          %vm3425 = vcmp.eq.s32.totalorder %v224, %v3397
          %vm3426 = vcmp.eq.s32.totalorder %v224, %v3401
          %vm3427 = vcmp.eq.s32.totalorder %v224, %v3405
          %vm3428 = vcmp.eq.s32.totalorder %v224, %v3409
          %vm3429 = vcmp.eq.s32.totalorder %v224, %v3413
          %v3430 = vsub.f32 1.0, %v3366
          %v3431 = vsub.f32 1.0, %v3367
          %v3432 = vsub.f32 1.0, %v3368
          %v3433 = vsub.f32 1.0, %v3369
          %v3434 = vsub.f32 1.0, %v3370
          %v3435 = vsub.f32 1.0, %v3371
          %v3436 = vsub.f32 1.0, %v3372
          %v3437 = vsub.f32 1.0, %v3373
          %v3438 = vadd.s32 %v3374, 1
          %v3439 = vadd.s32 %v3375, 1
          %v3440 = vadd.s32 %v3376, 1
          %v3441 = vadd.s32 %v3377, 1
          %v3442 = vadd.s32 %v3378, 1
          %v3443 = vadd.s32 %v3379, 1
          %v3444 = vadd.s32 %v3380, 1
          %v3445 = vadd.s32 %v3381, 1
          %v3446 = vlaneseq
          %v3447 = vshrl.u32 %v3446, 7
          %v3448 = vsub.s32 3, %v3447
          %v3449 = vrot.slane %v3438, %v3448
          %v3450 = vlaneseq
          %v3451 = vshrl.u32 %v3450, 7
          %v3452 = vsub.s32 3, %v3451
          %v3453 = vrot.slane %v3439, %v3452
          %v3454 = vlaneseq
          %v3455 = vshrl.u32 %v3454, 7
          %v3456 = vsub.s32 3, %v3455
          %v3457 = vrot.slane %v3440, %v3456
          %v3458 = vlaneseq
          %v3459 = vshrl.u32 %v3458, 7
          %v3460 = vsub.s32 3, %v3459
          %v3461 = vrot.slane %v3441, %v3460
          %v3462 = vlaneseq
          %v3463 = vshrl.u32 %v3462, 7
          %v3464 = vsub.s32 3, %v3463
          %v3465 = vrot.slane %v3442, %v3464
          %v3466 = vlaneseq
          %v3467 = vshrl.u32 %v3466, 7
          %v3468 = vsub.s32 3, %v3467
          %v3469 = vrot.slane %v3443, %v3468
          %v3470 = vlaneseq
          %v3471 = vshrl.u32 %v3470, 7
          %v3472 = vsub.s32 3, %v3471
          %v3473 = vrot.slane %v3444, %v3472
          %v3474 = vlaneseq
          %v3475 = vshrl.u32 %v3474, 7
          %v3476 = vsub.s32 3, %v3475
          %v3477 = vrot.slane %v3445, %v3476
          %vm3478 = vcmp.eq.s32.totalorder %v223, %v3449
          %vm3479 = vcmp.eq.s32.totalorder %v223, %v3453
          %vm3480 = vcmp.eq.s32.totalorder %v223, %v3457
          %vm3481 = vcmp.eq.s32.totalorder %v223, %v3461
          %vm3482 = vcmp.eq.s32.totalorder %v223, %v3465
          %vm3483 = vcmp.eq.s32.totalorder %v223, %v3469
          %vm3484 = vcmp.eq.s32.totalorder %v223, %v3473
          %vm3485 = vcmp.eq.s32.totalorder %v223, %v3477
          %vm3486 = vcmp.eq.s32.totalorder %v224, %v3449
          %vm3487 = vcmp.eq.s32.totalorder %v224, %v3453
          %vm3488 = vcmp.eq.s32.totalorder %v224, %v3457
          %vm3489 = vcmp.eq.s32.totalorder %v224, %v3461
          %vm3490 = vcmp.eq.s32.totalorder %v224, %v3465
          %vm3491 = vcmp.eq.s32.totalorder %v224, %v3469
          %vm3492 = vcmp.eq.s32.totalorder %v224, %v3473
          %vm3493 = vcmp.eq.s32.totalorder %v224, %v3477
          %v3494 = vlaneseq
          %v3495 = vshrl.u32 %v3494, 7
          %v3496 = vsub.s32 3, %v3495
          %v3497 = vrot.slane %v3366, %v3496
          %v3498 = vlaneseq
          %v3499 = vshrl.u32 %v3498, 7
          %v3500 = vsub.s32 3, %v3499
          %v3501 = vrot.slane %v3367, %v3500
          %v3502 = vlaneseq
          %v3503 = vshrl.u32 %v3502, 7
          %v3504 = vsub.s32 3, %v3503
          %v3505 = vrot.slane %v3368, %v3504
          %v3506 = vlaneseq
          %v3507 = vshrl.u32 %v3506, 7
          %v3508 = vsub.s32 3, %v3507
          %v3509 = vrot.slane %v3369, %v3508
          %v3510 = vlaneseq
          %v3511 = vshrl.u32 %v3510, 7
          %v3512 = vsub.s32 3, %v3511
          %v3513 = vrot.slane %v3370, %v3512
          %v3514 = vlaneseq
          %v3515 = vshrl.u32 %v3514, 7
          %v3516 = vsub.s32 3, %v3515
          %v3517 = vrot.slane %v3371, %v3516
          %v3518 = vlaneseq
          %v3519 = vshrl.u32 %v3518, 7
          %v3520 = vsub.s32 3, %v3519
          %v3521 = vrot.slane %v3372, %v3520
          %v3522 = vlaneseq
          %v3523 = vshrl.u32 %v3522, 7
          %v3524 = vsub.s32 3, %v3523
          %v3525 = vrot.slane %v3373, %v3524
          %v3526 = vsel %vm3478, %v3497, 0.0
          %v3527 = vsel %vm3479, %v3501, 0.0
          %v3528 = vsel %vm3480, %v3505, 0.0
          %v3529 = vsel %vm3481, %v3509, 0.0
          %v3530 = vsel %vm3482, %v3513, 0.0
          %v3531 = vsel %vm3483, %v3517, 0.0
          %v3532 = vsel %vm3484, %v3521, 0.0
          %v3533 = vsel %vm3485, %v3525, 0.0
          %v3534 = vsel %vm3486, %v3497, 0.0
          %v3535 = vsel %vm3487, %v3501, 0.0
          %v3536 = vsel %vm3488, %v3505, 0.0
          %v3537 = vsel %vm3489, %v3509, 0.0
          %v3538 = vsel %vm3490, %v3513, 0.0
          %v3539 = vsel %vm3491, %v3517, 0.0
          %v3540 = vsel %vm3492, %v3521, 0.0
          %v3541 = vsel %vm3493, %v3525, 0.0
          %v3542 = vlaneseq
          %v3543 = vshrl.u32 %v3542, 7
          %v3544 = vsub.s32 3, %v3543
          %v3545 = vrot.slane %v3430, %v3544
          %v3546 = vlaneseq
          %v3547 = vshrl.u32 %v3546, 7
          %v3548 = vsub.s32 3, %v3547
          %v3549 = vrot.slane %v3431, %v3548
          %v3550 = vlaneseq
          %v3551 = vshrl.u32 %v3550, 7
          %v3552 = vsub.s32 3, %v3551
          %v3553 = vrot.slane %v3432, %v3552
          %v3554 = vlaneseq
          %v3555 = vshrl.u32 %v3554, 7
          %v3556 = vsub.s32 3, %v3555
          %v3557 = vrot.slane %v3433, %v3556
          %v3558 = vlaneseq
          %v3559 = vshrl.u32 %v3558, 7
          %v3560 = vsub.s32 3, %v3559
          %v3561 = vrot.slane %v3434, %v3560
          %v3562 = vlaneseq
          %v3563 = vshrl.u32 %v3562, 7
          %v3564 = vsub.s32 3, %v3563
          %v3565 = vrot.slane %v3435, %v3564
          %v3566 = vlaneseq
          %v3567 = vshrl.u32 %v3566, 7
          %v3568 = vsub.s32 3, %v3567
          %v3569 = vrot.slane %v3436, %v3568
          %v3570 = vlaneseq
          %v3571 = vshrl.u32 %v3570, 7
          %v3572 = vsub.s32 3, %v3571
          %v3573 = vrot.slane %v3437, %v3572
          %v3574 = vsel %vm3414, %v3545, %v3526
          %v3575 = vsel %vm3415, %v3549, %v3527
          %v3576 = vsel %vm3416, %v3553, %v3528
          %v3577 = vsel %vm3417, %v3557, %v3529
          %v3578 = vsel %vm3418, %v3561, %v3530
          %v3579 = vsel %vm3419, %v3565, %v3531
          %v3580 = vsel %vm3420, %v3569, %v3532
          %v3581 = vsel %vm3421, %v3573, %v3533
          %v3582 = vsel %vm3422, %v3545, %v3534
          %v3583 = vsel %vm3423, %v3549, %v3535
          %v3584 = vsel %vm3424, %v3553, %v3536
          %v3585 = vsel %vm3425, %v3557, %v3537
          %v3586 = vsel %vm3426, %v3561, %v3538
          %v3587 = vsel %vm3427, %v3565, %v3539
          %v3588 = vsel %vm3428, %v3569, %v3540
          %v3589 = vsel %vm3429, %v3573, %v3541
          %v3590 = vsub.f32 %v255, %v3574
          %v3591 = vsub.f32 %v255, %v3575
          %v3592 = vsub.f32 %v255, %v3576
          %v3593 = vsub.f32 %v255, %v3577
          %v3594 = vsub.f32 %v255, %v3578
          %v3595 = vsub.f32 %v255, %v3579
          %v3596 = vsub.f32 %v255, %v3580
          %v3597 = vsub.f32 %v255, %v3581
          %v3598 = vsub.f32 %v256, %v3582
          %v3599 = vsub.f32 %v256, %v3583
          %v3600 = vsub.f32 %v256, %v3584
          %v3601 = vsub.f32 %v256, %v3585
          %v3602 = vsub.f32 %v256, %v3586
          %v3603 = vsub.f32 %v256, %v3587
          %v3604 = vsub.f32 %v256, %v3588
          %v3605 = vsub.f32 %v256, %v3589
          %v3606 = vlaneseq
          %v3607 = vshrl.u32 %v3606, 7
          %v3608 = vsub.s32 3, %v3607
          %v3609 = vrot.slane %v753, %v3608
          %v3610 = vlaneseq
          %v3611 = vshrl.u32 %v3610, 7
          %v3612 = vsub.s32 3, %v3611
          %v3613 = vrot.slane %v754, %v3612
          %v3614 = vlaneseq
          %v3615 = vshrl.u32 %v3614, 7
          %v3616 = vsub.s32 3, %v3615
          %v3617 = vrot.slane %v755, %v3616
          %v3618 = vlaneseq
          %v3619 = vshrl.u32 %v3618, 7
          %v3620 = vsub.s32 3, %v3619
          %v3621 = vrot.slane %v756, %v3620
          %v3622 = vlaneseq
          %v3623 = vshrl.u32 %v3622, 7
          %v3624 = vsub.s32 3, %v3623
          %v3625 = vrot.slane %v757, %v3624
          %v3626 = vlaneseq
          %v3627 = vshrl.u32 %v3626, 7
          %v3628 = vsub.s32 3, %v3627
          %v3629 = vrot.slane %v758, %v3628
          %v3630 = vlaneseq
          %v3631 = vshrl.u32 %v3630, 7
          %v3632 = vsub.s32 3, %v3631
          %v3633 = vrot.slane %v759, %v3632
          %v3634 = vlaneseq
          %v3635 = vshrl.u32 %v3634, 7
          %v3636 = vsub.s32 3, %v3635
          %v3637 = vrot.slane %v760, %v3636
          %v3638 = vmul.f32 %v3609, %v3590
          %v3639 = vmul.f32 %v3613, %v3591
          %v3640 = vmul.f32 %v3617, %v3592
          %v3641 = vmul.f32 %v3621, %v3593
          %v3642 = vmul.f32 %v3625, %v3594
          %v3643 = vmul.f32 %v3629, %v3595
          %v3644 = vmul.f32 %v3633, %v3596
          %v3645 = vmul.f32 %v3637, %v3597
          %v3646 = vmul.f32 %v3609, %v3598
          %v3647 = vmul.f32 %v3613, %v3599
          %v3648 = vmul.f32 %v3617, %v3600
          %v3649 = vmul.f32 %v3621, %v3601
          %v3650 = vmul.f32 %v3625, %v3602
          %v3651 = vmul.f32 %v3629, %v3603
          %v3652 = vmul.f32 %v3633, %v3604
          %v3653 = vmul.f32 %v3637, %v3605
          %v3654 = vadd.f32 %v3310, -1.0
          %v3655 = vadd.f32 %v3311, -1.0
          %v3656 = vadd.f32 %v3312, -1.0
          %v3657 = vadd.f32 %v3313, -1.0
          %v3658 = vadd.f32 %v3314, -1.0
          %v3659 = vadd.f32 %v3315, -1.0
          %v3660 = vadd.f32 %v3316, -1.0
          %v3661 = vadd.f32 %v3317, -1.0
          %v3662 = vmax.f32 %v3654, -1.0
          %v3663 = vmax.f32 %v3655, -1.0
          %v3664 = vmax.f32 %v3656, -1.0
          %v3665 = vmax.f32 %v3657, -1.0
          %v3666 = vmax.f32 %v3658, -1.0
          %v3667 = vmax.f32 %v3659, -1.0
          %v3668 = vmax.f32 %v3660, -1.0
          %v3669 = vmax.f32 %v3661, -1.0
          %v3670 = vmin.f32 %v3662, 1.0
          %v3671 = vmin.f32 %v3663, 1.0
          %v3672 = vmin.f32 %v3664, 1.0
          %v3673 = vmin.f32 %v3665, 1.0
          %v3674 = vmin.f32 %v3666, 1.0
          %v3675 = vmin.f32 %v3667, 1.0
          %v3676 = vmin.f32 %v3668, 1.0
          %v3677 = vmin.f32 %v3669, 1.0
          %v3678 = vadd.f32 %v3670, 1.0
          %v3679 = vadd.f32 %v3671, 1.0
          %v3680 = vadd.f32 %v3672, 1.0
          %v3681 = vadd.f32 %v3673, 1.0
          %v3682 = vadd.f32 %v3674, 1.0
          %v3683 = vadd.f32 %v3675, 1.0
          %v3684 = vadd.f32 %v3676, 1.0
          %v3685 = vadd.f32 %v3677, 1.0
          %v3686 = vmul.f32 %v3678, 7.5
          %v3687 = vmul.f32 %v3679, 7.5
          %v3688 = vmul.f32 %v3680, 7.5
          %v3689 = vmul.f32 %v3681, 7.5
          %v3690 = vmul.f32 %v3682, 7.5
          %v3691 = vmul.f32 %v3683, 7.5
          %v3692 = vmul.f32 %v3684, 7.5
          %v3693 = vmul.f32 %v3685, 7.5
          %v3694 = vfloor.f32 %v3686
          %v3695 = vfloor.f32 %v3687
          %v3696 = vfloor.f32 %v3688
          %v3697 = vfloor.f32 %v3689
          %v3698 = vfloor.f32 %v3690
          %v3699 = vfloor.f32 %v3691
          %v3700 = vfloor.f32 %v3692
          %v3701 = vfloor.f32 %v3693
          %v3702 = vsub.f32 %v3686, %v3694
          %v3703 = vsub.f32 %v3687, %v3695
          %v3704 = vsub.f32 %v3688, %v3696
          %v3705 = vsub.f32 %v3689, %v3697
          %v3706 = vsub.f32 %v3690, %v3698
          %v3707 = vsub.f32 %v3691, %v3699
          %v3708 = vsub.f32 %v3692, %v3700
          %v3709 = vsub.f32 %v3693, %v3701
          %v3710 = vcvt.f32.s32.to.zero.pseudo %v3694
          %v3711 = vcvt.f32.s32.to.zero.pseudo %v3695
          %v3712 = vcvt.f32.s32.to.zero.pseudo %v3696
          %v3713 = vcvt.f32.s32.to.zero.pseudo %v3697
          %v3714 = vcvt.f32.s32.to.zero.pseudo %v3698
          %v3715 = vcvt.f32.s32.to.zero.pseudo %v3699
          %v3716 = vcvt.f32.s32.to.zero.pseudo %v3700
          %v3717 = vcvt.f32.s32.to.zero.pseudo %v3701
          %v3718 = vlaneseq
          %v3719 = vshrl.u32 %v3718, 7
          %v3720 = vsub.s32 2, %v3719
          %v3721 = vrot.slane %v3710, %v3720
          %v3722 = vlaneseq
          %v3723 = vshrl.u32 %v3722, 7
          %v3724 = vsub.s32 2, %v3723
          %v3725 = vrot.slane %v3711, %v3724
          %v3726 = vlaneseq
          %v3727 = vshrl.u32 %v3726, 7
          %v3728 = vsub.s32 2, %v3727
          %v3729 = vrot.slane %v3712, %v3728
          %v3730 = vlaneseq
          %v3731 = vshrl.u32 %v3730, 7
          %v3732 = vsub.s32 2, %v3731
          %v3733 = vrot.slane %v3713, %v3732
          %v3734 = vlaneseq
          %v3735 = vshrl.u32 %v3734, 7
          %v3736 = vsub.s32 2, %v3735
          %v3737 = vrot.slane %v3714, %v3736
          %v3738 = vlaneseq
          %v3739 = vshrl.u32 %v3738, 7
          %v3740 = vsub.s32 2, %v3739
          %v3741 = vrot.slane %v3715, %v3740
          %v3742 = vlaneseq
          %v3743 = vshrl.u32 %v3742, 7
          %v3744 = vsub.s32 2, %v3743
          %v3745 = vrot.slane %v3716, %v3744
          %v3746 = vlaneseq
          %v3747 = vshrl.u32 %v3746, 7
          %v3748 = vsub.s32 2, %v3747
          %v3749 = vrot.slane %v3717, %v3748
          %vm3750 = vcmp.eq.s32.totalorder %v223, %v3721
          %vm3751 = vcmp.eq.s32.totalorder %v223, %v3725
          %vm3752 = vcmp.eq.s32.totalorder %v223, %v3729
          %vm3753 = vcmp.eq.s32.totalorder %v223, %v3733
          %vm3754 = vcmp.eq.s32.totalorder %v223, %v3737
          %vm3755 = vcmp.eq.s32.totalorder %v223, %v3741
          %vm3756 = vcmp.eq.s32.totalorder %v223, %v3745
          %vm3757 = vcmp.eq.s32.totalorder %v223, %v3749
          %vm3758 = vcmp.eq.s32.totalorder %v224, %v3721
          %vm3759 = vcmp.eq.s32.totalorder %v224, %v3725
          %vm3760 = vcmp.eq.s32.totalorder %v224, %v3729
          %vm3761 = vcmp.eq.s32.totalorder %v224, %v3733
          %vm3762 = vcmp.eq.s32.totalorder %v224, %v3737
          %vm3763 = vcmp.eq.s32.totalorder %v224, %v3741
          %vm3764 = vcmp.eq.s32.totalorder %v224, %v3745
          %vm3765 = vcmp.eq.s32.totalorder %v224, %v3749
          %v3766 = vsub.f32 1.0, %v3702
          %v3767 = vsub.f32 1.0, %v3703
          %v3768 = vsub.f32 1.0, %v3704
          %v3769 = vsub.f32 1.0, %v3705
          %v3770 = vsub.f32 1.0, %v3706
          %v3771 = vsub.f32 1.0, %v3707
          %v3772 = vsub.f32 1.0, %v3708
          %v3773 = vsub.f32 1.0, %v3709
          %v3774 = vadd.s32 %v3710, 1
          %v3775 = vadd.s32 %v3711, 1
          %v3776 = vadd.s32 %v3712, 1
          %v3777 = vadd.s32 %v3713, 1
          %v3778 = vadd.s32 %v3714, 1
          %v3779 = vadd.s32 %v3715, 1
          %v3780 = vadd.s32 %v3716, 1
          %v3781 = vadd.s32 %v3717, 1
          %v3782 = vlaneseq
          %v3783 = vshrl.u32 %v3782, 7
          %v3784 = vsub.s32 2, %v3783
          %v3785 = vrot.slane %v3774, %v3784
          %v3786 = vlaneseq
          %v3787 = vshrl.u32 %v3786, 7
          %v3788 = vsub.s32 2, %v3787
          %v3789 = vrot.slane %v3775, %v3788
          %v3790 = vlaneseq
          %v3791 = vshrl.u32 %v3790, 7
          %v3792 = vsub.s32 2, %v3791
          %v3793 = vrot.slane %v3776, %v3792
          %v3794 = vlaneseq
          %v3795 = vshrl.u32 %v3794, 7
          %v3796 = vsub.s32 2, %v3795
          %v3797 = vrot.slane %v3777, %v3796
          %v3798 = vlaneseq
          %v3799 = vshrl.u32 %v3798, 7
          %v3800 = vsub.s32 2, %v3799
          %v3801 = vrot.slane %v3778, %v3800
          %v3802 = vlaneseq
          %v3803 = vshrl.u32 %v3802, 7
          %v3804 = vsub.s32 2, %v3803
          %v3805 = vrot.slane %v3779, %v3804
          %v3806 = vlaneseq
          %v3807 = vshrl.u32 %v3806, 7
          %v3808 = vsub.s32 2, %v3807
          %v3809 = vrot.slane %v3780, %v3808
          %v3810 = vlaneseq
          %v3811 = vshrl.u32 %v3810, 7
          %v3812 = vsub.s32 2, %v3811
          %v3813 = vrot.slane %v3781, %v3812
          %vm3814 = vcmp.eq.s32.totalorder %v223, %v3785
          %vm3815 = vcmp.eq.s32.totalorder %v223, %v3789
          %vm3816 = vcmp.eq.s32.totalorder %v223, %v3793
          %vm3817 = vcmp.eq.s32.totalorder %v223, %v3797
          %vm3818 = vcmp.eq.s32.totalorder %v223, %v3801
          %vm3819 = vcmp.eq.s32.totalorder %v223, %v3805
          %vm3820 = vcmp.eq.s32.totalorder %v223, %v3809
          %vm3821 = vcmp.eq.s32.totalorder %v223, %v3813
          %vm3822 = vcmp.eq.s32.totalorder %v224, %v3785
          %vm3823 = vcmp.eq.s32.totalorder %v224, %v3789
          %vm3824 = vcmp.eq.s32.totalorder %v224, %v3793
          %vm3825 = vcmp.eq.s32.totalorder %v224, %v3797
          %vm3826 = vcmp.eq.s32.totalorder %v224, %v3801
          %vm3827 = vcmp.eq.s32.totalorder %v224, %v3805
          %vm3828 = vcmp.eq.s32.totalorder %v224, %v3809
          %vm3829 = vcmp.eq.s32.totalorder %v224, %v3813
          %v3830 = vlaneseq
          %v3831 = vshrl.u32 %v3830, 7
          %v3832 = vsub.s32 2, %v3831
          %v3833 = vrot.slane %v3702, %v3832
          %v3834 = vlaneseq
          %v3835 = vshrl.u32 %v3834, 7
          %v3836 = vsub.s32 2, %v3835
          %v3837 = vrot.slane %v3703, %v3836
          %v3838 = vlaneseq
          %v3839 = vshrl.u32 %v3838, 7
          %v3840 = vsub.s32 2, %v3839
          %v3841 = vrot.slane %v3704, %v3840
          %v3842 = vlaneseq
          %v3843 = vshrl.u32 %v3842, 7
          %v3844 = vsub.s32 2, %v3843
          %v3845 = vrot.slane %v3705, %v3844
          %v3846 = vlaneseq
          %v3847 = vshrl.u32 %v3846, 7
          %v3848 = vsub.s32 2, %v3847
          %v3849 = vrot.slane %v3706, %v3848
          %v3850 = vlaneseq
          %v3851 = vshrl.u32 %v3850, 7
          %v3852 = vsub.s32 2, %v3851
          %v3853 = vrot.slane %v3707, %v3852
          %v3854 = vlaneseq
          %v3855 = vshrl.u32 %v3854, 7
          %v3856 = vsub.s32 2, %v3855
          %v3857 = vrot.slane %v3708, %v3856
          %v3858 = vlaneseq
          %v3859 = vshrl.u32 %v3858, 7
          %v3860 = vsub.s32 2, %v3859
          %v3861 = vrot.slane %v3709, %v3860
          %v3862 = vsel %vm3814, %v3833, 0.0
          %v3863 = vsel %vm3815, %v3837, 0.0
          %v3864 = vsel %vm3816, %v3841, 0.0
          %v3865 = vsel %vm3817, %v3845, 0.0
          %v3866 = vsel %vm3818, %v3849, 0.0
          %v3867 = vsel %vm3819, %v3853, 0.0
          %v3868 = vsel %vm3820, %v3857, 0.0
          %v3869 = vsel %vm3821, %v3861, 0.0
          %v3870 = vsel %vm3822, %v3833, 0.0
          %v3871 = vsel %vm3823, %v3837, 0.0
          %v3872 = vsel %vm3824, %v3841, 0.0
          %v3873 = vsel %vm3825, %v3845, 0.0
          %v3874 = vsel %vm3826, %v3849, 0.0
          %v3875 = vsel %vm3827, %v3853, 0.0
          %v3876 = vsel %vm3828, %v3857, 0.0
          %v3877 = vsel %vm3829, %v3861, 0.0
          %v3878 = vlaneseq
          %v3879 = vshrl.u32 %v3878, 7
          %v3880 = vsub.s32 2, %v3879
          %v3881 = vrot.slane %v3766, %v3880
          %v3882 = vlaneseq
          %v3883 = vshrl.u32 %v3882, 7
          %v3884 = vsub.s32 2, %v3883
          %v3885 = vrot.slane %v3767, %v3884
          %v3886 = vlaneseq
          %v3887 = vshrl.u32 %v3886, 7
          %v3888 = vsub.s32 2, %v3887
          %v3889 = vrot.slane %v3768, %v3888
          %v3890 = vlaneseq
          %v3891 = vshrl.u32 %v3890, 7
          %v3892 = vsub.s32 2, %v3891
          %v3893 = vrot.slane %v3769, %v3892
          %v3894 = vlaneseq
          %v3895 = vshrl.u32 %v3894, 7
          %v3896 = vsub.s32 2, %v3895
          %v3897 = vrot.slane %v3770, %v3896
          %v3898 = vlaneseq
          %v3899 = vshrl.u32 %v3898, 7
          %v3900 = vsub.s32 2, %v3899
          %v3901 = vrot.slane %v3771, %v3900
          %v3902 = vlaneseq
          %v3903 = vshrl.u32 %v3902, 7
          %v3904 = vsub.s32 2, %v3903
          %v3905 = vrot.slane %v3772, %v3904
          %v3906 = vlaneseq
          %v3907 = vshrl.u32 %v3906, 7
          %v3908 = vsub.s32 2, %v3907
          %v3909 = vrot.slane %v3773, %v3908
          %v3910 = vsel %vm3750, %v3881, %v3862
          %v3911 = vsel %vm3751, %v3885, %v3863
          %v3912 = vsel %vm3752, %v3889, %v3864
          %v3913 = vsel %vm3753, %v3893, %v3865
          %v3914 = vsel %vm3754, %v3897, %v3866
          %v3915 = vsel %vm3755, %v3901, %v3867
          %v3916 = vsel %vm3756, %v3905, %v3868
          %v3917 = vsel %vm3757, %v3909, %v3869
          %v3918 = vsel %vm3758, %v3881, %v3870
          %v3919 = vsel %vm3759, %v3885, %v3871
          %v3920 = vsel %vm3760, %v3889, %v3872
          %v3921 = vsel %vm3761, %v3893, %v3873
          %v3922 = vsel %vm3762, %v3897, %v3874
          %v3923 = vsel %vm3763, %v3901, %v3875
          %v3924 = vsel %vm3764, %v3905, %v3876
          %v3925 = vsel %vm3765, %v3909, %v3877
          %v3926 = vsub.f32 %v3910, %v235
          %v3927 = vsub.f32 %v3911, %v235
          %v3928 = vsub.f32 %v3912, %v235
          %v3929 = vsub.f32 %v3913, %v235
          %v3930 = vsub.f32 %v3914, %v235
          %v3931 = vsub.f32 %v3915, %v235
          %v3932 = vsub.f32 %v3916, %v235
          %v3933 = vsub.f32 %v3917, %v235
          %v3934 = vsub.f32 %v3918, %v236
          %v3935 = vsub.f32 %v3919, %v236
          %v3936 = vsub.f32 %v3920, %v236
          %v3937 = vsub.f32 %v3921, %v236
          %v3938 = vsub.f32 %v3922, %v236
          %v3939 = vsub.f32 %v3923, %v236
          %v3940 = vsub.f32 %v3924, %v236
          %v3941 = vsub.f32 %v3925, %v236
          %v3942 = vlaneseq
          %v3943 = vshrl.u32 %v3942, 7
          %v3944 = vsub.s32 2, %v3943
          %v3945 = vrot.slane %v777, %v3944
          %v3946 = vlaneseq
          %v3947 = vshrl.u32 %v3946, 7
          %v3948 = vsub.s32 2, %v3947
          %v3949 = vrot.slane %v778, %v3948
          %v3950 = vlaneseq
          %v3951 = vshrl.u32 %v3950, 7
          %v3952 = vsub.s32 2, %v3951
          %v3953 = vrot.slane %v779, %v3952
          %v3954 = vlaneseq
          %v3955 = vshrl.u32 %v3954, 7
          %v3956 = vsub.s32 2, %v3955
          %v3957 = vrot.slane %v780, %v3956
          %v3958 = vlaneseq
          %v3959 = vshrl.u32 %v3958, 7
          %v3960 = vsub.s32 2, %v3959
          %v3961 = vrot.slane %v781, %v3960
          %v3962 = vlaneseq
          %v3963 = vshrl.u32 %v3962, 7
          %v3964 = vsub.s32 2, %v3963
          %v3965 = vrot.slane %v782, %v3964
          %v3966 = vlaneseq
          %v3967 = vshrl.u32 %v3966, 7
          %v3968 = vsub.s32 2, %v3967
          %v3969 = vrot.slane %v783, %v3968
          %v3970 = vlaneseq
          %v3971 = vshrl.u32 %v3970, 7
          %v3972 = vsub.s32 2, %v3971
          %v3973 = vrot.slane %v784, %v3972
          %v3974 = vmul.f32 %v3945, %v3926
          %v3975 = vmul.f32 %v3949, %v3927
          %v3976 = vmul.f32 %v3953, %v3928
          %v3977 = vmul.f32 %v3957, %v3929
          %v3978 = vmul.f32 %v3961, %v3930
          %v3979 = vmul.f32 %v3965, %v3931
          %v3980 = vmul.f32 %v3969, %v3932
          %v3981 = vmul.f32 %v3973, %v3933
          %v3982 = vmul.f32 %v3945, %v3934
          %v3983 = vmul.f32 %v3949, %v3935
          %v3984 = vmul.f32 %v3953, %v3936
          %v3985 = vmul.f32 %v3957, %v3937
          %v3986 = vmul.f32 %v3961, %v3938
          %v3987 = vmul.f32 %v3965, %v3939
          %v3988 = vmul.f32 %v3969, %v3940
          %v3989 = vmul.f32 %v3973, %v3941
          %v3990 = vadd.f32 %v3638, %v3974
          %v3991 = vadd.f32 %v3639, %v3975
          %v3992 = vadd.f32 %v3640, %v3976
          %v3993 = vadd.f32 %v3641, %v3977
          %v3994 = vadd.f32 %v3642, %v3978
          %v3995 = vadd.f32 %v3643, %v3979
          %v3996 = vadd.f32 %v3644, %v3980
          %v3997 = vadd.f32 %v3645, %v3981
          %v3998 = vadd.f32 %v3646, %v3982
          %v3999 = vadd.f32 %v3647, %v3983
          %v4000 = vadd.f32 %v3648, %v3984
          %v4001 = vadd.f32 %v3649, %v3985
          %v4002 = vadd.f32 %v3650, %v3986
          %v4003 = vadd.f32 %v3651, %v3987
          %v4004 = vadd.f32 %v3652, %v3988
          %v4005 = vadd.f32 %v3653, %v3989
          %v4006 = vlaneseq
          %v4007 = vshrl.u32 %v4006, 7
          %v4008 = vsub.s32 5, %v4007
          %v4009 = vrot.slane %v809, %v4008
          %v4010 = vlaneseq
          %v4011 = vshrl.u32 %v4010, 7
          %v4012 = vsub.s32 5, %v4011
          %v4013 = vrot.slane %v810, %v4012
          %v4014 = vlaneseq
          %v4015 = vshrl.u32 %v4014, 7
          %v4016 = vsub.s32 5, %v4015
          %v4017 = vrot.slane %v811, %v4016
          %v4018 = vlaneseq
          %v4019 = vshrl.u32 %v4018, 7
          %v4020 = vsub.s32 5, %v4019
          %v4021 = vrot.slane %v812, %v4020
          %v4022 = vlaneseq
          %v4023 = vshrl.u32 %v4022, 7
          %v4024 = vsub.s32 5, %v4023
          %v4025 = vrot.slane %v813, %v4024
          %v4026 = vlaneseq
          %v4027 = vshrl.u32 %v4026, 7
          %v4028 = vsub.s32 5, %v4027
          %v4029 = vrot.slane %v814, %v4028
          %v4030 = vlaneseq
          %v4031 = vshrl.u32 %v4030, 7
          %v4032 = vsub.s32 5, %v4031
          %v4033 = vrot.slane %v815, %v4032
          %v4034 = vlaneseq
          %v4035 = vshrl.u32 %v4034, 7
          %v4036 = vsub.s32 5, %v4035
          %v4037 = vrot.slane %v816, %v4036
          %vm4038 = vcmp.eq.s32.totalorder %v223, %v4009
          %vm4039 = vcmp.eq.s32.totalorder %v223, %v4013
          %vm4040 = vcmp.eq.s32.totalorder %v223, %v4017
          %vm4041 = vcmp.eq.s32.totalorder %v223, %v4021
          %vm4042 = vcmp.eq.s32.totalorder %v223, %v4025
          %vm4043 = vcmp.eq.s32.totalorder %v223, %v4029
          %vm4044 = vcmp.eq.s32.totalorder %v223, %v4033
          %vm4045 = vcmp.eq.s32.totalorder %v223, %v4037
          %vm4046 = vcmp.eq.s32.totalorder %v224, %v4009
          %vm4047 = vcmp.eq.s32.totalorder %v224, %v4013
          %vm4048 = vcmp.eq.s32.totalorder %v224, %v4017
          %vm4049 = vcmp.eq.s32.totalorder %v224, %v4021
          %vm4050 = vcmp.eq.s32.totalorder %v224, %v4025
          %vm4051 = vcmp.eq.s32.totalorder %v224, %v4029
          %vm4052 = vcmp.eq.s32.totalorder %v224, %v4033
          %vm4053 = vcmp.eq.s32.totalorder %v224, %v4037
          %vm4054 = vcmp.eq.s32.totalorder %v225, %v4009
          %vm4055 = vcmp.eq.s32.totalorder %v225, %v4013
          %vm4056 = vcmp.eq.s32.totalorder %v225, %v4017
          %vm4057 = vcmp.eq.s32.totalorder %v225, %v4021
          %vm4058 = vcmp.eq.s32.totalorder %v225, %v4025
          %vm4059 = vcmp.eq.s32.totalorder %v225, %v4029
          %vm4060 = vcmp.eq.s32.totalorder %v225, %v4033
          %vm4061 = vcmp.eq.s32.totalorder %v225, %v4037
          %vm4062 = vcmp.eq.s32.totalorder %v226, %v4009
          %vm4063 = vcmp.eq.s32.totalorder %v226, %v4013
          %vm4064 = vcmp.eq.s32.totalorder %v226, %v4017
          %vm4065 = vcmp.eq.s32.totalorder %v226, %v4021
          %vm4066 = vcmp.eq.s32.totalorder %v226, %v4025
          %vm4067 = vcmp.eq.s32.totalorder %v226, %v4029
          %vm4068 = vcmp.eq.s32.totalorder %v226, %v4033
          %vm4069 = vcmp.eq.s32.totalorder %v226, %v4037
          %v4070 = vlaneseq
          %v4071 = vshrl.u32 %v4070, 7
          %v4072 = vsub.s32 5, %v4071
          %v4073 = vrot.slane %v889, %v4072
          %v4074 = vlaneseq
          %v4075 = vshrl.u32 %v4074, 7
          %v4076 = vsub.s32 5, %v4075
          %v4077 = vrot.slane %v890, %v4076
          %v4078 = vlaneseq
          %v4079 = vshrl.u32 %v4078, 7
          %v4080 = vsub.s32 5, %v4079
          %v4081 = vrot.slane %v891, %v4080
          %v4082 = vlaneseq
          %v4083 = vshrl.u32 %v4082, 7
          %v4084 = vsub.s32 5, %v4083
          %v4085 = vrot.slane %v892, %v4084
          %v4086 = vlaneseq
          %v4087 = vshrl.u32 %v4086, 7
          %v4088 = vsub.s32 5, %v4087
          %v4089 = vrot.slane %v893, %v4088
          %v4090 = vlaneseq
          %v4091 = vshrl.u32 %v4090, 7
          %v4092 = vsub.s32 5, %v4091
          %v4093 = vrot.slane %v894, %v4092
          %v4094 = vlaneseq
          %v4095 = vshrl.u32 %v4094, 7
          %v4096 = vsub.s32 5, %v4095
          %v4097 = vrot.slane %v895, %v4096
          %v4098 = vlaneseq
          %v4099 = vshrl.u32 %v4098, 7
          %v4100 = vsub.s32 5, %v4099
          %v4101 = vrot.slane %v896, %v4100
          %vm4102 = vcmp.eq.s32.totalorder %v223, %v4073
          %vm4103 = vcmp.eq.s32.totalorder %v223, %v4077
          %vm4104 = vcmp.eq.s32.totalorder %v223, %v4081
          %vm4105 = vcmp.eq.s32.totalorder %v223, %v4085
          %vm4106 = vcmp.eq.s32.totalorder %v223, %v4089
          %vm4107 = vcmp.eq.s32.totalorder %v223, %v4093
          %vm4108 = vcmp.eq.s32.totalorder %v223, %v4097
          %vm4109 = vcmp.eq.s32.totalorder %v223, %v4101
          %vm4110 = vcmp.eq.s32.totalorder %v224, %v4073
          %vm4111 = vcmp.eq.s32.totalorder %v224, %v4077
          %vm4112 = vcmp.eq.s32.totalorder %v224, %v4081
          %vm4113 = vcmp.eq.s32.totalorder %v224, %v4085
          %vm4114 = vcmp.eq.s32.totalorder %v224, %v4089
          %vm4115 = vcmp.eq.s32.totalorder %v224, %v4093
          %vm4116 = vcmp.eq.s32.totalorder %v224, %v4097
          %vm4117 = vcmp.eq.s32.totalorder %v224, %v4101
          %vm4118 = vcmp.eq.s32.totalorder %v225, %v4073
          %vm4119 = vcmp.eq.s32.totalorder %v225, %v4077
          %vm4120 = vcmp.eq.s32.totalorder %v225, %v4081
          %vm4121 = vcmp.eq.s32.totalorder %v225, %v4085
          %vm4122 = vcmp.eq.s32.totalorder %v225, %v4089
          %vm4123 = vcmp.eq.s32.totalorder %v225, %v4093
          %vm4124 = vcmp.eq.s32.totalorder %v225, %v4097
          %vm4125 = vcmp.eq.s32.totalorder %v225, %v4101
          %vm4126 = vcmp.eq.s32.totalorder %v226, %v4073
          %vm4127 = vcmp.eq.s32.totalorder %v226, %v4077
          %vm4128 = vcmp.eq.s32.totalorder %v226, %v4081
          %vm4129 = vcmp.eq.s32.totalorder %v226, %v4085
          %vm4130 = vcmp.eq.s32.totalorder %v226, %v4089
          %vm4131 = vcmp.eq.s32.totalorder %v226, %v4093
          %vm4132 = vcmp.eq.s32.totalorder %v226, %v4097
          %vm4133 = vcmp.eq.s32.totalorder %v226, %v4101
          %v4134 = vlaneseq
          %v4135 = vshrl.u32 %v4134, 7
          %v4136 = vsub.s32 5, %v4135
          %v4137 = vrot.slane %v801, %v4136
          %v4138 = vlaneseq
          %v4139 = vshrl.u32 %v4138, 7
          %v4140 = vsub.s32 5, %v4139
          %v4141 = vrot.slane %v802, %v4140
          %v4142 = vlaneseq
          %v4143 = vshrl.u32 %v4142, 7
          %v4144 = vsub.s32 5, %v4143
          %v4145 = vrot.slane %v803, %v4144
          %v4146 = vlaneseq
          %v4147 = vshrl.u32 %v4146, 7
          %v4148 = vsub.s32 5, %v4147
          %v4149 = vrot.slane %v804, %v4148
          %v4150 = vlaneseq
          %v4151 = vshrl.u32 %v4150, 7
          %v4152 = vsub.s32 5, %v4151
          %v4153 = vrot.slane %v805, %v4152
          %v4154 = vlaneseq
          %v4155 = vshrl.u32 %v4154, 7
          %v4156 = vsub.s32 5, %v4155
          %v4157 = vrot.slane %v806, %v4156
          %v4158 = vlaneseq
          %v4159 = vshrl.u32 %v4158, 7
          %v4160 = vsub.s32 5, %v4159
          %v4161 = vrot.slane %v807, %v4160
          %v4162 = vlaneseq
          %v4163 = vshrl.u32 %v4162, 7
          %v4164 = vsub.s32 5, %v4163
          %v4165 = vrot.slane %v808, %v4164
          %v4166 = vsel %vm4102, %v4137, 0.0
          %v4167 = vsel %vm4103, %v4141, 0.0
          %v4168 = vsel %vm4104, %v4145, 0.0
          %v4169 = vsel %vm4105, %v4149, 0.0
          %v4170 = vsel %vm4106, %v4153, 0.0
          %v4171 = vsel %vm4107, %v4157, 0.0
          %v4172 = vsel %vm4108, %v4161, 0.0
          %v4173 = vsel %vm4109, %v4165, 0.0
          %v4174 = vsel %vm4110, %v4137, 0.0
          %v4175 = vsel %vm4111, %v4141, 0.0
          %v4176 = vsel %vm4112, %v4145, 0.0
          %v4177 = vsel %vm4113, %v4149, 0.0
          %v4178 = vsel %vm4114, %v4153, 0.0
          %v4179 = vsel %vm4115, %v4157, 0.0
          %v4180 = vsel %vm4116, %v4161, 0.0
          %v4181 = vsel %vm4117, %v4165, 0.0
          %v4182 = vsel %vm4118, %v4137, 0.0
          %v4183 = vsel %vm4119, %v4141, 0.0
          %v4184 = vsel %vm4120, %v4145, 0.0
          %v4185 = vsel %vm4121, %v4149, 0.0
          %v4186 = vsel %vm4122, %v4153, 0.0
          %v4187 = vsel %vm4123, %v4157, 0.0
          %v4188 = vsel %vm4124, %v4161, 0.0
          %v4189 = vsel %vm4125, %v4165, 0.0
          %v4190 = vsel %vm4126, %v4137, 0.0
          %v4191 = vsel %vm4127, %v4141, 0.0
          %v4192 = vsel %vm4128, %v4145, 0.0
          %v4193 = vsel %vm4129, %v4149, 0.0
          %v4194 = vsel %vm4130, %v4153, 0.0
          %v4195 = vsel %vm4131, %v4157, 0.0
          %v4196 = vsel %vm4132, %v4161, 0.0
          %v4197 = vsel %vm4133, %v4165, 0.0
          %v4198 = vlaneseq
          %v4199 = vshrl.u32 %v4198, 7
          %v4200 = vsub.s32 5, %v4199
          %v4201 = vrot.slane %v881, %v4200
          %v4202 = vlaneseq
          %v4203 = vshrl.u32 %v4202, 7
          %v4204 = vsub.s32 5, %v4203
          %v4205 = vrot.slane %v882, %v4204
          %v4206 = vlaneseq
          %v4207 = vshrl.u32 %v4206, 7
          %v4208 = vsub.s32 5, %v4207
          %v4209 = vrot.slane %v883, %v4208
          %v4210 = vlaneseq
          %v4211 = vshrl.u32 %v4210, 7
          %v4212 = vsub.s32 5, %v4211
          %v4213 = vrot.slane %v884, %v4212
          %v4214 = vlaneseq
          %v4215 = vshrl.u32 %v4214, 7
          %v4216 = vsub.s32 5, %v4215
          %v4217 = vrot.slane %v885, %v4216
          %v4218 = vlaneseq
          %v4219 = vshrl.u32 %v4218, 7
          %v4220 = vsub.s32 5, %v4219
          %v4221 = vrot.slane %v886, %v4220
          %v4222 = vlaneseq
          %v4223 = vshrl.u32 %v4222, 7
          %v4224 = vsub.s32 5, %v4223
          %v4225 = vrot.slane %v887, %v4224
          %v4226 = vlaneseq
          %v4227 = vshrl.u32 %v4226, 7
          %v4228 = vsub.s32 5, %v4227
          %v4229 = vrot.slane %v888, %v4228
          %v4230 = vsel %vm4038, %v4201, %v4166
          %v4231 = vsel %vm4039, %v4205, %v4167
          %v4232 = vsel %vm4040, %v4209, %v4168
          %v4233 = vsel %vm4041, %v4213, %v4169
          %v4234 = vsel %vm4042, %v4217, %v4170
          %v4235 = vsel %vm4043, %v4221, %v4171
          %v4236 = vsel %vm4044, %v4225, %v4172
          %v4237 = vsel %vm4045, %v4229, %v4173
          %v4238 = vsel %vm4046, %v4201, %v4174
          %v4239 = vsel %vm4047, %v4205, %v4175
          %v4240 = vsel %vm4048, %v4209, %v4176
          %v4241 = vsel %vm4049, %v4213, %v4177
          %v4242 = vsel %vm4050, %v4217, %v4178
          %v4243 = vsel %vm4051, %v4221, %v4179
          %v4244 = vsel %vm4052, %v4225, %v4180
          %v4245 = vsel %vm4053, %v4229, %v4181
          %v4246 = vsel %vm4054, %v4201, %v4182
          %v4247 = vsel %vm4055, %v4205, %v4183
          %v4248 = vsel %vm4056, %v4209, %v4184
          %v4249 = vsel %vm4057, %v4213, %v4185
          %v4250 = vsel %vm4058, %v4217, %v4186
          %v4251 = vsel %vm4059, %v4221, %v4187
          %v4252 = vsel %vm4060, %v4225, %v4188
          %v4253 = vsel %vm4061, %v4229, %v4189
          %v4254 = vsel %vm4062, %v4201, %v4190
          %v4255 = vsel %vm4063, %v4205, %v4191
          %v4256 = vsel %vm4064, %v4209, %v4192
          %v4257 = vsel %vm4065, %v4213, %v4193
          %v4258 = vsel %vm4066, %v4217, %v4194
          %v4259 = vsel %vm4067, %v4221, %v4195
          %v4260 = vsel %vm4068, %v4225, %v4196
          %v4261 = vsel %vm4069, %v4229, %v4197
          %v4262 = vlaneseq
          %v4263 = vshrl.u32 %v4262, 7
          %v4264 = vsub.s32 4, %v4263
          %v4265 = vrot.slane %v809, %v4264
          %v4266 = vlaneseq
          %v4267 = vshrl.u32 %v4266, 7
          %v4268 = vsub.s32 4, %v4267
          %v4269 = vrot.slane %v810, %v4268
          %v4270 = vlaneseq
          %v4271 = vshrl.u32 %v4270, 7
          %v4272 = vsub.s32 4, %v4271
          %v4273 = vrot.slane %v811, %v4272
          %v4274 = vlaneseq
          %v4275 = vshrl.u32 %v4274, 7
          %v4276 = vsub.s32 4, %v4275
          %v4277 = vrot.slane %v812, %v4276
          %v4278 = vlaneseq
          %v4279 = vshrl.u32 %v4278, 7
          %v4280 = vsub.s32 4, %v4279
          %v4281 = vrot.slane %v813, %v4280
          %v4282 = vlaneseq
          %v4283 = vshrl.u32 %v4282, 7
          %v4284 = vsub.s32 4, %v4283
          %v4285 = vrot.slane %v814, %v4284
          %v4286 = vlaneseq
          %v4287 = vshrl.u32 %v4286, 7
          %v4288 = vsub.s32 4, %v4287
          %v4289 = vrot.slane %v815, %v4288
          %v4290 = vlaneseq
          %v4291 = vshrl.u32 %v4290, 7
          %v4292 = vsub.s32 4, %v4291
          %v4293 = vrot.slane %v816, %v4292
          %vm4294 = vcmp.eq.s32.totalorder %v223, %v4265
          %vm4295 = vcmp.eq.s32.totalorder %v223, %v4269
          %vm4296 = vcmp.eq.s32.totalorder %v223, %v4273
          %vm4297 = vcmp.eq.s32.totalorder %v223, %v4277
          %vm4298 = vcmp.eq.s32.totalorder %v223, %v4281
          %vm4299 = vcmp.eq.s32.totalorder %v223, %v4285
          %vm4300 = vcmp.eq.s32.totalorder %v223, %v4289
          %vm4301 = vcmp.eq.s32.totalorder %v223, %v4293
          %vm4302 = vcmp.eq.s32.totalorder %v224, %v4265
          %vm4303 = vcmp.eq.s32.totalorder %v224, %v4269
          %vm4304 = vcmp.eq.s32.totalorder %v224, %v4273
          %vm4305 = vcmp.eq.s32.totalorder %v224, %v4277
          %vm4306 = vcmp.eq.s32.totalorder %v224, %v4281
          %vm4307 = vcmp.eq.s32.totalorder %v224, %v4285
          %vm4308 = vcmp.eq.s32.totalorder %v224, %v4289
          %vm4309 = vcmp.eq.s32.totalorder %v224, %v4293
          %vm4310 = vcmp.eq.s32.totalorder %v225, %v4265
          %vm4311 = vcmp.eq.s32.totalorder %v225, %v4269
          %vm4312 = vcmp.eq.s32.totalorder %v225, %v4273
          %vm4313 = vcmp.eq.s32.totalorder %v225, %v4277
          %vm4314 = vcmp.eq.s32.totalorder %v225, %v4281
          %vm4315 = vcmp.eq.s32.totalorder %v225, %v4285
          %vm4316 = vcmp.eq.s32.totalorder %v225, %v4289
          %vm4317 = vcmp.eq.s32.totalorder %v225, %v4293
          %vm4318 = vcmp.eq.s32.totalorder %v226, %v4265
          %vm4319 = vcmp.eq.s32.totalorder %v226, %v4269
          %vm4320 = vcmp.eq.s32.totalorder %v226, %v4273
          %vm4321 = vcmp.eq.s32.totalorder %v226, %v4277
          %vm4322 = vcmp.eq.s32.totalorder %v226, %v4281
          %vm4323 = vcmp.eq.s32.totalorder %v226, %v4285
          %vm4324 = vcmp.eq.s32.totalorder %v226, %v4289
          %vm4325 = vcmp.eq.s32.totalorder %v226, %v4293
          %v4326 = vlaneseq
          %v4327 = vshrl.u32 %v4326, 7
          %v4328 = vsub.s32 4, %v4327
          %v4329 = vrot.slane %v889, %v4328
          %v4330 = vlaneseq
          %v4331 = vshrl.u32 %v4330, 7
          %v4332 = vsub.s32 4, %v4331
          %v4333 = vrot.slane %v890, %v4332
          %v4334 = vlaneseq
          %v4335 = vshrl.u32 %v4334, 7
          %v4336 = vsub.s32 4, %v4335
          %v4337 = vrot.slane %v891, %v4336
          %v4338 = vlaneseq
          %v4339 = vshrl.u32 %v4338, 7
          %v4340 = vsub.s32 4, %v4339
          %v4341 = vrot.slane %v892, %v4340
          %v4342 = vlaneseq
          %v4343 = vshrl.u32 %v4342, 7
          %v4344 = vsub.s32 4, %v4343
          %v4345 = vrot.slane %v893, %v4344
          %v4346 = vlaneseq
          %v4347 = vshrl.u32 %v4346, 7
          %v4348 = vsub.s32 4, %v4347
          %v4349 = vrot.slane %v894, %v4348
          %v4350 = vlaneseq
          %v4351 = vshrl.u32 %v4350, 7
          %v4352 = vsub.s32 4, %v4351
          %v4353 = vrot.slane %v895, %v4352
          %v4354 = vlaneseq
          %v4355 = vshrl.u32 %v4354, 7
          %v4356 = vsub.s32 4, %v4355
          %v4357 = vrot.slane %v896, %v4356
          %vm4358 = vcmp.eq.s32.totalorder %v223, %v4329
          %vm4359 = vcmp.eq.s32.totalorder %v223, %v4333
          %vm4360 = vcmp.eq.s32.totalorder %v223, %v4337
          %vm4361 = vcmp.eq.s32.totalorder %v223, %v4341
          %vm4362 = vcmp.eq.s32.totalorder %v223, %v4345
          %vm4363 = vcmp.eq.s32.totalorder %v223, %v4349
          %vm4364 = vcmp.eq.s32.totalorder %v223, %v4353
          %vm4365 = vcmp.eq.s32.totalorder %v223, %v4357
          %vm4366 = vcmp.eq.s32.totalorder %v224, %v4329
          %vm4367 = vcmp.eq.s32.totalorder %v224, %v4333
          %vm4368 = vcmp.eq.s32.totalorder %v224, %v4337
          %vm4369 = vcmp.eq.s32.totalorder %v224, %v4341
          %vm4370 = vcmp.eq.s32.totalorder %v224, %v4345
          %vm4371 = vcmp.eq.s32.totalorder %v224, %v4349
          %vm4372 = vcmp.eq.s32.totalorder %v224, %v4353
          %vm4373 = vcmp.eq.s32.totalorder %v224, %v4357
          %vm4374 = vcmp.eq.s32.totalorder %v225, %v4329
          %vm4375 = vcmp.eq.s32.totalorder %v225, %v4333
          %vm4376 = vcmp.eq.s32.totalorder %v225, %v4337
          %vm4377 = vcmp.eq.s32.totalorder %v225, %v4341
          %vm4378 = vcmp.eq.s32.totalorder %v225, %v4345
          %vm4379 = vcmp.eq.s32.totalorder %v225, %v4349
          %vm4380 = vcmp.eq.s32.totalorder %v225, %v4353
          %vm4381 = vcmp.eq.s32.totalorder %v225, %v4357
          %vm4382 = vcmp.eq.s32.totalorder %v226, %v4329
          %vm4383 = vcmp.eq.s32.totalorder %v226, %v4333
          %vm4384 = vcmp.eq.s32.totalorder %v226, %v4337
          %vm4385 = vcmp.eq.s32.totalorder %v226, %v4341
          %vm4386 = vcmp.eq.s32.totalorder %v226, %v4345
          %vm4387 = vcmp.eq.s32.totalorder %v226, %v4349
          %vm4388 = vcmp.eq.s32.totalorder %v226, %v4353
          %vm4389 = vcmp.eq.s32.totalorder %v226, %v4357
          %v4390 = vlaneseq
          %v4391 = vshrl.u32 %v4390, 7
          %v4392 = vsub.s32 4, %v4391
          %v4393 = vrot.slane %v801, %v4392
          %v4394 = vlaneseq
          %v4395 = vshrl.u32 %v4394, 7
          %v4396 = vsub.s32 4, %v4395
          %v4397 = vrot.slane %v802, %v4396
          %v4398 = vlaneseq
          %v4399 = vshrl.u32 %v4398, 7
          %v4400 = vsub.s32 4, %v4399
          %v4401 = vrot.slane %v803, %v4400
          %v4402 = vlaneseq
          %v4403 = vshrl.u32 %v4402, 7
          %v4404 = vsub.s32 4, %v4403
          %v4405 = vrot.slane %v804, %v4404
          %v4406 = vlaneseq
          %v4407 = vshrl.u32 %v4406, 7
          %v4408 = vsub.s32 4, %v4407
          %v4409 = vrot.slane %v805, %v4408
          %v4410 = vlaneseq
          %v4411 = vshrl.u32 %v4410, 7
          %v4412 = vsub.s32 4, %v4411
          %v4413 = vrot.slane %v806, %v4412
          %v4414 = vlaneseq
          %v4415 = vshrl.u32 %v4414, 7
          %v4416 = vsub.s32 4, %v4415
          %v4417 = vrot.slane %v807, %v4416
          %v4418 = vlaneseq
          %v4419 = vshrl.u32 %v4418, 7
          %v4420 = vsub.s32 4, %v4419
          %v4421 = vrot.slane %v808, %v4420
          %v4422 = vsel %vm4358, %v4393, 0.0
          %v4423 = vsel %vm4359, %v4397, 0.0
          %v4424 = vsel %vm4360, %v4401, 0.0
          %v4425 = vsel %vm4361, %v4405, 0.0
          %v4426 = vsel %vm4362, %v4409, 0.0
          %v4427 = vsel %vm4363, %v4413, 0.0
          %v4428 = vsel %vm4364, %v4417, 0.0
          %v4429 = vsel %vm4365, %v4421, 0.0
          %v4430 = vsel %vm4366, %v4393, 0.0
          %v4431 = vsel %vm4367, %v4397, 0.0
          %v4432 = vsel %vm4368, %v4401, 0.0
          %v4433 = vsel %vm4369, %v4405, 0.0
          %v4434 = vsel %vm4370, %v4409, 0.0
          %v4435 = vsel %vm4371, %v4413, 0.0
          %v4436 = vsel %vm4372, %v4417, 0.0
          %v4437 = vsel %vm4373, %v4421, 0.0
          %v4438 = vsel %vm4374, %v4393, 0.0
          %v4439 = vsel %vm4375, %v4397, 0.0
          %v4440 = vsel %vm4376, %v4401, 0.0
          %v4441 = vsel %vm4377, %v4405, 0.0
          %v4442 = vsel %vm4378, %v4409, 0.0
          %v4443 = vsel %vm4379, %v4413, 0.0
          %v4444 = vsel %vm4380, %v4417, 0.0
          %v4445 = vsel %vm4381, %v4421, 0.0
          %v4446 = vsel %vm4382, %v4393, 0.0
          %v4447 = vsel %vm4383, %v4397, 0.0
          %v4448 = vsel %vm4384, %v4401, 0.0
          %v4449 = vsel %vm4385, %v4405, 0.0
          %v4450 = vsel %vm4386, %v4409, 0.0
          %v4451 = vsel %vm4387, %v4413, 0.0
          %v4452 = vsel %vm4388, %v4417, 0.0
          %v4453 = vsel %vm4389, %v4421, 0.0
          %v4454 = vlaneseq
          %v4455 = vshrl.u32 %v4454, 7
          %v4456 = vsub.s32 4, %v4455
          %v4457 = vrot.slane %v881, %v4456
          %v4458 = vlaneseq
          %v4459 = vshrl.u32 %v4458, 7
          %v4460 = vsub.s32 4, %v4459
          %v4461 = vrot.slane %v882, %v4460
          %v4462 = vlaneseq
          %v4463 = vshrl.u32 %v4462, 7
          %v4464 = vsub.s32 4, %v4463
          %v4465 = vrot.slane %v883, %v4464
          %v4466 = vlaneseq
          %v4467 = vshrl.u32 %v4466, 7
          %v4468 = vsub.s32 4, %v4467
          %v4469 = vrot.slane %v884, %v4468
          %v4470 = vlaneseq
          %v4471 = vshrl.u32 %v4470, 7
          %v4472 = vsub.s32 4, %v4471
          %v4473 = vrot.slane %v885, %v4472
          %v4474 = vlaneseq
          %v4475 = vshrl.u32 %v4474, 7
          %v4476 = vsub.s32 4, %v4475
          %v4477 = vrot.slane %v886, %v4476
          %v4478 = vlaneseq
          %v4479 = vshrl.u32 %v4478, 7
          %v4480 = vsub.s32 4, %v4479
          %v4481 = vrot.slane %v887, %v4480
          %v4482 = vlaneseq
          %v4483 = vshrl.u32 %v4482, 7
          %v4484 = vsub.s32 4, %v4483
          %v4485 = vrot.slane %v888, %v4484
          %v4486 = vsel %vm4294, %v4457, %v4422
          %v4487 = vsel %vm4295, %v4461, %v4423
          %v4488 = vsel %vm4296, %v4465, %v4424
          %v4489 = vsel %vm4297, %v4469, %v4425
          %v4490 = vsel %vm4298, %v4473, %v4426
          %v4491 = vsel %vm4299, %v4477, %v4427
          %v4492 = vsel %vm4300, %v4481, %v4428
          %v4493 = vsel %vm4301, %v4485, %v4429
          %v4494 = vsel %vm4302, %v4457, %v4430
          %v4495 = vsel %vm4303, %v4461, %v4431
          %v4496 = vsel %vm4304, %v4465, %v4432
          %v4497 = vsel %vm4305, %v4469, %v4433
          %v4498 = vsel %vm4306, %v4473, %v4434
          %v4499 = vsel %vm4307, %v4477, %v4435
          %v4500 = vsel %vm4308, %v4481, %v4436
          %v4501 = vsel %vm4309, %v4485, %v4437
          %v4502 = vsel %vm4310, %v4457, %v4438
          %v4503 = vsel %vm4311, %v4461, %v4439
          %v4504 = vsel %vm4312, %v4465, %v4440
          %v4505 = vsel %vm4313, %v4469, %v4441
          %v4506 = vsel %vm4314, %v4473, %v4442
          %v4507 = vsel %vm4315, %v4477, %v4443
          %v4508 = vsel %vm4316, %v4481, %v4444
          %v4509 = vsel %vm4317, %v4485, %v4445
          %v4510 = vsel %vm4318, %v4457, %v4446
          %v4511 = vsel %vm4319, %v4461, %v4447
          %v4512 = vsel %vm4320, %v4465, %v4448
          %v4513 = vsel %vm4321, %v4469, %v4449
          %v4514 = vsel %vm4322, %v4473, %v4450
          %v4515 = vsel %vm4323, %v4477, %v4451
          %v4516 = vsel %vm4324, %v4481, %v4452
          %v4517 = vsel %vm4325, %v4485, %v4453
          %v4518 = vsub.f32 %v4230, %v4486
          %v4519 = vsub.f32 %v4231, %v4487
          %v4520 = vsub.f32 %v4232, %v4488
          %v4521 = vsub.f32 %v4233, %v4489
          %v4522 = vsub.f32 %v4234, %v4490
          %v4523 = vsub.f32 %v4235, %v4491
          %v4524 = vsub.f32 %v4236, %v4492
          %v4525 = vsub.f32 %v4237, %v4493
          %v4526 = vsub.f32 %v4238, %v4494
          %v4527 = vsub.f32 %v4239, %v4495
          %v4528 = vsub.f32 %v4240, %v4496
          %v4529 = vsub.f32 %v4241, %v4497
          %v4530 = vsub.f32 %v4242, %v4498
          %v4531 = vsub.f32 %v4243, %v4499
          %v4532 = vsub.f32 %v4244, %v4500
          %v4533 = vsub.f32 %v4245, %v4501
          %v4534 = vsub.f32 %v4246, %v4502
          %v4535 = vsub.f32 %v4247, %v4503
          %v4536 = vsub.f32 %v4248, %v4504
          %v4537 = vsub.f32 %v4249, %v4505
          %v4538 = vsub.f32 %v4250, %v4506
          %v4539 = vsub.f32 %v4251, %v4507
          %v4540 = vsub.f32 %v4252, %v4508
          %v4541 = vsub.f32 %v4253, %v4509
          %v4542 = vsub.f32 %v4254, %v4510
          %v4543 = vsub.f32 %v4255, %v4511
          %v4544 = vsub.f32 %v4256, %v4512
          %v4545 = vsub.f32 %v4257, %v4513
          %v4546 = vsub.f32 %v4258, %v4514
          %v4547 = vsub.f32 %v4259, %v4515
          %v4548 = vsub.f32 %v4260, %v4516
          %v4549 = vsub.f32 %v4261, %v4517
          %v4550 = vlaneseq
          %v4551 = vshrl.u32 %v4550, 7
          %v4552 = vsub.s32 5, %v4551
          %v4553 = vrot.slane %v1433, %v4552
          %v4554 = vlaneseq
          %v4555 = vshrl.u32 %v4554, 7
          %v4556 = vsub.s32 5, %v4555
          %v4557 = vrot.slane %v1434, %v4556
          %v4558 = vlaneseq
          %v4559 = vshrl.u32 %v4558, 7
          %v4560 = vsub.s32 5, %v4559
          %v4561 = vrot.slane %v1435, %v4560
          %v4562 = vlaneseq
          %v4563 = vshrl.u32 %v4562, 7
          %v4564 = vsub.s32 5, %v4563
          %v4565 = vrot.slane %v1436, %v4564
          %v4566 = vlaneseq
          %v4567 = vshrl.u32 %v4566, 7
          %v4568 = vsub.s32 5, %v4567
          %v4569 = vrot.slane %v1437, %v4568
          %v4570 = vlaneseq
          %v4571 = vshrl.u32 %v4570, 7
          %v4572 = vsub.s32 5, %v4571
          %v4573 = vrot.slane %v1438, %v4572
          %v4574 = vlaneseq
          %v4575 = vshrl.u32 %v4574, 7
          %v4576 = vsub.s32 5, %v4575
          %v4577 = vrot.slane %v1439, %v4576
          %v4578 = vlaneseq
          %v4579 = vshrl.u32 %v4578, 7
          %v4580 = vsub.s32 5, %v4579
          %v4581 = vrot.slane %v1440, %v4580
          %vm4582 = vcmp.eq.s32.totalorder %v223, %v4553
          %vm4583 = vcmp.eq.s32.totalorder %v223, %v4557
          %vm4584 = vcmp.eq.s32.totalorder %v223, %v4561
          %vm4585 = vcmp.eq.s32.totalorder %v223, %v4565
          %vm4586 = vcmp.eq.s32.totalorder %v223, %v4569
          %vm4587 = vcmp.eq.s32.totalorder %v223, %v4573
          %vm4588 = vcmp.eq.s32.totalorder %v223, %v4577
          %vm4589 = vcmp.eq.s32.totalorder %v223, %v4581
          %vm4590 = vcmp.eq.s32.totalorder %v224, %v4553
          %vm4591 = vcmp.eq.s32.totalorder %v224, %v4557
          %vm4592 = vcmp.eq.s32.totalorder %v224, %v4561
          %vm4593 = vcmp.eq.s32.totalorder %v224, %v4565
          %vm4594 = vcmp.eq.s32.totalorder %v224, %v4569
          %vm4595 = vcmp.eq.s32.totalorder %v224, %v4573
          %vm4596 = vcmp.eq.s32.totalorder %v224, %v4577
          %vm4597 = vcmp.eq.s32.totalorder %v224, %v4581
          %vm4598 = vcmp.eq.s32.totalorder %v225, %v4553
          %vm4599 = vcmp.eq.s32.totalorder %v225, %v4557
          %vm4600 = vcmp.eq.s32.totalorder %v225, %v4561
          %vm4601 = vcmp.eq.s32.totalorder %v225, %v4565
          %vm4602 = vcmp.eq.s32.totalorder %v225, %v4569
          %vm4603 = vcmp.eq.s32.totalorder %v225, %v4573
          %vm4604 = vcmp.eq.s32.totalorder %v225, %v4577
          %vm4605 = vcmp.eq.s32.totalorder %v225, %v4581
          %vm4606 = vcmp.eq.s32.totalorder %v226, %v4553
          %vm4607 = vcmp.eq.s32.totalorder %v226, %v4557
          %vm4608 = vcmp.eq.s32.totalorder %v226, %v4561
          %vm4609 = vcmp.eq.s32.totalorder %v226, %v4565
          %vm4610 = vcmp.eq.s32.totalorder %v226, %v4569
          %vm4611 = vcmp.eq.s32.totalorder %v226, %v4573
          %vm4612 = vcmp.eq.s32.totalorder %v226, %v4577
          %vm4613 = vcmp.eq.s32.totalorder %v226, %v4581
          %v4614 = vlaneseq
          %v4615 = vshrl.u32 %v4614, 7
          %v4616 = vsub.s32 5, %v4615
          %v4617 = vrot.slane %v1513, %v4616
          %v4618 = vlaneseq
          %v4619 = vshrl.u32 %v4618, 7
          %v4620 = vsub.s32 5, %v4619
          %v4621 = vrot.slane %v1514, %v4620
          %v4622 = vlaneseq
          %v4623 = vshrl.u32 %v4622, 7
          %v4624 = vsub.s32 5, %v4623
          %v4625 = vrot.slane %v1515, %v4624
          %v4626 = vlaneseq
          %v4627 = vshrl.u32 %v4626, 7
          %v4628 = vsub.s32 5, %v4627
          %v4629 = vrot.slane %v1516, %v4628
          %v4630 = vlaneseq
          %v4631 = vshrl.u32 %v4630, 7
          %v4632 = vsub.s32 5, %v4631
          %v4633 = vrot.slane %v1517, %v4632
          %v4634 = vlaneseq
          %v4635 = vshrl.u32 %v4634, 7
          %v4636 = vsub.s32 5, %v4635
          %v4637 = vrot.slane %v1518, %v4636
          %v4638 = vlaneseq
          %v4639 = vshrl.u32 %v4638, 7
          %v4640 = vsub.s32 5, %v4639
          %v4641 = vrot.slane %v1519, %v4640
          %v4642 = vlaneseq
          %v4643 = vshrl.u32 %v4642, 7
          %v4644 = vsub.s32 5, %v4643
          %v4645 = vrot.slane %v1520, %v4644
          %vm4646 = vcmp.eq.s32.totalorder %v223, %v4617
          %vm4647 = vcmp.eq.s32.totalorder %v223, %v4621
          %vm4648 = vcmp.eq.s32.totalorder %v223, %v4625
          %vm4649 = vcmp.eq.s32.totalorder %v223, %v4629
          %vm4650 = vcmp.eq.s32.totalorder %v223, %v4633
          %vm4651 = vcmp.eq.s32.totalorder %v223, %v4637
          %vm4652 = vcmp.eq.s32.totalorder %v223, %v4641
          %vm4653 = vcmp.eq.s32.totalorder %v223, %v4645
          %vm4654 = vcmp.eq.s32.totalorder %v224, %v4617
          %vm4655 = vcmp.eq.s32.totalorder %v224, %v4621
          %vm4656 = vcmp.eq.s32.totalorder %v224, %v4625
          %vm4657 = vcmp.eq.s32.totalorder %v224, %v4629
          %vm4658 = vcmp.eq.s32.totalorder %v224, %v4633
          %vm4659 = vcmp.eq.s32.totalorder %v224, %v4637
          %vm4660 = vcmp.eq.s32.totalorder %v224, %v4641
          %vm4661 = vcmp.eq.s32.totalorder %v224, %v4645
          %vm4662 = vcmp.eq.s32.totalorder %v225, %v4617
          %vm4663 = vcmp.eq.s32.totalorder %v225, %v4621
          %vm4664 = vcmp.eq.s32.totalorder %v225, %v4625
          %vm4665 = vcmp.eq.s32.totalorder %v225, %v4629
          %vm4666 = vcmp.eq.s32.totalorder %v225, %v4633
          %vm4667 = vcmp.eq.s32.totalorder %v225, %v4637
          %vm4668 = vcmp.eq.s32.totalorder %v225, %v4641
          %vm4669 = vcmp.eq.s32.totalorder %v225, %v4645
          %vm4670 = vcmp.eq.s32.totalorder %v226, %v4617
          %vm4671 = vcmp.eq.s32.totalorder %v226, %v4621
          %vm4672 = vcmp.eq.s32.totalorder %v226, %v4625
          %vm4673 = vcmp.eq.s32.totalorder %v226, %v4629
          %vm4674 = vcmp.eq.s32.totalorder %v226, %v4633
          %vm4675 = vcmp.eq.s32.totalorder %v226, %v4637
          %vm4676 = vcmp.eq.s32.totalorder %v226, %v4641
          %vm4677 = vcmp.eq.s32.totalorder %v226, %v4645
          %v4678 = vlaneseq
          %v4679 = vshrl.u32 %v4678, 7
          %v4680 = vsub.s32 5, %v4679
          %v4681 = vrot.slane %v1425, %v4680
          %v4682 = vlaneseq
          %v4683 = vshrl.u32 %v4682, 7
          %v4684 = vsub.s32 5, %v4683
          %v4685 = vrot.slane %v1426, %v4684
          %v4686 = vlaneseq
          %v4687 = vshrl.u32 %v4686, 7
          %v4688 = vsub.s32 5, %v4687
          %v4689 = vrot.slane %v1427, %v4688
          %v4690 = vlaneseq
          %v4691 = vshrl.u32 %v4690, 7
          %v4692 = vsub.s32 5, %v4691
          %v4693 = vrot.slane %v1428, %v4692
          %v4694 = vlaneseq
          %v4695 = vshrl.u32 %v4694, 7
          %v4696 = vsub.s32 5, %v4695
          %v4697 = vrot.slane %v1429, %v4696
          %v4698 = vlaneseq
          %v4699 = vshrl.u32 %v4698, 7
          %v4700 = vsub.s32 5, %v4699
          %v4701 = vrot.slane %v1430, %v4700
          %v4702 = vlaneseq
          %v4703 = vshrl.u32 %v4702, 7
          %v4704 = vsub.s32 5, %v4703
          %v4705 = vrot.slane %v1431, %v4704
          %v4706 = vlaneseq
          %v4707 = vshrl.u32 %v4706, 7
          %v4708 = vsub.s32 5, %v4707
          %v4709 = vrot.slane %v1432, %v4708
          %v4710 = vsel %vm4646, %v4681, 0.0
          %v4711 = vsel %vm4647, %v4685, 0.0
          %v4712 = vsel %vm4648, %v4689, 0.0
          %v4713 = vsel %vm4649, %v4693, 0.0
          %v4714 = vsel %vm4650, %v4697, 0.0
          %v4715 = vsel %vm4651, %v4701, 0.0
          %v4716 = vsel %vm4652, %v4705, 0.0
          %v4717 = vsel %vm4653, %v4709, 0.0
          %v4718 = vsel %vm4654, %v4681, 0.0
          %v4719 = vsel %vm4655, %v4685, 0.0
          %v4720 = vsel %vm4656, %v4689, 0.0
          %v4721 = vsel %vm4657, %v4693, 0.0
          %v4722 = vsel %vm4658, %v4697, 0.0
          %v4723 = vsel %vm4659, %v4701, 0.0
          %v4724 = vsel %vm4660, %v4705, 0.0
          %v4725 = vsel %vm4661, %v4709, 0.0
          %v4726 = vsel %vm4662, %v4681, 0.0
          %v4727 = vsel %vm4663, %v4685, 0.0
          %v4728 = vsel %vm4664, %v4689, 0.0
          %v4729 = vsel %vm4665, %v4693, 0.0
          %v4730 = vsel %vm4666, %v4697, 0.0
          %v4731 = vsel %vm4667, %v4701, 0.0
          %v4732 = vsel %vm4668, %v4705, 0.0
          %v4733 = vsel %vm4669, %v4709, 0.0
          %v4734 = vsel %vm4670, %v4681, 0.0
          %v4735 = vsel %vm4671, %v4685, 0.0
          %v4736 = vsel %vm4672, %v4689, 0.0
          %v4737 = vsel %vm4673, %v4693, 0.0
          %v4738 = vsel %vm4674, %v4697, 0.0
          %v4739 = vsel %vm4675, %v4701, 0.0
          %v4740 = vsel %vm4676, %v4705, 0.0
          %v4741 = vsel %vm4677, %v4709, 0.0
          %v4742 = vlaneseq
          %v4743 = vshrl.u32 %v4742, 7
          %v4744 = vsub.s32 5, %v4743
          %v4745 = vrot.slane %v1505, %v4744
          %v4746 = vlaneseq
          %v4747 = vshrl.u32 %v4746, 7
          %v4748 = vsub.s32 5, %v4747
          %v4749 = vrot.slane %v1506, %v4748
          %v4750 = vlaneseq
          %v4751 = vshrl.u32 %v4750, 7
          %v4752 = vsub.s32 5, %v4751
          %v4753 = vrot.slane %v1507, %v4752
          %v4754 = vlaneseq
          %v4755 = vshrl.u32 %v4754, 7
          %v4756 = vsub.s32 5, %v4755
          %v4757 = vrot.slane %v1508, %v4756
          %v4758 = vlaneseq
          %v4759 = vshrl.u32 %v4758, 7
          %v4760 = vsub.s32 5, %v4759
          %v4761 = vrot.slane %v1509, %v4760
          %v4762 = vlaneseq
          %v4763 = vshrl.u32 %v4762, 7
          %v4764 = vsub.s32 5, %v4763
          %v4765 = vrot.slane %v1510, %v4764
          %v4766 = vlaneseq
          %v4767 = vshrl.u32 %v4766, 7
          %v4768 = vsub.s32 5, %v4767
          %v4769 = vrot.slane %v1511, %v4768
          %v4770 = vlaneseq
          %v4771 = vshrl.u32 %v4770, 7
          %v4772 = vsub.s32 5, %v4771
          %v4773 = vrot.slane %v1512, %v4772
          %v4774 = vsel %vm4582, %v4745, %v4710
          %v4775 = vsel %vm4583, %v4749, %v4711
          %v4776 = vsel %vm4584, %v4753, %v4712
          %v4777 = vsel %vm4585, %v4757, %v4713
          %v4778 = vsel %vm4586, %v4761, %v4714
          %v4779 = vsel %vm4587, %v4765, %v4715
          %v4780 = vsel %vm4588, %v4769, %v4716
          %v4781 = vsel %vm4589, %v4773, %v4717
          %v4782 = vsel %vm4590, %v4745, %v4718
          %v4783 = vsel %vm4591, %v4749, %v4719
          %v4784 = vsel %vm4592, %v4753, %v4720
          %v4785 = vsel %vm4593, %v4757, %v4721
          %v4786 = vsel %vm4594, %v4761, %v4722
          %v4787 = vsel %vm4595, %v4765, %v4723
          %v4788 = vsel %vm4596, %v4769, %v4724
          %v4789 = vsel %vm4597, %v4773, %v4725
          %v4790 = vsel %vm4598, %v4745, %v4726
          %v4791 = vsel %vm4599, %v4749, %v4727
          %v4792 = vsel %vm4600, %v4753, %v4728
          %v4793 = vsel %vm4601, %v4757, %v4729
          %v4794 = vsel %vm4602, %v4761, %v4730
          %v4795 = vsel %vm4603, %v4765, %v4731
          %v4796 = vsel %vm4604, %v4769, %v4732
          %v4797 = vsel %vm4605, %v4773, %v4733
          %v4798 = vsel %vm4606, %v4745, %v4734
          %v4799 = vsel %vm4607, %v4749, %v4735
          %v4800 = vsel %vm4608, %v4753, %v4736
          %v4801 = vsel %vm4609, %v4757, %v4737
          %v4802 = vsel %vm4610, %v4761, %v4738
          %v4803 = vsel %vm4611, %v4765, %v4739
          %v4804 = vsel %vm4612, %v4769, %v4740
          %v4805 = vsel %vm4613, %v4773, %v4741
          %v4806 = vsub.f32 %v4774, %v235
          %v4807 = vsub.f32 %v4775, %v235
          %v4808 = vsub.f32 %v4776, %v235
          %v4809 = vsub.f32 %v4777, %v235
          %v4810 = vsub.f32 %v4778, %v235
          %v4811 = vsub.f32 %v4779, %v235
          %v4812 = vsub.f32 %v4780, %v235
          %v4813 = vsub.f32 %v4781, %v235
          %v4814 = vsub.f32 %v4782, %v236
          %v4815 = vsub.f32 %v4783, %v236
          %v4816 = vsub.f32 %v4784, %v236
          %v4817 = vsub.f32 %v4785, %v236
          %v4818 = vsub.f32 %v4786, %v236
          %v4819 = vsub.f32 %v4787, %v236
          %v4820 = vsub.f32 %v4788, %v236
          %v4821 = vsub.f32 %v4789, %v236
          %v4822 = vsub.f32 %v4790, %v237
          %v4823 = vsub.f32 %v4791, %v237
          %v4824 = vsub.f32 %v4792, %v237
          %v4825 = vsub.f32 %v4793, %v237
          %v4826 = vsub.f32 %v4794, %v237
          %v4827 = vsub.f32 %v4795, %v237
          %v4828 = vsub.f32 %v4796, %v237
          %v4829 = vsub.f32 %v4797, %v237
          %v4830 = vsub.f32 %v4798, %v238
          %v4831 = vsub.f32 %v4799, %v238
          %v4832 = vsub.f32 %v4800, %v238
          %v4833 = vsub.f32 %v4801, %v238
          %v4834 = vsub.f32 %v4802, %v238
          %v4835 = vsub.f32 %v4803, %v238
          %v4836 = vsub.f32 %v4804, %v238
          %v4837 = vsub.f32 %v4805, %v238
          %v4838 = vlaneseq
          %v4839 = vshrl.u32 %v4838, 7
          %v4840 = vsub.s32 5, %v4839
          %v4841 = vrot.slane %v753, %v4840
          %v4842 = vlaneseq
          %v4843 = vshrl.u32 %v4842, 7
          %v4844 = vsub.s32 5, %v4843
          %v4845 = vrot.slane %v754, %v4844
          %v4846 = vlaneseq
          %v4847 = vshrl.u32 %v4846, 7
          %v4848 = vsub.s32 5, %v4847
          %v4849 = vrot.slane %v755, %v4848
          %v4850 = vlaneseq
          %v4851 = vshrl.u32 %v4850, 7
          %v4852 = vsub.s32 5, %v4851
          %v4853 = vrot.slane %v756, %v4852
          %v4854 = vlaneseq
          %v4855 = vshrl.u32 %v4854, 7
          %v4856 = vsub.s32 5, %v4855
          %v4857 = vrot.slane %v757, %v4856
          %v4858 = vlaneseq
          %v4859 = vshrl.u32 %v4858, 7
          %v4860 = vsub.s32 5, %v4859
          %v4861 = vrot.slane %v758, %v4860
          %v4862 = vlaneseq
          %v4863 = vshrl.u32 %v4862, 7
          %v4864 = vsub.s32 5, %v4863
          %v4865 = vrot.slane %v759, %v4864
          %v4866 = vlaneseq
          %v4867 = vshrl.u32 %v4866, 7
          %v4868 = vsub.s32 5, %v4867
          %v4869 = vrot.slane %v760, %v4868
          %v4870 = vmul.f32 %v4841, %v4806
          %v4871 = vmul.f32 %v4845, %v4807
          %v4872 = vmul.f32 %v4849, %v4808
          %v4873 = vmul.f32 %v4853, %v4809
          %v4874 = vmul.f32 %v4857, %v4810
          %v4875 = vmul.f32 %v4861, %v4811
          %v4876 = vmul.f32 %v4865, %v4812
          %v4877 = vmul.f32 %v4869, %v4813
          %v4878 = vmul.f32 %v4841, %v4814
          %v4879 = vmul.f32 %v4845, %v4815
          %v4880 = vmul.f32 %v4849, %v4816
          %v4881 = vmul.f32 %v4853, %v4817
          %v4882 = vmul.f32 %v4857, %v4818
          %v4883 = vmul.f32 %v4861, %v4819
          %v4884 = vmul.f32 %v4865, %v4820
          %v4885 = vmul.f32 %v4869, %v4821
          %v4886 = vmul.f32 %v4841, %v4822
          %v4887 = vmul.f32 %v4845, %v4823
          %v4888 = vmul.f32 %v4849, %v4824
          %v4889 = vmul.f32 %v4853, %v4825
          %v4890 = vmul.f32 %v4857, %v4826
          %v4891 = vmul.f32 %v4861, %v4827
          %v4892 = vmul.f32 %v4865, %v4828
          %v4893 = vmul.f32 %v4869, %v4829
          %v4894 = vmul.f32 %v4841, %v4830
          %v4895 = vmul.f32 %v4845, %v4831
          %v4896 = vmul.f32 %v4849, %v4832
          %v4897 = vmul.f32 %v4853, %v4833
          %v4898 = vmul.f32 %v4857, %v4834
          %v4899 = vmul.f32 %v4861, %v4835
          %v4900 = vmul.f32 %v4865, %v4836
          %v4901 = vmul.f32 %v4869, %v4837
          %v4902 = vadd.f32 %v4518, %v4870
          %v4903 = vadd.f32 %v4519, %v4871
          %v4904 = vadd.f32 %v4520, %v4872
          %v4905 = vadd.f32 %v4521, %v4873
          %v4906 = vadd.f32 %v4522, %v4874
          %v4907 = vadd.f32 %v4523, %v4875
          %v4908 = vadd.f32 %v4524, %v4876
          %v4909 = vadd.f32 %v4525, %v4877
          %v4910 = vadd.f32 %v4526, %v4878
          %v4911 = vadd.f32 %v4527, %v4879
          %v4912 = vadd.f32 %v4528, %v4880
          %v4913 = vadd.f32 %v4529, %v4881
          %v4914 = vadd.f32 %v4530, %v4882
          %v4915 = vadd.f32 %v4531, %v4883
          %v4916 = vadd.f32 %v4532, %v4884
          %v4917 = vadd.f32 %v4533, %v4885
          %v4918 = vadd.f32 %v4534, %v4886
          %v4919 = vadd.f32 %v4535, %v4887
          %v4920 = vadd.f32 %v4536, %v4888
          %v4921 = vadd.f32 %v4537, %v4889
          %v4922 = vadd.f32 %v4538, %v4890
          %v4923 = vadd.f32 %v4539, %v4891
          %v4924 = vadd.f32 %v4540, %v4892
          %v4925 = vadd.f32 %v4541, %v4893
          %v4926 = vadd.f32 %v4542, %v4894
          %v4927 = vadd.f32 %v4543, %v4895
          %v4928 = vadd.f32 %v4544, %v4896
          %v4929 = vadd.f32 %v4545, %v4897
          %v4930 = vadd.f32 %v4546, %v4898
          %v4931 = vadd.f32 %v4547, %v4899
          %v4932 = vadd.f32 %v4548, %v4900
          %v4933 = vadd.f32 %v4549, %v4901
          %v4934 = vlaneseq
          %v4935 = vshrl.u32 %v4934, 7
          %v4936 = vsub.s32 4, %v4935
          %v4937 = vrot.slane %v1897, %v4936
          %v4938 = vlaneseq
          %v4939 = vshrl.u32 %v4938, 7
          %v4940 = vsub.s32 4, %v4939
          %v4941 = vrot.slane %v1898, %v4940
          %v4942 = vlaneseq
          %v4943 = vshrl.u32 %v4942, 7
          %v4944 = vsub.s32 4, %v4943
          %v4945 = vrot.slane %v1899, %v4944
          %v4946 = vlaneseq
          %v4947 = vshrl.u32 %v4946, 7
          %v4948 = vsub.s32 4, %v4947
          %v4949 = vrot.slane %v1900, %v4948
          %v4950 = vlaneseq
          %v4951 = vshrl.u32 %v4950, 7
          %v4952 = vsub.s32 4, %v4951
          %v4953 = vrot.slane %v1901, %v4952
          %v4954 = vlaneseq
          %v4955 = vshrl.u32 %v4954, 7
          %v4956 = vsub.s32 4, %v4955
          %v4957 = vrot.slane %v1902, %v4956
          %v4958 = vlaneseq
          %v4959 = vshrl.u32 %v4958, 7
          %v4960 = vsub.s32 4, %v4959
          %v4961 = vrot.slane %v1903, %v4960
          %v4962 = vlaneseq
          %v4963 = vshrl.u32 %v4962, 7
          %v4964 = vsub.s32 4, %v4963
          %v4965 = vrot.slane %v1904, %v4964
          %vm4966 = vcmp.eq.s32.totalorder %v223, %v4937
          %vm4967 = vcmp.eq.s32.totalorder %v223, %v4941
          %vm4968 = vcmp.eq.s32.totalorder %v223, %v4945
          %vm4969 = vcmp.eq.s32.totalorder %v223, %v4949
          %vm4970 = vcmp.eq.s32.totalorder %v223, %v4953
          %vm4971 = vcmp.eq.s32.totalorder %v223, %v4957
          %vm4972 = vcmp.eq.s32.totalorder %v223, %v4961
          %vm4973 = vcmp.eq.s32.totalorder %v223, %v4965
          %vm4974 = vcmp.eq.s32.totalorder %v224, %v4937
          %vm4975 = vcmp.eq.s32.totalorder %v224, %v4941
          %vm4976 = vcmp.eq.s32.totalorder %v224, %v4945
          %vm4977 = vcmp.eq.s32.totalorder %v224, %v4949
          %vm4978 = vcmp.eq.s32.totalorder %v224, %v4953
          %vm4979 = vcmp.eq.s32.totalorder %v224, %v4957
          %vm4980 = vcmp.eq.s32.totalorder %v224, %v4961
          %vm4981 = vcmp.eq.s32.totalorder %v224, %v4965
          %vm4982 = vcmp.eq.s32.totalorder %v225, %v4937
          %vm4983 = vcmp.eq.s32.totalorder %v225, %v4941
          %vm4984 = vcmp.eq.s32.totalorder %v225, %v4945
          %vm4985 = vcmp.eq.s32.totalorder %v225, %v4949
          %vm4986 = vcmp.eq.s32.totalorder %v225, %v4953
          %vm4987 = vcmp.eq.s32.totalorder %v225, %v4957
          %vm4988 = vcmp.eq.s32.totalorder %v225, %v4961
          %vm4989 = vcmp.eq.s32.totalorder %v225, %v4965
          %vm4990 = vcmp.eq.s32.totalorder %v226, %v4937
          %vm4991 = vcmp.eq.s32.totalorder %v226, %v4941
          %vm4992 = vcmp.eq.s32.totalorder %v226, %v4945
          %vm4993 = vcmp.eq.s32.totalorder %v226, %v4949
          %vm4994 = vcmp.eq.s32.totalorder %v226, %v4953
          %vm4995 = vcmp.eq.s32.totalorder %v226, %v4957
          %vm4996 = vcmp.eq.s32.totalorder %v226, %v4961
          %vm4997 = vcmp.eq.s32.totalorder %v226, %v4965
          %v4998 = vlaneseq
          %v4999 = vshrl.u32 %v4998, 7
          %v5000 = vsub.s32 4, %v4999
          %v5001 = vrot.slane %v1977, %v5000
          %v5002 = vlaneseq
          %v5003 = vshrl.u32 %v5002, 7
          %v5004 = vsub.s32 4, %v5003
          %v5005 = vrot.slane %v1978, %v5004
          %v5006 = vlaneseq
          %v5007 = vshrl.u32 %v5006, 7
          %v5008 = vsub.s32 4, %v5007
          %v5009 = vrot.slane %v1979, %v5008
          %v5010 = vlaneseq
          %v5011 = vshrl.u32 %v5010, 7
          %v5012 = vsub.s32 4, %v5011
          %v5013 = vrot.slane %v1980, %v5012
          %v5014 = vlaneseq
          %v5015 = vshrl.u32 %v5014, 7
          %v5016 = vsub.s32 4, %v5015
          %v5017 = vrot.slane %v1981, %v5016
          %v5018 = vlaneseq
          %v5019 = vshrl.u32 %v5018, 7
          %v5020 = vsub.s32 4, %v5019
          %v5021 = vrot.slane %v1982, %v5020
          %v5022 = vlaneseq
          %v5023 = vshrl.u32 %v5022, 7
          %v5024 = vsub.s32 4, %v5023
          %v5025 = vrot.slane %v1983, %v5024
          %v5026 = vlaneseq
          %v5027 = vshrl.u32 %v5026, 7
          %v5028 = vsub.s32 4, %v5027
          %v5029 = vrot.slane %v1984, %v5028
          %vm5030 = vcmp.eq.s32.totalorder %v223, %v5001
          %vm5031 = vcmp.eq.s32.totalorder %v223, %v5005
          %vm5032 = vcmp.eq.s32.totalorder %v223, %v5009
          %vm5033 = vcmp.eq.s32.totalorder %v223, %v5013
          %vm5034 = vcmp.eq.s32.totalorder %v223, %v5017
          %vm5035 = vcmp.eq.s32.totalorder %v223, %v5021
          %vm5036 = vcmp.eq.s32.totalorder %v223, %v5025
          %vm5037 = vcmp.eq.s32.totalorder %v223, %v5029
          %vm5038 = vcmp.eq.s32.totalorder %v224, %v5001
          %vm5039 = vcmp.eq.s32.totalorder %v224, %v5005
          %vm5040 = vcmp.eq.s32.totalorder %v224, %v5009
          %vm5041 = vcmp.eq.s32.totalorder %v224, %v5013
          %vm5042 = vcmp.eq.s32.totalorder %v224, %v5017
          %vm5043 = vcmp.eq.s32.totalorder %v224, %v5021
          %vm5044 = vcmp.eq.s32.totalorder %v224, %v5025
          %vm5045 = vcmp.eq.s32.totalorder %v224, %v5029
          %vm5046 = vcmp.eq.s32.totalorder %v225, %v5001
          %vm5047 = vcmp.eq.s32.totalorder %v225, %v5005
          %vm5048 = vcmp.eq.s32.totalorder %v225, %v5009
          %vm5049 = vcmp.eq.s32.totalorder %v225, %v5013
          %vm5050 = vcmp.eq.s32.totalorder %v225, %v5017
          %vm5051 = vcmp.eq.s32.totalorder %v225, %v5021
          %vm5052 = vcmp.eq.s32.totalorder %v225, %v5025
          %vm5053 = vcmp.eq.s32.totalorder %v225, %v5029
          %vm5054 = vcmp.eq.s32.totalorder %v226, %v5001
          %vm5055 = vcmp.eq.s32.totalorder %v226, %v5005
          %vm5056 = vcmp.eq.s32.totalorder %v226, %v5009
          %vm5057 = vcmp.eq.s32.totalorder %v226, %v5013
          %vm5058 = vcmp.eq.s32.totalorder %v226, %v5017
          %vm5059 = vcmp.eq.s32.totalorder %v226, %v5021
          %vm5060 = vcmp.eq.s32.totalorder %v226, %v5025
          %vm5061 = vcmp.eq.s32.totalorder %v226, %v5029
          %v5062 = vlaneseq
          %v5063 = vshrl.u32 %v5062, 7
          %v5064 = vsub.s32 4, %v5063
          %v5065 = vrot.slane %v1889, %v5064
          %v5066 = vlaneseq
          %v5067 = vshrl.u32 %v5066, 7
          %v5068 = vsub.s32 4, %v5067
          %v5069 = vrot.slane %v1890, %v5068
          %v5070 = vlaneseq
          %v5071 = vshrl.u32 %v5070, 7
          %v5072 = vsub.s32 4, %v5071
          %v5073 = vrot.slane %v1891, %v5072
          %v5074 = vlaneseq
          %v5075 = vshrl.u32 %v5074, 7
          %v5076 = vsub.s32 4, %v5075
          %v5077 = vrot.slane %v1892, %v5076
          %v5078 = vlaneseq
          %v5079 = vshrl.u32 %v5078, 7
          %v5080 = vsub.s32 4, %v5079
          %v5081 = vrot.slane %v1893, %v5080
          %v5082 = vlaneseq
          %v5083 = vshrl.u32 %v5082, 7
          %v5084 = vsub.s32 4, %v5083
          %v5085 = vrot.slane %v1894, %v5084
          %v5086 = vlaneseq
          %v5087 = vshrl.u32 %v5086, 7
          %v5088 = vsub.s32 4, %v5087
          %v5089 = vrot.slane %v1895, %v5088
          %v5090 = vlaneseq
          %v5091 = vshrl.u32 %v5090, 7
          %v5092 = vsub.s32 4, %v5091
          %v5093 = vrot.slane %v1896, %v5092
          %v5094 = vsel %vm5030, %v5065, 0.0
          %v5095 = vsel %vm5031, %v5069, 0.0
          %v5096 = vsel %vm5032, %v5073, 0.0
          %v5097 = vsel %vm5033, %v5077, 0.0
          %v5098 = vsel %vm5034, %v5081, 0.0
          %v5099 = vsel %vm5035, %v5085, 0.0
          %v5100 = vsel %vm5036, %v5089, 0.0
          %v5101 = vsel %vm5037, %v5093, 0.0
          %v5102 = vsel %vm5038, %v5065, 0.0
          %v5103 = vsel %vm5039, %v5069, 0.0
          %v5104 = vsel %vm5040, %v5073, 0.0
          %v5105 = vsel %vm5041, %v5077, 0.0
          %v5106 = vsel %vm5042, %v5081, 0.0
          %v5107 = vsel %vm5043, %v5085, 0.0
          %v5108 = vsel %vm5044, %v5089, 0.0
          %v5109 = vsel %vm5045, %v5093, 0.0
          %v5110 = vsel %vm5046, %v5065, 0.0
          %v5111 = vsel %vm5047, %v5069, 0.0
          %v5112 = vsel %vm5048, %v5073, 0.0
          %v5113 = vsel %vm5049, %v5077, 0.0
          %v5114 = vsel %vm5050, %v5081, 0.0
          %v5115 = vsel %vm5051, %v5085, 0.0
          %v5116 = vsel %vm5052, %v5089, 0.0
          %v5117 = vsel %vm5053, %v5093, 0.0
          %v5118 = vsel %vm5054, %v5065, 0.0
          %v5119 = vsel %vm5055, %v5069, 0.0
          %v5120 = vsel %vm5056, %v5073, 0.0
          %v5121 = vsel %vm5057, %v5077, 0.0
          %v5122 = vsel %vm5058, %v5081, 0.0
          %v5123 = vsel %vm5059, %v5085, 0.0
          %v5124 = vsel %vm5060, %v5089, 0.0
          %v5125 = vsel %vm5061, %v5093, 0.0
          %v5126 = vlaneseq
          %v5127 = vshrl.u32 %v5126, 7
          %v5128 = vsub.s32 4, %v5127
          %v5129 = vrot.slane %v1969, %v5128
          %v5130 = vlaneseq
          %v5131 = vshrl.u32 %v5130, 7
          %v5132 = vsub.s32 4, %v5131
          %v5133 = vrot.slane %v1970, %v5132
          %v5134 = vlaneseq
          %v5135 = vshrl.u32 %v5134, 7
          %v5136 = vsub.s32 4, %v5135
          %v5137 = vrot.slane %v1971, %v5136
          %v5138 = vlaneseq
          %v5139 = vshrl.u32 %v5138, 7
          %v5140 = vsub.s32 4, %v5139
          %v5141 = vrot.slane %v1972, %v5140
          %v5142 = vlaneseq
          %v5143 = vshrl.u32 %v5142, 7
          %v5144 = vsub.s32 4, %v5143
          %v5145 = vrot.slane %v1973, %v5144
          %v5146 = vlaneseq
          %v5147 = vshrl.u32 %v5146, 7
          %v5148 = vsub.s32 4, %v5147
          %v5149 = vrot.slane %v1974, %v5148
          %v5150 = vlaneseq
          %v5151 = vshrl.u32 %v5150, 7
          %v5152 = vsub.s32 4, %v5151
          %v5153 = vrot.slane %v1975, %v5152
          %v5154 = vlaneseq
          %v5155 = vshrl.u32 %v5154, 7
          %v5156 = vsub.s32 4, %v5155
          %v5157 = vrot.slane %v1976, %v5156
          %v5158 = vsel %vm4966, %v5129, %v5094
          %v5159 = vsel %vm4967, %v5133, %v5095
          %v5160 = vsel %vm4968, %v5137, %v5096
          %v5161 = vsel %vm4969, %v5141, %v5097
          %v5162 = vsel %vm4970, %v5145, %v5098
          %v5163 = vsel %vm4971, %v5149, %v5099
          %v5164 = vsel %vm4972, %v5153, %v5100
          %v5165 = vsel %vm4973, %v5157, %v5101
          %v5166 = vsel %vm4974, %v5129, %v5102
          %v5167 = vsel %vm4975, %v5133, %v5103
          %v5168 = vsel %vm4976, %v5137, %v5104
          %v5169 = vsel %vm4977, %v5141, %v5105
          %v5170 = vsel %vm4978, %v5145, %v5106
          %v5171 = vsel %vm4979, %v5149, %v5107
          %v5172 = vsel %vm4980, %v5153, %v5108
          %v5173 = vsel %vm4981, %v5157, %v5109
          %v5174 = vsel %vm4982, %v5129, %v5110
          %v5175 = vsel %vm4983, %v5133, %v5111
          %v5176 = vsel %vm4984, %v5137, %v5112
          %v5177 = vsel %vm4985, %v5141, %v5113
          %v5178 = vsel %vm4986, %v5145, %v5114
          %v5179 = vsel %vm4987, %v5149, %v5115
          %v5180 = vsel %vm4988, %v5153, %v5116
          %v5181 = vsel %vm4989, %v5157, %v5117
          %v5182 = vsel %vm4990, %v5129, %v5118
          %v5183 = vsel %vm4991, %v5133, %v5119
          %v5184 = vsel %vm4992, %v5137, %v5120
          %v5185 = vsel %vm4993, %v5141, %v5121
          %v5186 = vsel %vm4994, %v5145, %v5122
          %v5187 = vsel %vm4995, %v5149, %v5123
          %v5188 = vsel %vm4996, %v5153, %v5124
          %v5189 = vsel %vm4997, %v5157, %v5125
          %v5190 = vsub.f32 %v247, %v5158
          %v5191 = vsub.f32 %v247, %v5159
          %v5192 = vsub.f32 %v247, %v5160
          %v5193 = vsub.f32 %v247, %v5161
          %v5194 = vsub.f32 %v247, %v5162
          %v5195 = vsub.f32 %v247, %v5163
          %v5196 = vsub.f32 %v247, %v5164
          %v5197 = vsub.f32 %v247, %v5165
          %v5198 = vsub.f32 %v248, %v5166
          %v5199 = vsub.f32 %v248, %v5167
          %v5200 = vsub.f32 %v248, %v5168
          %v5201 = vsub.f32 %v248, %v5169
          %v5202 = vsub.f32 %v248, %v5170
          %v5203 = vsub.f32 %v248, %v5171
          %v5204 = vsub.f32 %v248, %v5172
          %v5205 = vsub.f32 %v248, %v5173
          %v5206 = vsub.f32 %v249, %v5174
          %v5207 = vsub.f32 %v249, %v5175
          %v5208 = vsub.f32 %v249, %v5176
          %v5209 = vsub.f32 %v249, %v5177
          %v5210 = vsub.f32 %v249, %v5178
          %v5211 = vsub.f32 %v249, %v5179
          %v5212 = vsub.f32 %v249, %v5180
          %v5213 = vsub.f32 %v249, %v5181
          %v5214 = vsub.f32 %v250, %v5182
          %v5215 = vsub.f32 %v250, %v5183
          %v5216 = vsub.f32 %v250, %v5184
          %v5217 = vsub.f32 %v250, %v5185
          %v5218 = vsub.f32 %v250, %v5186
          %v5219 = vsub.f32 %v250, %v5187
          %v5220 = vsub.f32 %v250, %v5188
          %v5221 = vsub.f32 %v250, %v5189
          %v5222 = vlaneseq
          %v5223 = vshrl.u32 %v5222, 7
          %v5224 = vsub.s32 4, %v5223
          %v5225 = vrot.slane %v777, %v5224
          %v5226 = vlaneseq
          %v5227 = vshrl.u32 %v5226, 7
          %v5228 = vsub.s32 4, %v5227
          %v5229 = vrot.slane %v778, %v5228
          %v5230 = vlaneseq
          %v5231 = vshrl.u32 %v5230, 7
          %v5232 = vsub.s32 4, %v5231
          %v5233 = vrot.slane %v779, %v5232
          %v5234 = vlaneseq
          %v5235 = vshrl.u32 %v5234, 7
          %v5236 = vsub.s32 4, %v5235
          %v5237 = vrot.slane %v780, %v5236
          %v5238 = vlaneseq
          %v5239 = vshrl.u32 %v5238, 7
          %v5240 = vsub.s32 4, %v5239
          %v5241 = vrot.slane %v781, %v5240
          %v5242 = vlaneseq
          %v5243 = vshrl.u32 %v5242, 7
          %v5244 = vsub.s32 4, %v5243
          %v5245 = vrot.slane %v782, %v5244
          %v5246 = vlaneseq
          %v5247 = vshrl.u32 %v5246, 7
          %v5248 = vsub.s32 4, %v5247
          %v5249 = vrot.slane %v783, %v5248
          %v5250 = vlaneseq
          %v5251 = vshrl.u32 %v5250, 7
          %v5252 = vsub.s32 4, %v5251
          %v5253 = vrot.slane %v784, %v5252
          %v5254 = vmul.f32 %v5225, %v5190
          %v5255 = vmul.f32 %v5229, %v5191
          %v5256 = vmul.f32 %v5233, %v5192
          %v5257 = vmul.f32 %v5237, %v5193
          %v5258 = vmul.f32 %v5241, %v5194
          %v5259 = vmul.f32 %v5245, %v5195
          %v5260 = vmul.f32 %v5249, %v5196
          %v5261 = vmul.f32 %v5253, %v5197
          %v5262 = vmul.f32 %v5225, %v5198
          %v5263 = vmul.f32 %v5229, %v5199
          %v5264 = vmul.f32 %v5233, %v5200
          %v5265 = vmul.f32 %v5237, %v5201
          %v5266 = vmul.f32 %v5241, %v5202
          %v5267 = vmul.f32 %v5245, %v5203
          %v5268 = vmul.f32 %v5249, %v5204
          %v5269 = vmul.f32 %v5253, %v5205
          %v5270 = vmul.f32 %v5225, %v5206
          %v5271 = vmul.f32 %v5229, %v5207
          %v5272 = vmul.f32 %v5233, %v5208
          %v5273 = vmul.f32 %v5237, %v5209
          %v5274 = vmul.f32 %v5241, %v5210
          %v5275 = vmul.f32 %v5245, %v5211
          %v5276 = vmul.f32 %v5249, %v5212
          %v5277 = vmul.f32 %v5253, %v5213
          %v5278 = vmul.f32 %v5225, %v5214
          %v5279 = vmul.f32 %v5229, %v5215
          %v5280 = vmul.f32 %v5233, %v5216
          %v5281 = vmul.f32 %v5237, %v5217
          %v5282 = vmul.f32 %v5241, %v5218
          %v5283 = vmul.f32 %v5245, %v5219
          %v5284 = vmul.f32 %v5249, %v5220
          %v5285 = vmul.f32 %v5253, %v5221
          %v5286 = vadd.f32 %v4902, %v5254
          %v5287 = vadd.f32 %v4903, %v5255
          %v5288 = vadd.f32 %v4904, %v5256
          %v5289 = vadd.f32 %v4905, %v5257
          %v5290 = vadd.f32 %v4906, %v5258
          %v5291 = vadd.f32 %v4907, %v5259
          %v5292 = vadd.f32 %v4908, %v5260
          %v5293 = vadd.f32 %v4909, %v5261
          %v5294 = vadd.f32 %v4910, %v5262
          %v5295 = vadd.f32 %v4911, %v5263
          %v5296 = vadd.f32 %v4912, %v5264
          %v5297 = vadd.f32 %v4913, %v5265
          %v5298 = vadd.f32 %v4914, %v5266
          %v5299 = vadd.f32 %v4915, %v5267
          %v5300 = vadd.f32 %v4916, %v5268
          %v5301 = vadd.f32 %v4917, %v5269
          %v5302 = vadd.f32 %v4918, %v5270
          %v5303 = vadd.f32 %v4919, %v5271
          %v5304 = vadd.f32 %v4920, %v5272
          %v5305 = vadd.f32 %v4921, %v5273
          %v5306 = vadd.f32 %v4922, %v5274
          %v5307 = vadd.f32 %v4923, %v5275
          %v5308 = vadd.f32 %v4924, %v5276
          %v5309 = vadd.f32 %v4925, %v5277
          %v5310 = vadd.f32 %v4926, %v5278
          %v5311 = vadd.f32 %v4927, %v5279
          %v5312 = vadd.f32 %v4928, %v5280
          %v5313 = vadd.f32 %v4929, %v5281
          %v5314 = vadd.f32 %v4930, %v5282
          %v5315 = vadd.f32 %v4931, %v5283
          %v5316 = vadd.f32 %v4932, %v5284
          %v5317 = vadd.f32 %v4933, %v5285
          %5318 = vmatprep.subr.mxu0 %v5287
          %5319 = vmatpush1.msra.mxu0 %v5286
          %5320 = vmatprep.subr.mxu0 %v5295
          %5321 = vmatpush1.msra.mxu0 %v5294
          %5322 = vmatprep.subr.mxu0 %v5303
          %5323 = vmatpush1.msra.mxu0 %v5302
          %5324 = vmatprep.subr.mxu0 %v5311
          %5325 = vmatpush1.msra.mxu0 %v5310
          %5326 = vmatprep.subr.mxu0 0.0
          %5327 = vmatpush1.msra.mxu0 0.0
          %5328 = vmatprep.subr.mxu0 0.0
          %5329 = vmatpush1.msra.mxu0 0.0
          %5330 = vmatprep.subr.mxu0 0.0
          %5331 = vmatpush1.msra.mxu0 0.0
          %5332 = vmatprep.subr.mxu0 0.0
          %5333 = vmatpush1.msra.mxu0 0.0
          %5334 = vmatprep.subr.mxu0 0.0
          %5335 = vmatpush1.msra.mxu0 0.0
          %5336 = vmatprep.subr.mxu0 0.0
          %5337 = vmatpush1.msra.mxu0 0.0
          %5338 = vmatprep.subr.mxu0 0.0
          %5339 = vmatpush1.msra.mxu0 0.0
          %5340 = vmatprep.subr.mxu0 0.0
          %5341 = vmatpush1.msra.mxu0 0.0
          %5342 = vmatprep.subr.mxu0 0.0
          %5343 = vmatpush1.msra.mxu0 0.0
          %5344 = vmatprep.subr.mxu0 0.0
          %5345 = vmatpush1.msra.mxu0 0.0
          %5346 = vmatprep.subr.mxu0 0.0
          %5347 = vmatpush1.msra.mxu0 0.0
          %5348 = vmatprep.subr.mxu0 0.0
          %5349 = vmatpush1.msra.mxu0 0.0
          %5350 = vmatprep.subr.mxu0 0.0
          %5351 = vmatpush1.msra.mxu0 0.0
          %5352 = vmatprep.subr.mxu0 0.0
          %5353 = vmatpush1.msra.mxu0 0.0
          %5354 = vmatprep.subr.mxu0 0.0
          %5355 = vmatpush1.msra.mxu0 0.0
          %5356 = vmatprep.subr.mxu0 0.0
          %5357 = vmatpush1.msra.mxu0 0.0
          %5358 = vmatprep.subr.mxu0 0.0
          %5359 = vmatpush1.msra.mxu0 0.0
          %5360 = vmatprep.subr.mxu0 0.0
          %5361 = vmatpush1.msra.mxu0 0.0
          %5362 = vmatprep.subr.mxu0 0.0
          %5363 = vmatpush1.msra.mxu0 0.0
          %5364 = vmatprep.subr.mxu0 0.0
          %5365 = vmatpush1.msra.mxu0 0.0
          %5366 = vmatprep.subr.mxu0 0.0
          %5367 = vmatpush1.msra.mxu0 0.0
          %5368 = vmatprep.subr.mxu0 0.0
          %5369 = vmatpush1.msra.mxu0 0.0
          %5370 = vmatprep.subr.mxu0 0.0
          %5371 = vmatpush1.msra.mxu0 0.0
          %5372 = vmatprep.subr.mxu0 0.0
          %5373 = vmatpush1.msra.mxu0 0.0
          %5374 = vmatprep.subr.mxu0 0.0
          %5375 = vmatpush1.msra.mxu0 0.0
          %5376 = vmatprep.subr.mxu0 0.0
          %5377 = vmatpush1.msra.mxu0 0.0
          %5378 = vmatprep.subr.mxu0 0.0
          %5379 = vmatpush1.msra.mxu0 0.0
          %5380 = vmatprep.subr.mxu0 0.0
          %5381 = vmatpush1.msra.mxu0 0.0
          %5382 = vmatprep.mubr.f32.mxu0 0.0
          %5383 = vmatmul.mubr.f32.gmra.mrb[0].mxu0 %v2307
          %v5384 = vpop.f32.mrb[0].mxu0
          %v5385 = vadd.f32 0.0, %v5384
          %v5386 = vpop.f32.mrb[0].mxu0
          %v5387 = vadd.f32 0.0, %v5386
          %5388 = vmatprep.mubr.f32.mxu0 0.0
          %5389 = vmatmul.mubr.f32.gmra.mrb[0].mxu0 %v2310
          %v5390 = vpop.f32.mrb[0].mxu0
          %v5391 = vadd.f32 0.0, %v5390
          %v5392 = vpop.f32.mrb[0].mxu0
          %v5393 = vadd.f32 0.0, %v5392
          %5394 = vmatprep.mubr.f32.mxu0 0.0
          %5395 = vmatmul.mubr.f32.gmra.mrb[0].mxu0 %v2313
          %v5396 = vpop.f32.mrb[0].mxu0
          %v5397 = vadd.f32 0.0, %v5396
          %v5398 = vpop.f32.mrb[0].mxu0
          %v5399 = vadd.f32 0.0, %v5398
          %5400 = vmatprep.mubr.f32.mxu0 0.0
          %5401 = vmatmul.mubr.f32.gmra.mrb[0].mxu0 %v2316
          %v5402 = vpop.f32.mrb[0].mxu0
          %v5403 = vadd.f32 0.0, %v5402
          %v5404 = vpop.f32.mrb[0].mxu0
          %v5405 = vadd.f32 0.0, %v5404
          %5406 = vmatprep.mubr.f32.mxu0 0.0
          %5407 = vmatmul.mubr.f32.gmra.mrb[0].mxu0 %v2319
          %v5408 = vpop.f32.mrb[0].mxu0
          %v5409 = vadd.f32 0.0, %v5408
          %v5410 = vpop.f32.mrb[0].mxu0
          %v5411 = vadd.f32 0.0, %v5410
          %5412 = vmatprep.mubr.f32.mxu0 0.0
          %5413 = vmatmul.mubr.f32.gmra.mrb[0].mxu0 %v2322
          %v5414 = vpop.f32.mrb[0].mxu0
          %v5415 = vadd.f32 0.0, %v5414
          %v5416 = vpop.f32.mrb[0].mxu0
          %v5417 = vadd.f32 0.0, %v5416
          %5418 = vdwg.mxu0
          %5419 = vmatprep.subr.mxu0 %v5289
          %5420 = vmatpush1.msra.mxu0 %v5288
          %5421 = vmatprep.subr.mxu0 %v5297
          %5422 = vmatpush1.msra.mxu0 %v5296
          %5423 = vmatprep.subr.mxu0 %v5305
          %5424 = vmatpush1.msra.mxu0 %v5304
          %5425 = vmatprep.subr.mxu0 %v5313
          %5426 = vmatpush1.msra.mxu0 %v5312
          %5427 = vmatprep.subr.mxu0 0.0
          %5428 = vmatpush1.msra.mxu0 0.0
          %5429 = vmatprep.subr.mxu0 0.0
          %5430 = vmatpush1.msra.mxu0 0.0
          %5431 = vmatprep.subr.mxu0 0.0
          %5432 = vmatpush1.msra.mxu0 0.0
          %5433 = vmatprep.subr.mxu0 0.0
          %5434 = vmatpush1.msra.mxu0 0.0
          %5435 = vmatprep.subr.mxu0 0.0
          %5436 = vmatpush1.msra.mxu0 0.0
          %5437 = vmatprep.subr.mxu0 0.0
          %5438 = vmatpush1.msra.mxu0 0.0
          %5439 = vmatprep.subr.mxu0 0.0
          %5440 = vmatpush1.msra.mxu0 0.0
          %5441 = vmatprep.subr.mxu0 0.0
          %5442 = vmatpush1.msra.mxu0 0.0
          %5443 = vmatprep.subr.mxu0 0.0
          %5444 = vmatpush1.msra.mxu0 0.0
          %5445 = vmatprep.subr.mxu0 0.0
          %5446 = vmatpush1.msra.mxu0 0.0
          %5447 = vmatprep.subr.mxu0 0.0
          %5448 = vmatpush1.msra.mxu0 0.0
          %5449 = vmatprep.subr.mxu0 0.0
          %5450 = vmatpush1.msra.mxu0 0.0
          %5451 = vmatprep.subr.mxu0 0.0
          %5452 = vmatpush1.msra.mxu0 0.0
          %5453 = vmatprep.subr.mxu0 0.0
          %5454 = vmatpush1.msra.mxu0 0.0
          %5455 = vmatprep.subr.mxu0 0.0
          %5456 = vmatpush1.msra.mxu0 0.0
          %5457 = vmatprep.subr.mxu0 0.0
          %5458 = vmatpush1.msra.mxu0 0.0
          %5459 = vmatprep.subr.mxu0 0.0
          %5460 = vmatpush1.msra.mxu0 0.0
          %5461 = vmatprep.subr.mxu0 0.0
          %5462 = vmatpush1.msra.mxu0 0.0
          %5463 = vmatprep.subr.mxu0 0.0
          %5464 = vmatpush1.msra.mxu0 0.0
          %5465 = vmatprep.subr.mxu0 0.0
          %5466 = vmatpush1.msra.mxu0 0.0
          %5467 = vmatprep.subr.mxu0 0.0
          %5468 = vmatpush1.msra.mxu0 0.0
          %5469 = vmatprep.subr.mxu0 0.0
          %5470 = vmatpush1.msra.mxu0 0.0
          %5471 = vmatprep.subr.mxu0 0.0
          %5472 = vmatpush1.msra.mxu0 0.0
          %5473 = vmatprep.subr.mxu0 0.0
          %5474 = vmatpush1.msra.mxu0 0.0
          %5475 = vmatprep.subr.mxu0 0.0
          %5476 = vmatpush1.msra.mxu0 0.0
          %5477 = vmatprep.subr.mxu0 0.0
          %5478 = vmatpush1.msra.mxu0 0.0
          %5479 = vmatprep.subr.mxu0 0.0
          %5480 = vmatpush1.msra.mxu0 0.0
          %5481 = vmatprep.subr.mxu0 0.0
          %5482 = vmatpush1.msra.mxu0 0.0
          %5483 = vmatprep.mubr.f32.mxu0 0.0
          %5484 = vmatmul.mubr.f32.gmra.mrb[0].mxu0 %v2307
          %v5485 = vpop.f32.mrb[0].mxu0
          %v5486 = vadd.f32 0.0, %v5485
          %v5487 = vpop.f32.mrb[0].mxu0
          %v5488 = vadd.f32 0.0, %v5487
          %5489 = vmatprep.mubr.f32.mxu0 0.0
          %5490 = vmatmul.mubr.f32.gmra.mrb[0].mxu0 %v2310
          %v5491 = vpop.f32.mrb[0].mxu0
          %v5492 = vadd.f32 0.0, %v5491
          %v5493 = vpop.f32.mrb[0].mxu0
          %v5494 = vadd.f32 0.0, %v5493
          %5495 = vmatprep.mubr.f32.mxu0 0.0
          %5496 = vmatmul.mubr.f32.gmra.mrb[0].mxu0 %v2313
          %v5497 = vpop.f32.mrb[0].mxu0
          %v5498 = vadd.f32 0.0, %v5497
          %v5499 = vpop.f32.mrb[0].mxu0
          %v5500 = vadd.f32 0.0, %v5499
          %5501 = vmatprep.mubr.f32.mxu0 0.0
          %5502 = vmatmul.mubr.f32.gmra.mrb[0].mxu0 %v2316
          %v5503 = vpop.f32.mrb[0].mxu0
          %v5504 = vadd.f32 0.0, %v5503
          %v5505 = vpop.f32.mrb[0].mxu0
          %v5506 = vadd.f32 0.0, %v5505
          %5507 = vmatprep.mubr.f32.mxu0 0.0
          %5508 = vmatmul.mubr.f32.gmra.mrb[0].mxu0 %v2319
          %v5509 = vpop.f32.mrb[0].mxu0
          %v5510 = vadd.f32 0.0, %v5509
          %v5511 = vpop.f32.mrb[0].mxu0
          %v5512 = vadd.f32 0.0, %v5511
          %5513 = vmatprep.mubr.f32.mxu0 0.0
          %5514 = vmatmul.mubr.f32.gmra.mrb[0].mxu0 %v2322
          %v5515 = vpop.f32.mrb[0].mxu0
          %v5516 = vadd.f32 0.0, %v5515
          %v5517 = vpop.f32.mrb[0].mxu0
          %v5518 = vadd.f32 0.0, %v5517
          %5519 = vdwg.mxu0
          %5520 = vmatprep.subr.mxu0 %v5291
          %5521 = vmatpush1.msra.mxu0 %v5290
          %5522 = vmatprep.subr.mxu0 %v5299
          %5523 = vmatpush1.msra.mxu0 %v5298
          %5524 = vmatprep.subr.mxu0 %v5307
          %5525 = vmatpush1.msra.mxu0 %v5306
          %5526 = vmatprep.subr.mxu0 %v5315
          %5527 = vmatpush1.msra.mxu0 %v5314
          %5528 = vmatprep.subr.mxu0 0.0
          %5529 = vmatpush1.msra.mxu0 0.0
          %5530 = vmatprep.subr.mxu0 0.0
          %5531 = vmatpush1.msra.mxu0 0.0
          %5532 = vmatprep.subr.mxu0 0.0
          %5533 = vmatpush1.msra.mxu0 0.0
          %5534 = vmatprep.subr.mxu0 0.0
          %5535 = vmatpush1.msra.mxu0 0.0
          %5536 = vmatprep.subr.mxu0 0.0
          %5537 = vmatpush1.msra.mxu0 0.0
          %5538 = vmatprep.subr.mxu0 0.0
          %5539 = vmatpush1.msra.mxu0 0.0
          %5540 = vmatprep.subr.mxu0 0.0
          %5541 = vmatpush1.msra.mxu0 0.0
          %5542 = vmatprep.subr.mxu0 0.0
          %5543 = vmatpush1.msra.mxu0 0.0
          %5544 = vmatprep.subr.mxu0 0.0
          %5545 = vmatpush1.msra.mxu0 0.0
          %5546 = vmatprep.subr.mxu0 0.0
          %5547 = vmatpush1.msra.mxu0 0.0
          %5548 = vmatprep.subr.mxu0 0.0
          %5549 = vmatpush1.msra.mxu0 0.0
          %5550 = vmatprep.subr.mxu0 0.0
          %5551 = vmatpush1.msra.mxu0 0.0
          %5552 = vmatprep.subr.mxu0 0.0
          %5553 = vmatpush1.msra.mxu0 0.0
          %5554 = vmatprep.subr.mxu0 0.0
          %5555 = vmatpush1.msra.mxu0 0.0
          %5556 = vmatprep.subr.mxu0 0.0
          %5557 = vmatpush1.msra.mxu0 0.0
          %5558 = vmatprep.subr.mxu0 0.0
          %5559 = vmatpush1.msra.mxu0 0.0
          %5560 = vmatprep.subr.mxu0 0.0
          %5561 = vmatpush1.msra.mxu0 0.0
          %5562 = vmatprep.subr.mxu0 0.0
          %5563 = vmatpush1.msra.mxu0 0.0
          %5564 = vmatprep.subr.mxu0 0.0
          %5565 = vmatpush1.msra.mxu0 0.0
          %5566 = vmatprep.subr.mxu0 0.0
          %5567 = vmatpush1.msra.mxu0 0.0
          %5568 = vmatprep.subr.mxu0 0.0
          %5569 = vmatpush1.msra.mxu0 0.0
          %5570 = vmatprep.subr.mxu0 0.0
          %5571 = vmatpush1.msra.mxu0 0.0
          %5572 = vmatprep.subr.mxu0 0.0
          %5573 = vmatpush1.msra.mxu0 0.0
          %5574 = vmatprep.subr.mxu0 0.0
          %5575 = vmatpush1.msra.mxu0 0.0
          %5576 = vmatprep.subr.mxu0 0.0
          %5577 = vmatpush1.msra.mxu0 0.0
          %5578 = vmatprep.subr.mxu0 0.0
          %5579 = vmatpush1.msra.mxu0 0.0
          %5580 = vmatprep.subr.mxu0 0.0
          %5581 = vmatpush1.msra.mxu0 0.0
          %5582 = vmatprep.subr.mxu0 0.0
          %5583 = vmatpush1.msra.mxu0 0.0
          %5584 = vmatprep.mubr.f32.mxu0 0.0
          %5585 = vmatmul.mubr.f32.gmra.mrb[0].mxu0 %v2307
          %v5586 = vpop.f32.mrb[0].mxu0
          %v5587 = vadd.f32 0.0, %v5586
          %v5588 = vpop.f32.mrb[0].mxu0
          %v5589 = vadd.f32 0.0, %v5588
          %5590 = vmatprep.mubr.f32.mxu0 0.0
          %5591 = vmatmul.mubr.f32.gmra.mrb[0].mxu0 %v2310
          %v5592 = vpop.f32.mrb[0].mxu0
          %v5593 = vadd.f32 0.0, %v5592
          %v5594 = vpop.f32.mrb[0].mxu0
          %v5595 = vadd.f32 0.0, %v5594
          %5596 = vmatprep.mubr.f32.mxu0 0.0
          %5597 = vmatmul.mubr.f32.gmra.mrb[0].mxu0 %v2313
          %v5598 = vpop.f32.mrb[0].mxu0
          %v5599 = vadd.f32 0.0, %v5598
          %v5600 = vpop.f32.mrb[0].mxu0
          %v5601 = vadd.f32 0.0, %v5600
          %5602 = vmatprep.mubr.f32.mxu0 0.0
          %5603 = vmatmul.mubr.f32.gmra.mrb[0].mxu0 %v2316
          %v5604 = vpop.f32.mrb[0].mxu0
          %v5605 = vadd.f32 0.0, %v5604
          %v5606 = vpop.f32.mrb[0].mxu0
          %v5607 = vadd.f32 0.0, %v5606
          %5608 = vmatprep.mubr.f32.mxu0 0.0
          %5609 = vmatmul.mubr.f32.gmra.mrb[0].mxu0 %v2319
          %v5610 = vpop.f32.mrb[0].mxu0
          %v5611 = vadd.f32 0.0, %v5610
          %v5612 = vpop.f32.mrb[0].mxu0
          %v5613 = vadd.f32 0.0, %v5612
          %5614 = vmatprep.mubr.f32.mxu0 0.0
          %5615 = vmatmul.mubr.f32.gmra.mrb[0].mxu0 %v2322
          %v5616 = vpop.f32.mrb[0].mxu0
          %v5617 = vadd.f32 0.0, %v5616
          %v5618 = vpop.f32.mrb[0].mxu0
          %v5619 = vadd.f32 0.0, %v5618
          %5620 = vdwg.mxu0
          %5621 = vmatprep.subr.mxu0 %v5293
          %5622 = vmatpush1.msra.mxu0 %v5292
          %5623 = vmatprep.subr.mxu0 %v5301
          %5624 = vmatpush1.msra.mxu0 %v5300
          %5625 = vmatprep.subr.mxu0 %v5309
          %5626 = vmatpush1.msra.mxu0 %v5308
          %5627 = vmatprep.subr.mxu0 %v5317
          %5628 = vmatpush1.msra.mxu0 %v5316
          %5629 = vmatprep.subr.mxu0 0.0
          %5630 = vmatpush1.msra.mxu0 0.0
          %5631 = vmatprep.subr.mxu0 0.0
          %5632 = vmatpush1.msra.mxu0 0.0
          %5633 = vmatprep.subr.mxu0 0.0
          %5634 = vmatpush1.msra.mxu0 0.0
          %5635 = vmatprep.subr.mxu0 0.0
          %5636 = vmatpush1.msra.mxu0 0.0
          %5637 = vmatprep.subr.mxu0 0.0
          %5638 = vmatpush1.msra.mxu0 0.0
          %5639 = vmatprep.subr.mxu0 0.0
          %5640 = vmatpush1.msra.mxu0 0.0
          %5641 = vmatprep.subr.mxu0 0.0
          %5642 = vmatpush1.msra.mxu0 0.0
          %5643 = vmatprep.subr.mxu0 0.0
          %5644 = vmatpush1.msra.mxu0 0.0
          %5645 = vmatprep.subr.mxu0 0.0
          %5646 = vmatpush1.msra.mxu0 0.0
          %5647 = vmatprep.subr.mxu0 0.0
          %5648 = vmatpush1.msra.mxu0 0.0
          %5649 = vmatprep.subr.mxu0 0.0
          %5650 = vmatpush1.msra.mxu0 0.0
          %5651 = vmatprep.subr.mxu0 0.0
          %5652 = vmatpush1.msra.mxu0 0.0
          %5653 = vmatprep.subr.mxu0 0.0
          %5654 = vmatpush1.msra.mxu0 0.0
          %5655 = vmatprep.subr.mxu0 0.0
          %5656 = vmatpush1.msra.mxu0 0.0
          %5657 = vmatprep.subr.mxu0 0.0
          %5658 = vmatpush1.msra.mxu0 0.0
          %5659 = vmatprep.subr.mxu0 0.0
          %5660 = vmatpush1.msra.mxu0 0.0
          %5661 = vmatprep.subr.mxu0 0.0
          %5662 = vmatpush1.msra.mxu0 0.0
          %5663 = vmatprep.subr.mxu0 0.0
          %5664 = vmatpush1.msra.mxu0 0.0
          %5665 = vmatprep.subr.mxu0 0.0
          %5666 = vmatpush1.msra.mxu0 0.0
          %5667 = vmatprep.subr.mxu0 0.0
          %5668 = vmatpush1.msra.mxu0 0.0
          %5669 = vmatprep.subr.mxu0 0.0
          %5670 = vmatpush1.msra.mxu0 0.0
          %5671 = vmatprep.subr.mxu0 0.0
          %5672 = vmatpush1.msra.mxu0 0.0
          %5673 = vmatprep.subr.mxu0 0.0
          %5674 = vmatpush1.msra.mxu0 0.0
          %5675 = vmatprep.subr.mxu0 0.0
          %5676 = vmatpush1.msra.mxu0 0.0
          %5677 = vmatprep.subr.mxu0 0.0
          %5678 = vmatpush1.msra.mxu0 0.0
          %5679 = vmatprep.subr.mxu0 0.0
          %5680 = vmatpush1.msra.mxu0 0.0
          %5681 = vmatprep.subr.mxu0 0.0
          %5682 = vmatpush1.msra.mxu0 0.0
          %5683 = vmatprep.subr.mxu0 0.0
          %5684 = vmatpush1.msra.mxu0 0.0
          %5685 = vmatprep.mubr.f32.mxu0 0.0
          %5686 = vmatmul.mubr.f32.gmra.mrb[0].mxu0 %v2307
          %v5687 = vpop.f32.mrb[0].mxu0
          %v5688 = vadd.f32 0.0, %v5687
          %v5689 = vpop.f32.mrb[0].mxu0
          %v5690 = vadd.f32 0.0, %v5689
          %5691 = vmatprep.mubr.f32.mxu0 0.0
          %5692 = vmatmul.mubr.f32.gmra.mrb[0].mxu0 %v2310
          %v5693 = vpop.f32.mrb[0].mxu0
          %v5694 = vadd.f32 0.0, %v5693
          %v5695 = vpop.f32.mrb[0].mxu0
          %v5696 = vadd.f32 0.0, %v5695
          %5697 = vmatprep.mubr.f32.mxu0 0.0
          %5698 = vmatmul.mubr.f32.gmra.mrb[0].mxu0 %v2313
          %v5699 = vpop.f32.mrb[0].mxu0
          %v5700 = vadd.f32 0.0, %v5699
          %v5701 = vpop.f32.mrb[0].mxu0
          %v5702 = vadd.f32 0.0, %v5701
          %5703 = vmatprep.mubr.f32.mxu0 0.0
          %5704 = vmatmul.mubr.f32.gmra.mrb[0].mxu0 %v2316
          %v5705 = vpop.f32.mrb[0].mxu0
          %v5706 = vadd.f32 0.0, %v5705
          %v5707 = vpop.f32.mrb[0].mxu0
          %v5708 = vadd.f32 0.0, %v5707
          %5709 = vmatprep.mubr.f32.mxu0 0.0
          %5710 = vmatmul.mubr.f32.gmra.mrb[0].mxu0 %v2319
          %v5711 = vpop.f32.mrb[0].mxu0
          %v5712 = vadd.f32 0.0, %v5711
          %v5713 = vpop.f32.mrb[0].mxu0
          %v5714 = vadd.f32 0.0, %v5713
          %5715 = vmatprep.mubr.f32.mxu0 0.0
          %5716 = vmatmul.mubr.f32.gmra.mrb[0].mxu0 %v2322
          %v5717 = vpop.f32.mrb[0].mxu0
          %v5718 = vadd.f32 0.0, %v5717
          %v5719 = vpop.f32.mrb[0].mxu0
          %v5720 = vadd.f32 0.0, %v5719
          %5721 = vdwg.mxu0
          %v5722 = vmul.f32 %v5385, %v3990
          %v5723 = vmul.f32 %v5387, %v3991
          %v5724 = vmul.f32 %v5486, %v3992
          %v5725 = vmul.f32 %v5488, %v3993
          %v5726 = vmul.f32 %v5587, %v3994
          %v5727 = vmul.f32 %v5589, %v3995
          %v5728 = vmul.f32 %v5688, %v3996
          %v5729 = vmul.f32 %v5690, %v3997
          %v5730 = vmul.f32 %v5391, %v3998
          %v5731 = vmul.f32 %v5393, %v3999
          %v5732 = vmul.f32 %v5492, %v4000
          %v5733 = vmul.f32 %v5494, %v4001
          %v5734 = vmul.f32 %v5593, %v4002
          %v5735 = vmul.f32 %v5595, %v4003
          %v5736 = vmul.f32 %v5694, %v4004
          %v5737 = vmul.f32 %v5696, %v4005
          %v5738 = vmul.f32 %v5397, %v3990
          %v5739 = vmul.f32 %v5399, %v3991
          %v5740 = vmul.f32 %v5498, %v3992
          %v5741 = vmul.f32 %v5500, %v3993
          %v5742 = vmul.f32 %v5599, %v3994
          %v5743 = vmul.f32 %v5601, %v3995
          %v5744 = vmul.f32 %v5700, %v3996
          %v5745 = vmul.f32 %v5702, %v3997
          %v5746 = vmul.f32 %v5403, %v3998
          %v5747 = vmul.f32 %v5405, %v3999
          %v5748 = vmul.f32 %v5504, %v4000
          %v5749 = vmul.f32 %v5506, %v4001
          %v5750 = vmul.f32 %v5605, %v4002
          %v5751 = vmul.f32 %v5607, %v4003
          %v5752 = vmul.f32 %v5706, %v4004
          %v5753 = vmul.f32 %v5708, %v4005
          %v5754 = vmul.f32 %v5409, %v3990
          %v5755 = vmul.f32 %v5411, %v3991
          %v5756 = vmul.f32 %v5510, %v3992
          %v5757 = vmul.f32 %v5512, %v3993
          %v5758 = vmul.f32 %v5611, %v3994
          %v5759 = vmul.f32 %v5613, %v3995
          %v5760 = vmul.f32 %v5712, %v3996
          %v5761 = vmul.f32 %v5714, %v3997
          %v5762 = vmul.f32 %v5415, %v3998
          %v5763 = vmul.f32 %v5417, %v3999
          %v5764 = vmul.f32 %v5516, %v4000
          %v5765 = vmul.f32 %v5518, %v4001
          %v5766 = vmul.f32 %v5617, %v4002
          %v5767 = vmul.f32 %v5619, %v4003
          %v5768 = vmul.f32 %v5718, %v4004
          %v5769 = vmul.f32 %v5720, %v4005
          %v5770 = vadd.f32 %v2728, %v5722
          %v5771 = vadd.f32 %v2729, %v5723
          %v5772 = vadd.f32 %v2730, %v5724
          %v5773 = vadd.f32 %v2731, %v5725
          %v5774 = vadd.f32 %v2732, %v5726
          %v5775 = vadd.f32 %v2733, %v5727
          %v5776 = vadd.f32 %v2734, %v5728
          %v5777 = vadd.f32 %v2735, %v5729
          %v5778 = vadd.f32 %v2736, %v5730
          %v5779 = vadd.f32 %v2737, %v5731
          %v5780 = vadd.f32 %v2738, %v5732
          %v5781 = vadd.f32 %v2739, %v5733
          %v5782 = vadd.f32 %v2740, %v5734
          %v5783 = vadd.f32 %v2741, %v5735
          %v5784 = vadd.f32 %v2742, %v5736
          %v5785 = vadd.f32 %v2743, %v5737
          %v5786 = vadd.f32 %v2744, %v5738
          %v5787 = vadd.f32 %v2745, %v5739
          %v5788 = vadd.f32 %v2746, %v5740
          %v5789 = vadd.f32 %v2747, %v5741
          %v5790 = vadd.f32 %v2748, %v5742
          %v5791 = vadd.f32 %v2749, %v5743
          %v5792 = vadd.f32 %v2750, %v5744
          %v5793 = vadd.f32 %v2751, %v5745
          %v5794 = vadd.f32 %v2752, %v5746
          %v5795 = vadd.f32 %v2753, %v5747
          %v5796 = vadd.f32 %v2754, %v5748
          %v5797 = vadd.f32 %v2755, %v5749
          %v5798 = vadd.f32 %v2756, %v5750
          %v5799 = vadd.f32 %v2757, %v5751
          %v5800 = vadd.f32 %v2758, %v5752
          %v5801 = vadd.f32 %v2759, %v5753
          %v5802 = vadd.f32 %v2760, %v5754
          %v5803 = vadd.f32 %v2761, %v5755
          %v5804 = vadd.f32 %v2762, %v5756
          %v5805 = vadd.f32 %v2763, %v5757
          %v5806 = vadd.f32 %v2764, %v5758
          %v5807 = vadd.f32 %v2765, %v5759
          %v5808 = vadd.f32 %v2766, %v5760
          %v5809 = vadd.f32 %v2767, %v5761
          %v5810 = vadd.f32 %v2768, %v5762
          %v5811 = vadd.f32 %v2769, %v5763
          %v5812 = vadd.f32 %v2770, %v5764
          %v5813 = vadd.f32 %v2771, %v5765
          %v5814 = vadd.f32 %v2772, %v5766
          %v5815 = vadd.f32 %v2773, %v5767
          %v5816 = vadd.f32 %v2774, %v5768
          %v5817 = vadd.f32 %v2775, %v5769
          %vm5818 = vcmask 392192
          %v5820 = vsel %vm5818, %v263, 0
          %5822 = vmatprep.subr.mxu0 %v5771
          %5823 = vmatpush1.msra.mxu0 %v5770
          %5824 = vmatprep.subr.mxu0 %v5779
          %5825 = vmatpush1.msra.mxu0 %v5778
          %5826 = vmatprep.subr.mxu0 %v5787
          %5827 = vmatpush1.msra.mxu0 %v5786
          %5828 = vmatprep.subr.mxu0 %v5795
          %5829 = vmatpush1.msra.mxu0 %v5794
          %5830 = vmatprep.subr.mxu0 %v5803
          %5831 = vmatpush1.msra.mxu0 %v5802
          %5832 = vmatprep.subr.mxu0 %v5811
          %5833 = vmatpush1.msra.mxu0 %v5810
          %5834 = vmatprep.subr.mxu0 0.0
          %5835 = vmatpush1.msra.mxu0 0.0
          %5836 = vmatprep.subr.mxu0 0.0
          %5837 = vmatpush1.msra.mxu0 0.0
          %5838 = vmatprep.subr.mxu0 0.0
          %5839 = vmatpush1.msra.mxu0 0.0
          %5840 = vmatprep.subr.mxu0 0.0
          %5841 = vmatpush1.msra.mxu0 0.0
          %5842 = vmatprep.subr.mxu0 0.0
          %5843 = vmatpush1.msra.mxu0 0.0
          %5844 = vmatprep.subr.mxu0 0.0
          %5845 = vmatpush1.msra.mxu0 0.0
          %5846 = vmatprep.subr.mxu0 0.0
          %5847 = vmatpush1.msra.mxu0 0.0
          %5848 = vmatprep.subr.mxu0 0.0
          %5849 = vmatpush1.msra.mxu0 0.0
          %5850 = vmatprep.subr.mxu0 0.0
          %5851 = vmatpush1.msra.mxu0 0.0
          %5852 = vmatprep.subr.mxu0 0.0
          %5853 = vmatpush1.msra.mxu0 0.0
          %5854 = vmatprep.subr.mxu0 0.0
          %5855 = vmatpush1.msra.mxu0 0.0
          %5856 = vmatprep.subr.mxu0 0.0
          %5857 = vmatpush1.msra.mxu0 0.0
          %5858 = vmatprep.subr.mxu0 0.0
          %5859 = vmatpush1.msra.mxu0 0.0
          %5860 = vmatprep.subr.mxu0 0.0
          %5861 = vmatpush1.msra.mxu0 0.0
          %5862 = vmatprep.subr.mxu0 0.0
          %5863 = vmatpush1.msra.mxu0 0.0
          %5864 = vmatprep.subr.mxu0 0.0
          %5865 = vmatpush1.msra.mxu0 0.0
          %5866 = vmatprep.subr.mxu0 0.0
          %5867 = vmatpush1.msra.mxu0 0.0
          %5868 = vmatprep.subr.mxu0 0.0
          %5869 = vmatpush1.msra.mxu0 0.0
          %5870 = vmatprep.subr.mxu0 0.0
          %5871 = vmatpush1.msra.mxu0 0.0
          %5872 = vmatprep.subr.mxu0 0.0
          %5873 = vmatpush1.msra.mxu0 0.0
          %5874 = vmatprep.subr.mxu0 0.0
          %5875 = vmatpush1.msra.mxu0 0.0
          %5876 = vmatprep.subr.mxu0 0.0
          %5877 = vmatpush1.msra.mxu0 0.0
          %5878 = vmatprep.subr.mxu0 0.0
          %5879 = vmatpush1.msra.mxu0 0.0
          %5880 = vmatprep.subr.mxu0 0.0
          %5881 = vmatpush1.msra.mxu0 0.0
          %5882 = vmatprep.subr.mxu0 0.0
          %5883 = vmatpush1.msra.mxu0 0.0
          %5884 = vmatprep.subr.mxu0 0.0
          %5885 = vmatpush1.msra.mxu0 0.0
          %5886 = vmatprep.mubr.f32.mxu0 0.0
          %5887 = vmatmul.mubr.f32.gmra.mrb[0].mxu0 %v5820
          %v5888 = vpop.f32.mrb[0].mxu0
          %v5889 = vadd.f32 0.0, %v5888
          %v5890 = vpop.f32.mrb[0].mxu0
          %v5891 = vadd.f32 0.0, %v5890
          %5892 = vdwg.mxu0
          %5893 = vmatprep.subr.mxu0 %v5773
          %5894 = vmatpush1.msra.mxu0 %v5772
          %5895 = vmatprep.subr.mxu0 %v5781
          %5896 = vmatpush1.msra.mxu0 %v5780
          %5897 = vmatprep.subr.mxu0 %v5789
          %5898 = vmatpush1.msra.mxu0 %v5788
          %5899 = vmatprep.subr.mxu0 %v5797
          %5900 = vmatpush1.msra.mxu0 %v5796
          %5901 = vmatprep.subr.mxu0 %v5805
          %5902 = vmatpush1.msra.mxu0 %v5804
          %5903 = vmatprep.subr.mxu0 %v5813
          %5904 = vmatpush1.msra.mxu0 %v5812
          %5905 = vmatprep.subr.mxu0 0.0
          %5906 = vmatpush1.msra.mxu0 0.0
          %5907 = vmatprep.subr.mxu0 0.0
          %5908 = vmatpush1.msra.mxu0 0.0
          %5909 = vmatprep.subr.mxu0 0.0
          %5910 = vmatpush1.msra.mxu0 0.0
          %5911 = vmatprep.subr.mxu0 0.0
          %5912 = vmatpush1.msra.mxu0 0.0
          %5913 = vmatprep.subr.mxu0 0.0
          %5914 = vmatpush1.msra.mxu0 0.0
          %5915 = vmatprep.subr.mxu0 0.0
          %5916 = vmatpush1.msra.mxu0 0.0
          %5917 = vmatprep.subr.mxu0 0.0
          %5918 = vmatpush1.msra.mxu0 0.0
          %5919 = vmatprep.subr.mxu0 0.0
          %5920 = vmatpush1.msra.mxu0 0.0
          %5921 = vmatprep.subr.mxu0 0.0
          %5922 = vmatpush1.msra.mxu0 0.0
          %5923 = vmatprep.subr.mxu0 0.0
          %5924 = vmatpush1.msra.mxu0 0.0
          %5925 = vmatprep.subr.mxu0 0.0
          %5926 = vmatpush1.msra.mxu0 0.0
          %5927 = vmatprep.subr.mxu0 0.0
          %5928 = vmatpush1.msra.mxu0 0.0
          %5929 = vmatprep.subr.mxu0 0.0
          %5930 = vmatpush1.msra.mxu0 0.0
          %5931 = vmatprep.subr.mxu0 0.0
          %5932 = vmatpush1.msra.mxu0 0.0
          %5933 = vmatprep.subr.mxu0 0.0
          %5934 = vmatpush1.msra.mxu0 0.0
          %5935 = vmatprep.subr.mxu0 0.0
          %5936 = vmatpush1.msra.mxu0 0.0
          %5937 = vmatprep.subr.mxu0 0.0
          %5938 = vmatpush1.msra.mxu0 0.0
          %5939 = vmatprep.subr.mxu0 0.0
          %5940 = vmatpush1.msra.mxu0 0.0
          %5941 = vmatprep.subr.mxu0 0.0
          %5942 = vmatpush1.msra.mxu0 0.0
          %5943 = vmatprep.subr.mxu0 0.0
          %5944 = vmatpush1.msra.mxu0 0.0
          %5945 = vmatprep.subr.mxu0 0.0
          %5946 = vmatpush1.msra.mxu0 0.0
          %5947 = vmatprep.subr.mxu0 0.0
          %5948 = vmatpush1.msra.mxu0 0.0
          %5949 = vmatprep.subr.mxu0 0.0
          %5950 = vmatpush1.msra.mxu0 0.0
          %5951 = vmatprep.subr.mxu0 0.0
          %5952 = vmatpush1.msra.mxu0 0.0
          %5953 = vmatprep.subr.mxu0 0.0
          %5954 = vmatpush1.msra.mxu0 0.0
          %5955 = vmatprep.subr.mxu0 0.0
          %5956 = vmatpush1.msra.mxu0 0.0
          %5957 = vmatprep.mubr.f32.mxu0 0.0
          %5958 = vmatmul.mubr.f32.gmra.mrb[0].mxu0 %v5820
          %v5959 = vpop.f32.mrb[0].mxu0
          %v5960 = vadd.f32 0.0, %v5959
          %v5961 = vpop.f32.mrb[0].mxu0
          %v5962 = vadd.f32 0.0, %v5961
          %5963 = vdwg.mxu0
          %5964 = vmatprep.subr.mxu0 %v5775
          %5965 = vmatpush1.msra.mxu0 %v5774
          %5966 = vmatprep.subr.mxu0 %v5783
          %5967 = vmatpush1.msra.mxu0 %v5782
          %5968 = vmatprep.subr.mxu0 %v5791
          %5969 = vmatpush1.msra.mxu0 %v5790
          %5970 = vmatprep.subr.mxu0 %v5799
          %5971 = vmatpush1.msra.mxu0 %v5798
          %5972 = vmatprep.subr.mxu0 %v5807
          %5973 = vmatpush1.msra.mxu0 %v5806
          %5974 = vmatprep.subr.mxu0 %v5815
          %5975 = vmatpush1.msra.mxu0 %v5814
          %5976 = vmatprep.subr.mxu0 0.0
          %5977 = vmatpush1.msra.mxu0 0.0
          %5978 = vmatprep.subr.mxu0 0.0
          %5979 = vmatpush1.msra.mxu0 0.0
          %5980 = vmatprep.subr.mxu0 0.0
          %5981 = vmatpush1.msra.mxu0 0.0
          %5982 = vmatprep.subr.mxu0 0.0
          %5983 = vmatpush1.msra.mxu0 0.0
          %5984 = vmatprep.subr.mxu0 0.0
          %5985 = vmatpush1.msra.mxu0 0.0
          %5986 = vmatprep.subr.mxu0 0.0
          %5987 = vmatpush1.msra.mxu0 0.0
          %5988 = vmatprep.subr.mxu0 0.0
          %5989 = vmatpush1.msra.mxu0 0.0
          %5990 = vmatprep.subr.mxu0 0.0
          %5991 = vmatpush1.msra.mxu0 0.0
          %5992 = vmatprep.subr.mxu0 0.0
          %5993 = vmatpush1.msra.mxu0 0.0
          %5994 = vmatprep.subr.mxu0 0.0
          %5995 = vmatpush1.msra.mxu0 0.0
          %5996 = vmatprep.subr.mxu0 0.0
          %5997 = vmatpush1.msra.mxu0 0.0
          %5998 = vmatprep.subr.mxu0 0.0
          %5999 = vmatpush1.msra.mxu0 0.0
          %6000 = vmatprep.subr.mxu0 0.0
          %6001 = vmatpush1.msra.mxu0 0.0
          %6002 = vmatprep.subr.mxu0 0.0
          %6003 = vmatpush1.msra.mxu0 0.0
          %6004 = vmatprep.subr.mxu0 0.0
          %6005 = vmatpush1.msra.mxu0 0.0
          %6006 = vmatprep.subr.mxu0 0.0
          %6007 = vmatpush1.msra.mxu0 0.0
          %6008 = vmatprep.subr.mxu0 0.0
          %6009 = vmatpush1.msra.mxu0 0.0
          %6010 = vmatprep.subr.mxu0 0.0
          %6011 = vmatpush1.msra.mxu0 0.0
          %6012 = vmatprep.subr.mxu0 0.0
          %6013 = vmatpush1.msra.mxu0 0.0
          %6014 = vmatprep.subr.mxu0 0.0
          %6015 = vmatpush1.msra.mxu0 0.0
          %6016 = vmatprep.subr.mxu0 0.0
          %6017 = vmatpush1.msra.mxu0 0.0
          %6018 = vmatprep.subr.mxu0 0.0
          %6019 = vmatpush1.msra.mxu0 0.0
          %6020 = vmatprep.subr.mxu0 0.0
          %6021 = vmatpush1.msra.mxu0 0.0
          %6022 = vmatprep.subr.mxu0 0.0
          %6023 = vmatpush1.msra.mxu0 0.0
          %6024 = vmatprep.subr.mxu0 0.0
          %6025 = vmatpush1.msra.mxu0 0.0
          %6026 = vmatprep.subr.mxu0 0.0
          %6027 = vmatpush1.msra.mxu0 0.0
          %6028 = vmatprep.mubr.f32.mxu0 0.0
          %6029 = vmatmul.mubr.f32.gmra.mrb[0].mxu0 %v5820
          %v6030 = vpop.f32.mrb[0].mxu0
          %v6031 = vadd.f32 0.0, %v6030
          %v6032 = vpop.f32.mrb[0].mxu0
          %v6033 = vadd.f32 0.0, %v6032
          %6034 = vdwg.mxu0
          %6035 = vmatprep.subr.mxu0 %v5777
          %6036 = vmatpush1.msra.mxu0 %v5776
          %6037 = vmatprep.subr.mxu0 %v5785
          %6038 = vmatpush1.msra.mxu0 %v5784
          %6039 = vmatprep.subr.mxu0 %v5793
          %6040 = vmatpush1.msra.mxu0 %v5792
          %6041 = vmatprep.subr.mxu0 %v5801
          %6042 = vmatpush1.msra.mxu0 %v5800
          %6043 = vmatprep.subr.mxu0 %v5809
          %6044 = vmatpush1.msra.mxu0 %v5808
          %6045 = vmatprep.subr.mxu0 %v5817
          %6046 = vmatpush1.msra.mxu0 %v5816
          %6047 = vmatprep.subr.mxu0 0.0
          %6048 = vmatpush1.msra.mxu0 0.0
          %6049 = vmatprep.subr.mxu0 0.0
          %6050 = vmatpush1.msra.mxu0 0.0
          %6051 = vmatprep.subr.mxu0 0.0
          %6052 = vmatpush1.msra.mxu0 0.0
          %6053 = vmatprep.subr.mxu0 0.0
          %6054 = vmatpush1.msra.mxu0 0.0
          %6055 = vmatprep.subr.mxu0 0.0
          %6056 = vmatpush1.msra.mxu0 0.0
          %6057 = vmatprep.subr.mxu0 0.0
          %6058 = vmatpush1.msra.mxu0 0.0
          %6059 = vmatprep.subr.mxu0 0.0
          %6060 = vmatpush1.msra.mxu0 0.0
          %6061 = vmatprep.subr.mxu0 0.0
          %6062 = vmatpush1.msra.mxu0 0.0
          %6063 = vmatprep.subr.mxu0 0.0
          %6064 = vmatpush1.msra.mxu0 0.0
          %6065 = vmatprep.subr.mxu0 0.0
          %6066 = vmatpush1.msra.mxu0 0.0
          %6067 = vmatprep.subr.mxu0 0.0
          %6068 = vmatpush1.msra.mxu0 0.0
          %6069 = vmatprep.subr.mxu0 0.0
          %6070 = vmatpush1.msra.mxu0 0.0
          %6071 = vmatprep.subr.mxu0 0.0
          %6072 = vmatpush1.msra.mxu0 0.0
          %6073 = vmatprep.subr.mxu0 0.0
          %6074 = vmatpush1.msra.mxu0 0.0
          %6075 = vmatprep.subr.mxu0 0.0
          %6076 = vmatpush1.msra.mxu0 0.0
          %6077 = vmatprep.subr.mxu0 0.0
          %6078 = vmatpush1.msra.mxu0 0.0
          %6079 = vmatprep.subr.mxu0 0.0
          %6080 = vmatpush1.msra.mxu0 0.0
          %6081 = vmatprep.subr.mxu0 0.0
          %6082 = vmatpush1.msra.mxu0 0.0
          %6083 = vmatprep.subr.mxu0 0.0
          %6084 = vmatpush1.msra.mxu0 0.0
          %6085 = vmatprep.subr.mxu0 0.0
          %6086 = vmatpush1.msra.mxu0 0.0
          %6087 = vmatprep.subr.mxu0 0.0
          %6088 = vmatpush1.msra.mxu0 0.0
          %6089 = vmatprep.subr.mxu0 0.0
          %6090 = vmatpush1.msra.mxu0 0.0
          %6091 = vmatprep.subr.mxu0 0.0
          %6092 = vmatpush1.msra.mxu0 0.0
          %6093 = vmatprep.subr.mxu0 0.0
          %6094 = vmatpush1.msra.mxu0 0.0
          %6095 = vmatprep.subr.mxu0 0.0
          %6096 = vmatpush1.msra.mxu0 0.0
          %6097 = vmatprep.subr.mxu0 0.0
          %6098 = vmatpush1.msra.mxu0 0.0
          %6099 = vmatprep.mubr.f32.mxu0 0.0
          %6100 = vmatmul.mubr.f32.gmra.mrb[0].mxu0 %v5820
          %v6101 = vpop.f32.mrb[0].mxu0
          %v6102 = vadd.f32 0.0, %v6101
          %v6103 = vpop.f32.mrb[0].mxu0
          %v6104 = vadd.f32 0.0, %v6103
          %6105 = vdwg.mxu0
          %v6106 = vlaneseq
          %v6107 = vshrl.u32 %v6106, 7
          %v6108 = vsub.s32 7, %v6107
          %v6109 = vrot.slane %v214, %v6108
          %v6110 = vlaneseq
          %v6111 = vshrl.u32 %v6110, 7
          %v6112 = vsub.s32 7, %v6111
          %v6113 = vrot.slane %v215, %v6112
          %v6114 = vlaneseq
          %v6115 = vshrl.u32 %v6114, 7
          %v6116 = vsub.s32 7, %v6115
          %v6117 = vrot.slane %v216, %v6116
          %v6118 = vlaneseq
          %v6119 = vshrl.u32 %v6118, 7
          %v6120 = vsub.s32 7, %v6119
          %v6121 = vrot.slane %v217, %v6120
          %v6122 = vlaneseq
          %v6123 = vshrl.u32 %v6122, 7
          %v6124 = vsub.s32 7, %v6123
          %v6125 = vrot.slane %v218, %v6124
          %v6126 = vlaneseq
          %v6127 = vshrl.u32 %v6126, 7
          %v6128 = vsub.s32 7, %v6127
          %v6129 = vrot.slane %v219, %v6128
          %v6130 = vlaneseq
          %v6131 = vshrl.u32 %v6130, 7
          %v6132 = vsub.s32 7, %v6131
          %v6133 = vrot.slane %v220, %v6132
          %v6134 = vlaneseq
          %v6135 = vshrl.u32 %v6134, 7
          %v6136 = vsub.s32 7, %v6135
          %v6137 = vrot.slane %v221, %v6136
          %v6138 = vmul.f32 %v5889, %v6109
          %v6139 = vmul.f32 %v5891, %v6113
          %v6140 = vmul.f32 %v5960, %v6117
          %v6141 = vmul.f32 %v5962, %v6121
          %v6142 = vmul.f32 %v6031, %v6125
          %v6143 = vmul.f32 %v6033, %v6129
          %v6144 = vmul.f32 %v6102, %v6133
          %v6145 = vmul.f32 %v6104, %v6137
          %vm6146 = vcmp.gt.f32.partialorder %v206, 0.625
          %vm6147 = vcmp.gt.f32.partialorder %v207, 0.625
          %vm6148 = vcmp.gt.f32.partialorder %v208, 0.625
          %vm6149 = vcmp.gt.f32.partialorder %v209, 0.625
          %vm6150 = vcmp.gt.f32.partialorder %v210, 0.625
          %vm6151 = vcmp.gt.f32.partialorder %v211, 0.625
          %vm6152 = vcmp.gt.f32.partialorder %v212, 0.625
          %vm6153 = vcmp.gt.f32.partialorder %v213, 0.625
          %v6154 = vsel %vm6146, 1, 0
          %v6155 = vsel %vm6147, 1, 0
          %v6156 = vsel %vm6148, 1, 0
          %v6157 = vsel %vm6149, 1, 0
          %v6158 = vsel %vm6150, 1, 0
          %v6159 = vsel %vm6151, 1, 0
          %v6160 = vsel %vm6152, 1, 0
          %v6161 = vsel %vm6153, 1, 0
          %v6162 = vlaneseq
          %v6163 = vshrl.u32 %v6162, 7
          %v6164 = vsub.s32 6, %v6163
          %v6165 = vrot.slane %v6154, %v6164
          %v6166 = vlaneseq
          %v6167 = vshrl.u32 %v6166, 7
          %v6168 = vsub.s32 6, %v6167
          %v6169 = vrot.slane %v6155, %v6168
          %v6170 = vlaneseq
          %v6171 = vshrl.u32 %v6170, 7
          %v6172 = vsub.s32 6, %v6171
          %v6173 = vrot.slane %v6156, %v6172
          %v6174 = vlaneseq
          %v6175 = vshrl.u32 %v6174, 7
          %v6176 = vsub.s32 6, %v6175
          %v6177 = vrot.slane %v6157, %v6176
          %v6178 = vlaneseq
          %v6179 = vshrl.u32 %v6178, 7
          %v6180 = vsub.s32 6, %v6179
          %v6181 = vrot.slane %v6158, %v6180
          %v6182 = vlaneseq
          %v6183 = vshrl.u32 %v6182, 7
          %v6184 = vsub.s32 6, %v6183
          %v6185 = vrot.slane %v6159, %v6184
          %v6186 = vlaneseq
          %v6187 = vshrl.u32 %v6186, 7
          %v6188 = vsub.s32 6, %v6187
          %v6189 = vrot.slane %v6160, %v6188
          %v6190 = vlaneseq
          %v6191 = vshrl.u32 %v6190, 7
          %v6192 = vsub.s32 6, %v6191
          %v6193 = vrot.slane %v6161, %v6192
          %vm6194 = vcmp.eq.s32.totalorder %v6165, 1
          %vm6195 = vcmp.eq.s32.totalorder %v6169, 1
          %vm6196 = vcmp.eq.s32.totalorder %v6173, 1
          %vm6197 = vcmp.eq.s32.totalorder %v6177, 1
          %vm6198 = vcmp.eq.s32.totalorder %v6181, 1
          %vm6199 = vcmp.eq.s32.totalorder %v6185, 1
          %vm6200 = vcmp.eq.s32.totalorder %v6189, 1
          %vm6201 = vcmp.eq.s32.totalorder %v6193, 1
          %6203 = vset.pattern.permute.xlu0 1
          %6204 = vperm.xlu0 %6203, %v264
          %v6205 = vpop.permute.xlu0 %6204
          %v6207 = vsel %vm6194, %v6205, %v6138
          %v6208 = vsel %vm6195, %v6205, %v6139
          %v6209 = vsel %vm6196, %v6205, %v6140
          %v6210 = vsel %vm6197, %v6205, %v6141
          %v6211 = vsel %vm6198, %v6205, %v6142
          %v6212 = vsel %vm6199, %v6205, %v6143
          %v6213 = vsel %vm6200, %v6205, %v6144
          %v6214 = vsel %vm6201, %v6205, %v6145
          %vm6215 = vcmp.lt.f32.partialorder %v206, -0.625
          %vm6216 = vcmp.lt.f32.partialorder %v207, -0.625
          %vm6217 = vcmp.lt.f32.partialorder %v208, -0.625
          %vm6218 = vcmp.lt.f32.partialorder %v209, -0.625
          %vm6219 = vcmp.lt.f32.partialorder %v210, -0.625
          %vm6220 = vcmp.lt.f32.partialorder %v211, -0.625
          %vm6221 = vcmp.lt.f32.partialorder %v212, -0.625
          %vm6222 = vcmp.lt.f32.partialorder %v213, -0.625
          %v6223 = vsel %vm6215, 1, 0
          %v6224 = vsel %vm6216, 1, 0
          %v6225 = vsel %vm6217, 1, 0
          %v6226 = vsel %vm6218, 1, 0
          %v6227 = vsel %vm6219, 1, 0
          %v6228 = vsel %vm6220, 1, 0
          %v6229 = vsel %vm6221, 1, 0
          %v6230 = vsel %vm6222, 1, 0
          %v6231 = vlaneseq
          %v6232 = vshrl.u32 %v6231, 7
          %v6233 = vsub.s32 6, %v6232
          %v6234 = vrot.slane %v6223, %v6233
          %v6235 = vlaneseq
          %v6236 = vshrl.u32 %v6235, 7
          %v6237 = vsub.s32 6, %v6236
          %v6238 = vrot.slane %v6224, %v6237
          %v6239 = vlaneseq
          %v6240 = vshrl.u32 %v6239, 7
          %v6241 = vsub.s32 6, %v6240
          %v6242 = vrot.slane %v6225, %v6241
          %v6243 = vlaneseq
          %v6244 = vshrl.u32 %v6243, 7
          %v6245 = vsub.s32 6, %v6244
          %v6246 = vrot.slane %v6226, %v6245
          %v6247 = vlaneseq
          %v6248 = vshrl.u32 %v6247, 7
          %v6249 = vsub.s32 6, %v6248
          %v6250 = vrot.slane %v6227, %v6249
          %v6251 = vlaneseq
          %v6252 = vshrl.u32 %v6251, 7
          %v6253 = vsub.s32 6, %v6252
          %v6254 = vrot.slane %v6228, %v6253
          %v6255 = vlaneseq
          %v6256 = vshrl.u32 %v6255, 7
          %v6257 = vsub.s32 6, %v6256
          %v6258 = vrot.slane %v6229, %v6257
          %v6259 = vlaneseq
          %v6260 = vshrl.u32 %v6259, 7
          %v6261 = vsub.s32 6, %v6260
          %v6262 = vrot.slane %v6230, %v6261
          %vm6263 = vcmp.eq.s32.totalorder %v6234, 1
          %vm6264 = vcmp.eq.s32.totalorder %v6238, 1
          %vm6265 = vcmp.eq.s32.totalorder %v6242, 1
          %vm6266 = vcmp.eq.s32.totalorder %v6246, 1
          %vm6267 = vcmp.eq.s32.totalorder %v6250, 1
          %vm6268 = vcmp.eq.s32.totalorder %v6254, 1
          %vm6269 = vcmp.eq.s32.totalorder %v6258, 1
          %vm6270 = vcmp.eq.s32.totalorder %v6262, 1
          %6271 = vset.pattern.permute.xlu0 0
          %6272 = vperm.xlu0 %6271, %v264
          %v6273 = vpop.permute.xlu0 %6272
          %v6275 = vsel %vm6263, %v6273, %v6207
          %v6276 = vsel %vm6264, %v6273, %v6208
          %v6277 = vsel %vm6265, %v6273, %v6209
          %v6278 = vsel %vm6266, %v6273, %v6210
          %v6279 = vsel %vm6267, %v6273, %v6211
          %v6280 = vsel %vm6268, %v6273, %v6212
          %v6281 = vsel %vm6269, %v6273, %v6213
          %v6282 = vsel %vm6270, %v6273, %v6214
          %v6291 = vcombine.low %v6275, %v6276
          %v6292 = vcombine.low %v6277, %v6278
          %v6293 = vcombine.low %v6279, %v6280
          %v6294 = vcombine.low %v6281, %v6282
          %6299 = vst [vmem:[%s198] sm:$0x77] %v6291
          %6300 = vst [vmem:[%s198 + $0x8] sm:$0x77] %v6292
          %6301 = vst [vmem:[%s198 + $0x10] sm:$0x77] %v6293
          %6302 = vst [vmem:[%s198 + $0x18] sm:$0x77] %v6294
        $region44: #{_lambda_.1} parent=35 // pred_fallthru
          _
        %s6303 = sand.u32 %s122, 1
        %s6304 = scalar_lea.sflag [#allocation5], %s6303
        %s6305 = sand.u32 %s122, 1
        %s6306 = smul.addr %s6305, 32
        %s6307 = scalar_lea.vmem [#allocation4], %s6306
        // Predicated region
        $region45: #{_lambda_.1} parent=35 // pred_check
          %p6308 = pneg %p132
        $region46: #{_lambda_.1} parent=35 // pred_check_branch
          %6310 = sbr.rel (%p6308) target = $region48
        $region47: #{_lambda_.1} parent=35 // pred_region
          %s6311 = smul.u32 8, %s25
          %s6313 = ssub.s32 512, 512
          %6314 = vsyncadd %s6304, %s6313
          %s6315 = smul.addr %s6311, 64
          %s6316 = scalar_lea.hbm %s5, %s6315
          %s6318 = sshll.u32 %s6307, 4
          %s6319 = int_to_ptr.vmem [resolvable:$true] %s6318
          %6321 = dma.vmem_to_hbm [thread:$0]  %s6319, 512, %s6316, %s6304
        $region48: #{_lambda_.1} parent=35 // pred_fallthru
          _
      $region36: #{_lambda_.1} parent=5 // pred_fallthru
        _
      %p6322 = scmp.le.s32.totalorder 2, %s20
      // Predicated region
      $region49: #{_lambda_.1} parent=5 // pred_check
        %p6323 = pneg %p6322
      $region50: #{_lambda_.1} parent=5 // pred_check_branch
        %6325 = sbr.rel (%p6323) target = $region52
      $region51: #{_lambda_.1} parent=5 // pred_region
        %s6326 = ssub.s32 %s20, 2
        // Predicated region
        $region53: #{_lambda_.1} parent=51 // pred_check
          %p6327 = pneg %p138
        $region54: #{_lambda_.1} parent=51 // pred_check_branch
          %6329 = sbr.rel (%p6327) target = $region56
        $region55: #{_lambda_.1} parent=51 // pred_region
          %s6330 = sand.u32 %s123, 1
          %s6331 = scalar_lea.sflag [#allocation5], %s6330
          %s6332 = sand.u32 %s123, 1
          %s6333 = smul.addr %s6332, 32
          %s6334 = scalar_lea.vmem [#allocation4], %s6333
          %6335 = dma.done %s6331, 512
        $region56: #{_lambda_.1} parent=51 // pred_fallthru
          _
      $region52: #{_lambda_.1} parent=5 // pred_fallthru
        _
    $region6: #{_lambda_.1} parent=1 // loop_footer
      %s24 = sadd.s32 1, %s20
    $region7: #{_lambda_.1} parent=1 // loop_footer_branch
      %19 = sbr.rel target = $region3
    $region8: #{_lambda_.1} parent=1 // loop_exit
      _
    %6336 = vsyncpa [#allocation5], 1
    %s6337 = scalar_lea.sflag [#allocation5], 1
    %6338 = vsyncpa %s6337, 1

</llo_original>
